<compile_context>
chip_gen: v6e
topology: v6e:2x2x1
jax: 0.10.0
libtpu: 0.0.40
codegen_flags: <defaults>
</compile_context>

<pallas_src>
import jax
import jax.numpy as jnp
import numpy as np
from jax.experimental import pallas as pl
from jax.experimental.pallas import tpu as pltpu

EPS = 1e-5  # PyTorch GroupNorm default eps


def _make_kernel(C, F, HW, G):
    Cg = C // G
    FC = F * C
    inv_cnt = 1.0 / float(Cg * F * HW)

    def kernel(x_ref, w_ref, p_ref, o_ref):
        # x_ref: (1, F*C, HW)  w_ref: (4, C, 3C)  p_ref: (C, 12)  o_ref: (1, F*C, HW)

        def gn_silu(h3, layer):
            # h3: (F, C, HW).  GroupNorm over (C//G, F, H, W) per group, then SiLU.
            gamma = p_ref[:, 3 * layer + 0:3 * layer + 1]                    # (C, 1)
            beta = p_ref[:, 3 * layer + 1:3 * layer + 2]                     # (C, 1)
            # Single-pass stats on the natural layout: per-channel sum / sumsq,
            # then group-aggregate only the tiny (C, 1) vectors.
            s1 = jnp.sum(jnp.sum(h3, axis=2, keepdims=True), axis=0)         # (C, 1)
            s2 = jnp.sum(jnp.sum(h3 * h3, axis=2, keepdims=True), axis=0)    # (C, 1)
            gs1 = jnp.sum(s1.reshape(G, Cg, 1), axis=1, keepdims=True)       # (G, 1, 1)
            gs2 = jnp.sum(s2.reshape(G, Cg, 1), axis=1, keepdims=True)       # (G, 1, 1)
            mean = gs1 * inv_cnt
            var = gs2 * inv_cnt - mean * mean                                # E[x^2]-E[x]^2
            inv = jax.lax.rsqrt(var + EPS)                                   # (G, 1, 1)
            # Fold normalization + affine into one per-channel scale/shift.
            gamma_g = gamma.reshape(G, Cg, 1)
            beta_g = beta.reshape(G, Cg, 1)
            scale = (inv * gamma_g).reshape(C, 1)                            # (C, 1)
            shift = (beta_g - mean * inv * gamma_g).reshape(C, 1)            # (C, 1)
            hn = h3 * scale[None] + shift[None]                              # one fused pass
            return hn * jax.nn.sigmoid(hn)                                   # SiLU

        def tconv(a3, layer):
            # Conv3d(kernel=(3,1,1), padding=(1,0,0)) as per-frame fused-tap matmuls.
            w = w_ref[layer]                                   # (C, 3C) = [prev|cur|next]
            bias = p_ref[:, 3 * layer + 2:3 * layer + 3]       # (C, 1)
            aflat = a3.reshape(FC, HW)                         # frames stacked on sublanes
            outs = []
            for f in range(F):
                lo = max(f - 1, 0)
                hi = min(f + 1, F - 1)
                wk = w[:, (lo - f + 1) * C:(hi - f + 2) * C]   # (C, K), K in {2C, 3C}
                ak = aflat[lo * C:(hi + 1) * C, :]             # (K, HW) contiguous slab
                outs.append(jnp.dot(wk, ak, preferred_element_type=jnp.float32))
            y = jnp.stack(outs, axis=0)                        # (F, C, HW)
            return y + bias[None]

        h = x_ref[0].reshape(F, C, HW)
        for layer in range(4):                                 # conv1 .. conv4
            h = tconv(gn_silu(h, layer), layer)
        # Residual: re-read the VMEM-resident input block instead of holding a
        # live copy across the four stages.
        o_ref[0] = x_ref[0] + h.reshape(FC, HW)

    return kernel


def temporal_conv_layer(hidden_states, num_frames, params, *, num_groups):
    """hidden_states: (B*F, C, H, W) float32.  params: list of 4 tuples
    (gamma (C,), beta (C,), weight (C, C, 3), bias (C,))."""
    BF, C, H, W = hidden_states.shape
    B = BF // num_frames
    Fr = num_frames
    HW = H * W
    FC = Fr * C

    # (B*F, C, H, W) -> (B, F*C, H*W): pure reshape, no HBM data movement.
    x = hidden_states.reshape(B, FC, HW).astype(jnp.float32)

    # Conv3d weights (O, C, 3) -> fused-tap matrices (O, 3C) = [W_k0 | W_k1 | W_k2],
    # stacked across the 4 layers into one (4, C, 3C) block.
    w_pack = jnp.stack(
        [jnp.transpose(w, (0, 2, 1)).reshape(C, 3 * C) for (_, _, w, _) in params],
        axis=0,
    ).astype(jnp.float32)

    # Per-channel vectors packed lane-dense: column 3*l+{0,1,2} = gamma/beta/bias.
    cols = []
    for (gamma, beta, _w, bias) in params:
        cols += [gamma, beta, bias]
    p_pack = jnp.stack(cols, axis=1).astype(jnp.float32)        # (C, 12)

    kernel = _make_kernel(C, Fr, HW, num_groups)
    out = pl.pallas_call(
        kernel,
        out_shape=jax.ShapeDtypeStruct((B, FC, HW), jnp.float32),
        grid=(B,),
        in_specs=[
            pl.BlockSpec((1, FC, HW), lambda i: (i, 0, 0)),      # activations
            pl.BlockSpec((4, C, 3 * C), lambda i: (0, 0, 0)),    # packed conv weights
            pl.BlockSpec((C, 12), lambda i: (0, 0)),             # packed gamma/beta/bias
        ],
        out_specs=pl.BlockSpec((1, FC, HW), lambda i: (i, 0, 0)),
        compiler_params=pltpu.CompilerParams(
            dimension_semantics=("parallel",),
            vmem_limit_bytes=32 * 1024 * 1024,
        ),
    )(x, w_pack, p_pack)

    # (B, F*C, H*W) -> (B*F, C, H, W): pure reshape again.
    return out.reshape(BF, C, H, W)


# ---------------- pure-JAX reference (mirrors the PyTorch forward) ----------
def ref_forward(hidden_states, num_frames, params, num_groups):
    BF, C, H, W = hidden_states.shape
    B = BF // num_frames
    x = hidden_states.reshape(B, num_frames, C, H, W).transpose(0, 2, 1, 3, 4)
    identity = x

    def gn(h, gamma, beta):
        Bb, Cc, Fr, Hh, Ww = h.shape
        hg = h.reshape(Bb, num_groups, Cc // num_groups, Fr, Hh, Ww)
        m = hg.mean(axis=(2, 3, 4, 5), keepdims=True)
        v = ((hg - m) ** 2).mean(axis=(2, 3, 4, 5), keepdims=True)
        hn = ((hg - m) / jnp.sqrt(v + EPS)).reshape(h.shape)
        return hn * gamma[None, :, None, None, None] + beta[None, :, None, None, None]

    def tconv(h, w, b):
        hp = jnp.pad(h, ((0, 0), (0, 0), (1, 1), (0, 0), (0, 0)))
        y = (jnp.einsum('oc,bcfhw->bofhw', w[:, :, 0], hp[:, :, :-2], precision='highest')
             + jnp.einsum('oc,bcfhw->bofhw', w[:, :, 1], hp[:, :, 1:-1], precision='highest')
             + jnp.einsum('oc,bcfhw->bofhw', w[:, :, 2], hp[:, :, 2:], precision='highest'))
        return y + b[None, :, None, None, None]

    h = x
    for (gamma, beta, w, b) in params:
        hn = gn(h, gamma, beta)
        h = tconv(hn * jax.nn.sigmoid(hn), w, b)
    h = identity + h
    return h.transpose(0, 2, 1, 3, 4).reshape(BF, C, H, W)


if __name__ == "__main__":
    B, Fr, C, H, W = 2, 8, 32, 16, 16        # in_dim == out_dim == 32
    G = 8                                    # norm_num_groups (must divide C)

    key = jax.random.PRNGKey(0)
    keys = jax.random.split(key, 8)
    x = jax.random.normal(keys[0], (B * Fr, C, H, W), jnp.float32)

    params = []
    for i in range(4):
        k1, k2, k3, k4 = jax.random.split(keys[i + 1], 4)
        gamma = 1.0 + 0.1 * jax.random.normal(k1, (C,), jnp.float32)
        beta = 0.1 * jax.random.normal(k2, (C,), jnp.float32)
        w = 0.05 * jax.random.normal(k3, (C, C, 3), jnp.float32)   # Conv3d weight (O,C,3,1,1) squeezed
        bias = 0.05 * jax.random.normal(k4, (C,), jnp.float32)
        params.append((gamma, beta, w, bias))
    # NOTE: the module zero-inits conv4; random weights are used here so the
    # full compute path is numerically exercised (same graph semantics).

    out = temporal_conv_layer(x, Fr, params, num_groups=G)
    out = jax.block_until_ready(out)

    ref = ref_forward(x, Fr, params, G)
    assert out.shape == x.shape
    np.testing.assert_allclose(np.asarray(out), np.asarray(ref), rtol=3e-3, atol=3e-3)
    print("KERNEL_OK")
</pallas_src>

<mosaic_0001>
module attributes {stable_mosaic.version = 11 : i64} {
  func.func @kernel(%arg0: i32, %arg1: memref<1x256x256xf32, #tpu.memory_space<vmem>>, %arg2: memref<4x32x96xf32, #tpu.memory_space<vmem>>, %arg3: memref<32x12xf32, #tpu.memory_space<vmem>>, %arg4: memref<1x256x256xf32, #tpu.memory_space<vmem>>) attributes {dimension_semantics = [#tpu.dimension_semantics<parallel>], iteration_bounds = array<i64: 2>, scalar_prefetch = 0 : i64, scratch_operands = 0 : i64, tpu.core_type = #tpu.core_type<tc>, window_params = [{transform_indices = @transform_0, window_bounds = array<i64: 1, 256, 256>}, {pipeline_mode = #tpu.pipeline_mode<synchronous>, transform_indices = @transform_1, window_bounds = array<i64: 4, 32, 96>}, {pipeline_mode = #tpu.pipeline_mode<synchronous>, transform_indices = @transform_2, window_bounds = array<i64: 32, 12>}, {transform_indices = @transform_3, window_bounds = array<i64: 1, 256, 256>}]} {
    %c0 = arith.constant 0 : index
    %c0_0 = arith.constant 0 : index
    %c0_1 = arith.constant 0 : index
    %0 = vector.load %arg1[%c0, %c0_0, %c0_1] : memref<1x256x256xf32, #tpu.memory_space<vmem>>, vector<1x256x256xf32>
    %1 = vector.shape_cast %0 : vector<1x256x256xf32> to vector<256x256xf32>
    %2 = vector.shape_cast %1 : vector<256x256xf32> to vector<8x32x256xf32>
    %c0_2 = arith.constant 0 : index
    %c0_3 = arith.constant 0 : index
    %3 = vector.load %arg3[%c0_2, %c0_3] : memref<32x12xf32, #tpu.memory_space<vmem>>, vector<32x1xf32>
    %c0_4 = arith.constant 0 : index
    %c1 = arith.constant 1 : index
    %4 = vector.load %arg3[%c0_4, %c1] : memref<32x12xf32, #tpu.memory_space<vmem>>, vector<32x1xf32>
    %cst = arith.constant dense<0.000000e+00> : vector<8x32xf32>
    %5 = vector.multi_reduction <add>, %2, %cst [2] : vector<8x32x256xf32> to vector<8x32xf32>
    %6 = vector.shape_cast %5 : vector<8x32xf32> to vector<8x32x1xf32>
    %cst_5 = arith.constant dense<0.000000e+00> : vector<32x1xf32>
    %7 = vector.multi_reduction <add>, %6, %cst_5 [0] : vector<8x32x1xf32> to vector<32x1xf32>
    %8 = arith.mulf %2, %2 : vector<8x32x256xf32>
    %cst_6 = arith.constant dense<0.000000e+00> : vector<8x32xf32>
    %9 = vector.multi_reduction <add>, %8, %cst_6 [2] : vector<8x32x256xf32> to vector<8x32xf32>
    %10 = vector.shape_cast %9 : vector<8x32xf32> to vector<8x32x1xf32>
    %cst_7 = arith.constant dense<0.000000e+00> : vector<32x1xf32>
    %11 = vector.multi_reduction <add>, %10, %cst_7 [0] : vector<8x32x1xf32> to vector<32x1xf32>
    %12 = vector.shape_cast %7 : vector<32x1xf32> to vector<8x4x1xf32>
    %cst_8 = arith.constant dense<0.000000e+00> : vector<8x1xf32>
    %13 = vector.multi_reduction <add>, %12, %cst_8 [1] : vector<8x4x1xf32> to vector<8x1xf32>
    %14 = vector.shape_cast %13 : vector<8x1xf32> to vector<8x1x1xf32>
    %15 = vector.shape_cast %11 : vector<32x1xf32> to vector<8x4x1xf32>
    %cst_9 = arith.constant dense<0.000000e+00> : vector<8x1xf32>
    %16 = vector.multi_reduction <add>, %15, %cst_9 [1] : vector<8x4x1xf32> to vector<8x1xf32>
    %17 = vector.shape_cast %16 : vector<8x1xf32> to vector<8x1x1xf32>
    %cst_10 = arith.constant 1.22070313E-4 : f32
    %18 = vector.broadcast %cst_10 : f32 to vector<8x1x1xf32>
    %19 = arith.mulf %14, %18 : vector<8x1x1xf32>
    %cst_11 = arith.constant 1.22070313E-4 : f32
    %20 = vector.broadcast %cst_11 : f32 to vector<8x1x1xf32>
    %21 = arith.mulf %17, %20 : vector<8x1x1xf32>
    %22 = arith.mulf %19, %19 : vector<8x1x1xf32>
    %23 = arith.subf %21, %22 : vector<8x1x1xf32>
    %cst_12 = arith.constant 9.99999974E-6 : f32
    %24 = vector.broadcast %cst_12 : f32 to vector<8x1x1xf32>
    %25 = arith.addf %23, %24 : vector<8x1x1xf32>
    %26 = math.rsqrt %25 : vector<8x1x1xf32>
    %27 = vector.shape_cast %3 : vector<32x1xf32> to vector<8x4x1xf32>
    %28 = vector.shape_cast %4 : vector<32x1xf32> to vector<8x4x1xf32>
    %29 = vector.broadcast %26 : vector<8x1x1xf32> to vector<8x4x1xf32>
    %30 = arith.mulf %29, %27 : vector<8x4x1xf32>
    %31 = vector.shape_cast %30 : vector<8x4x1xf32> to vector<32x1xf32>
    %32 = arith.mulf %19, %26 : vector<8x1x1xf32>
    %33 = vector.broadcast %32 : vector<8x1x1xf32> to vector<8x4x1xf32>
    %34 = arith.mulf %33, %27 : vector<8x4x1xf32>
    %35 = arith.subf %28, %34 : vector<8x4x1xf32>
    %36 = vector.shape_cast %35 : vector<8x4x1xf32> to vector<32x1xf32>
    %37 = vector.shape_cast %31 : vector<32x1xf32> to vector<1x32x1xf32>
    %38 = vector.broadcast %37 : vector<1x32x1xf32> to vector<8x32x256xf32>
    %39 = arith.mulf %2, %38 : vector<8x32x256xf32>
    %40 = vector.shape_cast %36 : vector<32x1xf32> to vector<1x32x1xf32>
    %41 = vector.broadcast %40 : vector<1x32x1xf32> to vector<8x32x256xf32>
    %42 = arith.addf %39, %41 : vector<8x32x256xf32>
    %43 = arith.negf %42 : vector<8x32x256xf32>
    %44 = math.exp %43 : vector<8x32x256xf32>
    %cst_13 = arith.constant 1.000000e+00 : f32
    %45 = vector.broadcast %cst_13 : f32 to vector<8x32x256xf32>
    %46 = arith.addf %45, %44 : vector<8x32x256xf32>
    %47 = arith.divf %45, %46 : vector<8x32x256xf32>
    %48 = arith.mulf %42, %47 : vector<8x32x256xf32>
    %c0_14 = arith.constant 0 : index
    %c0_15 = arith.constant 0 : index
    %c0_16 = arith.constant 0 : index
    %49 = vector.load %arg2[%c0_14, %c0_15, %c0_16] : memref<4x32x96xf32, #tpu.memory_space<vmem>>, vector<1x32x96xf32>
    %50 = vector.shape_cast %49 : vector<1x32x96xf32> to vector<32x96xf32>
    %c0_17 = arith.constant 0 : index
    %c2 = arith.constant 2 : index
    %51 = vector.load %arg3[%c0_17, %c2] : memref<32x12xf32, #tpu.memory_space<vmem>>, vector<32x1xf32>
    %52 = vector.shape_cast %48 : vector<8x32x256xf32> to vector<256x256xf32>
    %53 = vector.extract_strided_slice %50 {offsets = [0, 32], sizes = [32, 64], strides = [1, 1]} : vector<32x96xf32> to vector<32x64xf32>
    %54 = vector.extract_strided_slice %52 {offsets = [0, 0], sizes = [64, 256], strides = [1, 1]} : vector<256x256xf32> to vector<64x256xf32>
    %cst_18 = arith.constant dense<0.000000e+00> : vector<32x256xf32>
    %55 = tpu.matmul %53, %54, %cst_18 {dimension_numbers = #tpu.dot_dimension_numbers<[1], [0], [0], [1], [0, 0, 1, 1], [], []>} : vector<32x64xf32>, vector<64x256xf32>, vector<32x256xf32> -> vector<32x256xf32>
    %56 = vector.extract_strided_slice %52 {offsets = [0, 0], sizes = [96, 256], strides = [1, 1]} : vector<256x256xf32> to vector<96x256xf32>
    %cst_19 = arith.constant dense<0.000000e+00> : vector<32x256xf32>
    %57 = tpu.matmul %50, %56, %cst_19 {dimension_numbers = #tpu.dot_dimension_numbers<[1], [0], [0], [1], [0, 0, 1, 1], [], []>} : vector<32x96xf32>, vector<96x256xf32>, vector<32x256xf32> -> vector<32x256xf32>
    %58 = vector.extract_strided_slice %52 {offsets = [32, 0], sizes = [96, 256], strides = [1, 1]} : vector<256x256xf32> to vector<96x256xf32>
    %cst_20 = arith.constant dense<0.000000e+00> : vector<32x256xf32>
    %59 = tpu.matmul %50, %58, %cst_20 {dimension_numbers = #tpu.dot_dimension_numbers<[1], [0], [0], [1], [0, 0, 1, 1], [], []>} : vector<32x96xf32>, vector<96x256xf32>, vector<32x256xf32> -> vector<32x256xf32>
    %60 = vector.extract_strided_slice %52 {offsets = [64, 0], sizes = [96, 256], strides = [1, 1]} : vector<256x256xf32> to vector<96x256xf32>
    %cst_21 = arith.constant dense<0.000000e+00> : vector<32x256xf32>
    %61 = tpu.matmul %50, %60, %cst_21 {dimension_numbers = #tpu.dot_dimension_numbers<[1], [0], [0], [1], [0, 0, 1, 1], [], []>} : vector<32x96xf32>, vector<96x256xf32>, vector<32x256xf32> -> vector<32x256xf32>
    %62 = vector.extract_strided_slice %52 {offsets = [96, 0], sizes = [96, 256], strides = [1, 1]} : vector<256x256xf32> to vector<96x256xf32>
    %cst_22 = arith.constant dense<0.000000e+00> : vector<32x256xf32>
    %63 = tpu.matmul %50, %62, %cst_22 {dimension_numbers = #tpu.dot_dimension_numbers<[1], [0], [0], [1], [0, 0, 1, 1], [], []>} : vector<32x96xf32>, vector<96x256xf32>, vector<32x256xf32> -> vector<32x256xf32>
    %64 = vector.extract_strided_slice %52 {offsets = [128, 0], sizes = [96, 256], strides = [1, 1]} : vector<256x256xf32> to vector<96x256xf32>
    %cst_23 = arith.constant dense<0.000000e+00> : vector<32x256xf32>
    %65 = tpu.matmul %50, %64, %cst_23 {dimension_numbers = #tpu.dot_dimension_numbers<[1], [0], [0], [1], [0, 0, 1, 1], [], []>} : vector<32x96xf32>, vector<96x256xf32>, vector<32x256xf32> -> vector<32x256xf32>
    %66 = vector.extract_strided_slice %52 {offsets = [160, 0], sizes = [96, 256], strides = [1, 1]} : vector<256x256xf32> to vector<96x256xf32>
    %cst_24 = arith.constant dense<0.000000e+00> : vector<32x256xf32>
    %67 = tpu.matmul %50, %66, %cst_24 {dimension_numbers = #tpu.dot_dimension_numbers<[1], [0], [0], [1], [0, 0, 1, 1], [], []>} : vector<32x96xf32>, vector<96x256xf32>, vector<32x256xf32> -> vector<32x256xf32>
    %68 = vector.extract_strided_slice %50 {offsets = [0, 0], sizes = [32, 64], strides = [1, 1]} : vector<32x96xf32> to vector<32x64xf32>
    %69 = vector.extract_strided_slice %52 {offsets = [192, 0], sizes = [64, 256], strides = [1, 1]} : vector<256x256xf32> to vector<64x256xf32>
    %cst_25 = arith.constant dense<0.000000e+00> : vector<32x256xf32>
    %70 = tpu.matmul %68, %69, %cst_25 {dimension_numbers = #tpu.dot_dimension_numbers<[1], [0], [0], [1], [0, 0, 1, 1], [], []>} : vector<32x64xf32>, vector<64x256xf32>, vector<32x256xf32> -> vector<32x256xf32>
    %71 = vector.shape_cast %55 : vector<32x256xf32> to vector<1x32x256xf32>
    %72 = vector.shape_cast %57 : vector<32x256xf32> to vector<1x32x256xf32>
    %73 = vector.shape_cast %59 : vector<32x256xf32> to vector<1x32x256xf32>
    %74 = vector.shape_cast %61 : vector<32x256xf32> to vector<1x32x256xf32>
    %75 = vector.shape_cast %63 : vector<32x256xf32> to vector<1x32x256xf32>
    %76 = vector.shape_cast %65 : vector<32x256xf32> to vector<1x32x256xf32>
    %77 = vector.shape_cast %67 : vector<32x256xf32> to vector<1x32x256xf32>
    %78 = vector.shape_cast %70 : vector<32x256xf32> to vector<1x32x256xf32>
    %79 = tpu.concatenate %71, %72, %73, %74, %75, %76, %77, %78 in 0 : vector<1x32x256xf32>, vector<1x32x256xf32>, vector<1x32x256xf32>, vector<1x32x256xf32>, vector<1x32x256xf32>, vector<1x32x256xf32>, vector<1x32x256xf32>, vector<1x32x256xf32> -> vector<8x32x256xf32>
    %80 = vector.shape_cast %51 : vector<32x1xf32> to vector<1x32x1xf32>
    %81 = vector.broadcast %80 : vector<1x32x1xf32> to vector<8x32x256xf32>
    %82 = arith.addf %79, %81 : vector<8x32x256xf32>
    %c0_26 = arith.constant 0 : index
    %c3 = arith.constant 3 : index
    %83 = vector.load %arg3[%c0_26, %c3] : memref<32x12xf32, #tpu.memory_space<vmem>>, vector<32x1xf32>
    %c0_27 = arith.constant 0 : index
    %c4 = arith.constant 4 : index
    %84 = vector.load %arg3[%c0_27, %c4] : memref<32x12xf32, #tpu.memory_space<vmem>>, vector<32x1xf32>
    %cst_28 = arith.constant dense<0.000000e+00> : vector<8x32xf32>
    %85 = vector.multi_reduction <add>, %82, %cst_28 [2] : vector<8x32x256xf32> to vector<8x32xf32>
    %86 = vector.shape_cast %85 : vector<8x32xf32> to vector<8x32x1xf32>
    %cst_29 = arith.constant dense<0.000000e+00> : vector<32x1xf32>
    %87 = vector.multi_reduction <add>, %86, %cst_29 [0] : vector<8x32x1xf32> to vector<32x1xf32>
    %88 = arith.mulf %82, %82 : vector<8x32x256xf32>
    %cst_30 = arith.constant dense<0.000000e+00> : vector<8x32xf32>
    %89 = vector.multi_reduction <add>, %88, %cst_30 [2] : vector<8x32x256xf32> to vector<8x32xf32>
    %90 = vector.shape_cast %89 : vector<8x32xf32> to vector<8x32x1xf32>
    %cst_31 = arith.constant dense<0.000000e+00> : vector<32x1xf32>
    %91 = vector.multi_reduction <add>, %90, %cst_31 [0] : vector<8x32x1xf32> to vector<32x1xf32>
    %92 = vector.shape_cast %87 : vector<32x1xf32> to vector<8x4x1xf32>
    %cst_32 = arith.constant dense<0.000000e+00> : vector<8x1xf32>
    %93 = vector.multi_reduction <add>, %92, %cst_32 [1] : vector<8x4x1xf32> to vector<8x1xf32>
    %94 = vector.shape_cast %93 : vector<8x1xf32> to vector<8x1x1xf32>
    %95 = vector.shape_cast %91 : vector<32x1xf32> to vector<8x4x1xf32>
    %cst_33 = arith.constant dense<0.000000e+00> : vector<8x1xf32>
    %96 = vector.multi_reduction <add>, %95, %cst_33 [1] : vector<8x4x1xf32> to vector<8x1xf32>
    %97 = vector.shape_cast %96 : vector<8x1xf32> to vector<8x1x1xf32>
    %cst_34 = arith.constant 1.22070313E-4 : f32
    %98 = vector.broadcast %cst_34 : f32 to vector<8x1x1xf32>
    %99 = arith.mulf %94, %98 : vector<8x1x1xf32>
    %cst_35 = arith.constant 1.22070313E-4 : f32
    %100 = vector.broadcast %cst_35 : f32 to vector<8x1x1xf32>
    %101 = arith.mulf %97, %100 : vector<8x1x1xf32>
    %102 = arith.mulf %99, %99 : vector<8x1x1xf32>
    %103 = arith.subf %101, %102 : vector<8x1x1xf32>
    %cst_36 = arith.constant 9.99999974E-6 : f32
    %104 = vector.broadcast %cst_36 : f32 to vector<8x1x1xf32>
    %105 = arith.addf %103, %104 : vector<8x1x1xf32>
    %106 = math.rsqrt %105 : vector<8x1x1xf32>
    %107 = vector.shape_cast %83 : vector<32x1xf32> to vector<8x4x1xf32>
    %108 = vector.shape_cast %84 : vector<32x1xf32> to vector<8x4x1xf32>
    %109 = vector.broadcast %106 : vector<8x1x1xf32> to vector<8x4x1xf32>
    %110 = arith.mulf %109, %107 : vector<8x4x1xf32>
    %111 = vector.shape_cast %110 : vector<8x4x1xf32> to vector<32x1xf32>
    %112 = arith.mulf %99, %106 : vector<8x1x1xf32>
    %113 = vector.broadcast %112 : vector<8x1x1xf32> to vector<8x4x1xf32>
    %114 = arith.mulf %113, %107 : vector<8x4x1xf32>
    %115 = arith.subf %108, %114 : vector<8x4x1xf32>
    %116 = vector.shape_cast %115 : vector<8x4x1xf32> to vector<32x1xf32>
    %117 = vector.shape_cast %111 : vector<32x1xf32> to vector<1x32x1xf32>
    %118 = vector.broadcast %117 : vector<1x32x1xf32> to vector<8x32x256xf32>
    %119 = arith.mulf %82, %118 : vector<8x32x256xf32>
    %120 = vector.shape_cast %116 : vector<32x1xf32> to vector<1x32x1xf32>
    %121 = vector.broadcast %120 : vector<1x32x1xf32> to vector<8x32x256xf32>
    %122 = arith.addf %119, %121 : vector<8x32x256xf32>
    %123 = arith.negf %122 : vector<8x32x256xf32>
    %124 = math.exp %123 : vector<8x32x256xf32>
    %cst_37 = arith.constant 1.000000e+00 : f32
    %125 = vector.broadcast %cst_37 : f32 to vector<8x32x256xf32>
    %126 = arith.addf %125, %124 : vector<8x32x256xf32>
    %127 = arith.divf %125, %126 : vector<8x32x256xf32>
    %128 = arith.mulf %122, %127 : vector<8x32x256xf32>
    %c1_38 = arith.constant 1 : index
    %c0_39 = arith.constant 0 : index
    %c0_40 = arith.constant 0 : index
    %129 = vector.load %arg2[%c1_38, %c0_39, %c0_40] : memref<4x32x96xf32, #tpu.memory_space<vmem>>, vector<1x32x96xf32>
    %130 = vector.shape_cast %129 : vector<1x32x96xf32> to vector<32x96xf32>
    %c0_41 = arith.constant 0 : index
    %c5 = arith.constant 5 : index
    %131 = vector.load %arg3[%c0_41, %c5] : memref<32x12xf32, #tpu.memory_space<vmem>>, vector<32x1xf32>
    %132 = vector.shape_cast %128 : vector<8x32x256xf32> to vector<256x256xf32>
    %133 = vector.extract_strided_slice %130 {offsets = [0, 32], sizes = [32, 64], strides = [1, 1]} : vector<32x96xf32> to vector<32x64xf32>
    %134 = vector.extract_strided_slice %132 {offsets = [0, 0], sizes = [64, 256], strides = [1, 1]} : vector<256x256xf32> to vector<64x256xf32>
    %cst_42 = arith.constant dense<0.000000e+00> : vector<32x256xf32>
    %135 = tpu.matmul %133, %134, %cst_42 {dimension_numbers = #tpu.dot_dimension_numbers<[1], [0], [0], [1], [0, 0, 1, 1], [], []>} : vector<32x64xf32>, vector<64x256xf32>, vector<32x256xf32> -> vector<32x256xf32>
    %136 = vector.extract_strided_slice %132 {offsets = [0, 0], sizes = [96, 256], strides = [1, 1]} : vector<256x256xf32> to vector<96x256xf32>
    %cst_43 = arith.constant dense<0.000000e+00> : vector<32x256xf32>
    %137 = tpu.matmul %130, %136, %cst_43 {dimension_numbers = #tpu.dot_dimension_numbers<[1], [0], [0], [1], [0, 0, 1, 1], [], []>} : vector<32x96xf32>, vector<96x256xf32>, vector<32x256xf32> -> vector<32x256xf32>
    %138 = vector.extract_strided_slice %132 {offsets = [32, 0], sizes = [96, 256], strides = [1, 1]} : vector<256x256xf32> to vector<96x256xf32>
    %cst_44 = arith.constant dense<0.000000e+00> : vector<32x256xf32>
    %139 = tpu.matmul %130, %138, %cst_44 {dimension_numbers = #tpu.dot_dimension_numbers<[1], [0], [0], [1], [0, 0, 1, 1], [], []>} : vector<32x96xf32>, vector<96x256xf32>, vector<32x256xf32> -> vector<32x256xf32>
    %140 = vector.extract_strided_slice %132 {offsets = [64, 0], sizes = [96, 256], strides = [1, 1]} : vector<256x256xf32> to vector<96x256xf32>
    %cst_45 = arith.constant dense<0.000000e+00> : vector<32x256xf32>
    %141 = tpu.matmul %130, %140, %cst_45 {dimension_numbers = #tpu.dot_dimension_numbers<[1], [0], [0], [1], [0, 0, 1, 1], [], []>} : vector<32x96xf32>, vector<96x256xf32>, vector<32x256xf32> -> vector<32x256xf32>
    %142 = vector.extract_strided_slice %132 {offsets = [96, 0], sizes = [96, 256], strides = [1, 1]} : vector<256x256xf32> to vector<96x256xf32>
    %cst_46 = arith.constant dense<0.000000e+00> : vector<32x256xf32>
    %143 = tpu.matmul %130, %142, %cst_46 {dimension_numbers = #tpu.dot_dimension_numbers<[1], [0], [0], [1], [0, 0, 1, 1], [], []>} : vector<32x96xf32>, vector<96x256xf32>, vector<32x256xf32> -> vector<32x256xf32>
    %144 = vector.extract_strided_slice %132 {offsets = [128, 0], sizes = [96, 256], strides = [1, 1]} : vector<256x256xf32> to vector<96x256xf32>
    %cst_47 = arith.constant dense<0.000000e+00> : vector<32x256xf32>
    %145 = tpu.matmul %130, %144, %cst_47 {dimension_numbers = #tpu.dot_dimension_numbers<[1], [0], [0], [1], [0, 0, 1, 1], [], []>} : vector<32x96xf32>, vector<96x256xf32>, vector<32x256xf32> -> vector<32x256xf32>
    %146 = vector.extract_strided_slice %132 {offsets = [160, 0], sizes = [96, 256], strides = [1, 1]} : vector<256x256xf32> to vector<96x256xf32>
    %cst_48 = arith.constant dense<0.000000e+00> : vector<32x256xf32>
    %147 = tpu.matmul %130, %146, %cst_48 {dimension_numbers = #tpu.dot_dimension_numbers<[1], [0], [0], [1], [0, 0, 1, 1], [], []>} : vector<32x96xf32>, vector<96x256xf32>, vector<32x256xf32> -> vector<32x256xf32>
    %148 = vector.extract_strided_slice %130 {offsets = [0, 0], sizes = [32, 64], strides = [1, 1]} : vector<32x96xf32> to vector<32x64xf32>
    %149 = vector.extract_strided_slice %132 {offsets = [192, 0], sizes = [64, 256], strides = [1, 1]} : vector<256x256xf32> to vector<64x256xf32>
    %cst_49 = arith.constant dense<0.000000e+00> : vector<32x256xf32>
    %150 = tpu.matmul %148, %149, %cst_49 {dimension_numbers = #tpu.dot_dimension_numbers<[1], [0], [0], [1], [0, 0, 1, 1], [], []>} : vector<32x64xf32>, vector<64x256xf32>, vector<32x256xf32> -> vector<32x256xf32>
    %151 = vector.shape_cast %135 : vector<32x256xf32> to vector<1x32x256xf32>
    %152 = vector.shape_cast %137 : vector<32x256xf32> to vector<1x32x256xf32>
    %153 = vector.shape_cast %139 : vector<32x256xf32> to vector<1x32x256xf32>
    %154 = vector.shape_cast %141 : vector<32x256xf32> to vector<1x32x256xf32>
    %155 = vector.shape_cast %143 : vector<32x256xf32> to vector<1x32x256xf32>
    %156 = vector.shape_cast %145 : vector<32x256xf32> to vector<1x32x256xf32>
    %157 = vector.shape_cast %147 : vector<32x256xf32> to vector<1x32x256xf32>
    %158 = vector.shape_cast %150 : vector<32x256xf32> to vector<1x32x256xf32>
    %159 = tpu.concatenate %151, %152, %153, %154, %155, %156, %157, %158 in 0 : vector<1x32x256xf32>, vector<1x32x256xf32>, vector<1x32x256xf32>, vector<1x32x256xf32>, vector<1x32x256xf32>, vector<1x32x256xf32>, vector<1x32x256xf32>, vector<1x32x256xf32> -> vector<8x32x256xf32>
    %160 = vector.shape_cast %131 : vector<32x1xf32> to vector<1x32x1xf32>
    %161 = vector.broadcast %160 : vector<1x32x1xf32> to vector<8x32x256xf32>
    %162 = arith.addf %159, %161 : vector<8x32x256xf32>
    %c0_50 = arith.constant 0 : index
    %c6 = arith.constant 6 : index
    %163 = vector.load %arg3[%c0_50, %c6] : memref<32x12xf32, #tpu.memory_space<vmem>>, vector<32x1xf32>
    %c0_51 = arith.constant 0 : index
    %c7 = arith.constant 7 : index
    %164 = vector.load %arg3[%c0_51, %c7] : memref<32x12xf32, #tpu.memory_space<vmem>>, vector<32x1xf32>
    %cst_52 = arith.constant dense<0.000000e+00> : vector<8x32xf32>
    %165 = vector.multi_reduction <add>, %162, %cst_52 [2] : vector<8x32x256xf32> to vector<8x32xf32>
    %166 = vector.shape_cast %165 : vector<8x32xf32> to vector<8x32x1xf32>
    %cst_53 = arith.constant dense<0.000000e+00> : vector<32x1xf32>
    %167 = vector.multi_reduction <add>, %166, %cst_53 [0] : vector<8x32x1xf32> to vector<32x1xf32>
    %168 = arith.mulf %162, %162 : vector<8x32x256xf32>
    %cst_54 = arith.constant dense<0.000000e+00> : vector<8x32xf32>
    %169 = vector.multi_reduction <add>, %168, %cst_54 [2] : vector<8x32x256xf32> to vector<8x32xf32>
    %170 = vector.shape_cast %169 : vector<8x32xf32> to vector<8x32x1xf32>
    %cst_55 = arith.constant dense<0.000000e+00> : vector<32x1xf32>
    %171 = vector.multi_reduction <add>, %170, %cst_55 [0] : vector<8x32x1xf32> to vector<32x1xf32>
    %172 = vector.shape_cast %167 : vector<32x1xf32> to vector<8x4x1xf32>
    %cst_56 = arith.constant dense<0.000000e+00> : vector<8x1xf32>
    %173 = vector.multi_reduction <add>, %172, %cst_56 [1] : vector<8x4x1xf32> to vector<8x1xf32>
    %174 = vector.shape_cast %173 : vector<8x1xf32> to vector<8x1x1xf32>
    %175 = vector.shape_cast %171 : vector<32x1xf32> to vector<8x4x1xf32>
    %cst_57 = arith.constant dense<0.000000e+00> : vector<8x1xf32>
    %176 = vector.multi_reduction <add>, %175, %cst_57 [1] : vector<8x4x1xf32> to vector<8x1xf32>
    %177 = vector.shape_cast %176 : vector<8x1xf32> to vector<8x1x1xf32>
    %cst_58 = arith.constant 1.22070313E-4 : f32
    %178 = vector.broadcast %cst_58 : f32 to vector<8x1x1xf32>
    %179 = arith.mulf %174, %178 : vector<8x1x1xf32>
    %cst_59 = arith.constant 1.22070313E-4 : f32
    %180 = vector.broadcast %cst_59 : f32 to vector<8x1x1xf32>
    %181 = arith.mulf %177, %180 : vector<8x1x1xf32>
    %182 = arith.mulf %179, %179 : vector<8x1x1xf32>
    %183 = arith.subf %181, %182 : vector<8x1x1xf32>
    %cst_60 = arith.constant 9.99999974E-6 : f32
    %184 = vector.broadcast %cst_60 : f32 to vector<8x1x1xf32>
    %185 = arith.addf %183, %184 : vector<8x1x1xf32>
    %186 = math.rsqrt %185 : vector<8x1x1xf32>
    %187 = vector.shape_cast %163 : vector<32x1xf32> to vector<8x4x1xf32>
    %188 = vector.shape_cast %164 : vector<32x1xf32> to vector<8x4x1xf32>
    %189 = vector.broadcast %186 : vector<8x1x1xf32> to vector<8x4x1xf32>
    %190 = arith.mulf %189, %187 : vector<8x4x1xf32>
    %191 = vector.shape_cast %190 : vector<8x4x1xf32> to vector<32x1xf32>
    %192 = arith.mulf %179, %186 : vector<8x1x1xf32>
    %193 = vector.broadcast %192 : vector<8x1x1xf32> to vector<8x4x1xf32>
    %194 = arith.mulf %193, %187 : vector<8x4x1xf32>
    %195 = arith.subf %188, %194 : vector<8x4x1xf32>
    %196 = vector.shape_cast %195 : vector<8x4x1xf32> to vector<32x1xf32>
    %197 = vector.shape_cast %191 : vector<32x1xf32> to vector<1x32x1xf32>
    %198 = vector.broadcast %197 : vector<1x32x1xf32> to vector<8x32x256xf32>
    %199 = arith.mulf %162, %198 : vector<8x32x256xf32>
    %200 = vector.shape_cast %196 : vector<32x1xf32> to vector<1x32x1xf32>
    %201 = vector.broadcast %200 : vector<1x32x1xf32> to vector<8x32x256xf32>
    %202 = arith.addf %199, %201 : vector<8x32x256xf32>
    %203 = arith.negf %202 : vector<8x32x256xf32>
    %204 = math.exp %203 : vector<8x32x256xf32>
    %cst_61 = arith.constant 1.000000e+00 : f32
    %205 = vector.broadcast %cst_61 : f32 to vector<8x32x256xf32>
    %206 = arith.addf %205, %204 : vector<8x32x256xf32>
    %207 = arith.divf %205, %206 : vector<8x32x256xf32>
    %208 = arith.mulf %202, %207 : vector<8x32x256xf32>
    %c2_62 = arith.constant 2 : index
    %c0_63 = arith.constant 0 : index
    %c0_64 = arith.constant 0 : index
    %209 = vector.load %arg2[%c2_62, %c0_63, %c0_64] : memref<4x32x96xf32, #tpu.memory_space<vmem>>, vector<1x32x96xf32>
    %210 = vector.shape_cast %209 : vector<1x32x96xf32> to vector<32x96xf32>
    %c0_65 = arith.constant 0 : index
    %c8 = arith.constant 8 : index
    %211 = vector.load %arg3[%c0_65, %c8] : memref<32x12xf32, #tpu.memory_space<vmem>>, vector<32x1xf32>
    %212 = vector.shape_cast %208 : vector<8x32x256xf32> to vector<256x256xf32>
    %213 = vector.extract_strided_slice %210 {offsets = [0, 32], sizes = [32, 64], strides = [1, 1]} : vector<32x96xf32> to vector<32x64xf32>
    %214 = vector.extract_strided_slice %212 {offsets = [0, 0], sizes = [64, 256], strides = [1, 1]} : vector<256x256xf32> to vector<64x256xf32>
    %cst_66 = arith.constant dense<0.000000e+00> : vector<32x256xf32>
    %215 = tpu.matmul %213, %214, %cst_66 {dimension_numbers = #tpu.dot_dimension_numbers<[1], [0], [0], [1], [0, 0, 1, 1], [], []>} : vector<32x64xf32>, vector<64x256xf32>, vector<32x256xf32> -> vector<32x256xf32>
    %216 = vector.extract_strided_slice %212 {offsets = [0, 0], sizes = [96, 256], strides = [1, 1]} : vector<256x256xf32> to vector<96x256xf32>
    %cst_67 = arith.constant dense<0.000000e+00> : vector<32x256xf32>
    %217 = tpu.matmul %210, %216, %cst_67 {dimension_numbers = #tpu.dot_dimension_numbers<[1], [0], [0], [1], [0, 0, 1, 1], [], []>} : vector<32x96xf32>, vector<96x256xf32>, vector<32x256xf32> -> vector<32x256xf32>
    %218 = vector.extract_strided_slice %212 {offsets = [32, 0], sizes = [96, 256], strides = [1, 1]} : vector<256x256xf32> to vector<96x256xf32>
    %cst_68 = arith.constant dense<0.000000e+00> : vector<32x256xf32>
    %219 = tpu.matmul %210, %218, %cst_68 {dimension_numbers = #tpu.dot_dimension_numbers<[1], [0], [0], [1], [0, 0, 1, 1], [], []>} : vector<32x96xf32>, vector<96x256xf32>, vector<32x256xf32> -> vector<32x256xf32>
    %220 = vector.extract_strided_slice %212 {offsets = [64, 0], sizes = [96, 256], strides = [1, 1]} : vector<256x256xf32> to vector<96x256xf32>
    %cst_69 = arith.constant dense<0.000000e+00> : vector<32x256xf32>
    %221 = tpu.matmul %210, %220, %cst_69 {dimension_numbers = #tpu.dot_dimension_numbers<[1], [0], [0], [1], [0, 0, 1, 1], [], []>} : vector<32x96xf32>, vector<96x256xf32>, vector<32x256xf32> -> vector<32x256xf32>
    %222 = vector.extract_strided_slice %212 {offsets = [96, 0], sizes = [96, 256], strides = [1, 1]} : vector<256x256xf32> to vector<96x256xf32>
    %cst_70 = arith.constant dense<0.000000e+00> : vector<32x256xf32>
    %223 = tpu.matmul %210, %222, %cst_70 {dimension_numbers = #tpu.dot_dimension_numbers<[1], [0], [0], [1], [0, 0, 1, 1], [], []>} : vector<32x96xf32>, vector<96x256xf32>, vector<32x256xf32> -> vector<32x256xf32>
    %224 = vector.extract_strided_slice %212 {offsets = [128, 0], sizes = [96, 256], strides = [1, 1]} : vector<256x256xf32> to vector<96x256xf32>
    %cst_71 = arith.constant dense<0.000000e+00> : vector<32x256xf32>
    %225 = tpu.matmul %210, %224, %cst_71 {dimension_numbers = #tpu.dot_dimension_numbers<[1], [0], [0], [1], [0, 0, 1, 1], [], []>} : vector<32x96xf32>, vector<96x256xf32>, vector<32x256xf32> -> vector<32x256xf32>
    %226 = vector.extract_strided_slice %212 {offsets = [160, 0], sizes = [96, 256], strides = [1, 1]} : vector<256x256xf32> to vector<96x256xf32>
    %cst_72 = arith.constant dense<0.000000e+00> : vector<32x256xf32>
    %227 = tpu.matmul %210, %226, %cst_72 {dimension_numbers = #tpu.dot_dimension_numbers<[1], [0], [0], [1], [0, 0, 1, 1], [], []>} : vector<32x96xf32>, vector<96x256xf32>, vector<32x256xf32> -> vector<32x256xf32>
    %228 = vector.extract_strided_slice %210 {offsets = [0, 0], sizes = [32, 64], strides = [1, 1]} : vector<32x96xf32> to vector<32x64xf32>
    %229 = vector.extract_strided_slice %212 {offsets = [192, 0], sizes = [64, 256], strides = [1, 1]} : vector<256x256xf32> to vector<64x256xf32>
    %cst_73 = arith.constant dense<0.000000e+00> : vector<32x256xf32>
    %230 = tpu.matmul %228, %229, %cst_73 {dimension_numbers = #tpu.dot_dimension_numbers<[1], [0], [0], [1], [0, 0, 1, 1], [], []>} : vector<32x64xf32>, vector<64x256xf32>, vector<32x256xf32> -> vector<32x256xf32>
    %231 = vector.shape_cast %215 : vector<32x256xf32> to vector<1x32x256xf32>
    %232 = vector.shape_cast %217 : vector<32x256xf32> to vector<1x32x256xf32>
    %233 = vector.shape_cast %219 : vector<32x256xf32> to vector<1x32x256xf32>
    %234 = vector.shape_cast %221 : vector<32x256xf32> to vector<1x32x256xf32>
    %235 = vector.shape_cast %223 : vector<32x256xf32> to vector<1x32x256xf32>
    %236 = vector.shape_cast %225 : vector<32x256xf32> to vector<1x32x256xf32>
    %237 = vector.shape_cast %227 : vector<32x256xf32> to vector<1x32x256xf32>
    %238 = vector.shape_cast %230 : vector<32x256xf32> to vector<1x32x256xf32>
    %239 = tpu.concatenate %231, %232, %233, %234, %235, %236, %237, %238 in 0 : vector<1x32x256xf32>, vector<1x32x256xf32>, vector<1x32x256xf32>, vector<1x32x256xf32>, vector<1x32x256xf32>, vector<1x32x256xf32>, vector<1x32x256xf32>, vector<1x32x256xf32> -> vector<8x32x256xf32>
    %240 = vector.shape_cast %211 : vector<32x1xf32> to vector<1x32x1xf32>
    %241 = vector.broadcast %240 : vector<1x32x1xf32> to vector<8x32x256xf32>
    %242 = arith.addf %239, %241 : vector<8x32x256xf32>
    %c0_74 = arith.constant 0 : index
    %c9 = arith.constant 9 : index
    %243 = vector.load %arg3[%c0_74, %c9] : memref<32x12xf32, #tpu.memory_space<vmem>>, vector<32x1xf32>
    %c0_75 = arith.constant 0 : index
    %c10 = arith.constant 10 : index
    %244 = vector.load %arg3[%c0_75, %c10] : memref<32x12xf32, #tpu.memory_space<vmem>>, vector<32x1xf32>
    %cst_76 = arith.constant dense<0.000000e+00> : vector<8x32xf32>
    %245 = vector.multi_reduction <add>, %242, %cst_76 [2] : vector<8x32x256xf32> to vector<8x32xf32>
    %246 = vector.shape_cast %245 : vector<8x32xf32> to vector<8x32x1xf32>
    %cst_77 = arith.constant dense<0.000000e+00> : vector<32x1xf32>
    %247 = vector.multi_reduction <add>, %246, %cst_77 [0] : vector<8x32x1xf32> to vector<32x1xf32>
    %248 = arith.mulf %242, %242 : vector<8x32x256xf32>
    %cst_78 = arith.constant dense<0.000000e+00> : vector<8x32xf32>
    %249 = vector.multi_reduction <add>, %248, %cst_78 [2] : vector<8x32x256xf32> to vector<8x32xf32>
    %250 = vector.shape_cast %249 : vector<8x32xf32> to vector<8x32x1xf32>
    %cst_79 = arith.constant dense<0.000000e+00> : vector<32x1xf32>
    %251 = vector.multi_reduction <add>, %250, %cst_79 [0] : vector<8x32x1xf32> to vector<32x1xf32>
    %252 = vector.shape_cast %247 : vector<32x1xf32> to vector<8x4x1xf32>
    %cst_80 = arith.constant dense<0.000000e+00> : vector<8x1xf32>
    %253 = vector.multi_reduction <add>, %252, %cst_80 [1] : vector<8x4x1xf32> to vector<8x1xf32>
    %254 = vector.shape_cast %253 : vector<8x1xf32> to vector<8x1x1xf32>
    %255 = vector.shape_cast %251 : vector<32x1xf32> to vector<8x4x1xf32>
    %cst_81 = arith.constant dense<0.000000e+00> : vector<8x1xf32>
    %256 = vector.multi_reduction <add>, %255, %cst_81 [1] : vector<8x4x1xf32> to vector<8x1xf32>
    %257 = vector.shape_cast %256 : vector<8x1xf32> to vector<8x1x1xf32>
    %cst_82 = arith.constant 1.22070313E-4 : f32
    %258 = vector.broadcast %cst_82 : f32 to vector<8x1x1xf32>
    %259 = arith.mulf %254, %258 : vector<8x1x1xf32>
    %cst_83 = arith.constant 1.22070313E-4 : f32
    %260 = vector.broadcast %cst_83 : f32 to vector<8x1x1xf32>
    %261 = arith.mulf %257, %260 : vector<8x1x1xf32>
    %262 = arith.mulf %259, %259 : vector<8x1x1xf32>
    %263 = arith.subf %261, %262 : vector<8x1x1xf32>
    %cst_84 = arith.constant 9.99999974E-6 : f32
    %264 = vector.broadcast %cst_84 : f32 to vector<8x1x1xf32>
    %265 = arith.addf %263, %264 : vector<8x1x1xf32>
    %266 = math.rsqrt %265 : vector<8x1x1xf32>
    %267 = vector.shape_cast %243 : vector<32x1xf32> to vector<8x4x1xf32>
    %268 = vector.shape_cast %244 : vector<32x1xf32> to vector<8x4x1xf32>
    %269 = vector.broadcast %266 : vector<8x1x1xf32> to vector<8x4x1xf32>
    %270 = arith.mulf %269, %267 : vector<8x4x1xf32>
    %271 = vector.shape_cast %270 : vector<8x4x1xf32> to vector<32x1xf32>
    %272 = arith.mulf %259, %266 : vector<8x1x1xf32>
    %273 = vector.broadcast %272 : vector<8x1x1xf32> to vector<8x4x1xf32>
    %274 = arith.mulf %273, %267 : vector<8x4x1xf32>
    %275 = arith.subf %268, %274 : vector<8x4x1xf32>
    %276 = vector.shape_cast %275 : vector<8x4x1xf32> to vector<32x1xf32>
    %277 = vector.shape_cast %271 : vector<32x1xf32> to vector<1x32x1xf32>
    %278 = vector.broadcast %277 : vector<1x32x1xf32> to vector<8x32x256xf32>
    %279 = arith.mulf %242, %278 : vector<8x32x256xf32>
    %280 = vector.shape_cast %276 : vector<32x1xf32> to vector<1x32x1xf32>
    %281 = vector.broadcast %280 : vector<1x32x1xf32> to vector<8x32x256xf32>
    %282 = arith.addf %279, %281 : vector<8x32x256xf32>
    %283 = arith.negf %282 : vector<8x32x256xf32>
    %284 = math.exp %283 : vector<8x32x256xf32>
    %cst_85 = arith.constant 1.000000e+00 : f32
    %285 = vector.broadcast %cst_85 : f32 to vector<8x32x256xf32>
    %286 = arith.addf %285, %284 : vector<8x32x256xf32>
    %287 = arith.divf %285, %286 : vector<8x32x256xf32>
    %288 = arith.mulf %282, %287 : vector<8x32x256xf32>
    %c3_86 = arith.constant 3 : index
    %c0_87 = arith.constant 0 : index
    %c0_88 = arith.constant 0 : index
    %289 = vector.load %arg2[%c3_86, %c0_87, %c0_88] : memref<4x32x96xf32, #tpu.memory_space<vmem>>, vector<1x32x96xf32>
    %290 = vector.shape_cast %289 : vector<1x32x96xf32> to vector<32x96xf32>
    %c0_89 = arith.constant 0 : index
    %c11 = arith.constant 11 : index
    %291 = vector.load %arg3[%c0_89, %c11] : memref<32x12xf32, #tpu.memory_space<vmem>>, vector<32x1xf32>
    %292 = vector.shape_cast %288 : vector<8x32x256xf32> to vector<256x256xf32>
    %293 = vector.extract_strided_slice %290 {offsets = [0, 32], sizes = [32, 64], strides = [1, 1]} : vector<32x96xf32> to vector<32x64xf32>
    %294 = vector.extract_strided_slice %292 {offsets = [0, 0], sizes = [64, 256], strides = [1, 1]} : vector<256x256xf32> to vector<64x256xf32>
    %cst_90 = arith.constant dense<0.000000e+00> : vector<32x256xf32>
    %295 = tpu.matmul %293, %294, %cst_90 {dimension_numbers = #tpu.dot_dimension_numbers<[1], [0], [0], [1], [0, 0, 1, 1], [], []>} : vector<32x64xf32>, vector<64x256xf32>, vector<32x256xf32> -> vector<32x256xf32>
    %296 = vector.extract_strided_slice %292 {offsets = [0, 0], sizes = [96, 256], strides = [1, 1]} : vector<256x256xf32> to vector<96x256xf32>
    %cst_91 = arith.constant dense<0.000000e+00> : vector<32x256xf32>
    %297 = tpu.matmul %290, %296, %cst_91 {dimension_numbers = #tpu.dot_dimension_numbers<[1], [0], [0], [1], [0, 0, 1, 1], [], []>} : vector<32x96xf32>, vector<96x256xf32>, vector<32x256xf32> -> vector<32x256xf32>
    %298 = vector.extract_strided_slice %292 {offsets = [32, 0], sizes = [96, 256], strides = [1, 1]} : vector<256x256xf32> to vector<96x256xf32>
    %cst_92 = arith.constant dense<0.000000e+00> : vector<32x256xf32>
    %299 = tpu.matmul %290, %298, %cst_92 {dimension_numbers = #tpu.dot_dimension_numbers<[1], [0], [0], [1], [0, 0, 1, 1], [], []>} : vector<32x96xf32>, vector<96x256xf32>, vector<32x256xf32> -> vector<32x256xf32>
    %300 = vector.extract_strided_slice %292 {offsets = [64, 0], sizes = [96, 256], strides = [1, 1]} : vector<256x256xf32> to vector<96x256xf32>
    %cst_93 = arith.constant dense<0.000000e+00> : vector<32x256xf32>
    %301 = tpu.matmul %290, %300, %cst_93 {dimension_numbers = #tpu.dot_dimension_numbers<[1], [0], [0], [1], [0, 0, 1, 1], [], []>} : vector<32x96xf32>, vector<96x256xf32>, vector<32x256xf32> -> vector<32x256xf32>
    %302 = vector.extract_strided_slice %292 {offsets = [96, 0], sizes = [96, 256], strides = [1, 1]} : vector<256x256xf32> to vector<96x256xf32>
    %cst_94 = arith.constant dense<0.000000e+00> : vector<32x256xf32>
    %303 = tpu.matmul %290, %302, %cst_94 {dimension_numbers = #tpu.dot_dimension_numbers<[1], [0], [0], [1], [0, 0, 1, 1], [], []>} : vector<32x96xf32>, vector<96x256xf32>, vector<32x256xf32> -> vector<32x256xf32>
    %304 = vector.extract_strided_slice %292 {offsets = [128, 0], sizes = [96, 256], strides = [1, 1]} : vector<256x256xf32> to vector<96x256xf32>
    %cst_95 = arith.constant dense<0.000000e+00> : vector<32x256xf32>
    %305 = tpu.matmul %290, %304, %cst_95 {dimension_numbers = #tpu.dot_dimension_numbers<[1], [0], [0], [1], [0, 0, 1, 1], [], []>} : vector<32x96xf32>, vector<96x256xf32>, vector<32x256xf32> -> vector<32x256xf32>
    %306 = vector.extract_strided_slice %292 {offsets = [160, 0], sizes = [96, 256], strides = [1, 1]} : vector<256x256xf32> to vector<96x256xf32>
    %cst_96 = arith.constant dense<0.000000e+00> : vector<32x256xf32>
    %307 = tpu.matmul %290, %306, %cst_96 {dimension_numbers = #tpu.dot_dimension_numbers<[1], [0], [0], [1], [0, 0, 1, 1], [], []>} : vector<32x96xf32>, vector<96x256xf32>, vector<32x256xf32> -> vector<32x256xf32>
    %308 = vector.extract_strided_slice %290 {offsets = [0, 0], sizes = [32, 64], strides = [1, 1]} : vector<32x96xf32> to vector<32x64xf32>
    %309 = vector.extract_strided_slice %292 {offsets = [192, 0], sizes = [64, 256], strides = [1, 1]} : vector<256x256xf32> to vector<64x256xf32>
    %cst_97 = arith.constant dense<0.000000e+00> : vector<32x256xf32>
    %310 = tpu.matmul %308, %309, %cst_97 {dimension_numbers = #tpu.dot_dimension_numbers<[1], [0], [0], [1], [0, 0, 1, 1], [], []>} : vector<32x64xf32>, vector<64x256xf32>, vector<32x256xf32> -> vector<32x256xf32>
    %311 = vector.shape_cast %295 : vector<32x256xf32> to vector<1x32x256xf32>
    %312 = vector.shape_cast %297 : vector<32x256xf32> to vector<1x32x256xf32>
    %313 = vector.shape_cast %299 : vector<32x256xf32> to vector<1x32x256xf32>
    %314 = vector.shape_cast %301 : vector<32x256xf32> to vector<1x32x256xf32>
    %315 = vector.shape_cast %303 : vector<32x256xf32> to vector<1x32x256xf32>
    %316 = vector.shape_cast %305 : vector<32x256xf32> to vector<1x32x256xf32>
    %317 = vector.shape_cast %307 : vector<32x256xf32> to vector<1x32x256xf32>
    %318 = vector.shape_cast %310 : vector<32x256xf32> to vector<1x32x256xf32>
    %319 = tpu.concatenate %311, %312, %313, %314, %315, %316, %317, %318 in 0 : vector<1x32x256xf32>, vector<1x32x256xf32>, vector<1x32x256xf32>, vector<1x32x256xf32>, vector<1x32x256xf32>, vector<1x32x256xf32>, vector<1x32x256xf32>, vector<1x32x256xf32> -> vector<8x32x256xf32>
    %320 = vector.shape_cast %291 : vector<32x1xf32> to vector<1x32x1xf32>
    %321 = vector.broadcast %320 : vector<1x32x1xf32> to vector<8x32x256xf32>
    %322 = arith.addf %319, %321 : vector<8x32x256xf32>
    %c0_98 = arith.constant 0 : index
    %c0_99 = arith.constant 0 : index
    %c0_100 = arith.constant 0 : index
    %323 = vector.load %arg1[%c0_98, %c0_99, %c0_100] : memref<1x256x256xf32, #tpu.memory_space<vmem>>, vector<1x256x256xf32>
    %324 = vector.shape_cast %323 : vector<1x256x256xf32> to vector<256x256xf32>
    %325 = vector.shape_cast %322 : vector<8x32x256xf32> to vector<256x256xf32>
    %326 = arith.addf %324, %325 : vector<256x256xf32>
    %c0_101 = arith.constant 0 : index
    %c0_102 = arith.constant 0 : index
    %c0_103 = arith.constant 0 : index
    %327 = vector.load %arg4[%c0_101, %c0_102, %c0_103] : memref<1x256x256xf32, #tpu.memory_space<vmem>>, vector<1x256x256xf32>
    %328 = vector.shape_cast %327 : vector<1x256x256xf32> to vector<256x256xf32>
    %329 = vector.shape_cast %326 : vector<256x256xf32> to vector<1x256x256xf32>
    tpu.vector_store %arg4[%c0_101, %c0_102, %c0_103], %329 {strides = array<i32>} : memref<1x256x256xf32, #tpu.memory_space<vmem>>, vector<1x256x256xf32>,
    return
  }
  func.func @transform_0(%arg0: i32) -> (i32, i32, i32) {
    %c0_i32 = arith.constant 0 : i32
    %c0_i32_0 = arith.constant 0 : i32
    %c0_i32_1 = arith.constant 0 : i32
    return %arg0, %c0_i32, %c0_i32_0 : i32, i32, i32
  }
  func.func @transform_1(%arg0: i32) -> (i32, i32, i32) {
    %c0_i32 = arith.constant 0 : i32
    %c0_i32_0 = arith.constant 0 : i32
    %c0_i32_1 = arith.constant 0 : i32
    %c0_i32_2 = arith.constant 0 : i32
    return %c0_i32, %c0_i32_0, %c0_i32_1 : i32, i32, i32
  }
  func.func @transform_2(%arg0: i32) -> (i32, i32) {
    %c0_i32 = arith.constant 0 : i32
    %c0_i32_0 = arith.constant 0 : i32
    %c0_i32_1 = arith.constant 0 : i32
    return %c0_i32, %c0_i32_0 : i32, i32
  }
  func.func @transform_3(%arg0: i32) -> (i32, i32, i32) {
    %c0_i32 = arith.constant 0 : i32
    %c0_i32_0 = arith.constant 0 : i32
    %c0_i32_1 = arith.constant 0 : i32
    return %arg0, %c0_i32, %c0_i32_0 : i32, i32, i32
  }
}

</mosaic_0001>

<llo_original>
// kernel: tpu_custom_call.1
$region0: #{tpu_custom_call.1}
  #allocation0 [shape = 'u32[]', space=smem, size = 0x4, offset = 0x4, fixed_abs, tag = 'smem constant byte address 0x4 - core index']
  #allocation1 [shape = 'u32[144,128]{1,0:T(1,128)}', space=vmem, size = 0x12000, scoped, tag = 'internal scratch']
  %s0 = inlined_call_operand.hbm [shape: f32[2,256,256], index: 0, kind: input, shape index: {}]
  %s1 = inlined_call_operand.hbm [shape: f32[4,32,96], index: 1, kind: input, shape index: {}]
  %s2 = inlined_call_operand.vmem [shape: f32[32,12], index: 2, kind: input, shape index: {}]
  %s3 = inlined_call_operand.hbm [shape: f32[2,256,256], index: 3, kind: output, shape index: {}]
  %s4 = sld [smem:[#allocation0]]
  $region53: #{tpu_custom_call.1} parent=0
    _
  %s6 = ssub.s32 1, %s4
  %s7 = scalar_select 0, %s6, %s4
  $region1: #{tpu_custom_call.1} parent=0
    #allocation2 [shape = 'u8[524288]{0}', space=vmem, size = 0x80000, scoped, tag = 'input window, operand 0']
    #allocation3 [shape = 's32[2]{0}', space=sflag, size = 0x8, scoped, tag = 'scoped memory for tpu_custom_call.1']
    #allocation4 [shape = 's32[2]{0}', space=sflag, size = 0x8, scoped, tag = 'scoped memory for tpu_custom_call.1']
    #allocation5 [shape = 'u8[65536]{0}', space=vmem, size = 0x10000, scoped, tag = 'input window, operand 1, single buffered']
    #allocation6 [shape = 's32[1]{0}', space=sflag, size = 0x4, scoped, tag = 'scoped memory for tpu_custom_call.1']
    #allocation7 [shape = 'u8[524288]{0}', space=vmem, size = 0x80000, scoped, tag = 'output window, operand 0']
    %8 = vsyncpa [#allocation3], 0
    %s9 = scalar_lea.sflag [#allocation3], 1
    %10 = vsyncpa %s9, 0
    %11 = vsyncpa [#allocation6], 0
    %12 = vsyncpa [#allocation4], 0
    %s13 = scalar_lea.sflag [#allocation4], 1
    %14 = vsyncpa %s13, 0
    loop: start=0, step=1, limit=4
    $region2: #{tpu_custom_call.1} parent=1 // loop_pre_header
      _
    $region3: #{tpu_custom_call.1} parent=1 // loop_header
      %s16 = sphi 0, %s20
      %p17 = scmp.ge.s32.totalorder %s16, 4
      %s26 = sphi 0, %s28
      %s29 = sphi 0, %s26
      %s30 = sphi 0, %s29
      %s46 = sphi 0, %s30
      %s50 = sphi 0, %s50
      %s52 = sphi 0, %s50
      %s53 = sphi 0, %s52
      %s67 = sphi 0, %s53
      %s71 = sphi 0, %s71
      %s73 = sphi 0, %s71
      %s74 = sphi 0, %s73
      %s88 = sphi 0, %s74
      %s94 = sphi 0, %s96
      %s97 = sphi 0, %s94
      %s98 = sphi 0, %s97
      %s114 = sphi 0, %s98
    $region4: #{tpu_custom_call.1} parent=1 // loop_header_branch
      %19 = sbr.rel (%p17) target = $region8
    $region5: #{tpu_custom_call.1} parent=1 // loop_body
      %s21 = ssub.s32 %s16, 1
      %s22 = ssub.s32 %s16, 2
      %s23 = sadd.s32 %s16, 1
      %s24 = ssub.s32 %s16, %s23
      %p25 = scmp.eq.s32.totalorder %s24, 0
      %s27 = sadd.s32 %s26, 1
      %s28 = scalar_select %p25, %s26, %s27
      %p31 = pneg %p25
      %p32 = scmp.eq.s32.totalorder %s16, 1
      %p33 = por %p31, %p32
      %p34 = scmp.ne.s32.totalorder %s26, %s29
      %p35 = scmp.eq.s32.totalorder %s16, 0
      %p36 = por %p34, %p35
      %p37 = scmp.ne.s32.totalorder %s26, %s29
      %p38 = scmp.eq.s32.totalorder %s21, 1
      %p39 = por %p37, %p38
      %p40 = scmp.ne.s32.totalorder %s29, %s30
      %p41 = scmp.eq.s32.totalorder %s21, 0
      %p42 = por %p40, %p41
      %p43 = scmp.ne.s32.totalorder %s29, %s30
      %p44 = scmp.eq.s32.totalorder %s22, 1
      %p45 = por %p43, %p44
      %p47 = scmp.ne.s32.totalorder %s30, %s46
      %p48 = scmp.eq.s32.totalorder %s22, 0
      %p49 = por %p47, %p48
      %s51 = sadd.s32 %s50, 1
      %p54 = scmp.eq.s32.totalorder %s16, 1
      %p55 = scmp.ne.s32.totalorder %s50, %s52
      %p56 = scmp.eq.s32.totalorder %s16, 0
      %p57 = por %p55, %p56
      %p58 = scmp.ne.s32.totalorder %s50, %s52
      %p59 = scmp.eq.s32.totalorder %s21, 1
      %p60 = por %p58, %p59
      %p61 = scmp.ne.s32.totalorder %s52, %s53
      %p62 = scmp.eq.s32.totalorder %s21, 0
      %p63 = por %p61, %p62
      %p64 = scmp.ne.s32.totalorder %s52, %s53
      %p65 = scmp.eq.s32.totalorder %s22, 1
      %p66 = por %p64, %p65
      %p68 = scmp.ne.s32.totalorder %s53, %s67
      %p69 = scmp.eq.s32.totalorder %s22, 0
      %p70 = por %p68, %p69
      %s72 = sadd.s32 %s71, 1
      %p75 = scmp.eq.s32.totalorder %s16, 1
      %p76 = scmp.ne.s32.totalorder %s71, %s73
      %p77 = scmp.eq.s32.totalorder %s16, 0
      %p78 = por %p76, %p77
      %p79 = scmp.ne.s32.totalorder %s71, %s73
      %p80 = scmp.eq.s32.totalorder %s21, 1
      %p81 = por %p79, %p80
      %p82 = scmp.ne.s32.totalorder %s73, %s74
      %p83 = scmp.eq.s32.totalorder %s21, 0
      %p84 = por %p82, %p83
      %p85 = scmp.ne.s32.totalorder %s73, %s74
      %p86 = scmp.eq.s32.totalorder %s22, 1
      %p87 = por %p85, %p86
      %p89 = scmp.ne.s32.totalorder %s74, %s88
      %p90 = scmp.eq.s32.totalorder %s22, 0
      %p91 = por %p89, %p90
      %s92 = ssub.s32 %s16, %s23
      %p93 = scmp.eq.s32.totalorder %s92, 0
      %s95 = sadd.s32 %s94, 1
      %s96 = scalar_select %p93, %s94, %s95
      %p99 = pneg %p93
      %p100 = scmp.eq.s32.totalorder %s16, 1
      %p101 = por %p99, %p100
      %p102 = scmp.ne.s32.totalorder %s94, %s97
      %p103 = scmp.eq.s32.totalorder %s16, 0
      %p104 = por %p102, %p103
      %p105 = scmp.ne.s32.totalorder %s94, %s97
      %p106 = scmp.eq.s32.totalorder %s21, 1
      %p107 = por %p105, %p106
      %p108 = scmp.ne.s32.totalorder %s97, %s98
      %p109 = scmp.eq.s32.totalorder %s21, 0
      %p110 = por %p108, %p109
      %p111 = scmp.ne.s32.totalorder %s97, %s98
      %p112 = scmp.eq.s32.totalorder %s22, 1
      %p113 = por %p111, %p112
      %p115 = scmp.ne.s32.totalorder %s98, %s114
      %p116 = scmp.eq.s32.totalorder %s22, 0
      %p117 = por %p115, %p116
      %p118 = scmp.le.s32.totalorder 1, %s16
      %p119 = scmp.lt.s32.totalorder %s16, 3
      %p120 = pnand %p118, %p119
      %p121 = pneg %p120
      // Predicated region
      $region9: #{tpu_custom_call.1} parent=5 // pred_check
        _
      $region10: #{tpu_custom_call.1} parent=5 // pred_check_branch
        %123 = sbr.rel (%p120) target = $region12
      $region11: #{tpu_custom_call.1} parent=5 // pred_region
        %s124 = ssub.s32 %s16, 1
        // Predicated region
        $region13: #{tpu_custom_call.1} parent=11 // pred_check
          %p125 = pneg %p63
        $region14: #{tpu_custom_call.1} parent=11 // pred_check_branch
          %127 = sbr.rel (%p125) target = $region16
        $region15: #{tpu_custom_call.1} parent=11 // pred_region
          %s129 = ssub.s32 2048, 2048
          %130 = vsyncadd [#allocation6], %s129
          %s131 = sshll.u32 [#allocation5], 4
          %s132 = int_to_ptr.vmem [resolvable:$true] %s131
          %137 = dma.hbm_to_vmem [thread:$0]  %s1, 2048, %s132, [#allocation6], 128, 128, 8
        $region16: #{tpu_custom_call.1} parent=11 // pred_fallthru
          _
        // Predicated region
        $region17: #{tpu_custom_call.1} parent=11 // pred_check
          %p138 = pneg %p84
        $region18: #{tpu_custom_call.1} parent=11 // pred_check_branch
          %140 = sbr.rel (%p138) target = $region20
        $region19: #{tpu_custom_call.1} parent=11 // pred_region
          _
        $region20: #{tpu_custom_call.1} parent=11 // pred_fallthru
          _
      $region12: #{tpu_custom_call.1} parent=5 // pred_fallthru
        _
      %p141 = scmp.lt.s32.totalorder %s16, 2
      // Predicated region
      $region21: #{tpu_custom_call.1} parent=5 // pred_check
        %p142 = pneg %p141
      $region22: #{tpu_custom_call.1} parent=5 // pred_check_branch
        %144 = sbr.rel (%p142) target = $region24
      $region23: #{tpu_custom_call.1} parent=5 // pred_region
        // Predicated region
        $region25: #{tpu_custom_call.1} parent=23 // pred_check
          %p145 = pneg %p36
        $region26: #{tpu_custom_call.1} parent=23 // pred_check_branch
          %147 = sbr.rel (%p145) target = $region28
        $region27: #{tpu_custom_call.1} parent=23 // pred_region
          %s148 = sand.u32 %s26, 1
          %s149 = scalar_lea.sflag [#allocation3], %s148
          %s150 = sand.u32 %s26, 1
          %s151 = smul.addr %s150, 512
          %s152 = scalar_lea.vmem [#allocation2], %s151
          %s154 = ssub.s32 8192, 8192
          %155 = vsyncadd %s149, %s154
          %s156 = smul.addr %s16, 64
          %s157 = smul.addr %s156, 128
          %s158 = scalar_lea.hbm %s0, %s157
          %s159 = sshll.u32 %s152, 4
          %s160 = int_to_ptr.vmem [resolvable:$true] %s159
          %165 = dma.hbm_to_vmem [thread:$0]  %s158, 8192, %s160, %s149, 256, 256, 16
        $region28: #{tpu_custom_call.1} parent=23 // pred_fallthru
          _
      $region24: #{tpu_custom_call.1} parent=5 // pred_fallthru
        _
      %p166 = scmp.le.s32.totalorder 1, %s16
      %p167 = scmp.lt.s32.totalorder %s16, 3
      %p168 = pnand %p166, %p167
      %p169 = pneg %p168
      // Predicated region
      $region29: #{tpu_custom_call.1} parent=5 // pred_check
        _
      $region30: #{tpu_custom_call.1} parent=5 // pred_check_branch
        %171 = sbr.rel (%p168) target = $region32
      $region31: #{tpu_custom_call.1} parent=5 // pred_region
        %s172 = ssub.s32 %s16, 1
        %s173 = sand.u32 %s29, 1
        %s174 = scalar_lea.sflag [#allocation3], %s173
        %s175 = sand.u32 %s29, 1
        %s176 = smul.addr %s175, 512
        %s177 = scalar_lea.vmem [#allocation2], %s176
        // Predicated region
        $region33: #{tpu_custom_call.1} parent=31 // pred_check
          %p178 = pneg %p42
        $region34: #{tpu_custom_call.1} parent=31 // pred_check_branch
          %180 = sbr.rel (%p178) target = $region36
        $region35: #{tpu_custom_call.1} parent=31 // pred_region
          %181 = dma.done %s174, 8192
        $region36: #{tpu_custom_call.1} parent=31 // pred_fallthru
          _
        // Predicated region
        $region37: #{tpu_custom_call.1} parent=31 // pred_check
          %p182 = pneg %p63
        $region38: #{tpu_custom_call.1} parent=31 // pred_check_branch
          %184 = sbr.rel (%p182) target = $region40
        $region39: #{tpu_custom_call.1} parent=31 // pred_region
          %185 = dma.done [#allocation6], 2048
        $region40: #{tpu_custom_call.1} parent=31 // pred_fallthru
          _
        %s186 = sand.u32 %s29, 1
        %s187 = scalar_lea.sflag [#allocation3], %s186
        %s188 = sand.u32 %s29, 1
        %s189 = smul.addr %s188, 512
        %s190 = scalar_lea.vmem [#allocation2], %s189
        %p191 = pneg %p42
        %p192 = pneg %p39
        %p193 = pneg %p63
        %p194 = pneg %p60
        %p195 = pneg %p84
        %p196 = pneg %p81
        %p197 = pneg %p110
        %p198 = pneg %p107
        %s199 = sand.u32 %s97, 1
        %s200 = scalar_lea.sflag [#allocation4], %s199
        %s201 = sand.u32 %s97, 1
        %s202 = smul.addr %s201, 512
        %s203 = scalar_lea.vmem [#allocation7], %s202
        %v204 = vld [vmem:[%s177] sm:$0xff]
        %v205 = vld [vmem:[%s177 + $0x8] sm:$0xff]
        %v206 = vld [vmem:[%s177 + $0x10] sm:$0xff]
        %v207 = vld [vmem:[%s177 + $0x18] sm:$0xff]
        %v208 = vld [vmem:[%s177 + $0x20] sm:$0xff]
        %v209 = vld [vmem:[%s177 + $0x28] sm:$0xff]
        %v210 = vld [vmem:[%s177 + $0x30] sm:$0xff]
        %v211 = vld [vmem:[%s177 + $0x38] sm:$0xff]
        %v212 = vld [vmem:[%s177 + $0x40] sm:$0xff]
        %v213 = vld [vmem:[%s177 + $0x48] sm:$0xff]
        %v214 = vld [vmem:[%s177 + $0x50] sm:$0xff]
        %v215 = vld [vmem:[%s177 + $0x58] sm:$0xff]
        %v216 = vld [vmem:[%s177 + $0x60] sm:$0xff]
        %v217 = vld [vmem:[%s177 + $0x68] sm:$0xff]
        %v218 = vld [vmem:[%s177 + $0x70] sm:$0xff]
        %v219 = vld [vmem:[%s177 + $0x78] sm:$0xff]
        %v220 = vld [vmem:[%s177 + $0x80] sm:$0xff]
        %v221 = vld [vmem:[%s177 + $0x88] sm:$0xff]
        %v222 = vld [vmem:[%s177 + $0x90] sm:$0xff]
        %v223 = vld [vmem:[%s177 + $0x98] sm:$0xff]
        %v224 = vld [vmem:[%s177 + $0xa0] sm:$0xff]
        %v225 = vld [vmem:[%s177 + $0xa8] sm:$0xff]
        %v226 = vld [vmem:[%s177 + $0xb0] sm:$0xff]
        %v227 = vld [vmem:[%s177 + $0xb8] sm:$0xff]
        %v228 = vld [vmem:[%s177 + $0xc0] sm:$0xff]
        %v229 = vld [vmem:[%s177 + $0xc8] sm:$0xff]
        %v230 = vld [vmem:[%s177 + $0xd0] sm:$0xff]
        %v231 = vld [vmem:[%s177 + $0xd8] sm:$0xff]
        %v232 = vld [vmem:[%s177 + $0xe0] sm:$0xff]
        %v233 = vld [vmem:[%s177 + $0xe8] sm:$0xff]
        %v234 = vld [vmem:[%s177 + $0xf0] sm:$0xff]
        %v235 = vld [vmem:[%s177 + $0xf8] sm:$0xff]
        %v236 = vld [vmem:[%s177 + $0x100] sm:$0xff]
        %v237 = vld [vmem:[%s177 + $0x108] sm:$0xff]
        %v238 = vld [vmem:[%s177 + $0x110] sm:$0xff]
        %v239 = vld [vmem:[%s177 + $0x118] sm:$0xff]
        %v240 = vld [vmem:[%s177 + $0x120] sm:$0xff]
        %v241 = vld [vmem:[%s177 + $0x128] sm:$0xff]
        %v242 = vld [vmem:[%s177 + $0x130] sm:$0xff]
        %v243 = vld [vmem:[%s177 + $0x138] sm:$0xff]
        %v244 = vld [vmem:[%s177 + $0x140] sm:$0xff]
        %v245 = vld [vmem:[%s177 + $0x148] sm:$0xff]
        %v246 = vld [vmem:[%s177 + $0x150] sm:$0xff]
        %v247 = vld [vmem:[%s177 + $0x158] sm:$0xff]
        %v248 = vld [vmem:[%s177 + $0x160] sm:$0xff]
        %v249 = vld [vmem:[%s177 + $0x168] sm:$0xff]
        %v250 = vld [vmem:[%s177 + $0x170] sm:$0xff]
        %v251 = vld [vmem:[%s177 + $0x178] sm:$0xff]
        %v252 = vld [vmem:[%s177 + $0x180] sm:$0xff]
        %v253 = vld [vmem:[%s177 + $0x188] sm:$0xff]
        %v254 = vld [vmem:[%s177 + $0x190] sm:$0xff]
        %v255 = vld [vmem:[%s177 + $0x198] sm:$0xff]
        %v256 = vld [vmem:[%s177 + $0x1a0] sm:$0xff]
        %v257 = vld [vmem:[%s177 + $0x1a8] sm:$0xff]
        %v258 = vld [vmem:[%s177 + $0x1b0] sm:$0xff]
        %v259 = vld [vmem:[%s177 + $0x1b8] sm:$0xff]
        %v260 = vld [vmem:[%s177 + $0x1c0] sm:$0xff]
        %v261 = vld [vmem:[%s177 + $0x1c8] sm:$0xff]
        %v262 = vld [vmem:[%s177 + $0x1d0] sm:$0xff]
        %v263 = vld [vmem:[%s177 + $0x1d8] sm:$0xff]
        %v264 = vld [vmem:[%s177 + $0x1e0] sm:$0xff]
        %v265 = vld [vmem:[%s177 + $0x1e8] sm:$0xff]
        %v266 = vld [vmem:[%s177 + $0x1f0] sm:$0xff]
        %v267 = vld [vmem:[%s177 + $0x1f8] sm:$0xff]
        %v268 = vld [vmem:[%s2] sm:$0xff]
        %v269 = vld [vmem:[%s2 + $0x8] sm:$0xff]
        %v270 = vld [vmem:[%s2 + $0x10] sm:$0xff]
        %v271 = vld [vmem:[%s2 + $0x18] sm:$0xff]
        %v272 = vadd.f32 %v204, %v205
        %273 = vadd.xlane.f32.xlu0 %v272
        %v274 = vpop.xlane.xlu0 %273
        %v275 = vadd.f32 %v206, %v207
        %276 = vadd.xlane.f32.xlu0 %v275
        %v277 = vpop.xlane.xlu0 %276
        %v278 = vadd.f32 %v208, %v209
        %279 = vadd.xlane.f32.xlu0 %v278
        %v280 = vpop.xlane.xlu0 %279
        %v281 = vadd.f32 %v210, %v211
        %282 = vadd.xlane.f32.xlu0 %v281
        %v283 = vpop.xlane.xlu0 %282
        %v284 = vadd.f32 %v212, %v213
        %285 = vadd.xlane.f32.xlu0 %v284
        %v286 = vpop.xlane.xlu0 %285
        %v287 = vadd.f32 %v214, %v215
        %288 = vadd.xlane.f32.xlu0 %v287
        %v289 = vpop.xlane.xlu0 %288
        %v290 = vadd.f32 %v216, %v217
        %291 = vadd.xlane.f32.xlu0 %v290
        %v292 = vpop.xlane.xlu0 %291
        %v293 = vadd.f32 %v218, %v219
        %294 = vadd.xlane.f32.xlu0 %v293
        %v295 = vpop.xlane.xlu0 %294
        %v296 = vadd.f32 %v220, %v221
        %297 = vadd.xlane.f32.xlu0 %v296
        %v298 = vpop.xlane.xlu0 %297
        %v299 = vadd.f32 %v222, %v223
        %300 = vadd.xlane.f32.xlu0 %v299
        %v301 = vpop.xlane.xlu0 %300
        %v302 = vadd.f32 %v224, %v225
        %303 = vadd.xlane.f32.xlu0 %v302
        %v304 = vpop.xlane.xlu0 %303
        %v305 = vadd.f32 %v226, %v227
        %306 = vadd.xlane.f32.xlu0 %v305
        %v307 = vpop.xlane.xlu0 %306
        %v308 = vadd.f32 %v228, %v229
        %309 = vadd.xlane.f32.xlu0 %v308
        %v310 = vpop.xlane.xlu0 %309
        %v311 = vadd.f32 %v230, %v231
        %312 = vadd.xlane.f32.xlu0 %v311
        %v313 = vpop.xlane.xlu0 %312
        %v314 = vadd.f32 %v232, %v233
        %315 = vadd.xlane.f32.xlu0 %v314
        %v316 = vpop.xlane.xlu0 %315
        %v317 = vadd.f32 %v234, %v235
        %318 = vadd.xlane.f32.xlu0 %v317
        %v319 = vpop.xlane.xlu0 %318
        %v320 = vadd.f32 %v236, %v237
        %321 = vadd.xlane.f32.xlu0 %v320
        %v322 = vpop.xlane.xlu0 %321
        %v323 = vadd.f32 %v238, %v239
        %324 = vadd.xlane.f32.xlu0 %v323
        %v325 = vpop.xlane.xlu0 %324
        %v326 = vadd.f32 %v240, %v241
        %327 = vadd.xlane.f32.xlu0 %v326
        %v328 = vpop.xlane.xlu0 %327
        %v329 = vadd.f32 %v242, %v243
        %330 = vadd.xlane.f32.xlu0 %v329
        %v331 = vpop.xlane.xlu0 %330
        %v332 = vadd.f32 %v244, %v245
        %333 = vadd.xlane.f32.xlu0 %v332
        %v334 = vpop.xlane.xlu0 %333
        %v335 = vadd.f32 %v246, %v247
        %336 = vadd.xlane.f32.xlu0 %v335
        %v337 = vpop.xlane.xlu0 %336
        %v338 = vadd.f32 %v248, %v249
        %339 = vadd.xlane.f32.xlu0 %v338
        %v340 = vpop.xlane.xlu0 %339
        %v341 = vadd.f32 %v250, %v251
        %342 = vadd.xlane.f32.xlu0 %v341
        %v343 = vpop.xlane.xlu0 %342
        %v344 = vadd.f32 %v252, %v253
        %345 = vadd.xlane.f32.xlu0 %v344
        %v346 = vpop.xlane.xlu0 %345
        %v347 = vadd.f32 %v254, %v255
        %348 = vadd.xlane.f32.xlu0 %v347
        %v349 = vpop.xlane.xlu0 %348
        %v350 = vadd.f32 %v256, %v257
        %351 = vadd.xlane.f32.xlu0 %v350
        %v352 = vpop.xlane.xlu0 %351
        %v353 = vadd.f32 %v258, %v259
        %354 = vadd.xlane.f32.xlu0 %v353
        %v355 = vpop.xlane.xlu0 %354
        %v356 = vadd.f32 %v260, %v261
        %357 = vadd.xlane.f32.xlu0 %v356
        %v358 = vpop.xlane.xlu0 %357
        %v359 = vadd.f32 %v262, %v263
        %360 = vadd.xlane.f32.xlu0 %v359
        %v361 = vpop.xlane.xlu0 %360
        %v362 = vadd.f32 %v264, %v265
        %363 = vadd.xlane.f32.xlu0 %v362
        %v364 = vpop.xlane.xlu0 %363
        %v365 = vadd.f32 %v266, %v267
        %366 = vadd.xlane.f32.xlu0 %v365
        %v367 = vpop.xlane.xlu0 %366
        %v368 = vadd.f32 %v274, %v286
        %v369 = vadd.f32 %v368, %v298
        %v370 = vadd.f32 %v369, %v310
        %v371 = vadd.f32 %v370, %v322
        %v372 = vadd.f32 %v371, %v334
        %v373 = vadd.f32 %v372, %v346
        %v374 = vadd.f32 %v373, %v358
        %v375 = vadd.f32 %v277, %v289
        %v376 = vadd.f32 %v375, %v301
        %v377 = vadd.f32 %v376, %v313
        %v378 = vadd.f32 %v377, %v325
        %v379 = vadd.f32 %v378, %v337
        %v380 = vadd.f32 %v379, %v349
        %v381 = vadd.f32 %v380, %v361
        %v382 = vadd.f32 %v280, %v292
        %v383 = vadd.f32 %v382, %v304
        %v384 = vadd.f32 %v383, %v316
        %v385 = vadd.f32 %v384, %v328
        %v386 = vadd.f32 %v385, %v340
        %v387 = vadd.f32 %v386, %v352
        %v388 = vadd.f32 %v387, %v364
        %v389 = vadd.f32 %v283, %v295
        %v390 = vadd.f32 %v389, %v307
        %v391 = vadd.f32 %v390, %v319
        %v392 = vadd.f32 %v391, %v331
        %v393 = vadd.f32 %v392, %v343
        %v394 = vadd.f32 %v393, %v355
        %v395 = vadd.f32 %v394, %v367
        %v396 = vmul.f32 %v204, %v204
        %v397 = vmul.f32 %v205, %v205
        %v398 = vmul.f32 %v206, %v206
        %v399 = vmul.f32 %v207, %v207
        %v400 = vmul.f32 %v208, %v208
        %v401 = vmul.f32 %v209, %v209
        %v402 = vmul.f32 %v210, %v210
        %v403 = vmul.f32 %v211, %v211
        %v404 = vmul.f32 %v212, %v212
        %v405 = vmul.f32 %v213, %v213
        %v406 = vmul.f32 %v214, %v214
        %v407 = vmul.f32 %v215, %v215
        %v408 = vmul.f32 %v216, %v216
        %v409 = vmul.f32 %v217, %v217
        %v410 = vmul.f32 %v218, %v218
        %v411 = vmul.f32 %v219, %v219
        %v412 = vmul.f32 %v220, %v220
        %v413 = vmul.f32 %v221, %v221
        %v414 = vmul.f32 %v222, %v222
        %v415 = vmul.f32 %v223, %v223
        %v416 = vmul.f32 %v224, %v224
        %v417 = vmul.f32 %v225, %v225
        %v418 = vmul.f32 %v226, %v226
        %v419 = vmul.f32 %v227, %v227
        %v420 = vmul.f32 %v228, %v228
        %v421 = vmul.f32 %v229, %v229
        %v422 = vmul.f32 %v230, %v230
        %v423 = vmul.f32 %v231, %v231
        %v424 = vmul.f32 %v232, %v232
        %v425 = vmul.f32 %v233, %v233
        %v426 = vmul.f32 %v234, %v234
        %v427 = vmul.f32 %v235, %v235
        %v428 = vmul.f32 %v236, %v236
        %v429 = vmul.f32 %v237, %v237
        %v430 = vmul.f32 %v238, %v238
        %v431 = vmul.f32 %v239, %v239
        %v432 = vmul.f32 %v240, %v240
        %v433 = vmul.f32 %v241, %v241
        %v434 = vmul.f32 %v242, %v242
        %v435 = vmul.f32 %v243, %v243
        %v436 = vmul.f32 %v244, %v244
        %v437 = vmul.f32 %v245, %v245
        %v438 = vmul.f32 %v246, %v246
        %v439 = vmul.f32 %v247, %v247
        %v440 = vmul.f32 %v248, %v248
        %v441 = vmul.f32 %v249, %v249
        %v442 = vmul.f32 %v250, %v250
        %v443 = vmul.f32 %v251, %v251
        %v444 = vmul.f32 %v252, %v252
        %v445 = vmul.f32 %v253, %v253
        %v446 = vmul.f32 %v254, %v254
        %v447 = vmul.f32 %v255, %v255
        %v448 = vmul.f32 %v256, %v256
        %v449 = vmul.f32 %v257, %v257
        %v450 = vmul.f32 %v258, %v258
        %v451 = vmul.f32 %v259, %v259
        %v452 = vmul.f32 %v260, %v260
        %v453 = vmul.f32 %v261, %v261
        %v454 = vmul.f32 %v262, %v262
        %v455 = vmul.f32 %v263, %v263
        %v456 = vmul.f32 %v264, %v264
        %v457 = vmul.f32 %v265, %v265
        %v458 = vmul.f32 %v266, %v266
        %v459 = vmul.f32 %v267, %v267
        %v460 = vadd.f32 %v396, %v397
        %461 = vadd.xlane.f32.xlu0 %v460
        %v462 = vpop.xlane.xlu0 %461
        %v463 = vadd.f32 %v398, %v399
        %464 = vadd.xlane.f32.xlu0 %v463
        %v465 = vpop.xlane.xlu0 %464
        %v466 = vadd.f32 %v400, %v401
        %467 = vadd.xlane.f32.xlu0 %v466
        %v468 = vpop.xlane.xlu0 %467
        %v469 = vadd.f32 %v402, %v403
        %470 = vadd.xlane.f32.xlu0 %v469
        %v471 = vpop.xlane.xlu0 %470
        %v472 = vadd.f32 %v404, %v405
        %473 = vadd.xlane.f32.xlu0 %v472
        %v474 = vpop.xlane.xlu0 %473
        %v475 = vadd.f32 %v406, %v407
        %476 = vadd.xlane.f32.xlu0 %v475
        %v477 = vpop.xlane.xlu0 %476
        %v478 = vadd.f32 %v408, %v409
        %479 = vadd.xlane.f32.xlu0 %v478
        %v480 = vpop.xlane.xlu0 %479
        %v481 = vadd.f32 %v410, %v411
        %482 = vadd.xlane.f32.xlu0 %v481
        %v483 = vpop.xlane.xlu0 %482
        %v484 = vadd.f32 %v412, %v413
        %485 = vadd.xlane.f32.xlu0 %v484
        %v486 = vpop.xlane.xlu0 %485
        %v487 = vadd.f32 %v414, %v415
        %488 = vadd.xlane.f32.xlu0 %v487
        %v489 = vpop.xlane.xlu0 %488
        %v490 = vadd.f32 %v416, %v417
        %491 = vadd.xlane.f32.xlu0 %v490
        %v492 = vpop.xlane.xlu0 %491
        %v493 = vadd.f32 %v418, %v419
        %494 = vadd.xlane.f32.xlu0 %v493
        %v495 = vpop.xlane.xlu0 %494
        %v496 = vadd.f32 %v420, %v421
        %497 = vadd.xlane.f32.xlu0 %v496
        %v498 = vpop.xlane.xlu0 %497
        %v499 = vadd.f32 %v422, %v423
        %500 = vadd.xlane.f32.xlu0 %v499
        %v501 = vpop.xlane.xlu0 %500
        %v502 = vadd.f32 %v424, %v425
        %503 = vadd.xlane.f32.xlu0 %v502
        %v504 = vpop.xlane.xlu0 %503
        %v505 = vadd.f32 %v426, %v427
        %506 = vadd.xlane.f32.xlu0 %v505
        %v507 = vpop.xlane.xlu0 %506
        %v508 = vadd.f32 %v428, %v429
        %509 = vadd.xlane.f32.xlu0 %v508
        %v510 = vpop.xlane.xlu0 %509
        %v511 = vadd.f32 %v430, %v431
        %512 = vadd.xlane.f32.xlu0 %v511
        %v513 = vpop.xlane.xlu0 %512
        %v514 = vadd.f32 %v432, %v433
        %515 = vadd.xlane.f32.xlu0 %v514
        %v516 = vpop.xlane.xlu0 %515
        %v517 = vadd.f32 %v434, %v435
        %518 = vadd.xlane.f32.xlu0 %v517
        %v519 = vpop.xlane.xlu0 %518
        %v520 = vadd.f32 %v436, %v437
        %521 = vadd.xlane.f32.xlu0 %v520
        %v522 = vpop.xlane.xlu0 %521
        %v523 = vadd.f32 %v438, %v439
        %524 = vadd.xlane.f32.xlu0 %v523
        %v525 = vpop.xlane.xlu0 %524
        %v526 = vadd.f32 %v440, %v441
        %527 = vadd.xlane.f32.xlu0 %v526
        %v528 = vpop.xlane.xlu0 %527
        %v529 = vadd.f32 %v442, %v443
        %530 = vadd.xlane.f32.xlu0 %v529
        %v531 = vpop.xlane.xlu0 %530
        %v532 = vadd.f32 %v444, %v445
        %533 = vadd.xlane.f32.xlu0 %v532
        %v534 = vpop.xlane.xlu0 %533
        %v535 = vadd.f32 %v446, %v447
        %536 = vadd.xlane.f32.xlu0 %v535
        %v537 = vpop.xlane.xlu0 %536
        %v538 = vadd.f32 %v448, %v449
        %539 = vadd.xlane.f32.xlu0 %v538
        %v540 = vpop.xlane.xlu0 %539
        %v541 = vadd.f32 %v450, %v451
        %542 = vadd.xlane.f32.xlu0 %v541
        %v543 = vpop.xlane.xlu0 %542
        %v544 = vadd.f32 %v452, %v453
        %545 = vadd.xlane.f32.xlu0 %v544
        %v546 = vpop.xlane.xlu0 %545
        %v547 = vadd.f32 %v454, %v455
        %548 = vadd.xlane.f32.xlu0 %v547
        %v549 = vpop.xlane.xlu0 %548
        %v550 = vadd.f32 %v456, %v457
        %551 = vadd.xlane.f32.xlu0 %v550
        %v552 = vpop.xlane.xlu0 %551
        %v553 = vadd.f32 %v458, %v459
        %554 = vadd.xlane.f32.xlu0 %v553
        %v555 = vpop.xlane.xlu0 %554
        %v556 = vadd.f32 %v462, %v474
        %v557 = vadd.f32 %v556, %v486
        %v558 = vadd.f32 %v557, %v498
        %v559 = vadd.f32 %v558, %v510
        %v560 = vadd.f32 %v559, %v522
        %v561 = vadd.f32 %v560, %v534
        %v562 = vadd.f32 %v561, %v546
        %v563 = vadd.f32 %v465, %v477
        %v564 = vadd.f32 %v563, %v489
        %v565 = vadd.f32 %v564, %v501
        %v566 = vadd.f32 %v565, %v513
        %v567 = vadd.f32 %v566, %v525
        %v568 = vadd.f32 %v567, %v537
        %v569 = vadd.f32 %v568, %v549
        %v570 = vadd.f32 %v468, %v480
        %v571 = vadd.f32 %v570, %v492
        %v572 = vadd.f32 %v571, %v504
        %v573 = vadd.f32 %v572, %v516
        %v574 = vadd.f32 %v573, %v528
        %v575 = vadd.f32 %v574, %v540
        %v576 = vadd.f32 %v575, %v552
        %v577 = vadd.f32 %v471, %v483
        %v578 = vadd.f32 %v577, %v495
        %v579 = vadd.f32 %v578, %v507
        %v580 = vadd.f32 %v579, %v519
        %v581 = vadd.f32 %v580, %v531
        %v582 = vadd.f32 %v581, %v543
        %v583 = vadd.f32 %v582, %v555
        %v589 = vunpack.c.l.s4 839922192
        %v590 = vunpack.c.0.s8 %v589
        %v591 = vlaneseq
        %v592 = vshrl.u32 %v591, 7
        %v593 = vsub.s32 %v590, %v592
        %v594 = vrot.slane %v374, %v593
        %v596 = vunpack.c.l.s4 1985246804
        %v597 = vunpack.c.0.s8 %v596
        %v598 = vlaneseq
        %v599 = vshrl.u32 %v598, 7
        %v600 = vsub.s32 %v597, %v599
        %v601 = vrot.slane %v374, %v600
        %v603 = vunpack.c.l.s4 839922192
        %v604 = vunpack.c.0.s8 %v603
        %v605 = vlaneseq
        %v606 = vshrl.u32 %v605, 7
        %v607 = vsub.s32 %v604, %v606
        %v608 = vrot.slane %v381, %v607
        %v610 = vunpack.c.l.s4 1985246804
        %v611 = vunpack.c.0.s8 %v610
        %v612 = vlaneseq
        %v613 = vshrl.u32 %v612, 7
        %v614 = vsub.s32 %v611, %v613
        %v615 = vrot.slane %v381, %v614
        %v617 = vunpack.c.l.s4 839922192
        %v618 = vunpack.c.0.s8 %v617
        %v619 = vlaneseq
        %v620 = vshrl.u32 %v619, 7
        %v621 = vsub.s32 %v618, %v620
        %v622 = vrot.slane %v388, %v621
        %v624 = vunpack.c.l.s4 1985246804
        %v625 = vunpack.c.0.s8 %v624
        %v626 = vlaneseq
        %v627 = vshrl.u32 %v626, 7
        %v628 = vsub.s32 %v625, %v627
        %v629 = vrot.slane %v388, %v628
        %v631 = vunpack.c.l.s4 839922192
        %v632 = vunpack.c.0.s8 %v631
        %v633 = vlaneseq
        %v634 = vshrl.u32 %v633, 7
        %v635 = vsub.s32 %v632, %v634
        %v636 = vrot.slane %v395, %v635
        %v638 = vunpack.c.l.s4 1985246804
        %v639 = vunpack.c.0.s8 %v638
        %v640 = vlaneseq
        %v641 = vshrl.u32 %v640, 7
        %v642 = vsub.s32 %v639, %v641
        %v643 = vrot.slane %v395, %v642
        %vm652 = vcmask 1043456
        %v653 = vsel %vm652, %v594, 0.0
        %v654 = vrot.slane %v653, 4
        %v655 = vadd.f32 %v653, %v654
        %v656 = vrot.slane %v655, 2
        %v657 = vadd.f32 %v655, %v656
        %v658 = vrot.slane %v657, 1
        %v659 = vadd.f32 %v657, %v658
        %v660 = vsel %vm652, %v601, 0.0
        %v661 = vrot.slane %v660, 4
        %v662 = vadd.f32 %v660, %v661
        %v663 = vrot.slane %v662, 2
        %v664 = vadd.f32 %v662, %v663
        %v665 = vrot.slane %v664, 1
        %v666 = vadd.f32 %v664, %v665
        %v667 = vsel %vm652, %v608, 0.0
        %v668 = vrot.slane %v667, 4
        %v669 = vadd.f32 %v667, %v668
        %v670 = vrot.slane %v669, 2
        %v671 = vadd.f32 %v669, %v670
        %v672 = vrot.slane %v671, 1
        %v673 = vadd.f32 %v671, %v672
        %v674 = vsel %vm652, %v615, 0.0
        %v675 = vrot.slane %v674, 4
        %v676 = vadd.f32 %v674, %v675
        %v677 = vrot.slane %v676, 2
        %v678 = vadd.f32 %v676, %v677
        %v679 = vrot.slane %v678, 1
        %v680 = vadd.f32 %v678, %v679
        %v681 = vsel %vm652, %v622, 0.0
        %v682 = vrot.slane %v681, 4
        %v683 = vadd.f32 %v681, %v682
        %v684 = vrot.slane %v683, 2
        %v685 = vadd.f32 %v683, %v684
        %v686 = vrot.slane %v685, 1
        %v687 = vadd.f32 %v685, %v686
        %v688 = vsel %vm652, %v629, 0.0
        %v689 = vrot.slane %v688, 4
        %v690 = vadd.f32 %v688, %v689
        %v691 = vrot.slane %v690, 2
        %v692 = vadd.f32 %v690, %v691
        %v693 = vrot.slane %v692, 1
        %v694 = vadd.f32 %v692, %v693
        %v695 = vsel %vm652, %v636, 0.0
        %v696 = vrot.slane %v695, 4
        %v697 = vadd.f32 %v695, %v696
        %v698 = vrot.slane %v697, 2
        %v699 = vadd.f32 %v697, %v698
        %v700 = vrot.slane %v699, 1
        %v701 = vadd.f32 %v699, %v700
        %v702 = vsel %vm652, %v643, 0.0
        %v703 = vrot.slane %v702, 4
        %v704 = vadd.f32 %v702, %v703
        %v705 = vrot.slane %v704, 2
        %v706 = vadd.f32 %v704, %v705
        %v707 = vrot.slane %v706, 1
        %v708 = vadd.f32 %v706, %v707
        %v714 = vunpack.c.l.s4 839922192
        %v715 = vunpack.c.0.s8 %v714
        %v716 = vlaneseq
        %v717 = vshrl.u32 %v716, 7
        %v718 = vsub.s32 %v715, %v717
        %v719 = vrot.slane %v562, %v718
        %v721 = vunpack.c.l.s4 1985246804
        %v722 = vunpack.c.0.s8 %v721
        %v723 = vlaneseq
        %v724 = vshrl.u32 %v723, 7
        %v725 = vsub.s32 %v722, %v724
        %v726 = vrot.slane %v562, %v725
        %v728 = vunpack.c.l.s4 839922192
        %v729 = vunpack.c.0.s8 %v728
        %v730 = vlaneseq
        %v731 = vshrl.u32 %v730, 7
        %v732 = vsub.s32 %v729, %v731
        %v733 = vrot.slane %v569, %v732
        %v735 = vunpack.c.l.s4 1985246804
        %v736 = vunpack.c.0.s8 %v735
        %v737 = vlaneseq
        %v738 = vshrl.u32 %v737, 7
        %v739 = vsub.s32 %v736, %v738
        %v740 = vrot.slane %v569, %v739
        %v742 = vunpack.c.l.s4 839922192
        %v743 = vunpack.c.0.s8 %v742
        %v744 = vlaneseq
        %v745 = vshrl.u32 %v744, 7
        %v746 = vsub.s32 %v743, %v745
        %v747 = vrot.slane %v576, %v746
        %v749 = vunpack.c.l.s4 1985246804
        %v750 = vunpack.c.0.s8 %v749
        %v751 = vlaneseq
        %v752 = vshrl.u32 %v751, 7
        %v753 = vsub.s32 %v750, %v752
        %v754 = vrot.slane %v576, %v753
        %v756 = vunpack.c.l.s4 839922192
        %v757 = vunpack.c.0.s8 %v756
        %v758 = vlaneseq
        %v759 = vshrl.u32 %v758, 7
        %v760 = vsub.s32 %v757, %v759
        %v761 = vrot.slane %v583, %v760
        %v763 = vunpack.c.l.s4 1985246804
        %v764 = vunpack.c.0.s8 %v763
        %v765 = vlaneseq
        %v766 = vshrl.u32 %v765, 7
        %v767 = vsub.s32 %v764, %v766
        %v768 = vrot.slane %v583, %v767
        %v777 = vsel %vm652, %v719, 0.0
        %v778 = vrot.slane %v777, 4
        %v779 = vadd.f32 %v777, %v778
        %v780 = vrot.slane %v779, 2
        %v781 = vadd.f32 %v779, %v780
        %v782 = vrot.slane %v781, 1
        %v783 = vadd.f32 %v781, %v782
        %v784 = vsel %vm652, %v726, 0.0
        %v785 = vrot.slane %v784, 4
        %v786 = vadd.f32 %v784, %v785
        %v787 = vrot.slane %v786, 2
        %v788 = vadd.f32 %v786, %v787
        %v789 = vrot.slane %v788, 1
        %v790 = vadd.f32 %v788, %v789
        %v791 = vsel %vm652, %v733, 0.0
        %v792 = vrot.slane %v791, 4
        %v793 = vadd.f32 %v791, %v792
        %v794 = vrot.slane %v793, 2
        %v795 = vadd.f32 %v793, %v794
        %v796 = vrot.slane %v795, 1
        %v797 = vadd.f32 %v795, %v796
        %v798 = vsel %vm652, %v740, 0.0
        %v799 = vrot.slane %v798, 4
        %v800 = vadd.f32 %v798, %v799
        %v801 = vrot.slane %v800, 2
        %v802 = vadd.f32 %v800, %v801
        %v803 = vrot.slane %v802, 1
        %v804 = vadd.f32 %v802, %v803
        %v805 = vsel %vm652, %v747, 0.0
        %v806 = vrot.slane %v805, 4
        %v807 = vadd.f32 %v805, %v806
        %v808 = vrot.slane %v807, 2
        %v809 = vadd.f32 %v807, %v808
        %v810 = vrot.slane %v809, 1
        %v811 = vadd.f32 %v809, %v810
        %v812 = vsel %vm652, %v754, 0.0
        %v813 = vrot.slane %v812, 4
        %v814 = vadd.f32 %v812, %v813
        %v815 = vrot.slane %v814, 2
        %v816 = vadd.f32 %v814, %v815
        %v817 = vrot.slane %v816, 1
        %v818 = vadd.f32 %v816, %v817
        %v819 = vsel %vm652, %v761, 0.0
        %v820 = vrot.slane %v819, 4
        %v821 = vadd.f32 %v819, %v820
        %v822 = vrot.slane %v821, 2
        %v823 = vadd.f32 %v821, %v822
        %v824 = vrot.slane %v823, 1
        %v825 = vadd.f32 %v823, %v824
        %v826 = vsel %vm652, %v768, 0.0
        %v827 = vrot.slane %v826, 4
        %v828 = vadd.f32 %v826, %v827
        %v829 = vrot.slane %v828, 2
        %v830 = vadd.f32 %v828, %v829
        %v831 = vrot.slane %v830, 1
        %v832 = vadd.f32 %v830, %v831
        %v833 = vmul.f32 %v659, 0.00012207031
        %v834 = vmul.f32 %v666, 0.00012207031
        %v835 = vmul.f32 %v673, 0.00012207031
        %v836 = vmul.f32 %v680, 0.00012207031
        %v837 = vmul.f32 %v687, 0.00012207031
        %v838 = vmul.f32 %v694, 0.00012207031
        %v839 = vmul.f32 %v701, 0.00012207031
        %v840 = vmul.f32 %v708, 0.00012207031
        %v841 = vmul.f32 %v783, 0.00012207031
        %v842 = vmul.f32 %v790, 0.00012207031
        %v843 = vmul.f32 %v797, 0.00012207031
        %v844 = vmul.f32 %v804, 0.00012207031
        %v845 = vmul.f32 %v811, 0.00012207031
        %v846 = vmul.f32 %v818, 0.00012207031
        %v847 = vmul.f32 %v825, 0.00012207031
        %v848 = vmul.f32 %v832, 0.00012207031
        %v849 = vmul.f32 %v833, %v833
        %v850 = vmul.f32 %v834, %v834
        %v851 = vmul.f32 %v835, %v835
        %v852 = vmul.f32 %v836, %v836
        %v853 = vmul.f32 %v837, %v837
        %v854 = vmul.f32 %v838, %v838
        %v855 = vmul.f32 %v839, %v839
        %v856 = vmul.f32 %v840, %v840
        %v857 = vsub.f32 %v841, %v849
        %v858 = vsub.f32 %v842, %v850
        %v859 = vsub.f32 %v843, %v851
        %v860 = vsub.f32 %v844, %v852
        %v861 = vsub.f32 %v845, %v853
        %v862 = vsub.f32 %v846, %v854
        %v863 = vsub.f32 %v847, %v855
        %v864 = vsub.f32 %v848, %v856
        %v865 = vadd.f32 %v857, 1e-05
        %v866 = vadd.f32 %v858, 1e-05
        %v867 = vadd.f32 %v859, 1e-05
        %v868 = vadd.f32 %v860, 1e-05
        %v869 = vadd.f32 %v861, 1e-05
        %v870 = vadd.f32 %v862, 1e-05
        %v871 = vadd.f32 %v863, 1e-05
        %v872 = vadd.f32 %v864, 1e-05
        %v873 = vrsqrt.pop %v865
        %v874 = vrsqrt.pop %v866
        %v875 = vrsqrt.pop %v867
        %v876 = vrsqrt.pop %v868
        %v877 = vrsqrt.pop %v869
        %v878 = vrsqrt.pop %v870
        %v879 = vrsqrt.pop %v871
        %v880 = vrsqrt.pop %v872
        %v885 = vcombine.high %v268, %v268
        %v886 = vcombine.high %v269, %v269
        %v887 = vcombine.high %v270, %v270
        %v888 = vcombine.high %v271, %v271
        %v893 = vmul.f32 %v873, %v268
        %v894 = vmul.f32 %v874, %v885
        %v895 = vmul.f32 %v875, %v269
        %v896 = vmul.f32 %v876, %v886
        %v897 = vmul.f32 %v877, %v270
        %v898 = vmul.f32 %v878, %v887
        %v899 = vmul.f32 %v879, %v271
        %v900 = vmul.f32 %v880, %v888
        %v901 = vmul.f32 %v833, %v873
        %v902 = vmul.f32 %v834, %v874
        %v903 = vmul.f32 %v835, %v875
        %v904 = vmul.f32 %v836, %v876
        %v905 = vmul.f32 %v837, %v877
        %v906 = vmul.f32 %v838, %v878
        %v907 = vmul.f32 %v839, %v879
        %v908 = vmul.f32 %v840, %v880
        %v909 = vmul.f32 %v901, %v268
        %v910 = vmul.f32 %v902, %v885
        %v911 = vmul.f32 %v903, %v269
        %v912 = vmul.f32 %v904, %v886
        %v913 = vmul.f32 %v905, %v270
        %v914 = vmul.f32 %v906, %v887
        %v915 = vmul.f32 %v907, %v271
        %v916 = vmul.f32 %v908, %v888
        %925 = vrot.lane.b32.xlu0 %v909, 1
        %v926 = vpop.permute.xlu0 %925
        %927 = vrot.lane.b32.xlu0 %v910, 1
        %v928 = vpop.permute.xlu0 %927
        %929 = vrot.lane.b32.xlu0 %v911, 1
        %v930 = vpop.permute.xlu0 %929
        %931 = vrot.lane.b32.xlu0 %v912, 1
        %v932 = vpop.permute.xlu0 %931
        %933 = vrot.lane.b32.xlu0 %v913, 1
        %v934 = vpop.permute.xlu0 %933
        %935 = vrot.lane.b32.xlu0 %v914, 1
        %v936 = vpop.permute.xlu0 %935
        %937 = vrot.lane.b32.xlu0 %v915, 1
        %v938 = vpop.permute.xlu0 %937
        %939 = vrot.lane.b32.xlu0 %v916, 1
        %v940 = vpop.permute.xlu0 %939
        %v949 = vsub.f32 %v268, %v926
        %v950 = vsub.f32 %v885, %v928
        %v951 = vsub.f32 %v269, %v930
        %v952 = vsub.f32 %v886, %v932
        %v953 = vsub.f32 %v270, %v934
        %v954 = vsub.f32 %v887, %v936
        %v955 = vsub.f32 %v271, %v938
        %v956 = vsub.f32 %v888, %v940
        %958 = vset.pattern.permute.xlu0 0
        %959 = vperm.xlu0 %958, %v893
        %v960 = vpop.permute.xlu0 %959
        %v963 = vunpack.c.l.s4 839922192
        %v964 = vunpack.c.0.s8 %v963
        %v965 = vlaneseq
        %v966 = vshrl.u32 %v965, 7
        %v967 = vsub.s32 %v964, %v966
        %v968 = vrot.slane %v960, %v967
        %970 = vset.pattern.permute.xlu0 0
        %971 = vperm.xlu0 %970, %v894
        %v972 = vpop.permute.xlu0 %971
        %v975 = vunpack.c.l.s4 839922192
        %v976 = vunpack.c.0.s8 %v975
        %v977 = vlaneseq
        %v978 = vshrl.u32 %v977, 7
        %v979 = vsub.s32 %v976, %v978
        %v980 = vrot.slane %v972, %v979
        %982 = vset.pattern.permute.xlu0 0
        %983 = vperm.xlu0 %982, %v895
        %v984 = vpop.permute.xlu0 %983
        %v987 = vunpack.c.l.s4 839922192
        %v988 = vunpack.c.0.s8 %v987
        %v989 = vlaneseq
        %v990 = vshrl.u32 %v989, 7
        %v991 = vsub.s32 %v988, %v990
        %v992 = vrot.slane %v984, %v991
        %994 = vset.pattern.permute.xlu0 0
        %995 = vperm.xlu0 %994, %v896
        %v996 = vpop.permute.xlu0 %995
        %v999 = vunpack.c.l.s4 839922192
        %v1000 = vunpack.c.0.s8 %v999
        %v1001 = vlaneseq
        %v1002 = vshrl.u32 %v1001, 7
        %v1003 = vsub.s32 %v1000, %v1002
        %v1004 = vrot.slane %v996, %v1003
        %1006 = vset.pattern.permute.xlu0 0
        %1007 = vperm.xlu0 %1006, %v897
        %v1008 = vpop.permute.xlu0 %1007
        %v1011 = vunpack.c.l.s4 839922192
        %v1012 = vunpack.c.0.s8 %v1011
        %v1013 = vlaneseq
        %v1014 = vshrl.u32 %v1013, 7
        %v1015 = vsub.s32 %v1012, %v1014
        %v1016 = vrot.slane %v1008, %v1015
        %1018 = vset.pattern.permute.xlu0 0
        %1019 = vperm.xlu0 %1018, %v898
        %v1020 = vpop.permute.xlu0 %1019
        %v1023 = vunpack.c.l.s4 839922192
        %v1024 = vunpack.c.0.s8 %v1023
        %v1025 = vlaneseq
        %v1026 = vshrl.u32 %v1025, 7
        %v1027 = vsub.s32 %v1024, %v1026
        %v1028 = vrot.slane %v1020, %v1027
        %1030 = vset.pattern.permute.xlu0 0
        %1031 = vperm.xlu0 %1030, %v899
        %v1032 = vpop.permute.xlu0 %1031
        %v1035 = vunpack.c.l.s4 839922192
        %v1036 = vunpack.c.0.s8 %v1035
        %v1037 = vlaneseq
        %v1038 = vshrl.u32 %v1037, 7
        %v1039 = vsub.s32 %v1036, %v1038
        %v1040 = vrot.slane %v1032, %v1039
        %1042 = vset.pattern.permute.xlu0 0
        %1043 = vperm.xlu0 %1042, %v900
        %v1044 = vpop.permute.xlu0 %1043
        %v1047 = vunpack.c.l.s4 839922192
        %v1048 = vunpack.c.0.s8 %v1047
        %v1049 = vlaneseq
        %v1050 = vshrl.u32 %v1049, 7
        %v1051 = vsub.s32 %v1048, %v1050
        %v1052 = vrot.slane %v1044, %v1051
        %v1061 = vcombine.low %v968, %v980
        %v1062 = vcombine.high %v968, %v980
        %v1063 = vcombine.low %v992, %v1004
        %v1064 = vcombine.high %v992, %v1004
        %v1065 = vcombine.low %v1016, %v1028
        %v1066 = vcombine.high %v1016, %v1028
        %v1067 = vcombine.low %v1040, %v1052
        %v1068 = vcombine.high %v1040, %v1052
        %v1077 = vmul.f32 %v204, %v1061
        %v1078 = vmul.f32 %v205, %v1062
        %v1079 = vmul.f32 %v206, %v1063
        %v1080 = vmul.f32 %v207, %v1064
        %v1081 = vmul.f32 %v208, %v1065
        %v1082 = vmul.f32 %v209, %v1066
        %v1083 = vmul.f32 %v210, %v1067
        %v1084 = vmul.f32 %v211, %v1068
        %v1085 = vmul.f32 %v212, %v1061
        %v1086 = vmul.f32 %v213, %v1062
        %v1087 = vmul.f32 %v214, %v1063
        %v1088 = vmul.f32 %v215, %v1064
        %v1089 = vmul.f32 %v216, %v1065
        %v1090 = vmul.f32 %v217, %v1066
        %v1091 = vmul.f32 %v218, %v1067
        %v1092 = vmul.f32 %v219, %v1068
        %v1093 = vmul.f32 %v220, %v1061
        %v1094 = vmul.f32 %v221, %v1062
        %v1095 = vmul.f32 %v222, %v1063
        %v1096 = vmul.f32 %v223, %v1064
        %v1097 = vmul.f32 %v224, %v1065
        %v1098 = vmul.f32 %v225, %v1066
        %v1099 = vmul.f32 %v226, %v1067
        %v1100 = vmul.f32 %v227, %v1068
        %v1101 = vmul.f32 %v228, %v1061
        %v1102 = vmul.f32 %v229, %v1062
        %v1103 = vmul.f32 %v230, %v1063
        %v1104 = vmul.f32 %v231, %v1064
        %v1105 = vmul.f32 %v232, %v1065
        %v1106 = vmul.f32 %v233, %v1066
        %v1107 = vmul.f32 %v234, %v1067
        %v1108 = vmul.f32 %v235, %v1068
        %v1109 = vmul.f32 %v236, %v1061
        %v1110 = vmul.f32 %v237, %v1062
        %v1111 = vmul.f32 %v238, %v1063
        %v1112 = vmul.f32 %v239, %v1064
        %v1113 = vmul.f32 %v240, %v1065
        %v1114 = vmul.f32 %v241, %v1066
        %v1115 = vmul.f32 %v242, %v1067
        %v1116 = vmul.f32 %v243, %v1068
        %v1117 = vmul.f32 %v244, %v1061
        %v1118 = vmul.f32 %v245, %v1062
        %v1119 = vmul.f32 %v246, %v1063
        %v1120 = vmul.f32 %v247, %v1064
        %v1121 = vmul.f32 %v248, %v1065
        %v1122 = vmul.f32 %v249, %v1066
        %v1123 = vmul.f32 %v250, %v1067
        %v1124 = vmul.f32 %v251, %v1068
        %v1125 = vmul.f32 %v252, %v1061
        %v1126 = vmul.f32 %v253, %v1062
        %v1127 = vmul.f32 %v254, %v1063
        %v1128 = vmul.f32 %v255, %v1064
        %v1129 = vmul.f32 %v256, %v1065
        %v1130 = vmul.f32 %v257, %v1066
        %v1131 = vmul.f32 %v258, %v1067
        %v1132 = vmul.f32 %v259, %v1068
        %v1133 = vmul.f32 %v260, %v1061
        %v1134 = vmul.f32 %v261, %v1062
        %v1135 = vmul.f32 %v262, %v1063
        %v1136 = vmul.f32 %v263, %v1064
        %v1137 = vmul.f32 %v264, %v1065
        %v1138 = vmul.f32 %v265, %v1066
        %v1139 = vmul.f32 %v266, %v1067
        %v1140 = vmul.f32 %v267, %v1068
        %1142 = vset.pattern.permute.xlu0 1
        %1143 = vperm.xlu0 %1142, %v949
        %v1144 = vpop.permute.xlu0 %1143
        %v1147 = vunpack.c.l.s4 839922192
        %v1148 = vunpack.c.0.s8 %v1147
        %v1149 = vlaneseq
        %v1150 = vshrl.u32 %v1149, 7
        %v1151 = vsub.s32 %v1148, %v1150
        %v1152 = vrot.slane %v1144, %v1151
        %1154 = vset.pattern.permute.xlu0 1
        %1155 = vperm.xlu0 %1154, %v950
        %v1156 = vpop.permute.xlu0 %1155
        %v1159 = vunpack.c.l.s4 839922192
        %v1160 = vunpack.c.0.s8 %v1159
        %v1161 = vlaneseq
        %v1162 = vshrl.u32 %v1161, 7
        %v1163 = vsub.s32 %v1160, %v1162
        %v1164 = vrot.slane %v1156, %v1163
        %1166 = vset.pattern.permute.xlu0 1
        %1167 = vperm.xlu0 %1166, %v951
        %v1168 = vpop.permute.xlu0 %1167
        %v1171 = vunpack.c.l.s4 839922192
        %v1172 = vunpack.c.0.s8 %v1171
        %v1173 = vlaneseq
        %v1174 = vshrl.u32 %v1173, 7
        %v1175 = vsub.s32 %v1172, %v1174
        %v1176 = vrot.slane %v1168, %v1175
        %1178 = vset.pattern.permute.xlu0 1
        %1179 = vperm.xlu0 %1178, %v952
        %v1180 = vpop.permute.xlu0 %1179
        %v1183 = vunpack.c.l.s4 839922192
        %v1184 = vunpack.c.0.s8 %v1183
        %v1185 = vlaneseq
        %v1186 = vshrl.u32 %v1185, 7
        %v1187 = vsub.s32 %v1184, %v1186
        %v1188 = vrot.slane %v1180, %v1187
        %1190 = vset.pattern.permute.xlu0 1
        %1191 = vperm.xlu0 %1190, %v953
        %v1192 = vpop.permute.xlu0 %1191
        %v1195 = vunpack.c.l.s4 839922192
        %v1196 = vunpack.c.0.s8 %v1195
        %v1197 = vlaneseq
        %v1198 = vshrl.u32 %v1197, 7
        %v1199 = vsub.s32 %v1196, %v1198
        %v1200 = vrot.slane %v1192, %v1199
        %1202 = vset.pattern.permute.xlu0 1
        %1203 = vperm.xlu0 %1202, %v954
        %v1204 = vpop.permute.xlu0 %1203
        %v1207 = vunpack.c.l.s4 839922192
        %v1208 = vunpack.c.0.s8 %v1207
        %v1209 = vlaneseq
        %v1210 = vshrl.u32 %v1209, 7
        %v1211 = vsub.s32 %v1208, %v1210
        %v1212 = vrot.slane %v1204, %v1211
        %1214 = vset.pattern.permute.xlu0 1
        %1215 = vperm.xlu0 %1214, %v955
        %v1216 = vpop.permute.xlu0 %1215
        %v1219 = vunpack.c.l.s4 839922192
        %v1220 = vunpack.c.0.s8 %v1219
        %v1221 = vlaneseq
        %v1222 = vshrl.u32 %v1221, 7
        %v1223 = vsub.s32 %v1220, %v1222
        %v1224 = vrot.slane %v1216, %v1223
        %1226 = vset.pattern.permute.xlu0 1
        %1227 = vperm.xlu0 %1226, %v956
        %v1228 = vpop.permute.xlu0 %1227
        %v1231 = vunpack.c.l.s4 839922192
        %v1232 = vunpack.c.0.s8 %v1231
        %v1233 = vlaneseq
        %v1234 = vshrl.u32 %v1233, 7
        %v1235 = vsub.s32 %v1232, %v1234
        %v1236 = vrot.slane %v1228, %v1235
        %v1245 = vcombine.low %v1152, %v1164
        %v1246 = vcombine.high %v1152, %v1164
        %v1247 = vcombine.low %v1176, %v1188
        %v1248 = vcombine.high %v1176, %v1188
        %v1249 = vcombine.low %v1200, %v1212
        %v1250 = vcombine.high %v1200, %v1212
        %v1251 = vcombine.low %v1224, %v1236
        %v1252 = vcombine.high %v1224, %v1236
        %v1261 = vadd.f32 %v1077, %v1245
        %v1262 = vadd.f32 %v1078, %v1246
        %v1263 = vadd.f32 %v1079, %v1247
        %v1264 = vadd.f32 %v1080, %v1248
        %v1265 = vadd.f32 %v1081, %v1249
        %v1266 = vadd.f32 %v1082, %v1250
        %v1267 = vadd.f32 %v1083, %v1251
        %v1268 = vadd.f32 %v1084, %v1252
        %v1269 = vadd.f32 %v1085, %v1245
        %v1270 = vadd.f32 %v1086, %v1246
        %v1271 = vadd.f32 %v1087, %v1247
        %v1272 = vadd.f32 %v1088, %v1248
        %v1273 = vadd.f32 %v1089, %v1249
        %v1274 = vadd.f32 %v1090, %v1250
        %v1275 = vadd.f32 %v1091, %v1251
        %v1276 = vadd.f32 %v1092, %v1252
        %v1277 = vadd.f32 %v1093, %v1245
        %v1278 = vadd.f32 %v1094, %v1246
        %v1279 = vadd.f32 %v1095, %v1247
        %v1280 = vadd.f32 %v1096, %v1248
        %v1281 = vadd.f32 %v1097, %v1249
        %v1282 = vadd.f32 %v1098, %v1250
        %v1283 = vadd.f32 %v1099, %v1251
        %v1284 = vadd.f32 %v1100, %v1252
        %v1285 = vadd.f32 %v1101, %v1245
        %v1286 = vadd.f32 %v1102, %v1246
        %v1287 = vadd.f32 %v1103, %v1247
        %v1288 = vadd.f32 %v1104, %v1248
        %v1289 = vadd.f32 %v1105, %v1249
        %v1290 = vadd.f32 %v1106, %v1250
        %v1291 = vadd.f32 %v1107, %v1251
        %v1292 = vadd.f32 %v1108, %v1252
        %v1293 = vadd.f32 %v1109, %v1245
        %v1294 = vadd.f32 %v1110, %v1246
        %v1295 = vadd.f32 %v1111, %v1247
        %v1296 = vadd.f32 %v1112, %v1248
        %v1297 = vadd.f32 %v1113, %v1249
        %v1298 = vadd.f32 %v1114, %v1250
        %v1299 = vadd.f32 %v1115, %v1251
        %v1300 = vadd.f32 %v1116, %v1252
        %v1301 = vadd.f32 %v1117, %v1245
        %v1302 = vadd.f32 %v1118, %v1246
        %v1303 = vadd.f32 %v1119, %v1247
        %v1304 = vadd.f32 %v1120, %v1248
        %v1305 = vadd.f32 %v1121, %v1249
        %v1306 = vadd.f32 %v1122, %v1250
        %v1307 = vadd.f32 %v1123, %v1251
        %v1308 = vadd.f32 %v1124, %v1252
        %v1309 = vadd.f32 %v1125, %v1245
        %v1310 = vadd.f32 %v1126, %v1246
        %v1311 = vadd.f32 %v1127, %v1247
        %v1312 = vadd.f32 %v1128, %v1248
        %v1313 = vadd.f32 %v1129, %v1249
        %v1314 = vadd.f32 %v1130, %v1250
        %v1315 = vadd.f32 %v1131, %v1251
        %v1316 = vadd.f32 %v1132, %v1252
        %v1317 = vadd.f32 %v1133, %v1245
        %v1318 = vadd.f32 %v1134, %v1246
        %v1319 = vadd.f32 %v1135, %v1247
        %v1320 = vadd.f32 %v1136, %v1248
        %v1321 = vadd.f32 %v1137, %v1249
        %v1322 = vadd.f32 %v1138, %v1250
        %v1323 = vadd.f32 %v1139, %v1251
        %v1324 = vadd.f32 %v1140, %v1252
        %v1325 = vxor.u32 %v1261, 2147483648
        %v1326 = vxor.u32 %v1262, 2147483648
        %v1327 = vxor.u32 %v1263, 2147483648
        %v1328 = vxor.u32 %v1264, 2147483648
        %v1329 = vxor.u32 %v1265, 2147483648
        %v1330 = vxor.u32 %v1266, 2147483648
        %v1331 = vxor.u32 %v1267, 2147483648
        %v1332 = vxor.u32 %v1268, 2147483648
        %v1333 = vxor.u32 %v1269, 2147483648
        %v1334 = vxor.u32 %v1270, 2147483648
        %v1335 = vxor.u32 %v1271, 2147483648
        %v1336 = vxor.u32 %v1272, 2147483648
        %v1337 = vxor.u32 %v1273, 2147483648
        %v1338 = vxor.u32 %v1274, 2147483648
        %v1339 = vxor.u32 %v1275, 2147483648
        %v1340 = vxor.u32 %v1276, 2147483648
        %v1341 = vxor.u32 %v1277, 2147483648
        %v1342 = vxor.u32 %v1278, 2147483648
        %v1343 = vxor.u32 %v1279, 2147483648
        %v1344 = vxor.u32 %v1280, 2147483648
        %v1345 = vxor.u32 %v1281, 2147483648
        %v1346 = vxor.u32 %v1282, 2147483648
        %v1347 = vxor.u32 %v1283, 2147483648
        %v1348 = vxor.u32 %v1284, 2147483648
        %v1349 = vxor.u32 %v1285, 2147483648
        %v1350 = vxor.u32 %v1286, 2147483648
        %v1351 = vxor.u32 %v1287, 2147483648
        %v1352 = vxor.u32 %v1288, 2147483648
        %v1353 = vxor.u32 %v1289, 2147483648
        %v1354 = vxor.u32 %v1290, 2147483648
        %v1355 = vxor.u32 %v1291, 2147483648
        %v1356 = vxor.u32 %v1292, 2147483648
        %v1357 = vxor.u32 %v1293, 2147483648
        %v1358 = vxor.u32 %v1294, 2147483648
        %v1359 = vxor.u32 %v1295, 2147483648
        %v1360 = vxor.u32 %v1296, 2147483648
        %v1361 = vxor.u32 %v1297, 2147483648
        %v1362 = vxor.u32 %v1298, 2147483648
        %v1363 = vxor.u32 %v1299, 2147483648
        %v1364 = vxor.u32 %v1300, 2147483648
        %v1365 = vxor.u32 %v1301, 2147483648
        %v1366 = vxor.u32 %v1302, 2147483648
        %v1367 = vxor.u32 %v1303, 2147483648
        %v1368 = vxor.u32 %v1304, 2147483648
        %v1369 = vxor.u32 %v1305, 2147483648
        %v1370 = vxor.u32 %v1306, 2147483648
        %v1371 = vxor.u32 %v1307, 2147483648
        %v1372 = vxor.u32 %v1308, 2147483648
        %v1373 = vxor.u32 %v1309, 2147483648
        %v1374 = vxor.u32 %v1310, 2147483648
        %v1375 = vxor.u32 %v1311, 2147483648
        %v1376 = vxor.u32 %v1312, 2147483648
        %v1377 = vxor.u32 %v1313, 2147483648
        %v1378 = vxor.u32 %v1314, 2147483648
        %v1379 = vxor.u32 %v1315, 2147483648
        %v1380 = vxor.u32 %v1316, 2147483648
        %v1381 = vxor.u32 %v1317, 2147483648
        %v1382 = vxor.u32 %v1318, 2147483648
        %v1383 = vxor.u32 %v1319, 2147483648
        %v1384 = vxor.u32 %v1320, 2147483648
        %v1385 = vxor.u32 %v1321, 2147483648
        %v1386 = vxor.u32 %v1322, 2147483648
        %v1387 = vxor.u32 %v1323, 2147483648
        %v1388 = vxor.u32 %v1324, 2147483648
        %v1389 = vmul.f32 %v1325, 1.442695
        %v1390 = vpow.pop %v1389
        %v1391 = vmul.f32 %v1326, 1.442695
        %v1392 = vpow.pop %v1391
        %v1393 = vmul.f32 %v1327, 1.442695
        %v1394 = vpow.pop %v1393
        %v1395 = vmul.f32 %v1328, 1.442695
        %v1396 = vpow.pop %v1395
        %v1397 = vmul.f32 %v1329, 1.442695
        %v1398 = vpow.pop %v1397
        %v1399 = vmul.f32 %v1330, 1.442695
        %v1400 = vpow.pop %v1399
        %v1401 = vmul.f32 %v1331, 1.442695
        %v1402 = vpow.pop %v1401
        %v1403 = vmul.f32 %v1332, 1.442695
        %v1404 = vpow.pop %v1403
        %v1405 = vmul.f32 %v1333, 1.442695
        %v1406 = vpow.pop %v1405
        %v1407 = vmul.f32 %v1334, 1.442695
        %v1408 = vpow.pop %v1407
        %v1409 = vmul.f32 %v1335, 1.442695
        %v1410 = vpow.pop %v1409
        %v1411 = vmul.f32 %v1336, 1.442695
        %v1412 = vpow.pop %v1411
        %v1413 = vmul.f32 %v1337, 1.442695
        %v1414 = vpow.pop %v1413
        %v1415 = vmul.f32 %v1338, 1.442695
        %v1416 = vpow.pop %v1415
        %v1417 = vmul.f32 %v1339, 1.442695
        %v1418 = vpow.pop %v1417
        %v1419 = vmul.f32 %v1340, 1.442695
        %v1420 = vpow.pop %v1419
        %v1421 = vmul.f32 %v1341, 1.442695
        %v1422 = vpow.pop %v1421
        %v1423 = vmul.f32 %v1342, 1.442695
        %v1424 = vpow.pop %v1423
        %v1425 = vmul.f32 %v1343, 1.442695
        %v1426 = vpow.pop %v1425
        %v1427 = vmul.f32 %v1344, 1.442695
        %v1428 = vpow.pop %v1427
        %v1429 = vmul.f32 %v1345, 1.442695
        %v1430 = vpow.pop %v1429
        %v1431 = vmul.f32 %v1346, 1.442695
        %v1432 = vpow.pop %v1431
        %v1433 = vmul.f32 %v1347, 1.442695
        %v1434 = vpow.pop %v1433
        %v1435 = vmul.f32 %v1348, 1.442695
        %v1436 = vpow.pop %v1435
        %v1437 = vmul.f32 %v1349, 1.442695
        %v1438 = vpow.pop %v1437
        %v1439 = vmul.f32 %v1350, 1.442695
        %v1440 = vpow.pop %v1439
        %v1441 = vmul.f32 %v1351, 1.442695
        %v1442 = vpow.pop %v1441
        %v1443 = vmul.f32 %v1352, 1.442695
        %v1444 = vpow.pop %v1443
        %v1445 = vmul.f32 %v1353, 1.442695
        %v1446 = vpow.pop %v1445
        %v1447 = vmul.f32 %v1354, 1.442695
        %v1448 = vpow.pop %v1447
        %v1449 = vmul.f32 %v1355, 1.442695
        %v1450 = vpow.pop %v1449
        %v1451 = vmul.f32 %v1356, 1.442695
        %v1452 = vpow.pop %v1451
        %v1453 = vmul.f32 %v1357, 1.442695
        %v1454 = vpow.pop %v1453
        %v1455 = vmul.f32 %v1358, 1.442695
        %v1456 = vpow.pop %v1455
        %v1457 = vmul.f32 %v1359, 1.442695
        %v1458 = vpow.pop %v1457
        %v1459 = vmul.f32 %v1360, 1.442695
        %v1460 = vpow.pop %v1459
        %v1461 = vmul.f32 %v1361, 1.442695
        %v1462 = vpow.pop %v1461
        %v1463 = vmul.f32 %v1362, 1.442695
        %v1464 = vpow.pop %v1463
        %v1465 = vmul.f32 %v1363, 1.442695
        %v1466 = vpow.pop %v1465
        %v1467 = vmul.f32 %v1364, 1.442695
        %v1468 = vpow.pop %v1467
        %v1469 = vmul.f32 %v1365, 1.442695
        %v1470 = vpow.pop %v1469
        %v1471 = vmul.f32 %v1366, 1.442695
        %v1472 = vpow.pop %v1471
        %v1473 = vmul.f32 %v1367, 1.442695
        %v1474 = vpow.pop %v1473
        %v1475 = vmul.f32 %v1368, 1.442695
        %v1476 = vpow.pop %v1475
        %v1477 = vmul.f32 %v1369, 1.442695
        %v1478 = vpow.pop %v1477
        %v1479 = vmul.f32 %v1370, 1.442695
        %v1480 = vpow.pop %v1479
        %v1481 = vmul.f32 %v1371, 1.442695
        %v1482 = vpow.pop %v1481
        %v1483 = vmul.f32 %v1372, 1.442695
        %v1484 = vpow.pop %v1483
        %v1485 = vmul.f32 %v1373, 1.442695
        %v1486 = vpow.pop %v1485
        %v1487 = vmul.f32 %v1374, 1.442695
        %v1488 = vpow.pop %v1487
        %v1489 = vmul.f32 %v1375, 1.442695
        %v1490 = vpow.pop %v1489
        %v1491 = vmul.f32 %v1376, 1.442695
        %v1492 = vpow.pop %v1491
        %v1493 = vmul.f32 %v1377, 1.442695
        %v1494 = vpow.pop %v1493
        %v1495 = vmul.f32 %v1378, 1.442695
        %v1496 = vpow.pop %v1495
        %v1497 = vmul.f32 %v1379, 1.442695
        %v1498 = vpow.pop %v1497
        %v1499 = vmul.f32 %v1380, 1.442695
        %v1500 = vpow.pop %v1499
        %v1501 = vmul.f32 %v1381, 1.442695
        %v1502 = vpow.pop %v1501
        %v1503 = vmul.f32 %v1382, 1.442695
        %v1504 = vpow.pop %v1503
        %v1505 = vmul.f32 %v1383, 1.442695
        %v1506 = vpow.pop %v1505
        %v1507 = vmul.f32 %v1384, 1.442695
        %v1508 = vpow.pop %v1507
        %v1509 = vmul.f32 %v1385, 1.442695
        %v1510 = vpow.pop %v1509
        %v1511 = vmul.f32 %v1386, 1.442695
        %v1512 = vpow.pop %v1511
        %v1513 = vmul.f32 %v1387, 1.442695
        %v1514 = vpow.pop %v1513
        %v1515 = vmul.f32 %v1388, 1.442695
        %v1516 = vpow.pop %v1515
        %v1517 = vadd.f32 %v1390, 1.0
        %v1518 = vadd.f32 %v1392, 1.0
        %v1519 = vadd.f32 %v1394, 1.0
        %v1520 = vadd.f32 %v1396, 1.0
        %v1521 = vadd.f32 %v1398, 1.0
        %v1522 = vadd.f32 %v1400, 1.0
        %v1523 = vadd.f32 %v1402, 1.0
        %v1524 = vadd.f32 %v1404, 1.0
        %v1525 = vadd.f32 %v1406, 1.0
        %v1526 = vadd.f32 %v1408, 1.0
        %v1527 = vadd.f32 %v1410, 1.0
        %v1528 = vadd.f32 %v1412, 1.0
        %v1529 = vadd.f32 %v1414, 1.0
        %v1530 = vadd.f32 %v1416, 1.0
        %v1531 = vadd.f32 %v1418, 1.0
        %v1532 = vadd.f32 %v1420, 1.0
        %v1533 = vadd.f32 %v1422, 1.0
        %v1534 = vadd.f32 %v1424, 1.0
        %v1535 = vadd.f32 %v1426, 1.0
        %v1536 = vadd.f32 %v1428, 1.0
        %v1537 = vadd.f32 %v1430, 1.0
        %v1538 = vadd.f32 %v1432, 1.0
        %v1539 = vadd.f32 %v1434, 1.0
        %v1540 = vadd.f32 %v1436, 1.0
        %v1541 = vadd.f32 %v1438, 1.0
        %v1542 = vadd.f32 %v1440, 1.0
        %v1543 = vadd.f32 %v1442, 1.0
        %v1544 = vadd.f32 %v1444, 1.0
        %v1545 = vadd.f32 %v1446, 1.0
        %v1546 = vadd.f32 %v1448, 1.0
        %v1547 = vadd.f32 %v1450, 1.0
        %v1548 = vadd.f32 %v1452, 1.0
        %v1549 = vadd.f32 %v1454, 1.0
        %v1550 = vadd.f32 %v1456, 1.0
        %v1551 = vadd.f32 %v1458, 1.0
        %v1552 = vadd.f32 %v1460, 1.0
        %v1553 = vadd.f32 %v1462, 1.0
        %v1554 = vadd.f32 %v1464, 1.0
        %v1555 = vadd.f32 %v1466, 1.0
        %v1556 = vadd.f32 %v1468, 1.0
        %v1557 = vadd.f32 %v1470, 1.0
        %v1558 = vadd.f32 %v1472, 1.0
        %v1559 = vadd.f32 %v1474, 1.0
        %v1560 = vadd.f32 %v1476, 1.0
        %v1561 = vadd.f32 %v1478, 1.0
        %v1562 = vadd.f32 %v1480, 1.0
        %v1563 = vadd.f32 %v1482, 1.0
        %v1564 = vadd.f32 %v1484, 1.0
        %v1565 = vadd.f32 %v1486, 1.0
        %v1566 = vadd.f32 %v1488, 1.0
        %v1567 = vadd.f32 %v1490, 1.0
        %v1568 = vadd.f32 %v1492, 1.0
        %v1569 = vadd.f32 %v1494, 1.0
        %v1570 = vadd.f32 %v1496, 1.0
        %v1571 = vadd.f32 %v1498, 1.0
        %v1572 = vadd.f32 %v1500, 1.0
        %v1573 = vadd.f32 %v1502, 1.0
        %v1574 = vadd.f32 %v1504, 1.0
        %v1575 = vadd.f32 %v1506, 1.0
        %v1576 = vadd.f32 %v1508, 1.0
        %v1577 = vadd.f32 %v1510, 1.0
        %v1578 = vadd.f32 %v1512, 1.0
        %v1579 = vadd.f32 %v1514, 1.0
        %v1580 = vadd.f32 %v1516, 1.0
        %v1581 = vrcp.pop %v1517
        %v1582 = vmul.f32 1.0, %v1581
        %v1583 = vrcp.pop %v1518
        %v1584 = vmul.f32 1.0, %v1583
        %v1585 = vrcp.pop %v1519
        %v1586 = vmul.f32 1.0, %v1585
        %v1587 = vrcp.pop %v1520
        %v1588 = vmul.f32 1.0, %v1587
        %v1589 = vrcp.pop %v1521
        %v1590 = vmul.f32 1.0, %v1589
        %v1591 = vrcp.pop %v1522
        %v1592 = vmul.f32 1.0, %v1591
        %v1593 = vrcp.pop %v1523
        %v1594 = vmul.f32 1.0, %v1593
        %v1595 = vrcp.pop %v1524
        %v1596 = vmul.f32 1.0, %v1595
        %v1597 = vrcp.pop %v1525
        %v1598 = vmul.f32 1.0, %v1597
        %v1599 = vrcp.pop %v1526
        %v1600 = vmul.f32 1.0, %v1599
        %v1601 = vrcp.pop %v1527
        %v1602 = vmul.f32 1.0, %v1601
        %v1603 = vrcp.pop %v1528
        %v1604 = vmul.f32 1.0, %v1603
        %v1605 = vrcp.pop %v1529
        %v1606 = vmul.f32 1.0, %v1605
        %v1607 = vrcp.pop %v1530
        %v1608 = vmul.f32 1.0, %v1607
        %v1609 = vrcp.pop %v1531
        %v1610 = vmul.f32 1.0, %v1609
        %v1611 = vrcp.pop %v1532
        %v1612 = vmul.f32 1.0, %v1611
        %v1613 = vrcp.pop %v1533
        %v1614 = vmul.f32 1.0, %v1613
        %v1615 = vrcp.pop %v1534
        %v1616 = vmul.f32 1.0, %v1615
        %v1617 = vrcp.pop %v1535
        %v1618 = vmul.f32 1.0, %v1617
        %v1619 = vrcp.pop %v1536
        %v1620 = vmul.f32 1.0, %v1619
        %v1621 = vrcp.pop %v1537
        %v1622 = vmul.f32 1.0, %v1621
        %v1623 = vrcp.pop %v1538
        %v1624 = vmul.f32 1.0, %v1623
        %v1625 = vrcp.pop %v1539
        %v1626 = vmul.f32 1.0, %v1625
        %v1627 = vrcp.pop %v1540
        %v1628 = vmul.f32 1.0, %v1627
        %v1629 = vrcp.pop %v1541
        %v1630 = vmul.f32 1.0, %v1629
        %v1631 = vrcp.pop %v1542
        %v1632 = vmul.f32 1.0, %v1631
        %v1633 = vrcp.pop %v1543
        %v1634 = vmul.f32 1.0, %v1633
        %v1635 = vrcp.pop %v1544
        %v1636 = vmul.f32 1.0, %v1635
        %v1637 = vrcp.pop %v1545
        %v1638 = vmul.f32 1.0, %v1637
        %v1639 = vrcp.pop %v1546
        %v1640 = vmul.f32 1.0, %v1639
        %v1641 = vrcp.pop %v1547
        %v1642 = vmul.f32 1.0, %v1641
        %v1643 = vrcp.pop %v1548
        %v1644 = vmul.f32 1.0, %v1643
        %v1645 = vrcp.pop %v1549
        %v1646 = vmul.f32 1.0, %v1645
        %v1647 = vrcp.pop %v1550
        %v1648 = vmul.f32 1.0, %v1647
        %v1649 = vrcp.pop %v1551
        %v1650 = vmul.f32 1.0, %v1649
        %v1651 = vrcp.pop %v1552
        %v1652 = vmul.f32 1.0, %v1651
        %v1653 = vrcp.pop %v1553
        %v1654 = vmul.f32 1.0, %v1653
        %v1655 = vrcp.pop %v1554
        %v1656 = vmul.f32 1.0, %v1655
        %v1657 = vrcp.pop %v1555
        %v1658 = vmul.f32 1.0, %v1657
        %v1659 = vrcp.pop %v1556
        %v1660 = vmul.f32 1.0, %v1659
        %v1661 = vrcp.pop %v1557
        %v1662 = vmul.f32 1.0, %v1661
        %v1663 = vrcp.pop %v1558
        %v1664 = vmul.f32 1.0, %v1663
        %v1665 = vrcp.pop %v1559
        %v1666 = vmul.f32 1.0, %v1665
        %v1667 = vrcp.pop %v1560
        %v1668 = vmul.f32 1.0, %v1667
        %v1669 = vrcp.pop %v1561
        %v1670 = vmul.f32 1.0, %v1669
        %v1671 = vrcp.pop %v1562
        %v1672 = vmul.f32 1.0, %v1671
        %v1673 = vrcp.pop %v1563
        %v1674 = vmul.f32 1.0, %v1673
        %v1675 = vrcp.pop %v1564
        %v1676 = vmul.f32 1.0, %v1675
        %v1677 = vrcp.pop %v1565
        %v1678 = vmul.f32 1.0, %v1677
        %v1679 = vrcp.pop %v1566
        %v1680 = vmul.f32 1.0, %v1679
        %v1681 = vrcp.pop %v1567
        %v1682 = vmul.f32 1.0, %v1681
        %v1683 = vrcp.pop %v1568
        %v1684 = vmul.f32 1.0, %v1683
        %v1685 = vrcp.pop %v1569
        %v1686 = vmul.f32 1.0, %v1685
        %v1687 = vrcp.pop %v1570
        %v1688 = vmul.f32 1.0, %v1687
        %v1689 = vrcp.pop %v1571
        %v1690 = vmul.f32 1.0, %v1689
        %v1691 = vrcp.pop %v1572
        %v1692 = vmul.f32 1.0, %v1691
        %v1693 = vrcp.pop %v1573
        %v1694 = vmul.f32 1.0, %v1693
        %v1695 = vrcp.pop %v1574
        %v1696 = vmul.f32 1.0, %v1695
        %v1697 = vrcp.pop %v1575
        %v1698 = vmul.f32 1.0, %v1697
        %v1699 = vrcp.pop %v1576
        %v1700 = vmul.f32 1.0, %v1699
        %v1701 = vrcp.pop %v1577
        %v1702 = vmul.f32 1.0, %v1701
        %v1703 = vrcp.pop %v1578
        %v1704 = vmul.f32 1.0, %v1703
        %v1705 = vrcp.pop %v1579
        %v1706 = vmul.f32 1.0, %v1705
        %v1707 = vrcp.pop %v1580
        %v1708 = vmul.f32 1.0, %v1707
        %v1709 = vmul.f32 %v1261, %v1582
        %v1710 = vmul.f32 %v1262, %v1584
        %v1711 = vmul.f32 %v1263, %v1586
        %v1712 = vmul.f32 %v1264, %v1588
        %v1713 = vmul.f32 %v1265, %v1590
        %v1714 = vmul.f32 %v1266, %v1592
        %v1715 = vmul.f32 %v1267, %v1594
        %v1716 = vmul.f32 %v1268, %v1596
        %v1717 = vmul.f32 %v1269, %v1598
        %v1718 = vmul.f32 %v1270, %v1600
        %v1719 = vmul.f32 %v1271, %v1602
        %v1720 = vmul.f32 %v1272, %v1604
        %v1721 = vmul.f32 %v1273, %v1606
        %v1722 = vmul.f32 %v1274, %v1608
        %v1723 = vmul.f32 %v1275, %v1610
        %v1724 = vmul.f32 %v1276, %v1612
        %v1725 = vmul.f32 %v1277, %v1614
        %v1726 = vmul.f32 %v1278, %v1616
        %v1727 = vmul.f32 %v1279, %v1618
        %v1728 = vmul.f32 %v1280, %v1620
        %v1729 = vmul.f32 %v1281, %v1622
        %v1730 = vmul.f32 %v1282, %v1624
        %v1731 = vmul.f32 %v1283, %v1626
        %v1732 = vmul.f32 %v1284, %v1628
        %v1733 = vmul.f32 %v1285, %v1630
        %v1734 = vmul.f32 %v1286, %v1632
        %v1735 = vmul.f32 %v1287, %v1634
        %v1736 = vmul.f32 %v1288, %v1636
        %v1737 = vmul.f32 %v1289, %v1638
        %v1738 = vmul.f32 %v1290, %v1640
        %v1739 = vmul.f32 %v1291, %v1642
        %v1740 = vmul.f32 %v1292, %v1644
        %v1741 = vmul.f32 %v1293, %v1646
        %v1742 = vmul.f32 %v1294, %v1648
        %v1743 = vmul.f32 %v1295, %v1650
        %v1744 = vmul.f32 %v1296, %v1652
        %v1745 = vmul.f32 %v1297, %v1654
        %v1746 = vmul.f32 %v1298, %v1656
        %v1747 = vmul.f32 %v1299, %v1658
        %v1748 = vmul.f32 %v1300, %v1660
        %v1749 = vmul.f32 %v1301, %v1662
        %v1750 = vmul.f32 %v1302, %v1664
        %v1751 = vmul.f32 %v1303, %v1666
        %v1752 = vmul.f32 %v1304, %v1668
        %v1753 = vmul.f32 %v1305, %v1670
        %v1754 = vmul.f32 %v1306, %v1672
        %v1755 = vmul.f32 %v1307, %v1674
        %v1756 = vmul.f32 %v1308, %v1676
        %v1757 = vmul.f32 %v1309, %v1678
        %v1758 = vmul.f32 %v1310, %v1680
        %v1759 = vmul.f32 %v1311, %v1682
        %v1760 = vmul.f32 %v1312, %v1684
        %v1761 = vmul.f32 %v1313, %v1686
        %v1762 = vmul.f32 %v1314, %v1688
        %v1763 = vmul.f32 %v1315, %v1690
        %v1764 = vmul.f32 %v1316, %v1692
        %v1765 = vmul.f32 %v1317, %v1694
        %v1766 = vmul.f32 %v1318, %v1696
        %v1767 = vmul.f32 %v1319, %v1698
        %v1768 = vmul.f32 %v1320, %v1700
        %v1769 = vmul.f32 %v1321, %v1702
        %v1770 = vmul.f32 %v1322, %v1704
        %v1771 = vmul.f32 %v1323, %v1706
        %v1772 = vmul.f32 %v1324, %v1708
        %v1773 = vld [vmem:[#allocation5] sm:$0xff]
        %v1774 = vld [vmem:[#allocation5 + $0x8] sm:$0xff]
        %v1775 = vld [vmem:[#allocation5 + $0x10] sm:$0xff]
        %v1776 = vld [vmem:[#allocation5 + $0x18] sm:$0xff]
        %v1777 = vld [vmem:[%s2] sm:$0xff]
        %v1778 = vld [vmem:[%s2 + $0x8] sm:$0xff]
        %v1779 = vld [vmem:[%s2 + $0x10] sm:$0xff]
        %v1780 = vld [vmem:[%s2 + $0x18] sm:$0xff]
        %1785 = vrot.lane.b32.xlu0 %v1773, 96
        %v1786 = vpop.permute.xlu0 %1785
        %1787 = vrot.lane.b32.xlu0 %v1774, 96
        %v1788 = vpop.permute.xlu0 %1787
        %1789 = vrot.lane.b32.xlu0 %v1775, 96
        %v1790 = vpop.permute.xlu0 %1789
        %1791 = vrot.lane.b32.xlu0 %v1776, 96
        %v1792 = vpop.permute.xlu0 %1791
        %vm1793 = vcmask 523264
        %v1794 = vsel %vm1793, %v1786, 0
        %v1796 = vsel %vm1793, %v1788, 0
        %v1798 = vsel %vm1793, %v1790, 0
        %v1800 = vsel %vm1793, %v1792, 0
        %1802 = vmatprep.subr.mxu0 0.0
        %1803 = vmatpush1.msra.mxu0 0.0
        %1804 = vmatprep.subr.mxu0 0.0
        %1805 = vmatpush1.msra.mxu0 0.0
        %1806 = vmatprep.subr.mxu0 0.0
        %1807 = vmatpush1.msra.mxu0 0.0
        %1808 = vmatprep.subr.mxu0 0.0
        %1809 = vmatpush1.msra.mxu0 0.0
        %1810 = vmatprep.subr.mxu0 0.0
        %1811 = vmatpush1.msra.mxu0 0.0
        %1812 = vmatprep.subr.mxu0 0.0
        %1813 = vmatpush1.msra.mxu0 0.0
        %1814 = vmatprep.subr.mxu0 0.0
        %1815 = vmatpush1.msra.mxu0 0.0
        %1816 = vmatprep.subr.mxu0 0.0
        %1817 = vmatpush1.msra.mxu0 0.0
        %1818 = vmatprep.subr.mxu0 %v1724
        %1819 = vmatpush1.msra.mxu0 %v1723
        %1820 = vmatprep.subr.mxu0 %v1722
        %1821 = vmatpush1.msra.mxu0 %v1721
        %1822 = vmatprep.subr.mxu0 %v1720
        %1823 = vmatpush1.msra.mxu0 %v1719
        %1824 = vmatprep.subr.mxu0 %v1718
        %1825 = vmatpush1.msra.mxu0 %v1717
        %1826 = vmatprep.subr.mxu0 %v1716
        %1827 = vmatpush1.msra.mxu0 %v1715
        %1828 = vmatprep.subr.mxu0 %v1714
        %1829 = vmatpush1.msra.mxu0 %v1713
        %1830 = vmatprep.subr.mxu0 %v1712
        %1831 = vmatpush1.msra.mxu0 %v1711
        %1832 = vmatprep.subr.mxu0 %v1710
        %1833 = vmatpush1.msra.mxu0 %v1709
        %1834 = vmatprep.subr.mxu0 0.0
        %1835 = vmatpush2.msra.mxu0 0.0
        %1836 = vmatprep.subr.mxu0 0.0
        %1837 = vmatpush2.msra.mxu0 0.0
        %1838 = vmatprep.subr.mxu0 0.0
        %1839 = vmatpush2.msra.mxu0 0.0
        %1840 = vmatprep.subr.mxu0 0.0
        %1841 = vmatpush2.msra.mxu0 0.0
        %1842 = vmatprep.subr.mxu0 0.0
        %1843 = vmatpush2.msra.mxu0 0.0
        %1844 = vmatprep.subr.mxu0 0.0
        %1845 = vmatpush2.msra.mxu0 0.0
        %1846 = vmatprep.subr.mxu0 0.0
        %1847 = vmatpush2.msra.mxu0 0.0
        %1848 = vmatprep.subr.mxu0 0.0
        %1849 = vmatpush2.msra.mxu0 0.0
        %1850 = vmatprep.subr.mxu0 0.0
        %1851 = vmatpush2.msra.mxu0 0.0
        %1852 = vmatprep.subr.mxu0 0.0
        %1853 = vmatpush2.msra.mxu0 0.0
        %1854 = vmatprep.subr.mxu0 0.0
        %1855 = vmatpush2.msra.mxu0 0.0
        %1856 = vmatprep.subr.mxu0 0.0
        %1857 = vmatpush2.msra.mxu0 0.0
        %1858 = vmatprep.subr.mxu0 0.0
        %1859 = vmatpush2.msra.mxu0 0.0
        %1860 = vmatprep.subr.mxu0 0.0
        %1861 = vmatpush2.msra.mxu0 0.0
        %1862 = vmatprep.subr.mxu0 0.0
        %1863 = vmatpush2.msra.mxu0 0.0
        %1864 = vmatprep.subr.mxu0 0.0
        %1865 = vmatpush2.msra.mxu0 0.0
        %1866 = vmatprep.mubr.f32.mxu0 0.0
        %1867 = vmatmul.mubr.f32.gmra.mxu0 %v1794
        %v1868 = vpop.f32.mrf.mxu0
        %v1869 = vadd.f32 0.0, %v1868
        %v1870 = vpop.f32.mrf.mxu0
        %v1871 = vadd.f32 0.0, %v1870
        %1872 = vmatprep.mubr.f32.mxu0 0.0
        %1873 = vmatmul.mubr.f32.gmra.mxu0 %v1796
        %v1874 = vpop.f32.mrf.mxu0
        %v1875 = vadd.f32 0.0, %v1874
        %v1876 = vpop.f32.mrf.mxu0
        %v1877 = vadd.f32 0.0, %v1876
        %1878 = vmatprep.mubr.f32.mxu0 0.0
        %1879 = vmatmul.mubr.f32.gmra.mxu0 %v1798
        %v1880 = vpop.f32.mrf.mxu0
        %v1881 = vadd.f32 0.0, %v1880
        %v1882 = vpop.f32.mrf.mxu0
        %v1883 = vadd.f32 0.0, %v1882
        %1884 = vmatprep.mubr.f32.mxu0 0.0
        %1885 = vmatmul.mubr.f32.gmra.mxu0 %v1800
        %v1886 = vpop.f32.mrf.mxu0
        %v1887 = vadd.f32 0.0, %v1886
        %v1888 = vpop.f32.mrf.mxu0
        %v1889 = vadd.f32 0.0, %v1888
        %1890 = vdwg.mxu0
        %vm1891 = vcmask 785408
        %v1892 = vsel %vm1891, %v1773, 0
        %v1894 = vsel %vm1891, %v1774, 0
        %v1896 = vsel %vm1891, %v1775, 0
        %v1898 = vsel %vm1891, %v1776, 0
        %1900 = vmatprep.subr.mxu0 0.0
        %1901 = vmatpush1.msra.mxu0 0.0
        %1902 = vmatprep.subr.mxu0 0.0
        %1903 = vmatpush1.msra.mxu0 0.0
        %1904 = vmatprep.subr.mxu0 0.0
        %1905 = vmatpush1.msra.mxu0 0.0
        %1906 = vmatprep.subr.mxu0 0.0
        %1907 = vmatpush1.msra.mxu0 0.0
        %1908 = vmatprep.subr.mxu0 %v1732
        %1909 = vmatpush1.msra.mxu0 %v1731
        %1910 = vmatprep.subr.mxu0 %v1730
        %1911 = vmatpush1.msra.mxu0 %v1729
        %1912 = vmatprep.subr.mxu0 %v1728
        %1913 = vmatpush1.msra.mxu0 %v1727
        %1914 = vmatprep.subr.mxu0 %v1726
        %1915 = vmatpush1.msra.mxu0 %v1725
        %1916 = vmatprep.subr.mxu0 %v1724
        %1917 = vmatpush1.msra.mxu0 %v1723
        %1918 = vmatprep.subr.mxu0 %v1722
        %1919 = vmatpush1.msra.mxu0 %v1721
        %1920 = vmatprep.subr.mxu0 %v1720
        %1921 = vmatpush1.msra.mxu0 %v1719
        %1922 = vmatprep.subr.mxu0 %v1718
        %1923 = vmatpush1.msra.mxu0 %v1717
        %1924 = vmatprep.subr.mxu0 %v1716
        %1925 = vmatpush1.msra.mxu0 %v1715
        %1926 = vmatprep.subr.mxu0 %v1714
        %1927 = vmatpush1.msra.mxu0 %v1713
        %1928 = vmatprep.subr.mxu0 %v1712
        %1929 = vmatpush1.msra.mxu0 %v1711
        %1930 = vmatprep.subr.mxu0 %v1710
        %1931 = vmatpush1.msra.mxu0 %v1709
        %1932 = vmatprep.subr.mxu0 0.0
        %1933 = vmatpush2.msra.mxu0 0.0
        %1934 = vmatprep.subr.mxu0 0.0
        %1935 = vmatpush2.msra.mxu0 0.0
        %1936 = vmatprep.subr.mxu0 0.0
        %1937 = vmatpush2.msra.mxu0 0.0
        %1938 = vmatprep.subr.mxu0 0.0
        %1939 = vmatpush2.msra.mxu0 0.0
        %1940 = vmatprep.subr.mxu0 0.0
        %1941 = vmatpush2.msra.mxu0 0.0
        %1942 = vmatprep.subr.mxu0 0.0
        %1943 = vmatpush2.msra.mxu0 0.0
        %1944 = vmatprep.subr.mxu0 0.0
        %1945 = vmatpush2.msra.mxu0 0.0
        %1946 = vmatprep.subr.mxu0 0.0
        %1947 = vmatpush2.msra.mxu0 0.0
        %1948 = vmatprep.subr.mxu0 0.0
        %1949 = vmatpush2.msra.mxu0 0.0
        %1950 = vmatprep.subr.mxu0 0.0
        %1951 = vmatpush2.msra.mxu0 0.0
        %1952 = vmatprep.subr.mxu0 0.0
        %1953 = vmatpush2.msra.mxu0 0.0
        %1954 = vmatprep.subr.mxu0 0.0
        %1955 = vmatpush2.msra.mxu0 0.0
        %1956 = vmatprep.subr.mxu0 0.0
        %1957 = vmatpush2.msra.mxu0 0.0
        %1958 = vmatprep.subr.mxu0 0.0
        %1959 = vmatpush2.msra.mxu0 0.0
        %1960 = vmatprep.subr.mxu0 0.0
        %1961 = vmatpush2.msra.mxu0 0.0
        %1962 = vmatprep.subr.mxu0 0.0
        %1963 = vmatpush2.msra.mxu0 0.0
        %1964 = vmatprep.mubr.f32.mxu0 0.0
        %1965 = vmatmul.mubr.f32.gmra.mxu0 %v1892
        %v1966 = vpop.f32.mrf.mxu0
        %v1967 = vadd.f32 0.0, %v1966
        %v1968 = vpop.f32.mrf.mxu0
        %v1969 = vadd.f32 0.0, %v1968
        %1970 = vmatprep.mubr.f32.mxu0 0.0
        %1971 = vmatmul.mubr.f32.gmra.mxu0 %v1894
        %v1972 = vpop.f32.mrf.mxu0
        %v1973 = vadd.f32 0.0, %v1972
        %v1974 = vpop.f32.mrf.mxu0
        %v1975 = vadd.f32 0.0, %v1974
        %1976 = vmatprep.mubr.f32.mxu0 0.0
        %1977 = vmatmul.mubr.f32.gmra.mxu0 %v1896
        %v1978 = vpop.f32.mrf.mxu0
        %v1979 = vadd.f32 0.0, %v1978
        %v1980 = vpop.f32.mrf.mxu0
        %v1981 = vadd.f32 0.0, %v1980
        %1982 = vmatprep.mubr.f32.mxu0 0.0
        %1983 = vmatmul.mubr.f32.gmra.mxu0 %v1898
        %v1984 = vpop.f32.mrf.mxu0
        %v1985 = vadd.f32 0.0, %v1984
        %v1986 = vpop.f32.mrf.mxu0
        %v1987 = vadd.f32 0.0, %v1986
        %1988 = vdwg.mxu0
        %1989 = vmatprep.subr.mxu0 0.0
        %1990 = vmatpush1.msra.mxu0 0.0
        %1991 = vmatprep.subr.mxu0 0.0
        %1992 = vmatpush1.msra.mxu0 0.0
        %1993 = vmatprep.subr.mxu0 0.0
        %1994 = vmatpush1.msra.mxu0 0.0
        %1995 = vmatprep.subr.mxu0 0.0
        %1996 = vmatpush1.msra.mxu0 0.0
        %1997 = vmatprep.subr.mxu0 %v1740
        %1998 = vmatpush1.msra.mxu0 %v1739
        %1999 = vmatprep.subr.mxu0 %v1738
        %2000 = vmatpush1.msra.mxu0 %v1737
        %2001 = vmatprep.subr.mxu0 %v1736
        %2002 = vmatpush1.msra.mxu0 %v1735
        %2003 = vmatprep.subr.mxu0 %v1734
        %2004 = vmatpush1.msra.mxu0 %v1733
        %2005 = vmatprep.subr.mxu0 %v1732
        %2006 = vmatpush1.msra.mxu0 %v1731
        %2007 = vmatprep.subr.mxu0 %v1730
        %2008 = vmatpush1.msra.mxu0 %v1729
        %2009 = vmatprep.subr.mxu0 %v1728
        %2010 = vmatpush1.msra.mxu0 %v1727
        %2011 = vmatprep.subr.mxu0 %v1726
        %2012 = vmatpush1.msra.mxu0 %v1725
        %2013 = vmatprep.subr.mxu0 %v1724
        %2014 = vmatpush1.msra.mxu0 %v1723
        %2015 = vmatprep.subr.mxu0 %v1722
        %2016 = vmatpush1.msra.mxu0 %v1721
        %2017 = vmatprep.subr.mxu0 %v1720
        %2018 = vmatpush1.msra.mxu0 %v1719
        %2019 = vmatprep.subr.mxu0 %v1718
        %2020 = vmatpush1.msra.mxu0 %v1717
        %2021 = vmatprep.subr.mxu0 0.0
        %2022 = vmatpush2.msra.mxu0 0.0
        %2023 = vmatprep.subr.mxu0 0.0
        %2024 = vmatpush2.msra.mxu0 0.0
        %2025 = vmatprep.subr.mxu0 0.0
        %2026 = vmatpush2.msra.mxu0 0.0
        %2027 = vmatprep.subr.mxu0 0.0
        %2028 = vmatpush2.msra.mxu0 0.0
        %2029 = vmatprep.subr.mxu0 0.0
        %2030 = vmatpush2.msra.mxu0 0.0
        %2031 = vmatprep.subr.mxu0 0.0
        %2032 = vmatpush2.msra.mxu0 0.0
        %2033 = vmatprep.subr.mxu0 0.0
        %2034 = vmatpush2.msra.mxu0 0.0
        %2035 = vmatprep.subr.mxu0 0.0
        %2036 = vmatpush2.msra.mxu0 0.0
        %2037 = vmatprep.subr.mxu0 0.0
        %2038 = vmatpush2.msra.mxu0 0.0
        %2039 = vmatprep.subr.mxu0 0.0
        %2040 = vmatpush2.msra.mxu0 0.0
        %2041 = vmatprep.subr.mxu0 0.0
        %2042 = vmatpush2.msra.mxu0 0.0
        %2043 = vmatprep.subr.mxu0 0.0
        %2044 = vmatpush2.msra.mxu0 0.0
        %2045 = vmatprep.subr.mxu0 0.0
        %2046 = vmatpush2.msra.mxu0 0.0
        %2047 = vmatprep.subr.mxu0 0.0
        %2048 = vmatpush2.msra.mxu0 0.0
        %2049 = vmatprep.subr.mxu0 0.0
        %2050 = vmatpush2.msra.mxu0 0.0
        %2051 = vmatprep.subr.mxu0 0.0
        %2052 = vmatpush2.msra.mxu0 0.0
        %2053 = vmatprep.mubr.f32.mxu0 0.0
        %2054 = vmatmul.mubr.f32.gmra.mxu0 %v1892
        %v2055 = vpop.f32.mrf.mxu0
        %v2056 = vadd.f32 0.0, %v2055
        %v2057 = vpop.f32.mrf.mxu0
        %v2058 = vadd.f32 0.0, %v2057
        %2059 = vmatprep.mubr.f32.mxu0 0.0
        %2060 = vmatmul.mubr.f32.gmra.mxu0 %v1894
        %v2061 = vpop.f32.mrf.mxu0
        %v2062 = vadd.f32 0.0, %v2061
        %v2063 = vpop.f32.mrf.mxu0
        %v2064 = vadd.f32 0.0, %v2063
        %2065 = vmatprep.mubr.f32.mxu0 0.0
        %2066 = vmatmul.mubr.f32.gmra.mxu0 %v1896
        %v2067 = vpop.f32.mrf.mxu0
        %v2068 = vadd.f32 0.0, %v2067
        %v2069 = vpop.f32.mrf.mxu0
        %v2070 = vadd.f32 0.0, %v2069
        %2071 = vmatprep.mubr.f32.mxu0 0.0
        %2072 = vmatmul.mubr.f32.gmra.mxu0 %v1898
        %v2073 = vpop.f32.mrf.mxu0
        %v2074 = vadd.f32 0.0, %v2073
        %v2075 = vpop.f32.mrf.mxu0
        %v2076 = vadd.f32 0.0, %v2075
        %2077 = vdwg.mxu0
        %2078 = vmatprep.subr.mxu0 0.0
        %2079 = vmatpush1.msra.mxu0 0.0
        %2080 = vmatprep.subr.mxu0 0.0
        %2081 = vmatpush1.msra.mxu0 0.0
        %2082 = vmatprep.subr.mxu0 0.0
        %2083 = vmatpush1.msra.mxu0 0.0
        %2084 = vmatprep.subr.mxu0 0.0
        %2085 = vmatpush1.msra.mxu0 0.0
        %2086 = vmatprep.subr.mxu0 %v1748
        %2087 = vmatpush1.msra.mxu0 %v1747
        %2088 = vmatprep.subr.mxu0 %v1746
        %2089 = vmatpush1.msra.mxu0 %v1745
        %2090 = vmatprep.subr.mxu0 %v1744
        %2091 = vmatpush1.msra.mxu0 %v1743
        %2092 = vmatprep.subr.mxu0 %v1742
        %2093 = vmatpush1.msra.mxu0 %v1741
        %2094 = vmatprep.subr.mxu0 %v1740
        %2095 = vmatpush1.msra.mxu0 %v1739
        %2096 = vmatprep.subr.mxu0 %v1738
        %2097 = vmatpush1.msra.mxu0 %v1737
        %2098 = vmatprep.subr.mxu0 %v1736
        %2099 = vmatpush1.msra.mxu0 %v1735
        %2100 = vmatprep.subr.mxu0 %v1734
        %2101 = vmatpush1.msra.mxu0 %v1733
        %2102 = vmatprep.subr.mxu0 %v1732
        %2103 = vmatpush1.msra.mxu0 %v1731
        %2104 = vmatprep.subr.mxu0 %v1730
        %2105 = vmatpush1.msra.mxu0 %v1729
        %2106 = vmatprep.subr.mxu0 %v1728
        %2107 = vmatpush1.msra.mxu0 %v1727
        %2108 = vmatprep.subr.mxu0 %v1726
        %2109 = vmatpush1.msra.mxu0 %v1725
        %2110 = vmatprep.subr.mxu0 0.0
        %2111 = vmatpush2.msra.mxu0 0.0
        %2112 = vmatprep.subr.mxu0 0.0
        %2113 = vmatpush2.msra.mxu0 0.0
        %2114 = vmatprep.subr.mxu0 0.0
        %2115 = vmatpush2.msra.mxu0 0.0
        %2116 = vmatprep.subr.mxu0 0.0
        %2117 = vmatpush2.msra.mxu0 0.0
        %2118 = vmatprep.subr.mxu0 0.0
        %2119 = vmatpush2.msra.mxu0 0.0
        %2120 = vmatprep.subr.mxu0 0.0
        %2121 = vmatpush2.msra.mxu0 0.0
        %2122 = vmatprep.subr.mxu0 0.0
        %2123 = vmatpush2.msra.mxu0 0.0
        %2124 = vmatprep.subr.mxu0 0.0
        %2125 = vmatpush2.msra.mxu0 0.0
        %2126 = vmatprep.subr.mxu0 0.0
        %2127 = vmatpush2.msra.mxu0 0.0
        %2128 = vmatprep.subr.mxu0 0.0
        %2129 = vmatpush2.msra.mxu0 0.0
        %2130 = vmatprep.subr.mxu0 0.0
        %2131 = vmatpush2.msra.mxu0 0.0
        %2132 = vmatprep.subr.mxu0 0.0
        %2133 = vmatpush2.msra.mxu0 0.0
        %2134 = vmatprep.subr.mxu0 0.0
        %2135 = vmatpush2.msra.mxu0 0.0
        %2136 = vmatprep.subr.mxu0 0.0
        %2137 = vmatpush2.msra.mxu0 0.0
        %2138 = vmatprep.subr.mxu0 0.0
        %2139 = vmatpush2.msra.mxu0 0.0
        %2140 = vmatprep.subr.mxu0 0.0
        %2141 = vmatpush2.msra.mxu0 0.0
        %2142 = vmatprep.mubr.f32.mxu0 0.0
        %2143 = vmatmul.mubr.f32.gmra.mxu0 %v1892
        %v2144 = vpop.f32.mrf.mxu0
        %v2145 = vadd.f32 0.0, %v2144
        %v2146 = vpop.f32.mrf.mxu0
        %v2147 = vadd.f32 0.0, %v2146
        %2148 = vmatprep.mubr.f32.mxu0 0.0
        %2149 = vmatmul.mubr.f32.gmra.mxu0 %v1894
        %v2150 = vpop.f32.mrf.mxu0
        %v2151 = vadd.f32 0.0, %v2150
        %v2152 = vpop.f32.mrf.mxu0
        %v2153 = vadd.f32 0.0, %v2152
        %2154 = vmatprep.mubr.f32.mxu0 0.0
        %2155 = vmatmul.mubr.f32.gmra.mxu0 %v1896
        %v2156 = vpop.f32.mrf.mxu0
        %v2157 = vadd.f32 0.0, %v2156
        %v2158 = vpop.f32.mrf.mxu0
        %v2159 = vadd.f32 0.0, %v2158
        %2160 = vmatprep.mubr.f32.mxu0 0.0
        %2161 = vmatmul.mubr.f32.gmra.mxu0 %v1898
        %v2162 = vpop.f32.mrf.mxu0
        %v2163 = vadd.f32 0.0, %v2162
        %v2164 = vpop.f32.mrf.mxu0
        %v2165 = vadd.f32 0.0, %v2164
        %2166 = vdwg.mxu0
        %2167 = vmatprep.subr.mxu0 0.0
        %2168 = vmatpush1.msra.mxu0 0.0
        %2169 = vmatprep.subr.mxu0 0.0
        %2170 = vmatpush1.msra.mxu0 0.0
        %2171 = vmatprep.subr.mxu0 0.0
        %2172 = vmatpush1.msra.mxu0 0.0
        %2173 = vmatprep.subr.mxu0 0.0
        %2174 = vmatpush1.msra.mxu0 0.0
        %2175 = vmatprep.subr.mxu0 %v1756
        %2176 = vmatpush1.msra.mxu0 %v1755
        %2177 = vmatprep.subr.mxu0 %v1754
        %2178 = vmatpush1.msra.mxu0 %v1753
        %2179 = vmatprep.subr.mxu0 %v1752
        %2180 = vmatpush1.msra.mxu0 %v1751
        %2181 = vmatprep.subr.mxu0 %v1750
        %2182 = vmatpush1.msra.mxu0 %v1749
        %2183 = vmatprep.subr.mxu0 %v1748
        %2184 = vmatpush1.msra.mxu0 %v1747
        %2185 = vmatprep.subr.mxu0 %v1746
        %2186 = vmatpush1.msra.mxu0 %v1745
        %2187 = vmatprep.subr.mxu0 %v1744
        %2188 = vmatpush1.msra.mxu0 %v1743
        %2189 = vmatprep.subr.mxu0 %v1742
        %2190 = vmatpush1.msra.mxu0 %v1741
        %2191 = vmatprep.subr.mxu0 %v1740
        %2192 = vmatpush1.msra.mxu0 %v1739
        %2193 = vmatprep.subr.mxu0 %v1738
        %2194 = vmatpush1.msra.mxu0 %v1737
        %2195 = vmatprep.subr.mxu0 %v1736
        %2196 = vmatpush1.msra.mxu0 %v1735
        %2197 = vmatprep.subr.mxu0 %v1734
        %2198 = vmatpush1.msra.mxu0 %v1733
        %2199 = vmatprep.subr.mxu0 0.0
        %2200 = vmatpush2.msra.mxu0 0.0
        %2201 = vmatprep.subr.mxu0 0.0
        %2202 = vmatpush2.msra.mxu0 0.0
        %2203 = vmatprep.subr.mxu0 0.0
        %2204 = vmatpush2.msra.mxu0 0.0
        %2205 = vmatprep.subr.mxu0 0.0
        %2206 = vmatpush2.msra.mxu0 0.0
        %2207 = vmatprep.subr.mxu0 0.0
        %2208 = vmatpush2.msra.mxu0 0.0
        %2209 = vmatprep.subr.mxu0 0.0
        %2210 = vmatpush2.msra.mxu0 0.0
        %2211 = vmatprep.subr.mxu0 0.0
        %2212 = vmatpush2.msra.mxu0 0.0
        %2213 = vmatprep.subr.mxu0 0.0
        %2214 = vmatpush2.msra.mxu0 0.0
        %2215 = vmatprep.subr.mxu0 0.0
        %2216 = vmatpush2.msra.mxu0 0.0
        %2217 = vmatprep.subr.mxu0 0.0
        %2218 = vmatpush2.msra.mxu0 0.0
        %2219 = vmatprep.subr.mxu0 0.0
        %2220 = vmatpush2.msra.mxu0 0.0
        %2221 = vmatprep.subr.mxu0 0.0
        %2222 = vmatpush2.msra.mxu0 0.0
        %2223 = vmatprep.subr.mxu0 0.0
        %2224 = vmatpush2.msra.mxu0 0.0
        %2225 = vmatprep.subr.mxu0 0.0
        %2226 = vmatpush2.msra.mxu0 0.0
        %2227 = vmatprep.subr.mxu0 0.0
        %2228 = vmatpush2.msra.mxu0 0.0
        %2229 = vmatprep.subr.mxu0 0.0
        %2230 = vmatpush2.msra.mxu0 0.0
        %2231 = vmatprep.mubr.f32.mxu0 0.0
        %2232 = vmatmul.mubr.f32.gmra.mxu0 %v1892
        %v2233 = vpop.f32.mrf.mxu0
        %v2234 = vadd.f32 0.0, %v2233
        %v2235 = vpop.f32.mrf.mxu0
        %v2236 = vadd.f32 0.0, %v2235
        %2237 = vmatprep.mubr.f32.mxu0 0.0
        %2238 = vmatmul.mubr.f32.gmra.mxu0 %v1894
        %v2239 = vpop.f32.mrf.mxu0
        %v2240 = vadd.f32 0.0, %v2239
        %v2241 = vpop.f32.mrf.mxu0
        %v2242 = vadd.f32 0.0, %v2241
        %2243 = vmatprep.mubr.f32.mxu0 0.0
        %2244 = vmatmul.mubr.f32.gmra.mxu0 %v1896
        %v2245 = vpop.f32.mrf.mxu0
        %v2246 = vadd.f32 0.0, %v2245
        %v2247 = vpop.f32.mrf.mxu0
        %v2248 = vadd.f32 0.0, %v2247
        %2249 = vmatprep.mubr.f32.mxu0 0.0
        %2250 = vmatmul.mubr.f32.gmra.mxu0 %v1898
        %v2251 = vpop.f32.mrf.mxu0
        %v2252 = vadd.f32 0.0, %v2251
        %v2253 = vpop.f32.mrf.mxu0
        %v2254 = vadd.f32 0.0, %v2253
        %2255 = vdwg.mxu0
        %2256 = vmatprep.subr.mxu0 0.0
        %2257 = vmatpush1.msra.mxu0 0.0
        %2258 = vmatprep.subr.mxu0 0.0
        %2259 = vmatpush1.msra.mxu0 0.0
        %2260 = vmatprep.subr.mxu0 0.0
        %2261 = vmatpush1.msra.mxu0 0.0
        %2262 = vmatprep.subr.mxu0 0.0
        %2263 = vmatpush1.msra.mxu0 0.0
        %2264 = vmatprep.subr.mxu0 %v1764
        %2265 = vmatpush1.msra.mxu0 %v1763
        %2266 = vmatprep.subr.mxu0 %v1762
        %2267 = vmatpush1.msra.mxu0 %v1761
        %2268 = vmatprep.subr.mxu0 %v1760
        %2269 = vmatpush1.msra.mxu0 %v1759
        %2270 = vmatprep.subr.mxu0 %v1758
        %2271 = vmatpush1.msra.mxu0 %v1757
        %2272 = vmatprep.subr.mxu0 %v1756
        %2273 = vmatpush1.msra.mxu0 %v1755
        %2274 = vmatprep.subr.mxu0 %v1754
        %2275 = vmatpush1.msra.mxu0 %v1753
        %2276 = vmatprep.subr.mxu0 %v1752
        %2277 = vmatpush1.msra.mxu0 %v1751
        %2278 = vmatprep.subr.mxu0 %v1750
        %2279 = vmatpush1.msra.mxu0 %v1749
        %2280 = vmatprep.subr.mxu0 %v1748
        %2281 = vmatpush1.msra.mxu0 %v1747
        %2282 = vmatprep.subr.mxu0 %v1746
        %2283 = vmatpush1.msra.mxu0 %v1745
        %2284 = vmatprep.subr.mxu0 %v1744
        %2285 = vmatpush1.msra.mxu0 %v1743
        %2286 = vmatprep.subr.mxu0 %v1742
        %2287 = vmatpush1.msra.mxu0 %v1741
        %2288 = vmatprep.subr.mxu0 0.0
        %2289 = vmatpush2.msra.mxu0 0.0
        %2290 = vmatprep.subr.mxu0 0.0
        %2291 = vmatpush2.msra.mxu0 0.0
        %2292 = vmatprep.subr.mxu0 0.0
        %2293 = vmatpush2.msra.mxu0 0.0
        %2294 = vmatprep.subr.mxu0 0.0
        %2295 = vmatpush2.msra.mxu0 0.0
        %2296 = vmatprep.subr.mxu0 0.0
        %2297 = vmatpush2.msra.mxu0 0.0
        %2298 = vmatprep.subr.mxu0 0.0
        %2299 = vmatpush2.msra.mxu0 0.0
        %2300 = vmatprep.subr.mxu0 0.0
        %2301 = vmatpush2.msra.mxu0 0.0
        %2302 = vmatprep.subr.mxu0 0.0
        %2303 = vmatpush2.msra.mxu0 0.0
        %2304 = vmatprep.subr.mxu0 0.0
        %2305 = vmatpush2.msra.mxu0 0.0
        %2306 = vmatprep.subr.mxu0 0.0
        %2307 = vmatpush2.msra.mxu0 0.0
        %2308 = vmatprep.subr.mxu0 0.0
        %2309 = vmatpush2.msra.mxu0 0.0
        %2310 = vmatprep.subr.mxu0 0.0
        %2311 = vmatpush2.msra.mxu0 0.0
        %2312 = vmatprep.subr.mxu0 0.0
        %2313 = vmatpush2.msra.mxu0 0.0
        %2314 = vmatprep.subr.mxu0 0.0
        %2315 = vmatpush2.msra.mxu0 0.0
        %2316 = vmatprep.subr.mxu0 0.0
        %2317 = vmatpush2.msra.mxu0 0.0
        %2318 = vmatprep.subr.mxu0 0.0
        %2319 = vmatpush2.msra.mxu0 0.0
        %2320 = vmatprep.mubr.f32.mxu0 0.0
        %2321 = vmatmul.mubr.f32.gmra.mxu0 %v1892
        %v2322 = vpop.f32.mrf.mxu0
        %v2323 = vadd.f32 0.0, %v2322
        %v2324 = vpop.f32.mrf.mxu0
        %v2325 = vadd.f32 0.0, %v2324
        %2326 = vmatprep.mubr.f32.mxu0 0.0
        %2327 = vmatmul.mubr.f32.gmra.mxu0 %v1894
        %v2328 = vpop.f32.mrf.mxu0
        %v2329 = vadd.f32 0.0, %v2328
        %v2330 = vpop.f32.mrf.mxu0
        %v2331 = vadd.f32 0.0, %v2330
        %2332 = vmatprep.mubr.f32.mxu0 0.0
        %2333 = vmatmul.mubr.f32.gmra.mxu0 %v1896
        %v2334 = vpop.f32.mrf.mxu0
        %v2335 = vadd.f32 0.0, %v2334
        %v2336 = vpop.f32.mrf.mxu0
        %v2337 = vadd.f32 0.0, %v2336
        %2338 = vmatprep.mubr.f32.mxu0 0.0
        %2339 = vmatmul.mubr.f32.gmra.mxu0 %v1898
        %v2340 = vpop.f32.mrf.mxu0
        %v2341 = vadd.f32 0.0, %v2340
        %v2342 = vpop.f32.mrf.mxu0
        %v2343 = vadd.f32 0.0, %v2342
        %2344 = vdwg.mxu0
        %2345 = vmatprep.subr.mxu0 0.0
        %2346 = vmatpush1.msra.mxu0 0.0
        %2347 = vmatprep.subr.mxu0 0.0
        %2348 = vmatpush1.msra.mxu0 0.0
        %2349 = vmatprep.subr.mxu0 0.0
        %2350 = vmatpush1.msra.mxu0 0.0
        %2351 = vmatprep.subr.mxu0 0.0
        %2352 = vmatpush1.msra.mxu0 0.0
        %2353 = vmatprep.subr.mxu0 %v1772
        %2354 = vmatpush1.msra.mxu0 %v1771
        %2355 = vmatprep.subr.mxu0 %v1770
        %2356 = vmatpush1.msra.mxu0 %v1769
        %2357 = vmatprep.subr.mxu0 %v1768
        %2358 = vmatpush1.msra.mxu0 %v1767
        %2359 = vmatprep.subr.mxu0 %v1766
        %2360 = vmatpush1.msra.mxu0 %v1765
        %2361 = vmatprep.subr.mxu0 %v1764
        %2362 = vmatpush1.msra.mxu0 %v1763
        %2363 = vmatprep.subr.mxu0 %v1762
        %2364 = vmatpush1.msra.mxu0 %v1761
        %2365 = vmatprep.subr.mxu0 %v1760
        %2366 = vmatpush1.msra.mxu0 %v1759
        %2367 = vmatprep.subr.mxu0 %v1758
        %2368 = vmatpush1.msra.mxu0 %v1757
        %2369 = vmatprep.subr.mxu0 %v1756
        %2370 = vmatpush1.msra.mxu0 %v1755
        %2371 = vmatprep.subr.mxu0 %v1754
        %2372 = vmatpush1.msra.mxu0 %v1753
        %2373 = vmatprep.subr.mxu0 %v1752
        %2374 = vmatpush1.msra.mxu0 %v1751
        %2375 = vmatprep.subr.mxu0 %v1750
        %2376 = vmatpush1.msra.mxu0 %v1749
        %2377 = vmatprep.subr.mxu0 0.0
        %2378 = vmatpush2.msra.mxu0 0.0
        %2379 = vmatprep.subr.mxu0 0.0
        %2380 = vmatpush2.msra.mxu0 0.0
        %2381 = vmatprep.subr.mxu0 0.0
        %2382 = vmatpush2.msra.mxu0 0.0
        %2383 = vmatprep.subr.mxu0 0.0
        %2384 = vmatpush2.msra.mxu0 0.0
        %2385 = vmatprep.subr.mxu0 0.0
        %2386 = vmatpush2.msra.mxu0 0.0
        %2387 = vmatprep.subr.mxu0 0.0
        %2388 = vmatpush2.msra.mxu0 0.0
        %2389 = vmatprep.subr.mxu0 0.0
        %2390 = vmatpush2.msra.mxu0 0.0
        %2391 = vmatprep.subr.mxu0 0.0
        %2392 = vmatpush2.msra.mxu0 0.0
        %2393 = vmatprep.subr.mxu0 0.0
        %2394 = vmatpush2.msra.mxu0 0.0
        %2395 = vmatprep.subr.mxu0 0.0
        %2396 = vmatpush2.msra.mxu0 0.0
        %2397 = vmatprep.subr.mxu0 0.0
        %2398 = vmatpush2.msra.mxu0 0.0
        %2399 = vmatprep.subr.mxu0 0.0
        %2400 = vmatpush2.msra.mxu0 0.0
        %2401 = vmatprep.subr.mxu0 0.0
        %2402 = vmatpush2.msra.mxu0 0.0
        %2403 = vmatprep.subr.mxu0 0.0
        %2404 = vmatpush2.msra.mxu0 0.0
        %2405 = vmatprep.subr.mxu0 0.0
        %2406 = vmatpush2.msra.mxu0 0.0
        %2407 = vmatprep.subr.mxu0 0.0
        %2408 = vmatpush2.msra.mxu0 0.0
        %2409 = vmatprep.mubr.f32.mxu0 0.0
        %2410 = vmatmul.mubr.f32.gmra.mxu0 %v1892
        %v2411 = vpop.f32.mrf.mxu0
        %v2412 = vadd.f32 0.0, %v2411
        %v2413 = vpop.f32.mrf.mxu0
        %v2414 = vadd.f32 0.0, %v2413
        %2415 = vmatprep.mubr.f32.mxu0 0.0
        %2416 = vmatmul.mubr.f32.gmra.mxu0 %v1894
        %v2417 = vpop.f32.mrf.mxu0
        %v2418 = vadd.f32 0.0, %v2417
        %v2419 = vpop.f32.mrf.mxu0
        %v2420 = vadd.f32 0.0, %v2419
        %2421 = vmatprep.mubr.f32.mxu0 0.0
        %2422 = vmatmul.mubr.f32.gmra.mxu0 %v1896
        %v2423 = vpop.f32.mrf.mxu0
        %v2424 = vadd.f32 0.0, %v2423
        %v2425 = vpop.f32.mrf.mxu0
        %v2426 = vadd.f32 0.0, %v2425
        %2427 = vmatprep.mubr.f32.mxu0 0.0
        %2428 = vmatmul.mubr.f32.gmra.mxu0 %v1898
        %v2429 = vpop.f32.mrf.mxu0
        %v2430 = vadd.f32 0.0, %v2429
        %v2431 = vpop.f32.mrf.mxu0
        %v2432 = vadd.f32 0.0, %v2431
        %2433 = vdwg.mxu0
        %v2434 = vsel %vm1793, %v1773, 0
        %v2436 = vsel %vm1793, %v1774, 0
        %v2438 = vsel %vm1793, %v1775, 0
        %v2440 = vsel %vm1793, %v1776, 0
        %2442 = vmatprep.subr.mxu0 0.0
        %2443 = vmatpush1.msra.mxu0 0.0
        %2444 = vmatprep.subr.mxu0 0.0
        %2445 = vmatpush1.msra.mxu0 0.0
        %2446 = vmatprep.subr.mxu0 0.0
        %2447 = vmatpush1.msra.mxu0 0.0
        %2448 = vmatprep.subr.mxu0 0.0
        %2449 = vmatpush1.msra.mxu0 0.0
        %2450 = vmatprep.subr.mxu0 0.0
        %2451 = vmatpush1.msra.mxu0 0.0
        %2452 = vmatprep.subr.mxu0 0.0
        %2453 = vmatpush1.msra.mxu0 0.0
        %2454 = vmatprep.subr.mxu0 0.0
        %2455 = vmatpush1.msra.mxu0 0.0
        %2456 = vmatprep.subr.mxu0 0.0
        %2457 = vmatpush1.msra.mxu0 0.0
        %2458 = vmatprep.subr.mxu0 %v1772
        %2459 = vmatpush1.msra.mxu0 %v1771
        %2460 = vmatprep.subr.mxu0 %v1770
        %2461 = vmatpush1.msra.mxu0 %v1769
        %2462 = vmatprep.subr.mxu0 %v1768
        %2463 = vmatpush1.msra.mxu0 %v1767
        %2464 = vmatprep.subr.mxu0 %v1766
        %2465 = vmatpush1.msra.mxu0 %v1765
        %2466 = vmatprep.subr.mxu0 %v1764
        %2467 = vmatpush1.msra.mxu0 %v1763
        %2468 = vmatprep.subr.mxu0 %v1762
        %2469 = vmatpush1.msra.mxu0 %v1761
        %2470 = vmatprep.subr.mxu0 %v1760
        %2471 = vmatpush1.msra.mxu0 %v1759
        %2472 = vmatprep.subr.mxu0 %v1758
        %2473 = vmatpush1.msra.mxu0 %v1757
        %2474 = vmatprep.subr.mxu0 0.0
        %2475 = vmatpush2.msra.mxu0 0.0
        %2476 = vmatprep.subr.mxu0 0.0
        %2477 = vmatpush2.msra.mxu0 0.0
        %2478 = vmatprep.subr.mxu0 0.0
        %2479 = vmatpush2.msra.mxu0 0.0
        %2480 = vmatprep.subr.mxu0 0.0
        %2481 = vmatpush2.msra.mxu0 0.0
        %2482 = vmatprep.subr.mxu0 0.0
        %2483 = vmatpush2.msra.mxu0 0.0
        %2484 = vmatprep.subr.mxu0 0.0
        %2485 = vmatpush2.msra.mxu0 0.0
        %2486 = vmatprep.subr.mxu0 0.0
        %2487 = vmatpush2.msra.mxu0 0.0
        %2488 = vmatprep.subr.mxu0 0.0
        %2489 = vmatpush2.msra.mxu0 0.0
        %2490 = vmatprep.subr.mxu0 0.0
        %2491 = vmatpush2.msra.mxu0 0.0
        %2492 = vmatprep.subr.mxu0 0.0
        %2493 = vmatpush2.msra.mxu0 0.0
        %2494 = vmatprep.subr.mxu0 0.0
        %2495 = vmatpush2.msra.mxu0 0.0
        %2496 = vmatprep.subr.mxu0 0.0
        %2497 = vmatpush2.msra.mxu0 0.0
        %2498 = vmatprep.subr.mxu0 0.0
        %2499 = vmatpush2.msra.mxu0 0.0
        %2500 = vmatprep.subr.mxu0 0.0
        %2501 = vmatpush2.msra.mxu0 0.0
        %2502 = vmatprep.subr.mxu0 0.0
        %2503 = vmatpush2.msra.mxu0 0.0
        %2504 = vmatprep.subr.mxu0 0.0
        %2505 = vmatpush2.msra.mxu0 0.0
        %2506 = vmatprep.mubr.f32.mxu0 0.0
        %2507 = vmatmul.mubr.f32.gmra.mxu0 %v2434
        %v2508 = vpop.f32.mrf.mxu0
        %v2509 = vadd.f32 0.0, %v2508
        %v2510 = vpop.f32.mrf.mxu0
        %v2511 = vadd.f32 0.0, %v2510
        %2512 = vmatprep.mubr.f32.mxu0 0.0
        %2513 = vmatmul.mubr.f32.gmra.mxu0 %v2436
        %v2514 = vpop.f32.mrf.mxu0
        %v2515 = vadd.f32 0.0, %v2514
        %v2516 = vpop.f32.mrf.mxu0
        %v2517 = vadd.f32 0.0, %v2516
        %2518 = vmatprep.mubr.f32.mxu0 0.0
        %2519 = vmatmul.mubr.f32.gmra.mxu0 %v2438
        %v2520 = vpop.f32.mrf.mxu0
        %v2521 = vadd.f32 0.0, %v2520
        %v2522 = vpop.f32.mrf.mxu0
        %v2523 = vadd.f32 0.0, %v2522
        %2524 = vmatprep.mubr.f32.mxu0 0.0
        %2525 = vmatmul.mubr.f32.gmra.mxu0 %v2440
        %v2526 = vpop.f32.mrf.mxu0
        %v2527 = vadd.f32 0.0, %v2526
        %v2528 = vpop.f32.mrf.mxu0
        %v2529 = vadd.f32 0.0, %v2528
        %2530 = vdwg.mxu0
        %2532 = vset.pattern.permute.xlu0 2
        %2533 = vperm.xlu0 %2532, %v1777
        %v2534 = vpop.permute.xlu0 %2533
        %2537 = vset.pattern.permute.xlu0 2
        %2538 = vperm.xlu0 %2537, %v1778
        %v2539 = vpop.permute.xlu0 %2538
        %2542 = vset.pattern.permute.xlu0 2
        %2543 = vperm.xlu0 %2542, %v1779
        %v2544 = vpop.permute.xlu0 %2543
        %2547 = vset.pattern.permute.xlu0 2
        %2548 = vperm.xlu0 %2547, %v1780
        %v2549 = vpop.permute.xlu0 %2548
        %v2551 = vadd.f32 %v1869, %v2534
        %v2552 = vadd.f32 %v1871, %v2534
        %v2553 = vadd.f32 %v1875, %v2539
        %v2554 = vadd.f32 %v1877, %v2539
        %v2555 = vadd.f32 %v1881, %v2544
        %v2556 = vadd.f32 %v1883, %v2544
        %v2557 = vadd.f32 %v1887, %v2549
        %v2558 = vadd.f32 %v1889, %v2549
        %v2559 = vadd.f32 %v1967, %v2534
        %v2560 = vadd.f32 %v1969, %v2534
        %v2561 = vadd.f32 %v1973, %v2539
        %v2562 = vadd.f32 %v1975, %v2539
        %v2563 = vadd.f32 %v1979, %v2544
        %v2564 = vadd.f32 %v1981, %v2544
        %v2565 = vadd.f32 %v1985, %v2549
        %v2566 = vadd.f32 %v1987, %v2549
        %v2567 = vadd.f32 %v2056, %v2534
        %v2568 = vadd.f32 %v2058, %v2534
        %v2569 = vadd.f32 %v2062, %v2539
        %v2570 = vadd.f32 %v2064, %v2539
        %v2571 = vadd.f32 %v2068, %v2544
        %v2572 = vadd.f32 %v2070, %v2544
        %v2573 = vadd.f32 %v2074, %v2549
        %v2574 = vadd.f32 %v2076, %v2549
        %v2575 = vadd.f32 %v2145, %v2534
        %v2576 = vadd.f32 %v2147, %v2534
        %v2577 = vadd.f32 %v2151, %v2539
        %v2578 = vadd.f32 %v2153, %v2539
        %v2579 = vadd.f32 %v2157, %v2544
        %v2580 = vadd.f32 %v2159, %v2544
        %v2581 = vadd.f32 %v2163, %v2549
        %v2582 = vadd.f32 %v2165, %v2549
        %v2583 = vadd.f32 %v2234, %v2534
        %v2584 = vadd.f32 %v2236, %v2534
        %v2585 = vadd.f32 %v2240, %v2539
        %v2586 = vadd.f32 %v2242, %v2539
        %v2587 = vadd.f32 %v2246, %v2544
        %v2588 = vadd.f32 %v2248, %v2544
        %v2589 = vadd.f32 %v2252, %v2549
        %v2590 = vadd.f32 %v2254, %v2549
        %v2591 = vadd.f32 %v2323, %v2534
        %v2592 = vadd.f32 %v2325, %v2534
        %v2593 = vadd.f32 %v2329, %v2539
        %v2594 = vadd.f32 %v2331, %v2539
        %v2595 = vadd.f32 %v2335, %v2544
        %v2596 = vadd.f32 %v2337, %v2544
        %v2597 = vadd.f32 %v2341, %v2549
        %v2598 = vadd.f32 %v2343, %v2549
        %v2599 = vadd.f32 %v2412, %v2534
        %v2600 = vadd.f32 %v2414, %v2534
        %v2601 = vadd.f32 %v2418, %v2539
        %v2602 = vadd.f32 %v2420, %v2539
        %v2603 = vadd.f32 %v2424, %v2544
        %v2604 = vadd.f32 %v2426, %v2544
        %v2605 = vadd.f32 %v2430, %v2549
        %v2606 = vadd.f32 %v2432, %v2549
        %v2607 = vadd.f32 %v2509, %v2534
        %v2608 = vadd.f32 %v2511, %v2534
        %v2609 = vadd.f32 %v2515, %v2539
        %v2610 = vadd.f32 %v2517, %v2539
        %v2611 = vadd.f32 %v2521, %v2544
        %v2612 = vadd.f32 %v2523, %v2544
        %v2613 = vadd.f32 %v2527, %v2549
        %v2614 = vadd.f32 %v2529, %v2549
        %v2615 = vadd.f32 %v2551, %v2552
        %2616 = vadd.xlane.f32.xlu0 %v2615
        %v2617 = vpop.xlane.xlu0 %2616
        %v2618 = vadd.f32 %v2553, %v2554
        %2619 = vadd.xlane.f32.xlu0 %v2618
        %v2620 = vpop.xlane.xlu0 %2619
        %v2621 = vadd.f32 %v2555, %v2556
        %2622 = vadd.xlane.f32.xlu0 %v2621
        %v2623 = vpop.xlane.xlu0 %2622
        %v2624 = vadd.f32 %v2557, %v2558
        %2625 = vadd.xlane.f32.xlu0 %v2624
        %v2626 = vpop.xlane.xlu0 %2625
        %v2627 = vadd.f32 %v2559, %v2560
        %2628 = vadd.xlane.f32.xlu0 %v2627
        %v2629 = vpop.xlane.xlu0 %2628
        %v2630 = vadd.f32 %v2561, %v2562
        %2631 = vadd.xlane.f32.xlu0 %v2630
        %v2632 = vpop.xlane.xlu0 %2631
        %v2633 = vadd.f32 %v2563, %v2564
        %2634 = vadd.xlane.f32.xlu0 %v2633
        %v2635 = vpop.xlane.xlu0 %2634
        %v2636 = vadd.f32 %v2565, %v2566
        %2637 = vadd.xlane.f32.xlu0 %v2636
        %v2638 = vpop.xlane.xlu0 %2637
        %v2639 = vadd.f32 %v2567, %v2568
        %2640 = vadd.xlane.f32.xlu0 %v2639
        %v2641 = vpop.xlane.xlu0 %2640
        %v2642 = vadd.f32 %v2569, %v2570
        %2643 = vadd.xlane.f32.xlu0 %v2642
        %v2644 = vpop.xlane.xlu0 %2643
        %v2645 = vadd.f32 %v2571, %v2572
        %2646 = vadd.xlane.f32.xlu0 %v2645
        %v2647 = vpop.xlane.xlu0 %2646
        %v2648 = vadd.f32 %v2573, %v2574
        %2649 = vadd.xlane.f32.xlu0 %v2648
        %v2650 = vpop.xlane.xlu0 %2649
        %v2651 = vadd.f32 %v2575, %v2576
        %2652 = vadd.xlane.f32.xlu0 %v2651
        %v2653 = vpop.xlane.xlu0 %2652
        %v2654 = vadd.f32 %v2577, %v2578
        %2655 = vadd.xlane.f32.xlu0 %v2654
        %v2656 = vpop.xlane.xlu0 %2655
        %v2657 = vadd.f32 %v2579, %v2580
        %2658 = vadd.xlane.f32.xlu0 %v2657
        %v2659 = vpop.xlane.xlu0 %2658
        %v2660 = vadd.f32 %v2581, %v2582
        %2661 = vadd.xlane.f32.xlu0 %v2660
        %v2662 = vpop.xlane.xlu0 %2661
        %v2663 = vadd.f32 %v2583, %v2584
        %2664 = vadd.xlane.f32.xlu0 %v2663
        %v2665 = vpop.xlane.xlu0 %2664
        %v2666 = vadd.f32 %v2585, %v2586
        %2667 = vadd.xlane.f32.xlu0 %v2666
        %v2668 = vpop.xlane.xlu0 %2667
        %v2669 = vadd.f32 %v2587, %v2588
        %2670 = vadd.xlane.f32.xlu0 %v2669
        %v2671 = vpop.xlane.xlu0 %2670
        %v2672 = vadd.f32 %v2589, %v2590
        %2673 = vadd.xlane.f32.xlu0 %v2672
        %v2674 = vpop.xlane.xlu0 %2673
        %v2675 = vadd.f32 %v2591, %v2592
        %2676 = vadd.xlane.f32.xlu0 %v2675
        %v2677 = vpop.xlane.xlu0 %2676
        %v2678 = vadd.f32 %v2593, %v2594
        %2679 = vadd.xlane.f32.xlu0 %v2678
        %v2680 = vpop.xlane.xlu0 %2679
        %v2681 = vadd.f32 %v2595, %v2596
        %2682 = vadd.xlane.f32.xlu0 %v2681
        %v2683 = vpop.xlane.xlu0 %2682
        %v2684 = vadd.f32 %v2597, %v2598
        %2685 = vadd.xlane.f32.xlu0 %v2684
        %v2686 = vpop.xlane.xlu0 %2685
        %v2687 = vadd.f32 %v2599, %v2600
        %2688 = vadd.xlane.f32.xlu0 %v2687
        %v2689 = vpop.xlane.xlu0 %2688
        %v2690 = vadd.f32 %v2601, %v2602
        %2691 = vadd.xlane.f32.xlu0 %v2690
        %v2692 = vpop.xlane.xlu0 %2691
        %v2693 = vadd.f32 %v2603, %v2604
        %2694 = vadd.xlane.f32.xlu0 %v2693
        %v2695 = vpop.xlane.xlu0 %2694
        %v2696 = vadd.f32 %v2605, %v2606
        %2697 = vadd.xlane.f32.xlu0 %v2696
        %v2698 = vpop.xlane.xlu0 %2697
        %v2699 = vadd.f32 %v2607, %v2608
        %2700 = vadd.xlane.f32.xlu0 %v2699
        %v2701 = vpop.xlane.xlu0 %2700
        %v2702 = vadd.f32 %v2609, %v2610
        %2703 = vadd.xlane.f32.xlu0 %v2702
        %v2704 = vpop.xlane.xlu0 %2703
        %v2705 = vadd.f32 %v2611, %v2612
        %2706 = vadd.xlane.f32.xlu0 %v2705
        %v2707 = vpop.xlane.xlu0 %2706
        %v2708 = vadd.f32 %v2613, %v2614
        %2709 = vadd.xlane.f32.xlu0 %v2708
        %v2710 = vpop.xlane.xlu0 %2709
        %v2711 = vadd.f32 %v2617, %v2629
        %v2712 = vadd.f32 %v2711, %v2641
        %v2713 = vadd.f32 %v2712, %v2653
        %v2714 = vadd.f32 %v2713, %v2665
        %v2715 = vadd.f32 %v2714, %v2677
        %v2716 = vadd.f32 %v2715, %v2689
        %v2717 = vadd.f32 %v2716, %v2701
        %v2718 = vadd.f32 %v2620, %v2632
        %v2719 = vadd.f32 %v2718, %v2644
        %v2720 = vadd.f32 %v2719, %v2656
        %v2721 = vadd.f32 %v2720, %v2668
        %v2722 = vadd.f32 %v2721, %v2680
        %v2723 = vadd.f32 %v2722, %v2692
        %v2724 = vadd.f32 %v2723, %v2704
        %v2725 = vadd.f32 %v2623, %v2635
        %v2726 = vadd.f32 %v2725, %v2647
        %v2727 = vadd.f32 %v2726, %v2659
        %v2728 = vadd.f32 %v2727, %v2671
        %v2729 = vadd.f32 %v2728, %v2683
        %v2730 = vadd.f32 %v2729, %v2695
        %v2731 = vadd.f32 %v2730, %v2707
        %v2732 = vadd.f32 %v2626, %v2638
        %v2733 = vadd.f32 %v2732, %v2650
        %v2734 = vadd.f32 %v2733, %v2662
        %v2735 = vadd.f32 %v2734, %v2674
        %v2736 = vadd.f32 %v2735, %v2686
        %v2737 = vadd.f32 %v2736, %v2698
        %v2738 = vadd.f32 %v2737, %v2710
        %v2739 = vmul.f32 %v2551, %v2551
        %v2740 = vmul.f32 %v2552, %v2552
        %v2741 = vmul.f32 %v2553, %v2553
        %v2742 = vmul.f32 %v2554, %v2554
        %v2743 = vmul.f32 %v2555, %v2555
        %v2744 = vmul.f32 %v2556, %v2556
        %v2745 = vmul.f32 %v2557, %v2557
        %v2746 = vmul.f32 %v2558, %v2558
        %v2747 = vmul.f32 %v2559, %v2559
        %v2748 = vmul.f32 %v2560, %v2560
        %v2749 = vmul.f32 %v2561, %v2561
        %v2750 = vmul.f32 %v2562, %v2562
        %v2751 = vmul.f32 %v2563, %v2563
        %v2752 = vmul.f32 %v2564, %v2564
        %v2753 = vmul.f32 %v2565, %v2565
        %v2754 = vmul.f32 %v2566, %v2566
        %v2755 = vmul.f32 %v2567, %v2567
        %v2756 = vmul.f32 %v2568, %v2568
        %v2757 = vmul.f32 %v2569, %v2569
        %v2758 = vmul.f32 %v2570, %v2570
        %v2759 = vmul.f32 %v2571, %v2571
        %v2760 = vmul.f32 %v2572, %v2572
        %v2761 = vmul.f32 %v2573, %v2573
        %v2762 = vmul.f32 %v2574, %v2574
        %v2763 = vmul.f32 %v2575, %v2575
        %v2764 = vmul.f32 %v2576, %v2576
        %v2765 = vmul.f32 %v2577, %v2577
        %v2766 = vmul.f32 %v2578, %v2578
        %v2767 = vmul.f32 %v2579, %v2579
        %v2768 = vmul.f32 %v2580, %v2580
        %v2769 = vmul.f32 %v2581, %v2581
        %v2770 = vmul.f32 %v2582, %v2582
        %v2771 = vmul.f32 %v2583, %v2583
        %v2772 = vmul.f32 %v2584, %v2584
        %v2773 = vmul.f32 %v2585, %v2585
        %v2774 = vmul.f32 %v2586, %v2586
        %v2775 = vmul.f32 %v2587, %v2587
        %v2776 = vmul.f32 %v2588, %v2588
        %v2777 = vmul.f32 %v2589, %v2589
        %v2778 = vmul.f32 %v2590, %v2590
        %v2779 = vmul.f32 %v2591, %v2591
        %v2780 = vmul.f32 %v2592, %v2592
        %v2781 = vmul.f32 %v2593, %v2593
        %v2782 = vmul.f32 %v2594, %v2594
        %v2783 = vmul.f32 %v2595, %v2595
        %v2784 = vmul.f32 %v2596, %v2596
        %v2785 = vmul.f32 %v2597, %v2597
        %v2786 = vmul.f32 %v2598, %v2598
        %v2787 = vmul.f32 %v2599, %v2599
        %v2788 = vmul.f32 %v2600, %v2600
        %v2789 = vmul.f32 %v2601, %v2601
        %v2790 = vmul.f32 %v2602, %v2602
        %v2791 = vmul.f32 %v2603, %v2603
        %v2792 = vmul.f32 %v2604, %v2604
        %v2793 = vmul.f32 %v2605, %v2605
        %v2794 = vmul.f32 %v2606, %v2606
        %v2795 = vmul.f32 %v2607, %v2607
        %v2796 = vmul.f32 %v2608, %v2608
        %v2797 = vmul.f32 %v2609, %v2609
        %v2798 = vmul.f32 %v2610, %v2610
        %v2799 = vmul.f32 %v2611, %v2611
        %v2800 = vmul.f32 %v2612, %v2612
        %v2801 = vmul.f32 %v2613, %v2613
        %v2802 = vmul.f32 %v2614, %v2614
        %v2803 = vadd.f32 %v2739, %v2740
        %2804 = vadd.xlane.f32.xlu0 %v2803
        %v2805 = vpop.xlane.xlu0 %2804
        %v2806 = vadd.f32 %v2741, %v2742
        %2807 = vadd.xlane.f32.xlu0 %v2806
        %v2808 = vpop.xlane.xlu0 %2807
        %v2809 = vadd.f32 %v2743, %v2744
        %2810 = vadd.xlane.f32.xlu0 %v2809
        %v2811 = vpop.xlane.xlu0 %2810
        %v2812 = vadd.f32 %v2745, %v2746
        %2813 = vadd.xlane.f32.xlu0 %v2812
        %v2814 = vpop.xlane.xlu0 %2813
        %v2815 = vadd.f32 %v2747, %v2748
        %2816 = vadd.xlane.f32.xlu0 %v2815
        %v2817 = vpop.xlane.xlu0 %2816
        %v2818 = vadd.f32 %v2749, %v2750
        %2819 = vadd.xlane.f32.xlu0 %v2818
        %v2820 = vpop.xlane.xlu0 %2819
        %v2821 = vadd.f32 %v2751, %v2752
        %2822 = vadd.xlane.f32.xlu0 %v2821
        %v2823 = vpop.xlane.xlu0 %2822
        %v2824 = vadd.f32 %v2753, %v2754
        %2825 = vadd.xlane.f32.xlu0 %v2824
        %v2826 = vpop.xlane.xlu0 %2825
        %v2827 = vadd.f32 %v2755, %v2756
        %2828 = vadd.xlane.f32.xlu0 %v2827
        %v2829 = vpop.xlane.xlu0 %2828
        %v2830 = vadd.f32 %v2757, %v2758
        %2831 = vadd.xlane.f32.xlu0 %v2830
        %v2832 = vpop.xlane.xlu0 %2831
        %v2833 = vadd.f32 %v2759, %v2760
        %2834 = vadd.xlane.f32.xlu0 %v2833
        %v2835 = vpop.xlane.xlu0 %2834
        %v2836 = vadd.f32 %v2761, %v2762
        %2837 = vadd.xlane.f32.xlu0 %v2836
        %v2838 = vpop.xlane.xlu0 %2837
        %v2839 = vadd.f32 %v2763, %v2764
        %2840 = vadd.xlane.f32.xlu0 %v2839
        %v2841 = vpop.xlane.xlu0 %2840
        %v2842 = vadd.f32 %v2765, %v2766
        %2843 = vadd.xlane.f32.xlu0 %v2842
        %v2844 = vpop.xlane.xlu0 %2843
        %v2845 = vadd.f32 %v2767, %v2768
        %2846 = vadd.xlane.f32.xlu0 %v2845
        %v2847 = vpop.xlane.xlu0 %2846
        %v2848 = vadd.f32 %v2769, %v2770
        %2849 = vadd.xlane.f32.xlu0 %v2848
        %v2850 = vpop.xlane.xlu0 %2849
        %v2851 = vadd.f32 %v2771, %v2772
        %2852 = vadd.xlane.f32.xlu0 %v2851
        %v2853 = vpop.xlane.xlu0 %2852
        %v2854 = vadd.f32 %v2773, %v2774
        %2855 = vadd.xlane.f32.xlu0 %v2854
        %v2856 = vpop.xlane.xlu0 %2855
        %v2857 = vadd.f32 %v2775, %v2776
        %2858 = vadd.xlane.f32.xlu0 %v2857
        %v2859 = vpop.xlane.xlu0 %2858
        %v2860 = vadd.f32 %v2777, %v2778
        %2861 = vadd.xlane.f32.xlu0 %v2860
        %v2862 = vpop.xlane.xlu0 %2861
        %v2863 = vadd.f32 %v2779, %v2780
        %2864 = vadd.xlane.f32.xlu0 %v2863
        %v2865 = vpop.xlane.xlu0 %2864
        %v2866 = vadd.f32 %v2781, %v2782
        %2867 = vadd.xlane.f32.xlu0 %v2866
        %v2868 = vpop.xlane.xlu0 %2867
        %v2869 = vadd.f32 %v2783, %v2784
        %2870 = vadd.xlane.f32.xlu0 %v2869
        %v2871 = vpop.xlane.xlu0 %2870
        %v2872 = vadd.f32 %v2785, %v2786
        %2873 = vadd.xlane.f32.xlu0 %v2872
        %v2874 = vpop.xlane.xlu0 %2873
        %v2875 = vadd.f32 %v2787, %v2788
        %2876 = vadd.xlane.f32.xlu0 %v2875
        %v2877 = vpop.xlane.xlu0 %2876
        %v2878 = vadd.f32 %v2789, %v2790
        %2879 = vadd.xlane.f32.xlu0 %v2878
        %v2880 = vpop.xlane.xlu0 %2879
        %v2881 = vadd.f32 %v2791, %v2792
        %2882 = vadd.xlane.f32.xlu0 %v2881
        %v2883 = vpop.xlane.xlu0 %2882
        %v2884 = vadd.f32 %v2793, %v2794
        %2885 = vadd.xlane.f32.xlu0 %v2884
        %v2886 = vpop.xlane.xlu0 %2885
        %v2887 = vadd.f32 %v2795, %v2796
        %2888 = vadd.xlane.f32.xlu0 %v2887
        %v2889 = vpop.xlane.xlu0 %2888
        %v2890 = vadd.f32 %v2797, %v2798
        %2891 = vadd.xlane.f32.xlu0 %v2890
        %v2892 = vpop.xlane.xlu0 %2891
        %v2893 = vadd.f32 %v2799, %v2800
        %2894 = vadd.xlane.f32.xlu0 %v2893
        %v2895 = vpop.xlane.xlu0 %2894
        %v2896 = vadd.f32 %v2801, %v2802
        %2897 = vadd.xlane.f32.xlu0 %v2896
        %v2898 = vpop.xlane.xlu0 %2897
        %v2899 = vadd.f32 %v2805, %v2817
        %v2900 = vadd.f32 %v2899, %v2829
        %v2901 = vadd.f32 %v2900, %v2841
        %v2902 = vadd.f32 %v2901, %v2853
        %v2903 = vadd.f32 %v2902, %v2865
        %v2904 = vadd.f32 %v2903, %v2877
        %v2905 = vadd.f32 %v2904, %v2889
        %v2906 = vadd.f32 %v2808, %v2820
        %v2907 = vadd.f32 %v2906, %v2832
        %v2908 = vadd.f32 %v2907, %v2844
        %v2909 = vadd.f32 %v2908, %v2856
        %v2910 = vadd.f32 %v2909, %v2868
        %v2911 = vadd.f32 %v2910, %v2880
        %v2912 = vadd.f32 %v2911, %v2892
        %v2913 = vadd.f32 %v2811, %v2823
        %v2914 = vadd.f32 %v2913, %v2835
        %v2915 = vadd.f32 %v2914, %v2847
        %v2916 = vadd.f32 %v2915, %v2859
        %v2917 = vadd.f32 %v2916, %v2871
        %v2918 = vadd.f32 %v2917, %v2883
        %v2919 = vadd.f32 %v2918, %v2895
        %v2920 = vadd.f32 %v2814, %v2826
        %v2921 = vadd.f32 %v2920, %v2838
        %v2922 = vadd.f32 %v2921, %v2850
        %v2923 = vadd.f32 %v2922, %v2862
        %v2924 = vadd.f32 %v2923, %v2874
        %v2925 = vadd.f32 %v2924, %v2886
        %v2926 = vadd.f32 %v2925, %v2898
        %v2932 = vunpack.c.l.s4 839922192
        %v2933 = vunpack.c.0.s8 %v2932
        %v2934 = vlaneseq
        %v2935 = vshrl.u32 %v2934, 7
        %v2936 = vsub.s32 %v2933, %v2935
        %v2937 = vrot.slane %v2717, %v2936
        %v2939 = vunpack.c.l.s4 1985246804
        %v2940 = vunpack.c.0.s8 %v2939
        %v2941 = vlaneseq
        %v2942 = vshrl.u32 %v2941, 7
        %v2943 = vsub.s32 %v2940, %v2942
        %v2944 = vrot.slane %v2717, %v2943
        %v2946 = vunpack.c.l.s4 839922192
        %v2947 = vunpack.c.0.s8 %v2946
        %v2948 = vlaneseq
        %v2949 = vshrl.u32 %v2948, 7
        %v2950 = vsub.s32 %v2947, %v2949
        %v2951 = vrot.slane %v2724, %v2950
        %v2953 = vunpack.c.l.s4 1985246804
        %v2954 = vunpack.c.0.s8 %v2953
        %v2955 = vlaneseq
        %v2956 = vshrl.u32 %v2955, 7
        %v2957 = vsub.s32 %v2954, %v2956
        %v2958 = vrot.slane %v2724, %v2957
        %v2960 = vunpack.c.l.s4 839922192
        %v2961 = vunpack.c.0.s8 %v2960
        %v2962 = vlaneseq
        %v2963 = vshrl.u32 %v2962, 7
        %v2964 = vsub.s32 %v2961, %v2963
        %v2965 = vrot.slane %v2731, %v2964
        %v2967 = vunpack.c.l.s4 1985246804
        %v2968 = vunpack.c.0.s8 %v2967
        %v2969 = vlaneseq
        %v2970 = vshrl.u32 %v2969, 7
        %v2971 = vsub.s32 %v2968, %v2970
        %v2972 = vrot.slane %v2731, %v2971
        %v2974 = vunpack.c.l.s4 839922192
        %v2975 = vunpack.c.0.s8 %v2974
        %v2976 = vlaneseq
        %v2977 = vshrl.u32 %v2976, 7
        %v2978 = vsub.s32 %v2975, %v2977
        %v2979 = vrot.slane %v2738, %v2978
        %v2981 = vunpack.c.l.s4 1985246804
        %v2982 = vunpack.c.0.s8 %v2981
        %v2983 = vlaneseq
        %v2984 = vshrl.u32 %v2983, 7
        %v2985 = vsub.s32 %v2982, %v2984
        %v2986 = vrot.slane %v2738, %v2985
        %v2995 = vsel %vm652, %v2937, 0.0
        %v2996 = vrot.slane %v2995, 4
        %v2997 = vadd.f32 %v2995, %v2996
        %v2998 = vrot.slane %v2997, 2
        %v2999 = vadd.f32 %v2997, %v2998
        %v3000 = vrot.slane %v2999, 1
        %v3001 = vadd.f32 %v2999, %v3000
        %v3002 = vsel %vm652, %v2944, 0.0
        %v3003 = vrot.slane %v3002, 4
        %v3004 = vadd.f32 %v3002, %v3003
        %v3005 = vrot.slane %v3004, 2
        %v3006 = vadd.f32 %v3004, %v3005
        %v3007 = vrot.slane %v3006, 1
        %v3008 = vadd.f32 %v3006, %v3007
        %v3009 = vsel %vm652, %v2951, 0.0
        %v3010 = vrot.slane %v3009, 4
        %v3011 = vadd.f32 %v3009, %v3010
        %v3012 = vrot.slane %v3011, 2
        %v3013 = vadd.f32 %v3011, %v3012
        %v3014 = vrot.slane %v3013, 1
        %v3015 = vadd.f32 %v3013, %v3014
        %v3016 = vsel %vm652, %v2958, 0.0
        %v3017 = vrot.slane %v3016, 4
        %v3018 = vadd.f32 %v3016, %v3017
        %v3019 = vrot.slane %v3018, 2
        %v3020 = vadd.f32 %v3018, %v3019
        %v3021 = vrot.slane %v3020, 1
        %v3022 = vadd.f32 %v3020, %v3021
        %v3023 = vsel %vm652, %v2965, 0.0
        %v3024 = vrot.slane %v3023, 4
        %v3025 = vadd.f32 %v3023, %v3024
        %v3026 = vrot.slane %v3025, 2
        %v3027 = vadd.f32 %v3025, %v3026
        %v3028 = vrot.slane %v3027, 1
        %v3029 = vadd.f32 %v3027, %v3028
        %v3030 = vsel %vm652, %v2972, 0.0
        %v3031 = vrot.slane %v3030, 4
        %v3032 = vadd.f32 %v3030, %v3031
        %v3033 = vrot.slane %v3032, 2
        %v3034 = vadd.f32 %v3032, %v3033
        %v3035 = vrot.slane %v3034, 1
        %v3036 = vadd.f32 %v3034, %v3035
        %v3037 = vsel %vm652, %v2979, 0.0
        %v3038 = vrot.slane %v3037, 4
        %v3039 = vadd.f32 %v3037, %v3038
        %v3040 = vrot.slane %v3039, 2
        %v3041 = vadd.f32 %v3039, %v3040
        %v3042 = vrot.slane %v3041, 1
        %v3043 = vadd.f32 %v3041, %v3042
        %v3044 = vsel %vm652, %v2986, 0.0
        %v3045 = vrot.slane %v3044, 4
        %v3046 = vadd.f32 %v3044, %v3045
        %v3047 = vrot.slane %v3046, 2
        %v3048 = vadd.f32 %v3046, %v3047
        %v3049 = vrot.slane %v3048, 1
        %v3050 = vadd.f32 %v3048, %v3049
        %v3056 = vunpack.c.l.s4 839922192
        %v3057 = vunpack.c.0.s8 %v3056
        %v3058 = vlaneseq
        %v3059 = vshrl.u32 %v3058, 7
        %v3060 = vsub.s32 %v3057, %v3059
        %v3061 = vrot.slane %v2905, %v3060
        %v3063 = vunpack.c.l.s4 1985246804
        %v3064 = vunpack.c.0.s8 %v3063
        %v3065 = vlaneseq
        %v3066 = vshrl.u32 %v3065, 7
        %v3067 = vsub.s32 %v3064, %v3066
        %v3068 = vrot.slane %v2905, %v3067
        %v3070 = vunpack.c.l.s4 839922192
        %v3071 = vunpack.c.0.s8 %v3070
        %v3072 = vlaneseq
        %v3073 = vshrl.u32 %v3072, 7
        %v3074 = vsub.s32 %v3071, %v3073
        %v3075 = vrot.slane %v2912, %v3074
        %v3077 = vunpack.c.l.s4 1985246804
        %v3078 = vunpack.c.0.s8 %v3077
        %v3079 = vlaneseq
        %v3080 = vshrl.u32 %v3079, 7
        %v3081 = vsub.s32 %v3078, %v3080
        %v3082 = vrot.slane %v2912, %v3081
        %v3084 = vunpack.c.l.s4 839922192
        %v3085 = vunpack.c.0.s8 %v3084
        %v3086 = vlaneseq
        %v3087 = vshrl.u32 %v3086, 7
        %v3088 = vsub.s32 %v3085, %v3087
        %v3089 = vrot.slane %v2919, %v3088
        %v3091 = vunpack.c.l.s4 1985246804
        %v3092 = vunpack.c.0.s8 %v3091
        %v3093 = vlaneseq
        %v3094 = vshrl.u32 %v3093, 7
        %v3095 = vsub.s32 %v3092, %v3094
        %v3096 = vrot.slane %v2919, %v3095
        %v3098 = vunpack.c.l.s4 839922192
        %v3099 = vunpack.c.0.s8 %v3098
        %v3100 = vlaneseq
        %v3101 = vshrl.u32 %v3100, 7
        %v3102 = vsub.s32 %v3099, %v3101
        %v3103 = vrot.slane %v2926, %v3102
        %v3105 = vunpack.c.l.s4 1985246804
        %v3106 = vunpack.c.0.s8 %v3105
        %v3107 = vlaneseq
        %v3108 = vshrl.u32 %v3107, 7
        %v3109 = vsub.s32 %v3106, %v3108
        %v3110 = vrot.slane %v2926, %v3109
        %v3119 = vsel %vm652, %v3061, 0.0
        %v3120 = vrot.slane %v3119, 4
        %v3121 = vadd.f32 %v3119, %v3120
        %v3122 = vrot.slane %v3121, 2
        %v3123 = vadd.f32 %v3121, %v3122
        %v3124 = vrot.slane %v3123, 1
        %v3125 = vadd.f32 %v3123, %v3124
        %v3126 = vsel %vm652, %v3068, 0.0
        %v3127 = vrot.slane %v3126, 4
        %v3128 = vadd.f32 %v3126, %v3127
        %v3129 = vrot.slane %v3128, 2
        %v3130 = vadd.f32 %v3128, %v3129
        %v3131 = vrot.slane %v3130, 1
        %v3132 = vadd.f32 %v3130, %v3131
        %v3133 = vsel %vm652, %v3075, 0.0
        %v3134 = vrot.slane %v3133, 4
        %v3135 = vadd.f32 %v3133, %v3134
        %v3136 = vrot.slane %v3135, 2
        %v3137 = vadd.f32 %v3135, %v3136
        %v3138 = vrot.slane %v3137, 1
        %v3139 = vadd.f32 %v3137, %v3138
        %v3140 = vsel %vm652, %v3082, 0.0
        %v3141 = vrot.slane %v3140, 4
        %v3142 = vadd.f32 %v3140, %v3141
        %v3143 = vrot.slane %v3142, 2
        %v3144 = vadd.f32 %v3142, %v3143
        %v3145 = vrot.slane %v3144, 1
        %v3146 = vadd.f32 %v3144, %v3145
        %v3147 = vsel %vm652, %v3089, 0.0
        %v3148 = vrot.slane %v3147, 4
        %v3149 = vadd.f32 %v3147, %v3148
        %v3150 = vrot.slane %v3149, 2
        %v3151 = vadd.f32 %v3149, %v3150
        %v3152 = vrot.slane %v3151, 1
        %v3153 = vadd.f32 %v3151, %v3152
        %v3154 = vsel %vm652, %v3096, 0.0
        %v3155 = vrot.slane %v3154, 4
        %v3156 = vadd.f32 %v3154, %v3155
        %v3157 = vrot.slane %v3156, 2
        %v3158 = vadd.f32 %v3156, %v3157
        %v3159 = vrot.slane %v3158, 1
        %v3160 = vadd.f32 %v3158, %v3159
        %v3161 = vsel %vm652, %v3103, 0.0
        %v3162 = vrot.slane %v3161, 4
        %v3163 = vadd.f32 %v3161, %v3162
        %v3164 = vrot.slane %v3163, 2
        %v3165 = vadd.f32 %v3163, %v3164
        %v3166 = vrot.slane %v3165, 1
        %v3167 = vadd.f32 %v3165, %v3166
        %v3168 = vsel %vm652, %v3110, 0.0
        %v3169 = vrot.slane %v3168, 4
        %v3170 = vadd.f32 %v3168, %v3169
        %v3171 = vrot.slane %v3170, 2
        %v3172 = vadd.f32 %v3170, %v3171
        %v3173 = vrot.slane %v3172, 1
        %v3174 = vadd.f32 %v3172, %v3173
        %v3175 = vmul.f32 %v3001, 0.00012207031
        %v3176 = vmul.f32 %v3008, 0.00012207031
        %v3177 = vmul.f32 %v3015, 0.00012207031
        %v3178 = vmul.f32 %v3022, 0.00012207031
        %v3179 = vmul.f32 %v3029, 0.00012207031
        %v3180 = vmul.f32 %v3036, 0.00012207031
        %v3181 = vmul.f32 %v3043, 0.00012207031
        %v3182 = vmul.f32 %v3050, 0.00012207031
        %v3183 = vmul.f32 %v3125, 0.00012207031
        %v3184 = vmul.f32 %v3132, 0.00012207031
        %v3185 = vmul.f32 %v3139, 0.00012207031
        %v3186 = vmul.f32 %v3146, 0.00012207031
        %v3187 = vmul.f32 %v3153, 0.00012207031
        %v3188 = vmul.f32 %v3160, 0.00012207031
        %v3189 = vmul.f32 %v3167, 0.00012207031
        %v3190 = vmul.f32 %v3174, 0.00012207031
        %v3191 = vmul.f32 %v3175, %v3175
        %v3192 = vmul.f32 %v3176, %v3176
        %v3193 = vmul.f32 %v3177, %v3177
        %v3194 = vmul.f32 %v3178, %v3178
        %v3195 = vmul.f32 %v3179, %v3179
        %v3196 = vmul.f32 %v3180, %v3180
        %v3197 = vmul.f32 %v3181, %v3181
        %v3198 = vmul.f32 %v3182, %v3182
        %v3199 = vsub.f32 %v3183, %v3191
        %v3200 = vsub.f32 %v3184, %v3192
        %v3201 = vsub.f32 %v3185, %v3193
        %v3202 = vsub.f32 %v3186, %v3194
        %v3203 = vsub.f32 %v3187, %v3195
        %v3204 = vsub.f32 %v3188, %v3196
        %v3205 = vsub.f32 %v3189, %v3197
        %v3206 = vsub.f32 %v3190, %v3198
        %v3207 = vadd.f32 %v3199, 1e-05
        %v3208 = vadd.f32 %v3200, 1e-05
        %v3209 = vadd.f32 %v3201, 1e-05
        %v3210 = vadd.f32 %v3202, 1e-05
        %v3211 = vadd.f32 %v3203, 1e-05
        %v3212 = vadd.f32 %v3204, 1e-05
        %v3213 = vadd.f32 %v3205, 1e-05
        %v3214 = vadd.f32 %v3206, 1e-05
        %v3215 = vrsqrt.pop %v3207
        %v3216 = vrsqrt.pop %v3208
        %v3217 = vrsqrt.pop %v3209
        %v3218 = vrsqrt.pop %v3210
        %v3219 = vrsqrt.pop %v3211
        %v3220 = vrsqrt.pop %v3212
        %v3221 = vrsqrt.pop %v3213
        %v3222 = vrsqrt.pop %v3214
        %v3223 = vcombine.high %v1777, %v1777
        %v3224 = vcombine.high %v1778, %v1778
        %v3225 = vcombine.high %v1779, %v1779
        %v3226 = vcombine.high %v1780, %v1780
        %v3231 = vmul.f32 %v3215, %v1777
        %v3232 = vmul.f32 %v3216, %v3223
        %v3233 = vmul.f32 %v3217, %v1778
        %v3234 = vmul.f32 %v3218, %v3224
        %v3235 = vmul.f32 %v3219, %v1779
        %v3236 = vmul.f32 %v3220, %v3225
        %v3237 = vmul.f32 %v3221, %v1780
        %v3238 = vmul.f32 %v3222, %v3226
        %v3239 = vmul.f32 %v3175, %v3215
        %v3240 = vmul.f32 %v3176, %v3216
        %v3241 = vmul.f32 %v3177, %v3217
        %v3242 = vmul.f32 %v3178, %v3218
        %v3243 = vmul.f32 %v3179, %v3219
        %v3244 = vmul.f32 %v3180, %v3220
        %v3245 = vmul.f32 %v3181, %v3221
        %v3246 = vmul.f32 %v3182, %v3222
        %v3247 = vmul.f32 %v3239, %v1777
        %v3248 = vmul.f32 %v3240, %v3223
        %v3249 = vmul.f32 %v3241, %v1778
        %v3250 = vmul.f32 %v3242, %v3224
        %v3251 = vmul.f32 %v3243, %v1779
        %v3252 = vmul.f32 %v3244, %v3225
        %v3253 = vmul.f32 %v3245, %v1780
        %v3254 = vmul.f32 %v3246, %v3226
        %3263 = vrot.lane.b32.xlu0 %v3247, 1
        %v3264 = vpop.permute.xlu0 %3263
        %3265 = vrot.lane.b32.xlu0 %v3248, 1
        %v3266 = vpop.permute.xlu0 %3265
        %3267 = vrot.lane.b32.xlu0 %v3249, 1
        %v3268 = vpop.permute.xlu0 %3267
        %3269 = vrot.lane.b32.xlu0 %v3250, 1
        %v3270 = vpop.permute.xlu0 %3269
        %3271 = vrot.lane.b32.xlu0 %v3251, 1
        %v3272 = vpop.permute.xlu0 %3271
        %3273 = vrot.lane.b32.xlu0 %v3252, 1
        %v3274 = vpop.permute.xlu0 %3273
        %3275 = vrot.lane.b32.xlu0 %v3253, 1
        %v3276 = vpop.permute.xlu0 %3275
        %3277 = vrot.lane.b32.xlu0 %v3254, 1
        %v3278 = vpop.permute.xlu0 %3277
        %v3287 = vsub.f32 %v1777, %v3264
        %v3288 = vsub.f32 %v3223, %v3266
        %v3289 = vsub.f32 %v1778, %v3268
        %v3290 = vsub.f32 %v3224, %v3270
        %v3291 = vsub.f32 %v1779, %v3272
        %v3292 = vsub.f32 %v3225, %v3274
        %v3293 = vsub.f32 %v1780, %v3276
        %v3294 = vsub.f32 %v3226, %v3278
        %3296 = vset.pattern.permute.xlu0 3
        %3297 = vperm.xlu0 %3296, %v3231
        %v3298 = vpop.permute.xlu0 %3297
        %v3301 = vunpack.c.l.s4 839922192
        %v3302 = vunpack.c.0.s8 %v3301
        %v3303 = vlaneseq
        %v3304 = vshrl.u32 %v3303, 7
        %v3305 = vsub.s32 %v3302, %v3304
        %v3306 = vrot.slane %v3298, %v3305
        %3308 = vset.pattern.permute.xlu0 3
        %3309 = vperm.xlu0 %3308, %v3232
        %v3310 = vpop.permute.xlu0 %3309
        %v3313 = vunpack.c.l.s4 839922192
        %v3314 = vunpack.c.0.s8 %v3313
        %v3315 = vlaneseq
        %v3316 = vshrl.u32 %v3315, 7
        %v3317 = vsub.s32 %v3314, %v3316
        %v3318 = vrot.slane %v3310, %v3317
        %3320 = vset.pattern.permute.xlu0 3
        %3321 = vperm.xlu0 %3320, %v3233
        %v3322 = vpop.permute.xlu0 %3321
        %v3325 = vunpack.c.l.s4 839922192
        %v3326 = vunpack.c.0.s8 %v3325
        %v3327 = vlaneseq
        %v3328 = vshrl.u32 %v3327, 7
        %v3329 = vsub.s32 %v3326, %v3328
        %v3330 = vrot.slane %v3322, %v3329
        %3332 = vset.pattern.permute.xlu0 3
        %3333 = vperm.xlu0 %3332, %v3234
        %v3334 = vpop.permute.xlu0 %3333
        %v3337 = vunpack.c.l.s4 839922192
        %v3338 = vunpack.c.0.s8 %v3337
        %v3339 = vlaneseq
        %v3340 = vshrl.u32 %v3339, 7
        %v3341 = vsub.s32 %v3338, %v3340
        %v3342 = vrot.slane %v3334, %v3341
        %3344 = vset.pattern.permute.xlu0 3
        %3345 = vperm.xlu0 %3344, %v3235
        %v3346 = vpop.permute.xlu0 %3345
        %v3349 = vunpack.c.l.s4 839922192
        %v3350 = vunpack.c.0.s8 %v3349
        %v3351 = vlaneseq
        %v3352 = vshrl.u32 %v3351, 7
        %v3353 = vsub.s32 %v3350, %v3352
        %v3354 = vrot.slane %v3346, %v3353
        %3356 = vset.pattern.permute.xlu0 3
        %3357 = vperm.xlu0 %3356, %v3236
        %v3358 = vpop.permute.xlu0 %3357
        %v3361 = vunpack.c.l.s4 839922192
        %v3362 = vunpack.c.0.s8 %v3361
        %v3363 = vlaneseq
        %v3364 = vshrl.u32 %v3363, 7
        %v3365 = vsub.s32 %v3362, %v3364
        %v3366 = vrot.slane %v3358, %v3365
        %3368 = vset.pattern.permute.xlu0 3
        %3369 = vperm.xlu0 %3368, %v3237
        %v3370 = vpop.permute.xlu0 %3369
        %v3373 = vunpack.c.l.s4 839922192
        %v3374 = vunpack.c.0.s8 %v3373
        %v3375 = vlaneseq
        %v3376 = vshrl.u32 %v3375, 7
        %v3377 = vsub.s32 %v3374, %v3376
        %v3378 = vrot.slane %v3370, %v3377
        %3380 = vset.pattern.permute.xlu0 3
        %3381 = vperm.xlu0 %3380, %v3238
        %v3382 = vpop.permute.xlu0 %3381
        %v3385 = vunpack.c.l.s4 839922192
        %v3386 = vunpack.c.0.s8 %v3385
        %v3387 = vlaneseq
        %v3388 = vshrl.u32 %v3387, 7
        %v3389 = vsub.s32 %v3386, %v3388
        %v3390 = vrot.slane %v3382, %v3389
        %v3399 = vcombine.low %v3306, %v3318
        %v3400 = vcombine.high %v3306, %v3318
        %v3401 = vcombine.low %v3330, %v3342
        %v3402 = vcombine.high %v3330, %v3342
        %v3403 = vcombine.low %v3354, %v3366
        %v3404 = vcombine.high %v3354, %v3366
        %v3405 = vcombine.low %v3378, %v3390
        %v3406 = vcombine.high %v3378, %v3390
        %v3415 = vmul.f32 %v2551, %v3399
        %v3416 = vmul.f32 %v2552, %v3400
        %v3417 = vmul.f32 %v2553, %v3401
        %v3418 = vmul.f32 %v2554, %v3402
        %v3419 = vmul.f32 %v2555, %v3403
        %v3420 = vmul.f32 %v2556, %v3404
        %v3421 = vmul.f32 %v2557, %v3405
        %v3422 = vmul.f32 %v2558, %v3406
        %v3423 = vmul.f32 %v2559, %v3399
        %v3424 = vmul.f32 %v2560, %v3400
        %v3425 = vmul.f32 %v2561, %v3401
        %v3426 = vmul.f32 %v2562, %v3402
        %v3427 = vmul.f32 %v2563, %v3403
        %v3428 = vmul.f32 %v2564, %v3404
        %v3429 = vmul.f32 %v2565, %v3405
        %v3430 = vmul.f32 %v2566, %v3406
        %v3431 = vmul.f32 %v2567, %v3399
        %v3432 = vmul.f32 %v2568, %v3400
        %v3433 = vmul.f32 %v2569, %v3401
        %v3434 = vmul.f32 %v2570, %v3402
        %v3435 = vmul.f32 %v2571, %v3403
        %v3436 = vmul.f32 %v2572, %v3404
        %v3437 = vmul.f32 %v2573, %v3405
        %v3438 = vmul.f32 %v2574, %v3406
        %v3439 = vmul.f32 %v2575, %v3399
        %v3440 = vmul.f32 %v2576, %v3400
        %v3441 = vmul.f32 %v2577, %v3401
        %v3442 = vmul.f32 %v2578, %v3402
        %v3443 = vmul.f32 %v2579, %v3403
        %v3444 = vmul.f32 %v2580, %v3404
        %v3445 = vmul.f32 %v2581, %v3405
        %v3446 = vmul.f32 %v2582, %v3406
        %v3447 = vmul.f32 %v2583, %v3399
        %v3448 = vmul.f32 %v2584, %v3400
        %v3449 = vmul.f32 %v2585, %v3401
        %v3450 = vmul.f32 %v2586, %v3402
        %v3451 = vmul.f32 %v2587, %v3403
        %v3452 = vmul.f32 %v2588, %v3404
        %v3453 = vmul.f32 %v2589, %v3405
        %v3454 = vmul.f32 %v2590, %v3406
        %v3455 = vmul.f32 %v2591, %v3399
        %v3456 = vmul.f32 %v2592, %v3400
        %v3457 = vmul.f32 %v2593, %v3401
        %v3458 = vmul.f32 %v2594, %v3402
        %v3459 = vmul.f32 %v2595, %v3403
        %v3460 = vmul.f32 %v2596, %v3404
        %v3461 = vmul.f32 %v2597, %v3405
        %v3462 = vmul.f32 %v2598, %v3406
        %v3463 = vmul.f32 %v2599, %v3399
        %v3464 = vmul.f32 %v2600, %v3400
        %v3465 = vmul.f32 %v2601, %v3401
        %v3466 = vmul.f32 %v2602, %v3402
        %v3467 = vmul.f32 %v2603, %v3403
        %v3468 = vmul.f32 %v2604, %v3404
        %v3469 = vmul.f32 %v2605, %v3405
        %v3470 = vmul.f32 %v2606, %v3406
        %v3471 = vmul.f32 %v2607, %v3399
        %v3472 = vmul.f32 %v2608, %v3400
        %v3473 = vmul.f32 %v2609, %v3401
        %v3474 = vmul.f32 %v2610, %v3402
        %v3475 = vmul.f32 %v2611, %v3403
        %v3476 = vmul.f32 %v2612, %v3404
        %v3477 = vmul.f32 %v2613, %v3405
        %v3478 = vmul.f32 %v2614, %v3406
        %3480 = vset.pattern.permute.xlu0 4
        %3481 = vperm.xlu0 %3480, %v3287
        %v3482 = vpop.permute.xlu0 %3481
        %v3485 = vunpack.c.l.s4 839922192
        %v3486 = vunpack.c.0.s8 %v3485
        %v3487 = vlaneseq
        %v3488 = vshrl.u32 %v3487, 7
        %v3489 = vsub.s32 %v3486, %v3488
        %v3490 = vrot.slane %v3482, %v3489
        %3492 = vset.pattern.permute.xlu0 4
        %3493 = vperm.xlu0 %3492, %v3288
        %v3494 = vpop.permute.xlu0 %3493
        %v3497 = vunpack.c.l.s4 839922192
        %v3498 = vunpack.c.0.s8 %v3497
        %v3499 = vlaneseq
        %v3500 = vshrl.u32 %v3499, 7
        %v3501 = vsub.s32 %v3498, %v3500
        %v3502 = vrot.slane %v3494, %v3501
        %3504 = vset.pattern.permute.xlu0 4
        %3505 = vperm.xlu0 %3504, %v3289
        %v3506 = vpop.permute.xlu0 %3505
        %v3509 = vunpack.c.l.s4 839922192
        %v3510 = vunpack.c.0.s8 %v3509
        %v3511 = vlaneseq
        %v3512 = vshrl.u32 %v3511, 7
        %v3513 = vsub.s32 %v3510, %v3512
        %v3514 = vrot.slane %v3506, %v3513
        %3516 = vset.pattern.permute.xlu0 4
        %3517 = vperm.xlu0 %3516, %v3290
        %v3518 = vpop.permute.xlu0 %3517
        %v3521 = vunpack.c.l.s4 839922192
        %v3522 = vunpack.c.0.s8 %v3521
        %v3523 = vlaneseq
        %v3524 = vshrl.u32 %v3523, 7
        %v3525 = vsub.s32 %v3522, %v3524
        %v3526 = vrot.slane %v3518, %v3525
        %3528 = vset.pattern.permute.xlu0 4
        %3529 = vperm.xlu0 %3528, %v3291
        %v3530 = vpop.permute.xlu0 %3529
        %v3533 = vunpack.c.l.s4 839922192
        %v3534 = vunpack.c.0.s8 %v3533
        %v3535 = vlaneseq
        %v3536 = vshrl.u32 %v3535, 7
        %v3537 = vsub.s32 %v3534, %v3536
        %v3538 = vrot.slane %v3530, %v3537
        %3540 = vset.pattern.permute.xlu0 4
        %3541 = vperm.xlu0 %3540, %v3292
        %v3542 = vpop.permute.xlu0 %3541
        %v3545 = vunpack.c.l.s4 839922192
        %v3546 = vunpack.c.0.s8 %v3545
        %v3547 = vlaneseq
        %v3548 = vshrl.u32 %v3547, 7
        %v3549 = vsub.s32 %v3546, %v3548
        %v3550 = vrot.slane %v3542, %v3549
        %3552 = vset.pattern.permute.xlu0 4
        %3553 = vperm.xlu0 %3552, %v3293
        %v3554 = vpop.permute.xlu0 %3553
        %v3557 = vunpack.c.l.s4 839922192
        %v3558 = vunpack.c.0.s8 %v3557
        %v3559 = vlaneseq
        %v3560 = vshrl.u32 %v3559, 7
        %v3561 = vsub.s32 %v3558, %v3560
        %v3562 = vrot.slane %v3554, %v3561
        %3564 = vset.pattern.permute.xlu0 4
        %3565 = vperm.xlu0 %3564, %v3294
        %v3566 = vpop.permute.xlu0 %3565
        %v3569 = vunpack.c.l.s4 839922192
        %v3570 = vunpack.c.0.s8 %v3569
        %v3571 = vlaneseq
        %v3572 = vshrl.u32 %v3571, 7
        %v3573 = vsub.s32 %v3570, %v3572
        %v3574 = vrot.slane %v3566, %v3573
        %v3583 = vcombine.low %v3490, %v3502
        %v3584 = vcombine.high %v3490, %v3502
        %v3585 = vcombine.low %v3514, %v3526
        %v3586 = vcombine.high %v3514, %v3526
        %v3587 = vcombine.low %v3538, %v3550
        %v3588 = vcombine.high %v3538, %v3550
        %v3589 = vcombine.low %v3562, %v3574
        %v3590 = vcombine.high %v3562, %v3574
        %v3599 = vadd.f32 %v3415, %v3583
        %v3600 = vadd.f32 %v3416, %v3584
        %v3601 = vadd.f32 %v3417, %v3585
        %v3602 = vadd.f32 %v3418, %v3586
        %v3603 = vadd.f32 %v3419, %v3587
        %v3604 = vadd.f32 %v3420, %v3588
        %v3605 = vadd.f32 %v3421, %v3589
        %v3606 = vadd.f32 %v3422, %v3590
        %v3607 = vadd.f32 %v3423, %v3583
        %v3608 = vadd.f32 %v3424, %v3584
        %v3609 = vadd.f32 %v3425, %v3585
        %v3610 = vadd.f32 %v3426, %v3586
        %v3611 = vadd.f32 %v3427, %v3587
        %v3612 = vadd.f32 %v3428, %v3588
        %v3613 = vadd.f32 %v3429, %v3589
        %v3614 = vadd.f32 %v3430, %v3590
        %v3615 = vadd.f32 %v3431, %v3583
        %v3616 = vadd.f32 %v3432, %v3584
        %v3617 = vadd.f32 %v3433, %v3585
        %v3618 = vadd.f32 %v3434, %v3586
        %v3619 = vadd.f32 %v3435, %v3587
        %v3620 = vadd.f32 %v3436, %v3588
        %v3621 = vadd.f32 %v3437, %v3589
        %v3622 = vadd.f32 %v3438, %v3590
        %v3623 = vadd.f32 %v3439, %v3583
        %v3624 = vadd.f32 %v3440, %v3584
        %v3625 = vadd.f32 %v3441, %v3585
        %v3626 = vadd.f32 %v3442, %v3586
        %v3627 = vadd.f32 %v3443, %v3587
        %v3628 = vadd.f32 %v3444, %v3588
        %v3629 = vadd.f32 %v3445, %v3589
        %v3630 = vadd.f32 %v3446, %v3590
        %v3631 = vadd.f32 %v3447, %v3583
        %v3632 = vadd.f32 %v3448, %v3584
        %v3633 = vadd.f32 %v3449, %v3585
        %v3634 = vadd.f32 %v3450, %v3586
        %v3635 = vadd.f32 %v3451, %v3587
        %v3636 = vadd.f32 %v3452, %v3588
        %v3637 = vadd.f32 %v3453, %v3589
        %v3638 = vadd.f32 %v3454, %v3590
        %v3639 = vadd.f32 %v3455, %v3583
        %v3640 = vadd.f32 %v3456, %v3584
        %v3641 = vadd.f32 %v3457, %v3585
        %v3642 = vadd.f32 %v3458, %v3586
        %v3643 = vadd.f32 %v3459, %v3587
        %v3644 = vadd.f32 %v3460, %v3588
        %v3645 = vadd.f32 %v3461, %v3589
        %v3646 = vadd.f32 %v3462, %v3590
        %v3647 = vadd.f32 %v3463, %v3583
        %v3648 = vadd.f32 %v3464, %v3584
        %v3649 = vadd.f32 %v3465, %v3585
        %v3650 = vadd.f32 %v3466, %v3586
        %v3651 = vadd.f32 %v3467, %v3587
        %v3652 = vadd.f32 %v3468, %v3588
        %v3653 = vadd.f32 %v3469, %v3589
        %v3654 = vadd.f32 %v3470, %v3590
        %v3655 = vadd.f32 %v3471, %v3583
        %v3656 = vadd.f32 %v3472, %v3584
        %v3657 = vadd.f32 %v3473, %v3585
        %v3658 = vadd.f32 %v3474, %v3586
        %v3659 = vadd.f32 %v3475, %v3587
        %v3660 = vadd.f32 %v3476, %v3588
        %v3661 = vadd.f32 %v3477, %v3589
        %v3662 = vadd.f32 %v3478, %v3590
        %v3663 = vxor.u32 %v3599, 2147483648
        %v3664 = vxor.u32 %v3600, 2147483648
        %v3665 = vxor.u32 %v3601, 2147483648
        %v3666 = vxor.u32 %v3602, 2147483648
        %v3667 = vxor.u32 %v3603, 2147483648
        %v3668 = vxor.u32 %v3604, 2147483648
        %v3669 = vxor.u32 %v3605, 2147483648
        %v3670 = vxor.u32 %v3606, 2147483648
        %v3671 = vxor.u32 %v3607, 2147483648
        %v3672 = vxor.u32 %v3608, 2147483648
        %v3673 = vxor.u32 %v3609, 2147483648
        %v3674 = vxor.u32 %v3610, 2147483648
        %v3675 = vxor.u32 %v3611, 2147483648
        %v3676 = vxor.u32 %v3612, 2147483648
        %v3677 = vxor.u32 %v3613, 2147483648
        %v3678 = vxor.u32 %v3614, 2147483648
        %v3679 = vxor.u32 %v3615, 2147483648
        %v3680 = vxor.u32 %v3616, 2147483648
        %v3681 = vxor.u32 %v3617, 2147483648
        %v3682 = vxor.u32 %v3618, 2147483648
        %v3683 = vxor.u32 %v3619, 2147483648
        %v3684 = vxor.u32 %v3620, 2147483648
        %v3685 = vxor.u32 %v3621, 2147483648
        %v3686 = vxor.u32 %v3622, 2147483648
        %v3687 = vxor.u32 %v3623, 2147483648
        %v3688 = vxor.u32 %v3624, 2147483648
        %v3689 = vxor.u32 %v3625, 2147483648
        %v3690 = vxor.u32 %v3626, 2147483648
        %v3691 = vxor.u32 %v3627, 2147483648
        %v3692 = vxor.u32 %v3628, 2147483648
        %v3693 = vxor.u32 %v3629, 2147483648
        %v3694 = vxor.u32 %v3630, 2147483648
        %v3695 = vxor.u32 %v3631, 2147483648
        %v3696 = vxor.u32 %v3632, 2147483648
        %v3697 = vxor.u32 %v3633, 2147483648
        %v3698 = vxor.u32 %v3634, 2147483648
        %v3699 = vxor.u32 %v3635, 2147483648
        %v3700 = vxor.u32 %v3636, 2147483648
        %v3701 = vxor.u32 %v3637, 2147483648
        %v3702 = vxor.u32 %v3638, 2147483648
        %v3703 = vxor.u32 %v3639, 2147483648
        %v3704 = vxor.u32 %v3640, 2147483648
        %v3705 = vxor.u32 %v3641, 2147483648
        %v3706 = vxor.u32 %v3642, 2147483648
        %v3707 = vxor.u32 %v3643, 2147483648
        %v3708 = vxor.u32 %v3644, 2147483648
        %v3709 = vxor.u32 %v3645, 2147483648
        %v3710 = vxor.u32 %v3646, 2147483648
        %v3711 = vxor.u32 %v3647, 2147483648
        %v3712 = vxor.u32 %v3648, 2147483648
        %v3713 = vxor.u32 %v3649, 2147483648
        %v3714 = vxor.u32 %v3650, 2147483648
        %v3715 = vxor.u32 %v3651, 2147483648
        %v3716 = vxor.u32 %v3652, 2147483648
        %v3717 = vxor.u32 %v3653, 2147483648
        %v3718 = vxor.u32 %v3654, 2147483648
        %v3719 = vxor.u32 %v3655, 2147483648
        %v3720 = vxor.u32 %v3656, 2147483648
        %v3721 = vxor.u32 %v3657, 2147483648
        %v3722 = vxor.u32 %v3658, 2147483648
        %v3723 = vxor.u32 %v3659, 2147483648
        %v3724 = vxor.u32 %v3660, 2147483648
        %v3725 = vxor.u32 %v3661, 2147483648
        %v3726 = vxor.u32 %v3662, 2147483648
        %v3727 = vmul.f32 %v3663, 1.442695
        %v3728 = vpow.pop %v3727
        %v3729 = vmul.f32 %v3664, 1.442695
        %v3730 = vpow.pop %v3729
        %v3731 = vmul.f32 %v3665, 1.442695
        %v3732 = vpow.pop %v3731
        %v3733 = vmul.f32 %v3666, 1.442695
        %v3734 = vpow.pop %v3733
        %v3735 = vmul.f32 %v3667, 1.442695
        %v3736 = vpow.pop %v3735
        %v3737 = vmul.f32 %v3668, 1.442695
        %v3738 = vpow.pop %v3737
        %v3739 = vmul.f32 %v3669, 1.442695
        %v3740 = vpow.pop %v3739
        %v3741 = vmul.f32 %v3670, 1.442695
        %v3742 = vpow.pop %v3741
        %v3743 = vmul.f32 %v3671, 1.442695
        %v3744 = vpow.pop %v3743
        %v3745 = vmul.f32 %v3672, 1.442695
        %v3746 = vpow.pop %v3745
        %v3747 = vmul.f32 %v3673, 1.442695
        %v3748 = vpow.pop %v3747
        %v3749 = vmul.f32 %v3674, 1.442695
        %v3750 = vpow.pop %v3749
        %v3751 = vmul.f32 %v3675, 1.442695
        %v3752 = vpow.pop %v3751
        %v3753 = vmul.f32 %v3676, 1.442695
        %v3754 = vpow.pop %v3753
        %v3755 = vmul.f32 %v3677, 1.442695
        %v3756 = vpow.pop %v3755
        %v3757 = vmul.f32 %v3678, 1.442695
        %v3758 = vpow.pop %v3757
        %v3759 = vmul.f32 %v3679, 1.442695
        %v3760 = vpow.pop %v3759
        %v3761 = vmul.f32 %v3680, 1.442695
        %v3762 = vpow.pop %v3761
        %v3763 = vmul.f32 %v3681, 1.442695
        %v3764 = vpow.pop %v3763
        %v3765 = vmul.f32 %v3682, 1.442695
        %v3766 = vpow.pop %v3765
        %v3767 = vmul.f32 %v3683, 1.442695
        %v3768 = vpow.pop %v3767
        %v3769 = vmul.f32 %v3684, 1.442695
        %v3770 = vpow.pop %v3769
        %v3771 = vmul.f32 %v3685, 1.442695
        %v3772 = vpow.pop %v3771
        %v3773 = vmul.f32 %v3686, 1.442695
        %v3774 = vpow.pop %v3773
        %v3775 = vmul.f32 %v3687, 1.442695
        %v3776 = vpow.pop %v3775
        %v3777 = vmul.f32 %v3688, 1.442695
        %v3778 = vpow.pop %v3777
        %v3779 = vmul.f32 %v3689, 1.442695
        %v3780 = vpow.pop %v3779
        %v3781 = vmul.f32 %v3690, 1.442695
        %v3782 = vpow.pop %v3781
        %v3783 = vmul.f32 %v3691, 1.442695
        %v3784 = vpow.pop %v3783
        %v3785 = vmul.f32 %v3692, 1.442695
        %v3786 = vpow.pop %v3785
        %v3787 = vmul.f32 %v3693, 1.442695
        %v3788 = vpow.pop %v3787
        %v3789 = vmul.f32 %v3694, 1.442695
        %v3790 = vpow.pop %v3789
        %v3791 = vmul.f32 %v3695, 1.442695
        %v3792 = vpow.pop %v3791
        %v3793 = vmul.f32 %v3696, 1.442695
        %v3794 = vpow.pop %v3793
        %v3795 = vmul.f32 %v3697, 1.442695
        %v3796 = vpow.pop %v3795
        %v3797 = vmul.f32 %v3698, 1.442695
        %v3798 = vpow.pop %v3797
        %v3799 = vmul.f32 %v3699, 1.442695
        %v3800 = vpow.pop %v3799
        %v3801 = vmul.f32 %v3700, 1.442695
        %v3802 = vpow.pop %v3801
        %v3803 = vmul.f32 %v3701, 1.442695
        %v3804 = vpow.pop %v3803
        %v3805 = vmul.f32 %v3702, 1.442695
        %v3806 = vpow.pop %v3805
        %v3807 = vmul.f32 %v3703, 1.442695
        %v3808 = vpow.pop %v3807
        %v3809 = vmul.f32 %v3704, 1.442695
        %v3810 = vpow.pop %v3809
        %v3811 = vmul.f32 %v3705, 1.442695
        %v3812 = vpow.pop %v3811
        %v3813 = vmul.f32 %v3706, 1.442695
        %v3814 = vpow.pop %v3813
        %v3815 = vmul.f32 %v3707, 1.442695
        %v3816 = vpow.pop %v3815
        %v3817 = vmul.f32 %v3708, 1.442695
        %v3818 = vpow.pop %v3817
        %v3819 = vmul.f32 %v3709, 1.442695
        %v3820 = vpow.pop %v3819
        %v3821 = vmul.f32 %v3710, 1.442695
        %v3822 = vpow.pop %v3821
        %v3823 = vmul.f32 %v3711, 1.442695
        %v3824 = vpow.pop %v3823
        %v3825 = vmul.f32 %v3712, 1.442695
        %v3826 = vpow.pop %v3825
        %v3827 = vmul.f32 %v3713, 1.442695
        %v3828 = vpow.pop %v3827
        %v3829 = vmul.f32 %v3714, 1.442695
        %v3830 = vpow.pop %v3829
        %v3831 = vmul.f32 %v3715, 1.442695
        %v3832 = vpow.pop %v3831
        %v3833 = vmul.f32 %v3716, 1.442695
        %v3834 = vpow.pop %v3833
        %v3835 = vmul.f32 %v3717, 1.442695
        %v3836 = vpow.pop %v3835
        %v3837 = vmul.f32 %v3718, 1.442695
        %v3838 = vpow.pop %v3837
        %v3839 = vmul.f32 %v3719, 1.442695
        %v3840 = vpow.pop %v3839
        %v3841 = vmul.f32 %v3720, 1.442695
        %v3842 = vpow.pop %v3841
        %v3843 = vmul.f32 %v3721, 1.442695
        %v3844 = vpow.pop %v3843
        %v3845 = vmul.f32 %v3722, 1.442695
        %v3846 = vpow.pop %v3845
        %v3847 = vmul.f32 %v3723, 1.442695
        %v3848 = vpow.pop %v3847
        %v3849 = vmul.f32 %v3724, 1.442695
        %v3850 = vpow.pop %v3849
        %v3851 = vmul.f32 %v3725, 1.442695
        %v3852 = vpow.pop %v3851
        %v3853 = vmul.f32 %v3726, 1.442695
        %v3854 = vpow.pop %v3853
        %v3855 = vadd.f32 %v3728, 1.0
        %v3856 = vadd.f32 %v3730, 1.0
        %v3857 = vadd.f32 %v3732, 1.0
        %v3858 = vadd.f32 %v3734, 1.0
        %v3859 = vadd.f32 %v3736, 1.0
        %v3860 = vadd.f32 %v3738, 1.0
        %v3861 = vadd.f32 %v3740, 1.0
        %v3862 = vadd.f32 %v3742, 1.0
        %v3863 = vadd.f32 %v3744, 1.0
        %v3864 = vadd.f32 %v3746, 1.0
        %v3865 = vadd.f32 %v3748, 1.0
        %v3866 = vadd.f32 %v3750, 1.0
        %v3867 = vadd.f32 %v3752, 1.0
        %v3868 = vadd.f32 %v3754, 1.0
        %v3869 = vadd.f32 %v3756, 1.0
        %v3870 = vadd.f32 %v3758, 1.0
        %v3871 = vadd.f32 %v3760, 1.0
        %v3872 = vadd.f32 %v3762, 1.0
        %v3873 = vadd.f32 %v3764, 1.0
        %v3874 = vadd.f32 %v3766, 1.0
        %v3875 = vadd.f32 %v3768, 1.0
        %v3876 = vadd.f32 %v3770, 1.0
        %v3877 = vadd.f32 %v3772, 1.0
        %v3878 = vadd.f32 %v3774, 1.0
        %v3879 = vadd.f32 %v3776, 1.0
        %v3880 = vadd.f32 %v3778, 1.0
        %v3881 = vadd.f32 %v3780, 1.0
        %v3882 = vadd.f32 %v3782, 1.0
        %v3883 = vadd.f32 %v3784, 1.0
        %v3884 = vadd.f32 %v3786, 1.0
        %v3885 = vadd.f32 %v3788, 1.0
        %v3886 = vadd.f32 %v3790, 1.0
        %v3887 = vadd.f32 %v3792, 1.0
        %v3888 = vadd.f32 %v3794, 1.0
        %v3889 = vadd.f32 %v3796, 1.0
        %v3890 = vadd.f32 %v3798, 1.0
        %v3891 = vadd.f32 %v3800, 1.0
        %v3892 = vadd.f32 %v3802, 1.0
        %v3893 = vadd.f32 %v3804, 1.0
        %v3894 = vadd.f32 %v3806, 1.0
        %v3895 = vadd.f32 %v3808, 1.0
        %v3896 = vadd.f32 %v3810, 1.0
        %v3897 = vadd.f32 %v3812, 1.0
        %v3898 = vadd.f32 %v3814, 1.0
        %v3899 = vadd.f32 %v3816, 1.0
        %v3900 = vadd.f32 %v3818, 1.0
        %v3901 = vadd.f32 %v3820, 1.0
        %v3902 = vadd.f32 %v3822, 1.0
        %v3903 = vadd.f32 %v3824, 1.0
        %v3904 = vadd.f32 %v3826, 1.0
        %v3905 = vadd.f32 %v3828, 1.0
        %v3906 = vadd.f32 %v3830, 1.0
        %v3907 = vadd.f32 %v3832, 1.0
        %v3908 = vadd.f32 %v3834, 1.0
        %v3909 = vadd.f32 %v3836, 1.0
        %v3910 = vadd.f32 %v3838, 1.0
        %v3911 = vadd.f32 %v3840, 1.0
        %v3912 = vadd.f32 %v3842, 1.0
        %v3913 = vadd.f32 %v3844, 1.0
        %v3914 = vadd.f32 %v3846, 1.0
        %v3915 = vadd.f32 %v3848, 1.0
        %v3916 = vadd.f32 %v3850, 1.0
        %v3917 = vadd.f32 %v3852, 1.0
        %v3918 = vadd.f32 %v3854, 1.0
        %v3919 = vrcp.pop %v3855
        %v3920 = vmul.f32 1.0, %v3919
        %v3921 = vrcp.pop %v3856
        %v3922 = vmul.f32 1.0, %v3921
        %v3923 = vrcp.pop %v3857
        %v3924 = vmul.f32 1.0, %v3923
        %v3925 = vrcp.pop %v3858
        %v3926 = vmul.f32 1.0, %v3925
        %v3927 = vrcp.pop %v3859
        %v3928 = vmul.f32 1.0, %v3927
        %v3929 = vrcp.pop %v3860
        %v3930 = vmul.f32 1.0, %v3929
        %v3931 = vrcp.pop %v3861
        %v3932 = vmul.f32 1.0, %v3931
        %v3933 = vrcp.pop %v3862
        %v3934 = vmul.f32 1.0, %v3933
        %v3935 = vrcp.pop %v3863
        %v3936 = vmul.f32 1.0, %v3935
        %v3937 = vrcp.pop %v3864
        %v3938 = vmul.f32 1.0, %v3937
        %v3939 = vrcp.pop %v3865
        %v3940 = vmul.f32 1.0, %v3939
        %v3941 = vrcp.pop %v3866
        %v3942 = vmul.f32 1.0, %v3941
        %v3943 = vrcp.pop %v3867
        %v3944 = vmul.f32 1.0, %v3943
        %v3945 = vrcp.pop %v3868
        %v3946 = vmul.f32 1.0, %v3945
        %v3947 = vrcp.pop %v3869
        %v3948 = vmul.f32 1.0, %v3947
        %v3949 = vrcp.pop %v3870
        %v3950 = vmul.f32 1.0, %v3949
        %v3951 = vrcp.pop %v3871
        %v3952 = vmul.f32 1.0, %v3951
        %v3953 = vrcp.pop %v3872
        %v3954 = vmul.f32 1.0, %v3953
        %v3955 = vrcp.pop %v3873
        %v3956 = vmul.f32 1.0, %v3955
        %v3957 = vrcp.pop %v3874
        %v3958 = vmul.f32 1.0, %v3957
        %v3959 = vrcp.pop %v3875
        %v3960 = vmul.f32 1.0, %v3959
        %v3961 = vrcp.pop %v3876
        %v3962 = vmul.f32 1.0, %v3961
        %v3963 = vrcp.pop %v3877
        %v3964 = vmul.f32 1.0, %v3963
        %v3965 = vrcp.pop %v3878
        %v3966 = vmul.f32 1.0, %v3965
        %v3967 = vrcp.pop %v3879
        %v3968 = vmul.f32 1.0, %v3967
        %v3969 = vrcp.pop %v3880
        %v3970 = vmul.f32 1.0, %v3969
        %v3971 = vrcp.pop %v3881
        %v3972 = vmul.f32 1.0, %v3971
        %v3973 = vrcp.pop %v3882
        %v3974 = vmul.f32 1.0, %v3973
        %v3975 = vrcp.pop %v3883
        %v3976 = vmul.f32 1.0, %v3975
        %v3977 = vrcp.pop %v3884
        %v3978 = vmul.f32 1.0, %v3977
        %v3979 = vrcp.pop %v3885
        %v3980 = vmul.f32 1.0, %v3979
        %v3981 = vrcp.pop %v3886
        %v3982 = vmul.f32 1.0, %v3981
        %v3983 = vrcp.pop %v3887
        %v3984 = vmul.f32 1.0, %v3983
        %v3985 = vrcp.pop %v3888
        %v3986 = vmul.f32 1.0, %v3985
        %v3987 = vrcp.pop %v3889
        %v3988 = vmul.f32 1.0, %v3987
        %v3989 = vrcp.pop %v3890
        %v3990 = vmul.f32 1.0, %v3989
        %v3991 = vrcp.pop %v3891
        %v3992 = vmul.f32 1.0, %v3991
        %v3993 = vrcp.pop %v3892
        %v3994 = vmul.f32 1.0, %v3993
        %v3995 = vrcp.pop %v3893
        %v3996 = vmul.f32 1.0, %v3995
        %v3997 = vrcp.pop %v3894
        %v3998 = vmul.f32 1.0, %v3997
        %v3999 = vrcp.pop %v3895
        %v4000 = vmul.f32 1.0, %v3999
        %v4001 = vrcp.pop %v3896
        %v4002 = vmul.f32 1.0, %v4001
        %v4003 = vrcp.pop %v3897
        %v4004 = vmul.f32 1.0, %v4003
        %v4005 = vrcp.pop %v3898
        %v4006 = vmul.f32 1.0, %v4005
        %v4007 = vrcp.pop %v3899
        %v4008 = vmul.f32 1.0, %v4007
        %v4009 = vrcp.pop %v3900
        %v4010 = vmul.f32 1.0, %v4009
        %v4011 = vrcp.pop %v3901
        %v4012 = vmul.f32 1.0, %v4011
        %v4013 = vrcp.pop %v3902
        %v4014 = vmul.f32 1.0, %v4013
        %v4015 = vrcp.pop %v3903
        %v4016 = vmul.f32 1.0, %v4015
        %v4017 = vrcp.pop %v3904
        %v4018 = vmul.f32 1.0, %v4017
        %v4019 = vrcp.pop %v3905
        %v4020 = vmul.f32 1.0, %v4019
        %v4021 = vrcp.pop %v3906
        %v4022 = vmul.f32 1.0, %v4021
        %v4023 = vrcp.pop %v3907
        %v4024 = vmul.f32 1.0, %v4023
        %v4025 = vrcp.pop %v3908
        %v4026 = vmul.f32 1.0, %v4025
        %v4027 = vrcp.pop %v3909
        %v4028 = vmul.f32 1.0, %v4027
        %v4029 = vrcp.pop %v3910
        %v4030 = vmul.f32 1.0, %v4029
        %v4031 = vrcp.pop %v3911
        %v4032 = vmul.f32 1.0, %v4031
        %v4033 = vrcp.pop %v3912
        %v4034 = vmul.f32 1.0, %v4033
        %v4035 = vrcp.pop %v3913
        %v4036 = vmul.f32 1.0, %v4035
        %v4037 = vrcp.pop %v3914
        %v4038 = vmul.f32 1.0, %v4037
        %v4039 = vrcp.pop %v3915
        %v4040 = vmul.f32 1.0, %v4039
        %v4041 = vrcp.pop %v3916
        %v4042 = vmul.f32 1.0, %v4041
        %v4043 = vrcp.pop %v3917
        %v4044 = vmul.f32 1.0, %v4043
        %v4045 = vrcp.pop %v3918
        %v4046 = vmul.f32 1.0, %v4045
        %v4047 = vmul.f32 %v3599, %v3920
        %v4048 = vmul.f32 %v3600, %v3922
        %v4049 = vmul.f32 %v3601, %v3924
        %v4050 = vmul.f32 %v3602, %v3926
        %v4051 = vmul.f32 %v3603, %v3928
        %v4052 = vmul.f32 %v3604, %v3930
        %v4053 = vmul.f32 %v3605, %v3932
        %v4054 = vmul.f32 %v3606, %v3934
        %v4055 = vmul.f32 %v3607, %v3936
        %v4056 = vmul.f32 %v3608, %v3938
        %v4057 = vmul.f32 %v3609, %v3940
        %v4058 = vmul.f32 %v3610, %v3942
        %v4059 = vmul.f32 %v3611, %v3944
        %v4060 = vmul.f32 %v3612, %v3946
        %v4061 = vmul.f32 %v3613, %v3948
        %v4062 = vmul.f32 %v3614, %v3950
        %v4063 = vmul.f32 %v3615, %v3952
        %v4064 = vmul.f32 %v3616, %v3954
        %v4065 = vmul.f32 %v3617, %v3956
        %v4066 = vmul.f32 %v3618, %v3958
        %v4067 = vmul.f32 %v3619, %v3960
        %v4068 = vmul.f32 %v3620, %v3962
        %v4069 = vmul.f32 %v3621, %v3964
        %v4070 = vmul.f32 %v3622, %v3966
        %v4071 = vmul.f32 %v3623, %v3968
        %v4072 = vmul.f32 %v3624, %v3970
        %v4073 = vmul.f32 %v3625, %v3972
        %v4074 = vmul.f32 %v3626, %v3974
        %v4075 = vmul.f32 %v3627, %v3976
        %v4076 = vmul.f32 %v3628, %v3978
        %v4077 = vmul.f32 %v3629, %v3980
        %v4078 = vmul.f32 %v3630, %v3982
        %v4079 = vmul.f32 %v3631, %v3984
        %v4080 = vmul.f32 %v3632, %v3986
        %v4081 = vmul.f32 %v3633, %v3988
        %v4082 = vmul.f32 %v3634, %v3990
        %v4083 = vmul.f32 %v3635, %v3992
        %v4084 = vmul.f32 %v3636, %v3994
        %v4085 = vmul.f32 %v3637, %v3996
        %v4086 = vmul.f32 %v3638, %v3998
        %v4087 = vmul.f32 %v3639, %v4000
        %v4088 = vmul.f32 %v3640, %v4002
        %v4089 = vmul.f32 %v3641, %v4004
        %v4090 = vmul.f32 %v3642, %v4006
        %v4091 = vmul.f32 %v3643, %v4008
        %v4092 = vmul.f32 %v3644, %v4010
        %v4093 = vmul.f32 %v3645, %v4012
        %v4094 = vmul.f32 %v3646, %v4014
        %v4095 = vmul.f32 %v3647, %v4016
        %v4096 = vmul.f32 %v3648, %v4018
        %v4097 = vmul.f32 %v3649, %v4020
        %v4098 = vmul.f32 %v3650, %v4022
        %v4099 = vmul.f32 %v3651, %v4024
        %v4100 = vmul.f32 %v3652, %v4026
        %v4101 = vmul.f32 %v3653, %v4028
        %v4102 = vmul.f32 %v3654, %v4030
        %v4103 = vmul.f32 %v3655, %v4032
        %v4104 = vmul.f32 %v3656, %v4034
        %v4105 = vmul.f32 %v3657, %v4036
        %v4106 = vmul.f32 %v3658, %v4038
        %v4107 = vmul.f32 %v3659, %v4040
        %v4108 = vmul.f32 %v3660, %v4042
        %v4109 = vmul.f32 %v3661, %v4044
        %v4110 = vmul.f32 %v3662, %v4046
        %s4111 = scalar_lea.vmem [#allocation5], 32
        %v4112 = vld [vmem:[%s4111] sm:$0xff]
        %v4113 = vld [vmem:[%s4111 + $0x8] sm:$0xff]
        %v4114 = vld [vmem:[%s4111 + $0x10] sm:$0xff]
        %v4115 = vld [vmem:[%s4111 + $0x18] sm:$0xff]
        %v4116 = vld [vmem:[%s2] sm:$0xff]
        %v4117 = vld [vmem:[%s2 + $0x8] sm:$0xff]
        %v4118 = vld [vmem:[%s2 + $0x10] sm:$0xff]
        %v4119 = vld [vmem:[%s2 + $0x18] sm:$0xff]
        %4124 = vrot.lane.b32.xlu0 %v4112, 96
        %v4125 = vpop.permute.xlu0 %4124
        %4126 = vrot.lane.b32.xlu0 %v4113, 96
        %v4127 = vpop.permute.xlu0 %4126
        %4128 = vrot.lane.b32.xlu0 %v4114, 96
        %v4129 = vpop.permute.xlu0 %4128
        %4130 = vrot.lane.b32.xlu0 %v4115, 96
        %v4131 = vpop.permute.xlu0 %4130
        %v4132 = vsel %vm1793, %v4125, 0
        %v4134 = vsel %vm1793, %v4127, 0
        %v4136 = vsel %vm1793, %v4129, 0
        %v4138 = vsel %vm1793, %v4131, 0
        %4140 = vmatprep.subr.mxu0 0.0
        %4141 = vmatpush1.msra.mxu0 0.0
        %4142 = vmatprep.subr.mxu0 0.0
        %4143 = vmatpush1.msra.mxu0 0.0
        %4144 = vmatprep.subr.mxu0 0.0
        %4145 = vmatpush1.msra.mxu0 0.0
        %4146 = vmatprep.subr.mxu0 0.0
        %4147 = vmatpush1.msra.mxu0 0.0
        %4148 = vmatprep.subr.mxu0 0.0
        %4149 = vmatpush1.msra.mxu0 0.0
        %4150 = vmatprep.subr.mxu0 0.0
        %4151 = vmatpush1.msra.mxu0 0.0
        %4152 = vmatprep.subr.mxu0 0.0
        %4153 = vmatpush1.msra.mxu0 0.0
        %4154 = vmatprep.subr.mxu0 0.0
        %4155 = vmatpush1.msra.mxu0 0.0
        %4156 = vmatprep.subr.mxu0 %v4062
        %4157 = vmatpush1.msra.mxu0 %v4061
        %4158 = vmatprep.subr.mxu0 %v4060
        %4159 = vmatpush1.msra.mxu0 %v4059
        %4160 = vmatprep.subr.mxu0 %v4058
        %4161 = vmatpush1.msra.mxu0 %v4057
        %4162 = vmatprep.subr.mxu0 %v4056
        %4163 = vmatpush1.msra.mxu0 %v4055
        %4164 = vmatprep.subr.mxu0 %v4054
        %4165 = vmatpush1.msra.mxu0 %v4053
        %4166 = vmatprep.subr.mxu0 %v4052
        %4167 = vmatpush1.msra.mxu0 %v4051
        %4168 = vmatprep.subr.mxu0 %v4050
        %4169 = vmatpush1.msra.mxu0 %v4049
        %4170 = vmatprep.subr.mxu0 %v4048
        %4171 = vmatpush1.msra.mxu0 %v4047
        %4172 = vmatprep.subr.mxu0 0.0
        %4173 = vmatpush2.msra.mxu0 0.0
        %4174 = vmatprep.subr.mxu0 0.0
        %4175 = vmatpush2.msra.mxu0 0.0
        %4176 = vmatprep.subr.mxu0 0.0
        %4177 = vmatpush2.msra.mxu0 0.0
        %4178 = vmatprep.subr.mxu0 0.0
        %4179 = vmatpush2.msra.mxu0 0.0
        %4180 = vmatprep.subr.mxu0 0.0
        %4181 = vmatpush2.msra.mxu0 0.0
        %4182 = vmatprep.subr.mxu0 0.0
        %4183 = vmatpush2.msra.mxu0 0.0
        %4184 = vmatprep.subr.mxu0 0.0
        %4185 = vmatpush2.msra.mxu0 0.0
        %4186 = vmatprep.subr.mxu0 0.0
        %4187 = vmatpush2.msra.mxu0 0.0
        %4188 = vmatprep.subr.mxu0 0.0
        %4189 = vmatpush2.msra.mxu0 0.0
        %4190 = vmatprep.subr.mxu0 0.0
        %4191 = vmatpush2.msra.mxu0 0.0
        %4192 = vmatprep.subr.mxu0 0.0
        %4193 = vmatpush2.msra.mxu0 0.0
        %4194 = vmatprep.subr.mxu0 0.0
        %4195 = vmatpush2.msra.mxu0 0.0
        %4196 = vmatprep.subr.mxu0 0.0
        %4197 = vmatpush2.msra.mxu0 0.0
        %4198 = vmatprep.subr.mxu0 0.0
        %4199 = vmatpush2.msra.mxu0 0.0
        %4200 = vmatprep.subr.mxu0 0.0
        %4201 = vmatpush2.msra.mxu0 0.0
        %4202 = vmatprep.subr.mxu0 0.0
        %4203 = vmatpush2.msra.mxu0 0.0
        %4204 = vmatprep.mubr.f32.mxu0 0.0
        %4205 = vmatmul.mubr.f32.gmra.mxu0 %v4132
        %v4206 = vpop.f32.mrf.mxu0
        %v4207 = vadd.f32 0.0, %v4206
        %v4208 = vpop.f32.mrf.mxu0
        %v4209 = vadd.f32 0.0, %v4208
        %4210 = vmatprep.mubr.f32.mxu0 0.0
        %4211 = vmatmul.mubr.f32.gmra.mxu0 %v4134
        %v4212 = vpop.f32.mrf.mxu0
        %v4213 = vadd.f32 0.0, %v4212
        %v4214 = vpop.f32.mrf.mxu0
        %v4215 = vadd.f32 0.0, %v4214
        %4216 = vmatprep.mubr.f32.mxu0 0.0
        %4217 = vmatmul.mubr.f32.gmra.mxu0 %v4136
        %v4218 = vpop.f32.mrf.mxu0
        %v4219 = vadd.f32 0.0, %v4218
        %v4220 = vpop.f32.mrf.mxu0
        %v4221 = vadd.f32 0.0, %v4220
        %4222 = vmatprep.mubr.f32.mxu0 0.0
        %4223 = vmatmul.mubr.f32.gmra.mxu0 %v4138
        %v4224 = vpop.f32.mrf.mxu0
        %v4225 = vadd.f32 0.0, %v4224
        %v4226 = vpop.f32.mrf.mxu0
        %v4227 = vadd.f32 0.0, %v4226
        %4228 = vdwg.mxu0
        %v4229 = vsel %vm1891, %v4112, 0
        %v4231 = vsel %vm1891, %v4113, 0
        %v4233 = vsel %vm1891, %v4114, 0
        %v4235 = vsel %vm1891, %v4115, 0
        %4237 = vmatprep.subr.mxu0 0.0
        %4238 = vmatpush1.msra.mxu0 0.0
        %4239 = vmatprep.subr.mxu0 0.0
        %4240 = vmatpush1.msra.mxu0 0.0
        %4241 = vmatprep.subr.mxu0 0.0
        %4242 = vmatpush1.msra.mxu0 0.0
        %4243 = vmatprep.subr.mxu0 0.0
        %4244 = vmatpush1.msra.mxu0 0.0
        %4245 = vmatprep.subr.mxu0 %v4070
        %4246 = vmatpush1.msra.mxu0 %v4069
        %4247 = vmatprep.subr.mxu0 %v4068
        %4248 = vmatpush1.msra.mxu0 %v4067
        %4249 = vmatprep.subr.mxu0 %v4066
        %4250 = vmatpush1.msra.mxu0 %v4065
        %4251 = vmatprep.subr.mxu0 %v4064
        %4252 = vmatpush1.msra.mxu0 %v4063
        %4253 = vmatprep.subr.mxu0 %v4062
        %4254 = vmatpush1.msra.mxu0 %v4061
        %4255 = vmatprep.subr.mxu0 %v4060
        %4256 = vmatpush1.msra.mxu0 %v4059
        %4257 = vmatprep.subr.mxu0 %v4058
        %4258 = vmatpush1.msra.mxu0 %v4057
        %4259 = vmatprep.subr.mxu0 %v4056
        %4260 = vmatpush1.msra.mxu0 %v4055
        %4261 = vmatprep.subr.mxu0 %v4054
        %4262 = vmatpush1.msra.mxu0 %v4053
        %4263 = vmatprep.subr.mxu0 %v4052
        %4264 = vmatpush1.msra.mxu0 %v4051
        %4265 = vmatprep.subr.mxu0 %v4050
        %4266 = vmatpush1.msra.mxu0 %v4049
        %4267 = vmatprep.subr.mxu0 %v4048
        %4268 = vmatpush1.msra.mxu0 %v4047
        %4269 = vmatprep.subr.mxu0 0.0
        %4270 = vmatpush2.msra.mxu0 0.0
        %4271 = vmatprep.subr.mxu0 0.0
        %4272 = vmatpush2.msra.mxu0 0.0
        %4273 = vmatprep.subr.mxu0 0.0
        %4274 = vmatpush2.msra.mxu0 0.0
        %4275 = vmatprep.subr.mxu0 0.0
        %4276 = vmatpush2.msra.mxu0 0.0
        %4277 = vmatprep.subr.mxu0 0.0
        %4278 = vmatpush2.msra.mxu0 0.0
        %4279 = vmatprep.subr.mxu0 0.0
        %4280 = vmatpush2.msra.mxu0 0.0
        %4281 = vmatprep.subr.mxu0 0.0
        %4282 = vmatpush2.msra.mxu0 0.0
        %4283 = vmatprep.subr.mxu0 0.0
        %4284 = vmatpush2.msra.mxu0 0.0
        %4285 = vmatprep.subr.mxu0 0.0
        %4286 = vmatpush2.msra.mxu0 0.0
        %4287 = vmatprep.subr.mxu0 0.0
        %4288 = vmatpush2.msra.mxu0 0.0
        %4289 = vmatprep.subr.mxu0 0.0
        %4290 = vmatpush2.msra.mxu0 0.0
        %4291 = vmatprep.subr.mxu0 0.0
        %4292 = vmatpush2.msra.mxu0 0.0
        %4293 = vmatprep.subr.mxu0 0.0
        %4294 = vmatpush2.msra.mxu0 0.0
        %4295 = vmatprep.subr.mxu0 0.0
        %4296 = vmatpush2.msra.mxu0 0.0
        %4297 = vmatprep.subr.mxu0 0.0
        %4298 = vmatpush2.msra.mxu0 0.0
        %4299 = vmatprep.subr.mxu0 0.0
        %4300 = vmatpush2.msra.mxu0 0.0
        %4301 = vmatprep.mubr.f32.mxu0 0.0
        %4302 = vmatmul.mubr.f32.gmra.mxu0 %v4229
        %v4303 = vpop.f32.mrf.mxu0
        %v4304 = vadd.f32 0.0, %v4303
        %v4305 = vpop.f32.mrf.mxu0
        %v4306 = vadd.f32 0.0, %v4305
        %4307 = vmatprep.mubr.f32.mxu0 0.0
        %4308 = vmatmul.mubr.f32.gmra.mxu0 %v4231
        %v4309 = vpop.f32.mrf.mxu0
        %v4310 = vadd.f32 0.0, %v4309
        %v4311 = vpop.f32.mrf.mxu0
        %v4312 = vadd.f32 0.0, %v4311
        %4313 = vmatprep.mubr.f32.mxu0 0.0
        %4314 = vmatmul.mubr.f32.gmra.mxu0 %v4233
        %v4315 = vpop.f32.mrf.mxu0
        %v4316 = vadd.f32 0.0, %v4315
        %v4317 = vpop.f32.mrf.mxu0
        %v4318 = vadd.f32 0.0, %v4317
        %4319 = vmatprep.mubr.f32.mxu0 0.0
        %4320 = vmatmul.mubr.f32.gmra.mxu0 %v4235
        %v4321 = vpop.f32.mrf.mxu0
        %v4322 = vadd.f32 0.0, %v4321
        %v4323 = vpop.f32.mrf.mxu0
        %v4324 = vadd.f32 0.0, %v4323
        %4325 = vdwg.mxu0
        %4326 = vmatprep.subr.mxu0 0.0
        %4327 = vmatpush1.msra.mxu0 0.0
        %4328 = vmatprep.subr.mxu0 0.0
        %4329 = vmatpush1.msra.mxu0 0.0
        %4330 = vmatprep.subr.mxu0 0.0
        %4331 = vmatpush1.msra.mxu0 0.0
        %4332 = vmatprep.subr.mxu0 0.0
        %4333 = vmatpush1.msra.mxu0 0.0
        %4334 = vmatprep.subr.mxu0 %v4078
        %4335 = vmatpush1.msra.mxu0 %v4077
        %4336 = vmatprep.subr.mxu0 %v4076
        %4337 = vmatpush1.msra.mxu0 %v4075
        %4338 = vmatprep.subr.mxu0 %v4074
        %4339 = vmatpush1.msra.mxu0 %v4073
        %4340 = vmatprep.subr.mxu0 %v4072
        %4341 = vmatpush1.msra.mxu0 %v4071
        %4342 = vmatprep.subr.mxu0 %v4070
        %4343 = vmatpush1.msra.mxu0 %v4069
        %4344 = vmatprep.subr.mxu0 %v4068
        %4345 = vmatpush1.msra.mxu0 %v4067
        %4346 = vmatprep.subr.mxu0 %v4066
        %4347 = vmatpush1.msra.mxu0 %v4065
        %4348 = vmatprep.subr.mxu0 %v4064
        %4349 = vmatpush1.msra.mxu0 %v4063
        %4350 = vmatprep.subr.mxu0 %v4062
        %4351 = vmatpush1.msra.mxu0 %v4061
        %4352 = vmatprep.subr.mxu0 %v4060
        %4353 = vmatpush1.msra.mxu0 %v4059
        %4354 = vmatprep.subr.mxu0 %v4058
        %4355 = vmatpush1.msra.mxu0 %v4057
        %4356 = vmatprep.subr.mxu0 %v4056
        %4357 = vmatpush1.msra.mxu0 %v4055
        %4358 = vmatprep.subr.mxu0 0.0
        %4359 = vmatpush2.msra.mxu0 0.0
        %4360 = vmatprep.subr.mxu0 0.0
        %4361 = vmatpush2.msra.mxu0 0.0
        %4362 = vmatprep.subr.mxu0 0.0
        %4363 = vmatpush2.msra.mxu0 0.0
        %4364 = vmatprep.subr.mxu0 0.0
        %4365 = vmatpush2.msra.mxu0 0.0
        %4366 = vmatprep.subr.mxu0 0.0
        %4367 = vmatpush2.msra.mxu0 0.0
        %4368 = vmatprep.subr.mxu0 0.0
        %4369 = vmatpush2.msra.mxu0 0.0
        %4370 = vmatprep.subr.mxu0 0.0
        %4371 = vmatpush2.msra.mxu0 0.0
        %4372 = vmatprep.subr.mxu0 0.0
        %4373 = vmatpush2.msra.mxu0 0.0
        %4374 = vmatprep.subr.mxu0 0.0
        %4375 = vmatpush2.msra.mxu0 0.0
        %4376 = vmatprep.subr.mxu0 0.0
        %4377 = vmatpush2.msra.mxu0 0.0
        %4378 = vmatprep.subr.mxu0 0.0
        %4379 = vmatpush2.msra.mxu0 0.0
        %4380 = vmatprep.subr.mxu0 0.0
        %4381 = vmatpush2.msra.mxu0 0.0
        %4382 = vmatprep.subr.mxu0 0.0
        %4383 = vmatpush2.msra.mxu0 0.0
        %4384 = vmatprep.subr.mxu0 0.0
        %4385 = vmatpush2.msra.mxu0 0.0
        %4386 = vmatprep.subr.mxu0 0.0
        %4387 = vmatpush2.msra.mxu0 0.0
        %4388 = vmatprep.subr.mxu0 0.0
        %4389 = vmatpush2.msra.mxu0 0.0
        %4390 = vmatprep.mubr.f32.mxu0 0.0
        %4391 = vmatmul.mubr.f32.gmra.mxu0 %v4229
        %v4392 = vpop.f32.mrf.mxu0
        %v4393 = vadd.f32 0.0, %v4392
        %v4394 = vpop.f32.mrf.mxu0
        %v4395 = vadd.f32 0.0, %v4394
        %4396 = vmatprep.mubr.f32.mxu0 0.0
        %4397 = vmatmul.mubr.f32.gmra.mxu0 %v4231
        %v4398 = vpop.f32.mrf.mxu0
        %v4399 = vadd.f32 0.0, %v4398
        %v4400 = vpop.f32.mrf.mxu0
        %v4401 = vadd.f32 0.0, %v4400
        %4402 = vmatprep.mubr.f32.mxu0 0.0
        %4403 = vmatmul.mubr.f32.gmra.mxu0 %v4233
        %v4404 = vpop.f32.mrf.mxu0
        %v4405 = vadd.f32 0.0, %v4404
        %v4406 = vpop.f32.mrf.mxu0
        %v4407 = vadd.f32 0.0, %v4406
        %4408 = vmatprep.mubr.f32.mxu0 0.0
        %4409 = vmatmul.mubr.f32.gmra.mxu0 %v4235
        %v4410 = vpop.f32.mrf.mxu0
        %v4411 = vadd.f32 0.0, %v4410
        %v4412 = vpop.f32.mrf.mxu0
        %v4413 = vadd.f32 0.0, %v4412
        %4414 = vdwg.mxu0
        %4415 = vmatprep.subr.mxu0 0.0
        %4416 = vmatpush1.msra.mxu0 0.0
        %4417 = vmatprep.subr.mxu0 0.0
        %4418 = vmatpush1.msra.mxu0 0.0
        %4419 = vmatprep.subr.mxu0 0.0
        %4420 = vmatpush1.msra.mxu0 0.0
        %4421 = vmatprep.subr.mxu0 0.0
        %4422 = vmatpush1.msra.mxu0 0.0
        %4423 = vmatprep.subr.mxu0 %v4086
        %4424 = vmatpush1.msra.mxu0 %v4085
        %4425 = vmatprep.subr.mxu0 %v4084
        %4426 = vmatpush1.msra.mxu0 %v4083
        %4427 = vmatprep.subr.mxu0 %v4082
        %4428 = vmatpush1.msra.mxu0 %v4081
        %4429 = vmatprep.subr.mxu0 %v4080
        %4430 = vmatpush1.msra.mxu0 %v4079
        %4431 = vmatprep.subr.mxu0 %v4078
        %4432 = vmatpush1.msra.mxu0 %v4077
        %4433 = vmatprep.subr.mxu0 %v4076
        %4434 = vmatpush1.msra.mxu0 %v4075
        %4435 = vmatprep.subr.mxu0 %v4074
        %4436 = vmatpush1.msra.mxu0 %v4073
        %4437 = vmatprep.subr.mxu0 %v4072
        %4438 = vmatpush1.msra.mxu0 %v4071
        %4439 = vmatprep.subr.mxu0 %v4070
        %4440 = vmatpush1.msra.mxu0 %v4069
        %4441 = vmatprep.subr.mxu0 %v4068
        %4442 = vmatpush1.msra.mxu0 %v4067
        %4443 = vmatprep.subr.mxu0 %v4066
        %4444 = vmatpush1.msra.mxu0 %v4065
        %4445 = vmatprep.subr.mxu0 %v4064
        %4446 = vmatpush1.msra.mxu0 %v4063
        %4447 = vmatprep.subr.mxu0 0.0
        %4448 = vmatpush2.msra.mxu0 0.0
        %4449 = vmatprep.subr.mxu0 0.0
        %4450 = vmatpush2.msra.mxu0 0.0
        %4451 = vmatprep.subr.mxu0 0.0
        %4452 = vmatpush2.msra.mxu0 0.0
        %4453 = vmatprep.subr.mxu0 0.0
        %4454 = vmatpush2.msra.mxu0 0.0
        %4455 = vmatprep.subr.mxu0 0.0
        %4456 = vmatpush2.msra.mxu0 0.0
        %4457 = vmatprep.subr.mxu0 0.0
        %4458 = vmatpush2.msra.mxu0 0.0
        %4459 = vmatprep.subr.mxu0 0.0
        %4460 = vmatpush2.msra.mxu0 0.0
        %4461 = vmatprep.subr.mxu0 0.0
        %4462 = vmatpush2.msra.mxu0 0.0
        %4463 = vmatprep.subr.mxu0 0.0
        %4464 = vmatpush2.msra.mxu0 0.0
        %4465 = vmatprep.subr.mxu0 0.0
        %4466 = vmatpush2.msra.mxu0 0.0
        %4467 = vmatprep.subr.mxu0 0.0
        %4468 = vmatpush2.msra.mxu0 0.0
        %4469 = vmatprep.subr.mxu0 0.0
        %4470 = vmatpush2.msra.mxu0 0.0
        %4471 = vmatprep.subr.mxu0 0.0
        %4472 = vmatpush2.msra.mxu0 0.0
        %4473 = vmatprep.subr.mxu0 0.0
        %4474 = vmatpush2.msra.mxu0 0.0
        %4475 = vmatprep.subr.mxu0 0.0
        %4476 = vmatpush2.msra.mxu0 0.0
        %4477 = vmatprep.subr.mxu0 0.0
        %4478 = vmatpush2.msra.mxu0 0.0
        %4479 = vmatprep.mubr.f32.mxu0 0.0
        %4480 = vmatmul.mubr.f32.gmra.mxu0 %v4229
        %v4481 = vpop.f32.mrf.mxu0
        %v4482 = vadd.f32 0.0, %v4481
        %v4483 = vpop.f32.mrf.mxu0
        %v4484 = vadd.f32 0.0, %v4483
        %4485 = vmatprep.mubr.f32.mxu0 0.0
        %4486 = vmatmul.mubr.f32.gmra.mxu0 %v4231
        %v4487 = vpop.f32.mrf.mxu0
        %v4488 = vadd.f32 0.0, %v4487
        %v4489 = vpop.f32.mrf.mxu0
        %v4490 = vadd.f32 0.0, %v4489
        %4491 = vmatprep.mubr.f32.mxu0 0.0
        %4492 = vmatmul.mubr.f32.gmra.mxu0 %v4233
        %v4493 = vpop.f32.mrf.mxu0
        %v4494 = vadd.f32 0.0, %v4493
        %v4495 = vpop.f32.mrf.mxu0
        %v4496 = vadd.f32 0.0, %v4495
        %4497 = vmatprep.mubr.f32.mxu0 0.0
        %4498 = vmatmul.mubr.f32.gmra.mxu0 %v4235
        %v4499 = vpop.f32.mrf.mxu0
        %v4500 = vadd.f32 0.0, %v4499
        %v4501 = vpop.f32.mrf.mxu0
        %v4502 = vadd.f32 0.0, %v4501
        %4503 = vdwg.mxu0
        %4504 = vmatprep.subr.mxu0 0.0
        %4505 = vmatpush1.msra.mxu0 0.0
        %4506 = vmatprep.subr.mxu0 0.0
        %4507 = vmatpush1.msra.mxu0 0.0
        %4508 = vmatprep.subr.mxu0 0.0
        %4509 = vmatpush1.msra.mxu0 0.0
        %4510 = vmatprep.subr.mxu0 0.0
        %4511 = vmatpush1.msra.mxu0 0.0
        %4512 = vmatprep.subr.mxu0 %v4094
        %4513 = vmatpush1.msra.mxu0 %v4093
        %4514 = vmatprep.subr.mxu0 %v4092
        %4515 = vmatpush1.msra.mxu0 %v4091
        %4516 = vmatprep.subr.mxu0 %v4090
        %4517 = vmatpush1.msra.mxu0 %v4089
        %4518 = vmatprep.subr.mxu0 %v4088
        %4519 = vmatpush1.msra.mxu0 %v4087
        %4520 = vmatprep.subr.mxu0 %v4086
        %4521 = vmatpush1.msra.mxu0 %v4085
        %4522 = vmatprep.subr.mxu0 %v4084
        %4523 = vmatpush1.msra.mxu0 %v4083
        %4524 = vmatprep.subr.mxu0 %v4082
        %4525 = vmatpush1.msra.mxu0 %v4081
        %4526 = vmatprep.subr.mxu0 %v4080
        %4527 = vmatpush1.msra.mxu0 %v4079
        %4528 = vmatprep.subr.mxu0 %v4078
        %4529 = vmatpush1.msra.mxu0 %v4077
        %4530 = vmatprep.subr.mxu0 %v4076
        %4531 = vmatpush1.msra.mxu0 %v4075
        %4532 = vmatprep.subr.mxu0 %v4074
        %4533 = vmatpush1.msra.mxu0 %v4073
        %4534 = vmatprep.subr.mxu0 %v4072
        %4535 = vmatpush1.msra.mxu0 %v4071
        %4536 = vmatprep.subr.mxu0 0.0
        %4537 = vmatpush2.msra.mxu0 0.0
        %4538 = vmatprep.subr.mxu0 0.0
        %4539 = vmatpush2.msra.mxu0 0.0
        %4540 = vmatprep.subr.mxu0 0.0
        %4541 = vmatpush2.msra.mxu0 0.0
        %4542 = vmatprep.subr.mxu0 0.0
        %4543 = vmatpush2.msra.mxu0 0.0
        %4544 = vmatprep.subr.mxu0 0.0
        %4545 = vmatpush2.msra.mxu0 0.0
        %4546 = vmatprep.subr.mxu0 0.0
        %4547 = vmatpush2.msra.mxu0 0.0
        %4548 = vmatprep.subr.mxu0 0.0
        %4549 = vmatpush2.msra.mxu0 0.0
        %4550 = vmatprep.subr.mxu0 0.0
        %4551 = vmatpush2.msra.mxu0 0.0
        %4552 = vmatprep.subr.mxu0 0.0
        %4553 = vmatpush2.msra.mxu0 0.0
        %4554 = vmatprep.subr.mxu0 0.0
        %4555 = vmatpush2.msra.mxu0 0.0
        %4556 = vmatprep.subr.mxu0 0.0
        %4557 = vmatpush2.msra.mxu0 0.0
        %4558 = vmatprep.subr.mxu0 0.0
        %4559 = vmatpush2.msra.mxu0 0.0
        %4560 = vmatprep.subr.mxu0 0.0
        %4561 = vmatpush2.msra.mxu0 0.0
        %4562 = vmatprep.subr.mxu0 0.0
        %4563 = vmatpush2.msra.mxu0 0.0
        %4564 = vmatprep.subr.mxu0 0.0
        %4565 = vmatpush2.msra.mxu0 0.0
        %4566 = vmatprep.subr.mxu0 0.0
        %4567 = vmatpush2.msra.mxu0 0.0
        %4568 = vmatprep.mubr.f32.mxu0 0.0
        %4569 = vmatmul.mubr.f32.gmra.mxu0 %v4229
        %v4570 = vpop.f32.mrf.mxu0
        %v4571 = vadd.f32 0.0, %v4570
        %v4572 = vpop.f32.mrf.mxu0
        %v4573 = vadd.f32 0.0, %v4572
        %4574 = vmatprep.mubr.f32.mxu0 0.0
        %4575 = vmatmul.mubr.f32.gmra.mxu0 %v4231
        %v4576 = vpop.f32.mrf.mxu0
        %v4577 = vadd.f32 0.0, %v4576
        %v4578 = vpop.f32.mrf.mxu0
        %v4579 = vadd.f32 0.0, %v4578
        %4580 = vmatprep.mubr.f32.mxu0 0.0
        %4581 = vmatmul.mubr.f32.gmra.mxu0 %v4233
        %v4582 = vpop.f32.mrf.mxu0
        %v4583 = vadd.f32 0.0, %v4582
        %v4584 = vpop.f32.mrf.mxu0
        %v4585 = vadd.f32 0.0, %v4584
        %4586 = vmatprep.mubr.f32.mxu0 0.0
        %4587 = vmatmul.mubr.f32.gmra.mxu0 %v4235
        %v4588 = vpop.f32.mrf.mxu0
        %v4589 = vadd.f32 0.0, %v4588
        %v4590 = vpop.f32.mrf.mxu0
        %v4591 = vadd.f32 0.0, %v4590
        %4592 = vdwg.mxu0
        %4593 = vmatprep.subr.mxu0 0.0
        %4594 = vmatpush1.msra.mxu0 0.0
        %4595 = vmatprep.subr.mxu0 0.0
        %4596 = vmatpush1.msra.mxu0 0.0
        %4597 = vmatprep.subr.mxu0 0.0
        %4598 = vmatpush1.msra.mxu0 0.0
        %4599 = vmatprep.subr.mxu0 0.0
        %4600 = vmatpush1.msra.mxu0 0.0
        %4601 = vmatprep.subr.mxu0 %v4102
        %4602 = vmatpush1.msra.mxu0 %v4101
        %4603 = vmatprep.subr.mxu0 %v4100
        %4604 = vmatpush1.msra.mxu0 %v4099
        %4605 = vmatprep.subr.mxu0 %v4098
        %4606 = vmatpush1.msra.mxu0 %v4097
        %4607 = vmatprep.subr.mxu0 %v4096
        %4608 = vmatpush1.msra.mxu0 %v4095
        %4609 = vmatprep.subr.mxu0 %v4094
        %4610 = vmatpush1.msra.mxu0 %v4093
        %4611 = vmatprep.subr.mxu0 %v4092
        %4612 = vmatpush1.msra.mxu0 %v4091
        %4613 = vmatprep.subr.mxu0 %v4090
        %4614 = vmatpush1.msra.mxu0 %v4089
        %4615 = vmatprep.subr.mxu0 %v4088
        %4616 = vmatpush1.msra.mxu0 %v4087
        %4617 = vmatprep.subr.mxu0 %v4086
        %4618 = vmatpush1.msra.mxu0 %v4085
        %4619 = vmatprep.subr.mxu0 %v4084
        %4620 = vmatpush1.msra.mxu0 %v4083
        %4621 = vmatprep.subr.mxu0 %v4082
        %4622 = vmatpush1.msra.mxu0 %v4081
        %4623 = vmatprep.subr.mxu0 %v4080
        %4624 = vmatpush1.msra.mxu0 %v4079
        %4625 = vmatprep.subr.mxu0 0.0
        %4626 = vmatpush2.msra.mxu0 0.0
        %4627 = vmatprep.subr.mxu0 0.0
        %4628 = vmatpush2.msra.mxu0 0.0
        %4629 = vmatprep.subr.mxu0 0.0
        %4630 = vmatpush2.msra.mxu0 0.0
        %4631 = vmatprep.subr.mxu0 0.0
        %4632 = vmatpush2.msra.mxu0 0.0
        %4633 = vmatprep.subr.mxu0 0.0
        %4634 = vmatpush2.msra.mxu0 0.0
        %4635 = vmatprep.subr.mxu0 0.0
        %4636 = vmatpush2.msra.mxu0 0.0
        %4637 = vmatprep.subr.mxu0 0.0
        %4638 = vmatpush2.msra.mxu0 0.0
        %4639 = vmatprep.subr.mxu0 0.0
        %4640 = vmatpush2.msra.mxu0 0.0
        %4641 = vmatprep.subr.mxu0 0.0
        %4642 = vmatpush2.msra.mxu0 0.0
        %4643 = vmatprep.subr.mxu0 0.0
        %4644 = vmatpush2.msra.mxu0 0.0
        %4645 = vmatprep.subr.mxu0 0.0
        %4646 = vmatpush2.msra.mxu0 0.0
        %4647 = vmatprep.subr.mxu0 0.0
        %4648 = vmatpush2.msra.mxu0 0.0
        %4649 = vmatprep.subr.mxu0 0.0
        %4650 = vmatpush2.msra.mxu0 0.0
        %4651 = vmatprep.subr.mxu0 0.0
        %4652 = vmatpush2.msra.mxu0 0.0
        %4653 = vmatprep.subr.mxu0 0.0
        %4654 = vmatpush2.msra.mxu0 0.0
        %4655 = vmatprep.subr.mxu0 0.0
        %4656 = vmatpush2.msra.mxu0 0.0
        %4657 = vmatprep.mubr.f32.mxu0 0.0
        %4658 = vmatmul.mubr.f32.gmra.mxu0 %v4229
        %v4659 = vpop.f32.mrf.mxu0
        %v4660 = vadd.f32 0.0, %v4659
        %v4661 = vpop.f32.mrf.mxu0
        %v4662 = vadd.f32 0.0, %v4661
        %4663 = vmatprep.mubr.f32.mxu0 0.0
        %4664 = vmatmul.mubr.f32.gmra.mxu0 %v4231
        %v4665 = vpop.f32.mrf.mxu0
        %v4666 = vadd.f32 0.0, %v4665
        %v4667 = vpop.f32.mrf.mxu0
        %v4668 = vadd.f32 0.0, %v4667
        %4669 = vmatprep.mubr.f32.mxu0 0.0
        %4670 = vmatmul.mubr.f32.gmra.mxu0 %v4233
        %v4671 = vpop.f32.mrf.mxu0
        %v4672 = vadd.f32 0.0, %v4671
        %v4673 = vpop.f32.mrf.mxu0
        %v4674 = vadd.f32 0.0, %v4673
        %4675 = vmatprep.mubr.f32.mxu0 0.0
        %4676 = vmatmul.mubr.f32.gmra.mxu0 %v4235
        %v4677 = vpop.f32.mrf.mxu0
        %v4678 = vadd.f32 0.0, %v4677
        %v4679 = vpop.f32.mrf.mxu0
        %v4680 = vadd.f32 0.0, %v4679
        %4681 = vdwg.mxu0
        %4682 = vmatprep.subr.mxu0 0.0
        %4683 = vmatpush1.msra.mxu0 0.0
        %4684 = vmatprep.subr.mxu0 0.0
        %4685 = vmatpush1.msra.mxu0 0.0
        %4686 = vmatprep.subr.mxu0 0.0
        %4687 = vmatpush1.msra.mxu0 0.0
        %4688 = vmatprep.subr.mxu0 0.0
        %4689 = vmatpush1.msra.mxu0 0.0
        %4690 = vmatprep.subr.mxu0 %v4110
        %4691 = vmatpush1.msra.mxu0 %v4109
        %4692 = vmatprep.subr.mxu0 %v4108
        %4693 = vmatpush1.msra.mxu0 %v4107
        %4694 = vmatprep.subr.mxu0 %v4106
        %4695 = vmatpush1.msra.mxu0 %v4105
        %4696 = vmatprep.subr.mxu0 %v4104
        %4697 = vmatpush1.msra.mxu0 %v4103
        %4698 = vmatprep.subr.mxu0 %v4102
        %4699 = vmatpush1.msra.mxu0 %v4101
        %4700 = vmatprep.subr.mxu0 %v4100
        %4701 = vmatpush1.msra.mxu0 %v4099
        %4702 = vmatprep.subr.mxu0 %v4098
        %4703 = vmatpush1.msra.mxu0 %v4097
        %4704 = vmatprep.subr.mxu0 %v4096
        %4705 = vmatpush1.msra.mxu0 %v4095
        %4706 = vmatprep.subr.mxu0 %v4094
        %4707 = vmatpush1.msra.mxu0 %v4093
        %4708 = vmatprep.subr.mxu0 %v4092
        %4709 = vmatpush1.msra.mxu0 %v4091
        %4710 = vmatprep.subr.mxu0 %v4090
        %4711 = vmatpush1.msra.mxu0 %v4089
        %4712 = vmatprep.subr.mxu0 %v4088
        %4713 = vmatpush1.msra.mxu0 %v4087
        %4714 = vmatprep.subr.mxu0 0.0
        %4715 = vmatpush2.msra.mxu0 0.0
        %4716 = vmatprep.subr.mxu0 0.0
        %4717 = vmatpush2.msra.mxu0 0.0
        %4718 = vmatprep.subr.mxu0 0.0
        %4719 = vmatpush2.msra.mxu0 0.0
        %4720 = vmatprep.subr.mxu0 0.0
        %4721 = vmatpush2.msra.mxu0 0.0
        %4722 = vmatprep.subr.mxu0 0.0
        %4723 = vmatpush2.msra.mxu0 0.0
        %4724 = vmatprep.subr.mxu0 0.0
        %4725 = vmatpush2.msra.mxu0 0.0
        %4726 = vmatprep.subr.mxu0 0.0
        %4727 = vmatpush2.msra.mxu0 0.0
        %4728 = vmatprep.subr.mxu0 0.0
        %4729 = vmatpush2.msra.mxu0 0.0
        %4730 = vmatprep.subr.mxu0 0.0
        %4731 = vmatpush2.msra.mxu0 0.0
        %4732 = vmatprep.subr.mxu0 0.0
        %4733 = vmatpush2.msra.mxu0 0.0
        %4734 = vmatprep.subr.mxu0 0.0
        %4735 = vmatpush2.msra.mxu0 0.0
        %4736 = vmatprep.subr.mxu0 0.0
        %4737 = vmatpush2.msra.mxu0 0.0
        %4738 = vmatprep.subr.mxu0 0.0
        %4739 = vmatpush2.msra.mxu0 0.0
        %4740 = vmatprep.subr.mxu0 0.0
        %4741 = vmatpush2.msra.mxu0 0.0
        %4742 = vmatprep.subr.mxu0 0.0
        %4743 = vmatpush2.msra.mxu0 0.0
        %4744 = vmatprep.subr.mxu0 0.0
        %4745 = vmatpush2.msra.mxu0 0.0
        %4746 = vmatprep.mubr.f32.mxu0 0.0
        %4747 = vmatmul.mubr.f32.gmra.mxu0 %v4229
        %v4748 = vpop.f32.mrf.mxu0
        %v4749 = vadd.f32 0.0, %v4748
        %v4750 = vpop.f32.mrf.mxu0
        %v4751 = vadd.f32 0.0, %v4750
        %4752 = vmatprep.mubr.f32.mxu0 0.0
        %4753 = vmatmul.mubr.f32.gmra.mxu0 %v4231
        %v4754 = vpop.f32.mrf.mxu0
        %v4755 = vadd.f32 0.0, %v4754
        %v4756 = vpop.f32.mrf.mxu0
        %v4757 = vadd.f32 0.0, %v4756
        %4758 = vmatprep.mubr.f32.mxu0 0.0
        %4759 = vmatmul.mubr.f32.gmra.mxu0 %v4233
        %v4760 = vpop.f32.mrf.mxu0
        %v4761 = vadd.f32 0.0, %v4760
        %v4762 = vpop.f32.mrf.mxu0
        %v4763 = vadd.f32 0.0, %v4762
        %4764 = vmatprep.mubr.f32.mxu0 0.0
        %4765 = vmatmul.mubr.f32.gmra.mxu0 %v4235
        %v4766 = vpop.f32.mrf.mxu0
        %v4767 = vadd.f32 0.0, %v4766
        %v4768 = vpop.f32.mrf.mxu0
        %v4769 = vadd.f32 0.0, %v4768
        %4770 = vdwg.mxu0
        %v4771 = vsel %vm1793, %v4112, 0
        %v4773 = vsel %vm1793, %v4113, 0
        %v4775 = vsel %vm1793, %v4114, 0
        %v4777 = vsel %vm1793, %v4115, 0
        %4779 = vmatprep.subr.mxu0 0.0
        %4780 = vmatpush1.msra.mxu0 0.0
        %4781 = vmatprep.subr.mxu0 0.0
        %4782 = vmatpush1.msra.mxu0 0.0
        %4783 = vmatprep.subr.mxu0 0.0
        %4784 = vmatpush1.msra.mxu0 0.0
        %4785 = vmatprep.subr.mxu0 0.0
        %4786 = vmatpush1.msra.mxu0 0.0
        %4787 = vmatprep.subr.mxu0 0.0
        %4788 = vmatpush1.msra.mxu0 0.0
        %4789 = vmatprep.subr.mxu0 0.0
        %4790 = vmatpush1.msra.mxu0 0.0
        %4791 = vmatprep.subr.mxu0 0.0
        %4792 = vmatpush1.msra.mxu0 0.0
        %4793 = vmatprep.subr.mxu0 0.0
        %4794 = vmatpush1.msra.mxu0 0.0
        %4795 = vmatprep.subr.mxu0 %v4110
        %4796 = vmatpush1.msra.mxu0 %v4109
        %4797 = vmatprep.subr.mxu0 %v4108
        %4798 = vmatpush1.msra.mxu0 %v4107
        %4799 = vmatprep.subr.mxu0 %v4106
        %4800 = vmatpush1.msra.mxu0 %v4105
        %4801 = vmatprep.subr.mxu0 %v4104
        %4802 = vmatpush1.msra.mxu0 %v4103
        %4803 = vmatprep.subr.mxu0 %v4102
        %4804 = vmatpush1.msra.mxu0 %v4101
        %4805 = vmatprep.subr.mxu0 %v4100
        %4806 = vmatpush1.msra.mxu0 %v4099
        %4807 = vmatprep.subr.mxu0 %v4098
        %4808 = vmatpush1.msra.mxu0 %v4097
        %4809 = vmatprep.subr.mxu0 %v4096
        %4810 = vmatpush1.msra.mxu0 %v4095
        %4811 = vmatprep.subr.mxu0 0.0
        %4812 = vmatpush2.msra.mxu0 0.0
        %4813 = vmatprep.subr.mxu0 0.0
        %4814 = vmatpush2.msra.mxu0 0.0
        %4815 = vmatprep.subr.mxu0 0.0
        %4816 = vmatpush2.msra.mxu0 0.0
        %4817 = vmatprep.subr.mxu0 0.0
        %4818 = vmatpush2.msra.mxu0 0.0
        %4819 = vmatprep.subr.mxu0 0.0
        %4820 = vmatpush2.msra.mxu0 0.0
        %4821 = vmatprep.subr.mxu0 0.0
        %4822 = vmatpush2.msra.mxu0 0.0
        %4823 = vmatprep.subr.mxu0 0.0
        %4824 = vmatpush2.msra.mxu0 0.0
        %4825 = vmatprep.subr.mxu0 0.0
        %4826 = vmatpush2.msra.mxu0 0.0
        %4827 = vmatprep.subr.mxu0 0.0
        %4828 = vmatpush2.msra.mxu0 0.0
        %4829 = vmatprep.subr.mxu0 0.0
        %4830 = vmatpush2.msra.mxu0 0.0
        %4831 = vmatprep.subr.mxu0 0.0
        %4832 = vmatpush2.msra.mxu0 0.0
        %4833 = vmatprep.subr.mxu0 0.0
        %4834 = vmatpush2.msra.mxu0 0.0
        %4835 = vmatprep.subr.mxu0 0.0
        %4836 = vmatpush2.msra.mxu0 0.0
        %4837 = vmatprep.subr.mxu0 0.0
        %4838 = vmatpush2.msra.mxu0 0.0
        %4839 = vmatprep.subr.mxu0 0.0
        %4840 = vmatpush2.msra.mxu0 0.0
        %4841 = vmatprep.subr.mxu0 0.0
        %4842 = vmatpush2.msra.mxu0 0.0
        %4843 = vmatprep.mubr.f32.mxu0 0.0
        %4844 = vmatmul.mubr.f32.gmra.mxu0 %v4771
        %v4845 = vpop.f32.mrf.mxu0
        %v4846 = vadd.f32 0.0, %v4845
        %v4847 = vpop.f32.mrf.mxu0
        %v4848 = vadd.f32 0.0, %v4847
        %4849 = vmatprep.mubr.f32.mxu0 0.0
        %4850 = vmatmul.mubr.f32.gmra.mxu0 %v4773
        %v4851 = vpop.f32.mrf.mxu0
        %v4852 = vadd.f32 0.0, %v4851
        %v4853 = vpop.f32.mrf.mxu0
        %v4854 = vadd.f32 0.0, %v4853
        %4855 = vmatprep.mubr.f32.mxu0 0.0
        %4856 = vmatmul.mubr.f32.gmra.mxu0 %v4775
        %v4857 = vpop.f32.mrf.mxu0
        %v4858 = vadd.f32 0.0, %v4857
        %v4859 = vpop.f32.mrf.mxu0
        %v4860 = vadd.f32 0.0, %v4859
        %4861 = vmatprep.mubr.f32.mxu0 0.0
        %4862 = vmatmul.mubr.f32.gmra.mxu0 %v4777
        %v4863 = vpop.f32.mrf.mxu0
        %v4864 = vadd.f32 0.0, %v4863
        %v4865 = vpop.f32.mrf.mxu0
        %v4866 = vadd.f32 0.0, %v4865
        %4867 = vdwg.mxu0
        %4869 = vset.pattern.permute.xlu0 5
        %4870 = vperm.xlu0 %4869, %v4116
        %v4871 = vpop.permute.xlu0 %4870
        %4874 = vset.pattern.permute.xlu0 5
        %4875 = vperm.xlu0 %4874, %v4117
        %v4876 = vpop.permute.xlu0 %4875
        %4879 = vset.pattern.permute.xlu0 5
        %4880 = vperm.xlu0 %4879, %v4118
        %v4881 = vpop.permute.xlu0 %4880
        %4884 = vset.pattern.permute.xlu0 5
        %4885 = vperm.xlu0 %4884, %v4119
        %v4886 = vpop.permute.xlu0 %4885
        %v4888 = vadd.f32 %v4207, %v4871
        %v4889 = vadd.f32 %v4209, %v4871
        %v4890 = vadd.f32 %v4213, %v4876
        %v4891 = vadd.f32 %v4215, %v4876
        %v4892 = vadd.f32 %v4219, %v4881
        %v4893 = vadd.f32 %v4221, %v4881
        %v4894 = vadd.f32 %v4225, %v4886
        %v4895 = vadd.f32 %v4227, %v4886
        %v4896 = vadd.f32 %v4304, %v4871
        %v4897 = vadd.f32 %v4306, %v4871
        %v4898 = vadd.f32 %v4310, %v4876
        %v4899 = vadd.f32 %v4312, %v4876
        %v4900 = vadd.f32 %v4316, %v4881
        %v4901 = vadd.f32 %v4318, %v4881
        %v4902 = vadd.f32 %v4322, %v4886
        %v4903 = vadd.f32 %v4324, %v4886
        %v4904 = vadd.f32 %v4393, %v4871
        %v4905 = vadd.f32 %v4395, %v4871
        %v4906 = vadd.f32 %v4399, %v4876
        %v4907 = vadd.f32 %v4401, %v4876
        %v4908 = vadd.f32 %v4405, %v4881
        %v4909 = vadd.f32 %v4407, %v4881
        %v4910 = vadd.f32 %v4411, %v4886
        %v4911 = vadd.f32 %v4413, %v4886
        %v4912 = vadd.f32 %v4482, %v4871
        %v4913 = vadd.f32 %v4484, %v4871
        %v4914 = vadd.f32 %v4488, %v4876
        %v4915 = vadd.f32 %v4490, %v4876
        %v4916 = vadd.f32 %v4494, %v4881
        %v4917 = vadd.f32 %v4496, %v4881
        %v4918 = vadd.f32 %v4500, %v4886
        %v4919 = vadd.f32 %v4502, %v4886
        %v4920 = vadd.f32 %v4571, %v4871
        %v4921 = vadd.f32 %v4573, %v4871
        %v4922 = vadd.f32 %v4577, %v4876
        %v4923 = vadd.f32 %v4579, %v4876
        %v4924 = vadd.f32 %v4583, %v4881
        %v4925 = vadd.f32 %v4585, %v4881
        %v4926 = vadd.f32 %v4589, %v4886
        %v4927 = vadd.f32 %v4591, %v4886
        %v4928 = vadd.f32 %v4660, %v4871
        %v4929 = vadd.f32 %v4662, %v4871
        %v4930 = vadd.f32 %v4666, %v4876
        %v4931 = vadd.f32 %v4668, %v4876
        %v4932 = vadd.f32 %v4672, %v4881
        %v4933 = vadd.f32 %v4674, %v4881
        %v4934 = vadd.f32 %v4678, %v4886
        %v4935 = vadd.f32 %v4680, %v4886
        %v4936 = vadd.f32 %v4749, %v4871
        %v4937 = vadd.f32 %v4751, %v4871
        %v4938 = vadd.f32 %v4755, %v4876
        %v4939 = vadd.f32 %v4757, %v4876
        %v4940 = vadd.f32 %v4761, %v4881
        %v4941 = vadd.f32 %v4763, %v4881
        %v4942 = vadd.f32 %v4767, %v4886
        %v4943 = vadd.f32 %v4769, %v4886
        %v4944 = vadd.f32 %v4846, %v4871
        %v4945 = vadd.f32 %v4848, %v4871
        %v4946 = vadd.f32 %v4852, %v4876
        %v4947 = vadd.f32 %v4854, %v4876
        %v4948 = vadd.f32 %v4858, %v4881
        %v4949 = vadd.f32 %v4860, %v4881
        %v4950 = vadd.f32 %v4864, %v4886
        %v4951 = vadd.f32 %v4866, %v4886
        %v4952 = vadd.f32 %v4888, %v4889
        %4953 = vadd.xlane.f32.xlu0 %v4952
        %v4954 = vpop.xlane.xlu0 %4953
        %v4955 = vadd.f32 %v4890, %v4891
        %4956 = vadd.xlane.f32.xlu0 %v4955
        %v4957 = vpop.xlane.xlu0 %4956
        %v4958 = vadd.f32 %v4892, %v4893
        %4959 = vadd.xlane.f32.xlu0 %v4958
        %v4960 = vpop.xlane.xlu0 %4959
        %v4961 = vadd.f32 %v4894, %v4895
        %4962 = vadd.xlane.f32.xlu0 %v4961
        %v4963 = vpop.xlane.xlu0 %4962
        %v4964 = vadd.f32 %v4896, %v4897
        %4965 = vadd.xlane.f32.xlu0 %v4964
        %v4966 = vpop.xlane.xlu0 %4965
        %v4967 = vadd.f32 %v4898, %v4899
        %4968 = vadd.xlane.f32.xlu0 %v4967
        %v4969 = vpop.xlane.xlu0 %4968
        %v4970 = vadd.f32 %v4900, %v4901
        %4971 = vadd.xlane.f32.xlu0 %v4970
        %v4972 = vpop.xlane.xlu0 %4971
        %v4973 = vadd.f32 %v4902, %v4903
        %4974 = vadd.xlane.f32.xlu0 %v4973
        %v4975 = vpop.xlane.xlu0 %4974
        %v4976 = vadd.f32 %v4904, %v4905
        %4977 = vadd.xlane.f32.xlu0 %v4976
        %v4978 = vpop.xlane.xlu0 %4977
        %v4979 = vadd.f32 %v4906, %v4907
        %4980 = vadd.xlane.f32.xlu0 %v4979
        %v4981 = vpop.xlane.xlu0 %4980
        %v4982 = vadd.f32 %v4908, %v4909
        %4983 = vadd.xlane.f32.xlu0 %v4982
        %v4984 = vpop.xlane.xlu0 %4983
        %v4985 = vadd.f32 %v4910, %v4911
        %4986 = vadd.xlane.f32.xlu0 %v4985
        %v4987 = vpop.xlane.xlu0 %4986
        %v4988 = vadd.f32 %v4912, %v4913
        %4989 = vadd.xlane.f32.xlu0 %v4988
        %v4990 = vpop.xlane.xlu0 %4989
        %v4991 = vadd.f32 %v4914, %v4915
        %4992 = vadd.xlane.f32.xlu0 %v4991
        %v4993 = vpop.xlane.xlu0 %4992
        %v4994 = vadd.f32 %v4916, %v4917
        %4995 = vadd.xlane.f32.xlu0 %v4994
        %v4996 = vpop.xlane.xlu0 %4995
        %v4997 = vadd.f32 %v4918, %v4919
        %4998 = vadd.xlane.f32.xlu0 %v4997
        %v4999 = vpop.xlane.xlu0 %4998
        %v5000 = vadd.f32 %v4920, %v4921
        %5001 = vadd.xlane.f32.xlu0 %v5000
        %v5002 = vpop.xlane.xlu0 %5001
        %v5003 = vadd.f32 %v4922, %v4923
        %5004 = vadd.xlane.f32.xlu0 %v5003
        %v5005 = vpop.xlane.xlu0 %5004
        %v5006 = vadd.f32 %v4924, %v4925
        %5007 = vadd.xlane.f32.xlu0 %v5006
        %v5008 = vpop.xlane.xlu0 %5007
        %v5009 = vadd.f32 %v4926, %v4927
        %5010 = vadd.xlane.f32.xlu0 %v5009
        %v5011 = vpop.xlane.xlu0 %5010
        %v5012 = vadd.f32 %v4928, %v4929
        %5013 = vadd.xlane.f32.xlu0 %v5012
        %v5014 = vpop.xlane.xlu0 %5013
        %v5015 = vadd.f32 %v4930, %v4931
        %5016 = vadd.xlane.f32.xlu0 %v5015
        %v5017 = vpop.xlane.xlu0 %5016
        %v5018 = vadd.f32 %v4932, %v4933
        %5019 = vadd.xlane.f32.xlu0 %v5018
        %v5020 = vpop.xlane.xlu0 %5019
        %v5021 = vadd.f32 %v4934, %v4935
        %5022 = vadd.xlane.f32.xlu0 %v5021
        %v5023 = vpop.xlane.xlu0 %5022
        %v5024 = vadd.f32 %v4936, %v4937
        %5025 = vadd.xlane.f32.xlu0 %v5024
        %v5026 = vpop.xlane.xlu0 %5025
        %v5027 = vadd.f32 %v4938, %v4939
        %5028 = vadd.xlane.f32.xlu0 %v5027
        %v5029 = vpop.xlane.xlu0 %5028
        %v5030 = vadd.f32 %v4940, %v4941
        %5031 = vadd.xlane.f32.xlu0 %v5030
        %v5032 = vpop.xlane.xlu0 %5031
        %v5033 = vadd.f32 %v4942, %v4943
        %5034 = vadd.xlane.f32.xlu0 %v5033
        %v5035 = vpop.xlane.xlu0 %5034
        %v5036 = vadd.f32 %v4944, %v4945
        %5037 = vadd.xlane.f32.xlu0 %v5036
        %v5038 = vpop.xlane.xlu0 %5037
        %v5039 = vadd.f32 %v4946, %v4947
        %5040 = vadd.xlane.f32.xlu0 %v5039
        %v5041 = vpop.xlane.xlu0 %5040
        %v5042 = vadd.f32 %v4948, %v4949
        %5043 = vadd.xlane.f32.xlu0 %v5042
        %v5044 = vpop.xlane.xlu0 %5043
        %v5045 = vadd.f32 %v4950, %v4951
        %5046 = vadd.xlane.f32.xlu0 %v5045
        %v5047 = vpop.xlane.xlu0 %5046
        %v5048 = vadd.f32 %v4954, %v4966
        %v5049 = vadd.f32 %v5048, %v4978
        %v5050 = vadd.f32 %v5049, %v4990
        %v5051 = vadd.f32 %v5050, %v5002
        %v5052 = vadd.f32 %v5051, %v5014
        %v5053 = vadd.f32 %v5052, %v5026
        %v5054 = vadd.f32 %v5053, %v5038
        %v5055 = vadd.f32 %v4957, %v4969
        %v5056 = vadd.f32 %v5055, %v4981
        %v5057 = vadd.f32 %v5056, %v4993
        %v5058 = vadd.f32 %v5057, %v5005
        %v5059 = vadd.f32 %v5058, %v5017
        %v5060 = vadd.f32 %v5059, %v5029
        %v5061 = vadd.f32 %v5060, %v5041
        %v5062 = vadd.f32 %v4960, %v4972
        %v5063 = vadd.f32 %v5062, %v4984
        %v5064 = vadd.f32 %v5063, %v4996
        %v5065 = vadd.f32 %v5064, %v5008
        %v5066 = vadd.f32 %v5065, %v5020
        %v5067 = vadd.f32 %v5066, %v5032
        %v5068 = vadd.f32 %v5067, %v5044
        %v5069 = vadd.f32 %v4963, %v4975
        %v5070 = vadd.f32 %v5069, %v4987
        %v5071 = vadd.f32 %v5070, %v4999
        %v5072 = vadd.f32 %v5071, %v5011
        %v5073 = vadd.f32 %v5072, %v5023
        %v5074 = vadd.f32 %v5073, %v5035
        %v5075 = vadd.f32 %v5074, %v5047
        %v5076 = vmul.f32 %v4888, %v4888
        %v5077 = vmul.f32 %v4889, %v4889
        %v5078 = vmul.f32 %v4890, %v4890
        %v5079 = vmul.f32 %v4891, %v4891
        %v5080 = vmul.f32 %v4892, %v4892
        %v5081 = vmul.f32 %v4893, %v4893
        %v5082 = vmul.f32 %v4894, %v4894
        %v5083 = vmul.f32 %v4895, %v4895
        %v5084 = vmul.f32 %v4896, %v4896
        %v5085 = vmul.f32 %v4897, %v4897
        %v5086 = vmul.f32 %v4898, %v4898
        %v5087 = vmul.f32 %v4899, %v4899
        %v5088 = vmul.f32 %v4900, %v4900
        %v5089 = vmul.f32 %v4901, %v4901
        %v5090 = vmul.f32 %v4902, %v4902
        %v5091 = vmul.f32 %v4903, %v4903
        %v5092 = vmul.f32 %v4904, %v4904
        %v5093 = vmul.f32 %v4905, %v4905
        %v5094 = vmul.f32 %v4906, %v4906
        %v5095 = vmul.f32 %v4907, %v4907
        %v5096 = vmul.f32 %v4908, %v4908
        %v5097 = vmul.f32 %v4909, %v4909
        %v5098 = vmul.f32 %v4910, %v4910
        %v5099 = vmul.f32 %v4911, %v4911
        %v5100 = vmul.f32 %v4912, %v4912
        %v5101 = vmul.f32 %v4913, %v4913
        %v5102 = vmul.f32 %v4914, %v4914
        %v5103 = vmul.f32 %v4915, %v4915
        %v5104 = vmul.f32 %v4916, %v4916
        %v5105 = vmul.f32 %v4917, %v4917
        %v5106 = vmul.f32 %v4918, %v4918
        %v5107 = vmul.f32 %v4919, %v4919
        %v5108 = vmul.f32 %v4920, %v4920
        %v5109 = vmul.f32 %v4921, %v4921
        %v5110 = vmul.f32 %v4922, %v4922
        %v5111 = vmul.f32 %v4923, %v4923
        %v5112 = vmul.f32 %v4924, %v4924
        %v5113 = vmul.f32 %v4925, %v4925
        %v5114 = vmul.f32 %v4926, %v4926
        %v5115 = vmul.f32 %v4927, %v4927
        %v5116 = vmul.f32 %v4928, %v4928
        %v5117 = vmul.f32 %v4929, %v4929
        %v5118 = vmul.f32 %v4930, %v4930
        %v5119 = vmul.f32 %v4931, %v4931
        %v5120 = vmul.f32 %v4932, %v4932
        %v5121 = vmul.f32 %v4933, %v4933
        %v5122 = vmul.f32 %v4934, %v4934
        %v5123 = vmul.f32 %v4935, %v4935
        %v5124 = vmul.f32 %v4936, %v4936
        %v5125 = vmul.f32 %v4937, %v4937
        %v5126 = vmul.f32 %v4938, %v4938
        %v5127 = vmul.f32 %v4939, %v4939
        %v5128 = vmul.f32 %v4940, %v4940
        %v5129 = vmul.f32 %v4941, %v4941
        %v5130 = vmul.f32 %v4942, %v4942
        %v5131 = vmul.f32 %v4943, %v4943
        %v5132 = vmul.f32 %v4944, %v4944
        %v5133 = vmul.f32 %v4945, %v4945
        %v5134 = vmul.f32 %v4946, %v4946
        %v5135 = vmul.f32 %v4947, %v4947
        %v5136 = vmul.f32 %v4948, %v4948
        %v5137 = vmul.f32 %v4949, %v4949
        %v5138 = vmul.f32 %v4950, %v4950
        %v5139 = vmul.f32 %v4951, %v4951
        %v5140 = vadd.f32 %v5076, %v5077
        %5141 = vadd.xlane.f32.xlu0 %v5140
        %v5142 = vpop.xlane.xlu0 %5141
        %v5143 = vadd.f32 %v5078, %v5079
        %5144 = vadd.xlane.f32.xlu0 %v5143
        %v5145 = vpop.xlane.xlu0 %5144
        %v5146 = vadd.f32 %v5080, %v5081
        %5147 = vadd.xlane.f32.xlu0 %v5146
        %v5148 = vpop.xlane.xlu0 %5147
        %v5149 = vadd.f32 %v5082, %v5083
        %5150 = vadd.xlane.f32.xlu0 %v5149
        %v5151 = vpop.xlane.xlu0 %5150
        %v5152 = vadd.f32 %v5084, %v5085
        %5153 = vadd.xlane.f32.xlu0 %v5152
        %v5154 = vpop.xlane.xlu0 %5153
        %v5155 = vadd.f32 %v5086, %v5087
        %5156 = vadd.xlane.f32.xlu0 %v5155
        %v5157 = vpop.xlane.xlu0 %5156
        %v5158 = vadd.f32 %v5088, %v5089
        %5159 = vadd.xlane.f32.xlu0 %v5158
        %v5160 = vpop.xlane.xlu0 %5159
        %v5161 = vadd.f32 %v5090, %v5091
        %5162 = vadd.xlane.f32.xlu0 %v5161
        %v5163 = vpop.xlane.xlu0 %5162
        %v5164 = vadd.f32 %v5092, %v5093
        %5165 = vadd.xlane.f32.xlu0 %v5164
        %v5166 = vpop.xlane.xlu0 %5165
        %v5167 = vadd.f32 %v5094, %v5095
        %5168 = vadd.xlane.f32.xlu0 %v5167
        %v5169 = vpop.xlane.xlu0 %5168
        %v5170 = vadd.f32 %v5096, %v5097
        %5171 = vadd.xlane.f32.xlu0 %v5170
        %v5172 = vpop.xlane.xlu0 %5171
        %v5173 = vadd.f32 %v5098, %v5099
        %5174 = vadd.xlane.f32.xlu0 %v5173
        %v5175 = vpop.xlane.xlu0 %5174
        %v5176 = vadd.f32 %v5100, %v5101
        %5177 = vadd.xlane.f32.xlu0 %v5176
        %v5178 = vpop.xlane.xlu0 %5177
        %v5179 = vadd.f32 %v5102, %v5103
        %5180 = vadd.xlane.f32.xlu0 %v5179
        %v5181 = vpop.xlane.xlu0 %5180
        %v5182 = vadd.f32 %v5104, %v5105
        %5183 = vadd.xlane.f32.xlu0 %v5182
        %v5184 = vpop.xlane.xlu0 %5183
        %v5185 = vadd.f32 %v5106, %v5107
        %5186 = vadd.xlane.f32.xlu0 %v5185
        %v5187 = vpop.xlane.xlu0 %5186
        %v5188 = vadd.f32 %v5108, %v5109
        %5189 = vadd.xlane.f32.xlu0 %v5188
        %v5190 = vpop.xlane.xlu0 %5189
        %v5191 = vadd.f32 %v5110, %v5111
        %5192 = vadd.xlane.f32.xlu0 %v5191
        %v5193 = vpop.xlane.xlu0 %5192
        %v5194 = vadd.f32 %v5112, %v5113
        %5195 = vadd.xlane.f32.xlu0 %v5194
        %v5196 = vpop.xlane.xlu0 %5195
        %v5197 = vadd.f32 %v5114, %v5115
        %5198 = vadd.xlane.f32.xlu0 %v5197
        %v5199 = vpop.xlane.xlu0 %5198
        %v5200 = vadd.f32 %v5116, %v5117
        %5201 = vadd.xlane.f32.xlu0 %v5200
        %v5202 = vpop.xlane.xlu0 %5201
        %v5203 = vadd.f32 %v5118, %v5119
        %5204 = vadd.xlane.f32.xlu0 %v5203
        %v5205 = vpop.xlane.xlu0 %5204
        %v5206 = vadd.f32 %v5120, %v5121
        %5207 = vadd.xlane.f32.xlu0 %v5206
        %v5208 = vpop.xlane.xlu0 %5207
        %v5209 = vadd.f32 %v5122, %v5123
        %5210 = vadd.xlane.f32.xlu0 %v5209
        %v5211 = vpop.xlane.xlu0 %5210
        %v5212 = vadd.f32 %v5124, %v5125
        %5213 = vadd.xlane.f32.xlu0 %v5212
        %v5214 = vpop.xlane.xlu0 %5213
        %v5215 = vadd.f32 %v5126, %v5127
        %5216 = vadd.xlane.f32.xlu0 %v5215
        %v5217 = vpop.xlane.xlu0 %5216
        %v5218 = vadd.f32 %v5128, %v5129
        %5219 = vadd.xlane.f32.xlu0 %v5218
        %v5220 = vpop.xlane.xlu0 %5219
        %v5221 = vadd.f32 %v5130, %v5131
        %5222 = vadd.xlane.f32.xlu0 %v5221
        %v5223 = vpop.xlane.xlu0 %5222
        %v5224 = vadd.f32 %v5132, %v5133
        %5225 = vadd.xlane.f32.xlu0 %v5224
        %v5226 = vpop.xlane.xlu0 %5225
        %v5227 = vadd.f32 %v5134, %v5135
        %5228 = vadd.xlane.f32.xlu0 %v5227
        %v5229 = vpop.xlane.xlu0 %5228
        %v5230 = vadd.f32 %v5136, %v5137
        %5231 = vadd.xlane.f32.xlu0 %v5230
        %v5232 = vpop.xlane.xlu0 %5231
        %v5233 = vadd.f32 %v5138, %v5139
        %5234 = vadd.xlane.f32.xlu0 %v5233
        %v5235 = vpop.xlane.xlu0 %5234
        %v5236 = vadd.f32 %v5142, %v5154
        %v5237 = vadd.f32 %v5236, %v5166
        %v5238 = vadd.f32 %v5237, %v5178
        %v5239 = vadd.f32 %v5238, %v5190
        %v5240 = vadd.f32 %v5239, %v5202
        %v5241 = vadd.f32 %v5240, %v5214
        %v5242 = vadd.f32 %v5241, %v5226
        %v5243 = vadd.f32 %v5145, %v5157
        %v5244 = vadd.f32 %v5243, %v5169
        %v5245 = vadd.f32 %v5244, %v5181
        %v5246 = vadd.f32 %v5245, %v5193
        %v5247 = vadd.f32 %v5246, %v5205
        %v5248 = vadd.f32 %v5247, %v5217
        %v5249 = vadd.f32 %v5248, %v5229
        %v5250 = vadd.f32 %v5148, %v5160
        %v5251 = vadd.f32 %v5250, %v5172
        %v5252 = vadd.f32 %v5251, %v5184
        %v5253 = vadd.f32 %v5252, %v5196
        %v5254 = vadd.f32 %v5253, %v5208
        %v5255 = vadd.f32 %v5254, %v5220
        %v5256 = vadd.f32 %v5255, %v5232
        %v5257 = vadd.f32 %v5151, %v5163
        %v5258 = vadd.f32 %v5257, %v5175
        %v5259 = vadd.f32 %v5258, %v5187
        %v5260 = vadd.f32 %v5259, %v5199
        %v5261 = vadd.f32 %v5260, %v5211
        %v5262 = vadd.f32 %v5261, %v5223
        %v5263 = vadd.f32 %v5262, %v5235
        %v5269 = vunpack.c.l.s4 839922192
        %v5270 = vunpack.c.0.s8 %v5269
        %v5271 = vlaneseq
        %v5272 = vshrl.u32 %v5271, 7
        %v5273 = vsub.s32 %v5270, %v5272
        %v5274 = vrot.slane %v5054, %v5273
        %v5276 = vunpack.c.l.s4 1985246804
        %v5277 = vunpack.c.0.s8 %v5276
        %v5278 = vlaneseq
        %v5279 = vshrl.u32 %v5278, 7
        %v5280 = vsub.s32 %v5277, %v5279
        %v5281 = vrot.slane %v5054, %v5280
        %v5283 = vunpack.c.l.s4 839922192
        %v5284 = vunpack.c.0.s8 %v5283
        %v5285 = vlaneseq
        %v5286 = vshrl.u32 %v5285, 7
        %v5287 = vsub.s32 %v5284, %v5286
        %v5288 = vrot.slane %v5061, %v5287
        %v5290 = vunpack.c.l.s4 1985246804
        %v5291 = vunpack.c.0.s8 %v5290
        %v5292 = vlaneseq
        %v5293 = vshrl.u32 %v5292, 7
        %v5294 = vsub.s32 %v5291, %v5293
        %v5295 = vrot.slane %v5061, %v5294
        %v5297 = vunpack.c.l.s4 839922192
        %v5298 = vunpack.c.0.s8 %v5297
        %v5299 = vlaneseq
        %v5300 = vshrl.u32 %v5299, 7
        %v5301 = vsub.s32 %v5298, %v5300
        %v5302 = vrot.slane %v5068, %v5301
        %v5304 = vunpack.c.l.s4 1985246804
        %v5305 = vunpack.c.0.s8 %v5304
        %v5306 = vlaneseq
        %v5307 = vshrl.u32 %v5306, 7
        %v5308 = vsub.s32 %v5305, %v5307
        %v5309 = vrot.slane %v5068, %v5308
        %v5311 = vunpack.c.l.s4 839922192
        %v5312 = vunpack.c.0.s8 %v5311
        %v5313 = vlaneseq
        %v5314 = vshrl.u32 %v5313, 7
        %v5315 = vsub.s32 %v5312, %v5314
        %v5316 = vrot.slane %v5075, %v5315
        %v5318 = vunpack.c.l.s4 1985246804
        %v5319 = vunpack.c.0.s8 %v5318
        %v5320 = vlaneseq
        %v5321 = vshrl.u32 %v5320, 7
        %v5322 = vsub.s32 %v5319, %v5321
        %v5323 = vrot.slane %v5075, %v5322
        %v5332 = vsel %vm652, %v5274, 0.0
        %v5333 = vrot.slane %v5332, 4
        %v5334 = vadd.f32 %v5332, %v5333
        %v5335 = vrot.slane %v5334, 2
        %v5336 = vadd.f32 %v5334, %v5335
        %v5337 = vrot.slane %v5336, 1
        %v5338 = vadd.f32 %v5336, %v5337
        %v5339 = vsel %vm652, %v5281, 0.0
        %v5340 = vrot.slane %v5339, 4
        %v5341 = vadd.f32 %v5339, %v5340
        %v5342 = vrot.slane %v5341, 2
        %v5343 = vadd.f32 %v5341, %v5342
        %v5344 = vrot.slane %v5343, 1
        %v5345 = vadd.f32 %v5343, %v5344
        %v5346 = vsel %vm652, %v5288, 0.0
        %v5347 = vrot.slane %v5346, 4
        %v5348 = vadd.f32 %v5346, %v5347
        %v5349 = vrot.slane %v5348, 2
        %v5350 = vadd.f32 %v5348, %v5349
        %v5351 = vrot.slane %v5350, 1
        %v5352 = vadd.f32 %v5350, %v5351
        %v5353 = vsel %vm652, %v5295, 0.0
        %v5354 = vrot.slane %v5353, 4
        %v5355 = vadd.f32 %v5353, %v5354
        %v5356 = vrot.slane %v5355, 2
        %v5357 = vadd.f32 %v5355, %v5356
        %v5358 = vrot.slane %v5357, 1
        %v5359 = vadd.f32 %v5357, %v5358
        %v5360 = vsel %vm652, %v5302, 0.0
        %v5361 = vrot.slane %v5360, 4
        %v5362 = vadd.f32 %v5360, %v5361
        %v5363 = vrot.slane %v5362, 2
        %v5364 = vadd.f32 %v5362, %v5363
        %v5365 = vrot.slane %v5364, 1
        %v5366 = vadd.f32 %v5364, %v5365
        %v5367 = vsel %vm652, %v5309, 0.0
        %v5368 = vrot.slane %v5367, 4
        %v5369 = vadd.f32 %v5367, %v5368
        %v5370 = vrot.slane %v5369, 2
        %v5371 = vadd.f32 %v5369, %v5370
        %v5372 = vrot.slane %v5371, 1
        %v5373 = vadd.f32 %v5371, %v5372
        %v5374 = vsel %vm652, %v5316, 0.0
        %v5375 = vrot.slane %v5374, 4
        %v5376 = vadd.f32 %v5374, %v5375
        %v5377 = vrot.slane %v5376, 2
        %v5378 = vadd.f32 %v5376, %v5377
        %v5379 = vrot.slane %v5378, 1
        %v5380 = vadd.f32 %v5378, %v5379
        %v5381 = vsel %vm652, %v5323, 0.0
        %v5382 = vrot.slane %v5381, 4
        %v5383 = vadd.f32 %v5381, %v5382
        %v5384 = vrot.slane %v5383, 2
        %v5385 = vadd.f32 %v5383, %v5384
        %v5386 = vrot.slane %v5385, 1
        %v5387 = vadd.f32 %v5385, %v5386
        %v5393 = vunpack.c.l.s4 839922192
        %v5394 = vunpack.c.0.s8 %v5393
        %v5395 = vlaneseq
        %v5396 = vshrl.u32 %v5395, 7
        %v5397 = vsub.s32 %v5394, %v5396
        %v5398 = vrot.slane %v5242, %v5397
        %v5400 = vunpack.c.l.s4 1985246804
        %v5401 = vunpack.c.0.s8 %v5400
        %v5402 = vlaneseq
        %v5403 = vshrl.u32 %v5402, 7
        %v5404 = vsub.s32 %v5401, %v5403
        %v5405 = vrot.slane %v5242, %v5404
        %v5407 = vunpack.c.l.s4 839922192
        %v5408 = vunpack.c.0.s8 %v5407
        %v5409 = vlaneseq
        %v5410 = vshrl.u32 %v5409, 7
        %v5411 = vsub.s32 %v5408, %v5410
        %v5412 = vrot.slane %v5249, %v5411
        %v5414 = vunpack.c.l.s4 1985246804
        %v5415 = vunpack.c.0.s8 %v5414
        %v5416 = vlaneseq
        %v5417 = vshrl.u32 %v5416, 7
        %v5418 = vsub.s32 %v5415, %v5417
        %v5419 = vrot.slane %v5249, %v5418
        %v5421 = vunpack.c.l.s4 839922192
        %v5422 = vunpack.c.0.s8 %v5421
        %v5423 = vlaneseq
        %v5424 = vshrl.u32 %v5423, 7
        %v5425 = vsub.s32 %v5422, %v5424
        %v5426 = vrot.slane %v5256, %v5425
        %v5428 = vunpack.c.l.s4 1985246804
        %v5429 = vunpack.c.0.s8 %v5428
        %v5430 = vlaneseq
        %v5431 = vshrl.u32 %v5430, 7
        %v5432 = vsub.s32 %v5429, %v5431
        %v5433 = vrot.slane %v5256, %v5432
        %v5435 = vunpack.c.l.s4 839922192
        %v5436 = vunpack.c.0.s8 %v5435
        %v5437 = vlaneseq
        %v5438 = vshrl.u32 %v5437, 7
        %v5439 = vsub.s32 %v5436, %v5438
        %v5440 = vrot.slane %v5263, %v5439
        %v5442 = vunpack.c.l.s4 1985246804
        %v5443 = vunpack.c.0.s8 %v5442
        %v5444 = vlaneseq
        %v5445 = vshrl.u32 %v5444, 7
        %v5446 = vsub.s32 %v5443, %v5445
        %v5447 = vrot.slane %v5263, %v5446
        %v5456 = vsel %vm652, %v5398, 0.0
        %v5457 = vrot.slane %v5456, 4
        %v5458 = vadd.f32 %v5456, %v5457
        %v5459 = vrot.slane %v5458, 2
        %v5460 = vadd.f32 %v5458, %v5459
        %v5461 = vrot.slane %v5460, 1
        %v5462 = vadd.f32 %v5460, %v5461
        %v5463 = vsel %vm652, %v5405, 0.0
        %v5464 = vrot.slane %v5463, 4
        %v5465 = vadd.f32 %v5463, %v5464
        %v5466 = vrot.slane %v5465, 2
        %v5467 = vadd.f32 %v5465, %v5466
        %v5468 = vrot.slane %v5467, 1
        %v5469 = vadd.f32 %v5467, %v5468
        %v5470 = vsel %vm652, %v5412, 0.0
        %v5471 = vrot.slane %v5470, 4
        %v5472 = vadd.f32 %v5470, %v5471
        %v5473 = vrot.slane %v5472, 2
        %v5474 = vadd.f32 %v5472, %v5473
        %v5475 = vrot.slane %v5474, 1
        %v5476 = vadd.f32 %v5474, %v5475
        %v5477 = vsel %vm652, %v5419, 0.0
        %v5478 = vrot.slane %v5477, 4
        %v5479 = vadd.f32 %v5477, %v5478
        %v5480 = vrot.slane %v5479, 2
        %v5481 = vadd.f32 %v5479, %v5480
        %v5482 = vrot.slane %v5481, 1
        %v5483 = vadd.f32 %v5481, %v5482
        %v5484 = vsel %vm652, %v5426, 0.0
        %v5485 = vrot.slane %v5484, 4
        %v5486 = vadd.f32 %v5484, %v5485
        %v5487 = vrot.slane %v5486, 2
        %v5488 = vadd.f32 %v5486, %v5487
        %v5489 = vrot.slane %v5488, 1
        %v5490 = vadd.f32 %v5488, %v5489
        %v5491 = vsel %vm652, %v5433, 0.0
        %v5492 = vrot.slane %v5491, 4
        %v5493 = vadd.f32 %v5491, %v5492
        %v5494 = vrot.slane %v5493, 2
        %v5495 = vadd.f32 %v5493, %v5494
        %v5496 = vrot.slane %v5495, 1
        %v5497 = vadd.f32 %v5495, %v5496
        %v5498 = vsel %vm652, %v5440, 0.0
        %v5499 = vrot.slane %v5498, 4
        %v5500 = vadd.f32 %v5498, %v5499
        %v5501 = vrot.slane %v5500, 2
        %v5502 = vadd.f32 %v5500, %v5501
        %v5503 = vrot.slane %v5502, 1
        %v5504 = vadd.f32 %v5502, %v5503
        %v5505 = vsel %vm652, %v5447, 0.0
        %v5506 = vrot.slane %v5505, 4
        %v5507 = vadd.f32 %v5505, %v5506
        %v5508 = vrot.slane %v5507, 2
        %v5509 = vadd.f32 %v5507, %v5508
        %v5510 = vrot.slane %v5509, 1
        %v5511 = vadd.f32 %v5509, %v5510
        %v5512 = vmul.f32 %v5338, 0.00012207031
        %v5513 = vmul.f32 %v5345, 0.00012207031
        %v5514 = vmul.f32 %v5352, 0.00012207031
        %v5515 = vmul.f32 %v5359, 0.00012207031
        %v5516 = vmul.f32 %v5366, 0.00012207031
        %v5517 = vmul.f32 %v5373, 0.00012207031
        %v5518 = vmul.f32 %v5380, 0.00012207031
        %v5519 = vmul.f32 %v5387, 0.00012207031
        %v5520 = vmul.f32 %v5462, 0.00012207031
        %v5521 = vmul.f32 %v5469, 0.00012207031
        %v5522 = vmul.f32 %v5476, 0.00012207031
        %v5523 = vmul.f32 %v5483, 0.00012207031
        %v5524 = vmul.f32 %v5490, 0.00012207031
        %v5525 = vmul.f32 %v5497, 0.00012207031
        %v5526 = vmul.f32 %v5504, 0.00012207031
        %v5527 = vmul.f32 %v5511, 0.00012207031
        %v5528 = vmul.f32 %v5512, %v5512
        %v5529 = vmul.f32 %v5513, %v5513
        %v5530 = vmul.f32 %v5514, %v5514
        %v5531 = vmul.f32 %v5515, %v5515
        %v5532 = vmul.f32 %v5516, %v5516
        %v5533 = vmul.f32 %v5517, %v5517
        %v5534 = vmul.f32 %v5518, %v5518
        %v5535 = vmul.f32 %v5519, %v5519
        %v5536 = vsub.f32 %v5520, %v5528
        %v5537 = vsub.f32 %v5521, %v5529
        %v5538 = vsub.f32 %v5522, %v5530
        %v5539 = vsub.f32 %v5523, %v5531
        %v5540 = vsub.f32 %v5524, %v5532
        %v5541 = vsub.f32 %v5525, %v5533
        %v5542 = vsub.f32 %v5526, %v5534
        %v5543 = vsub.f32 %v5527, %v5535
        %v5544 = vadd.f32 %v5536, 1e-05
        %v5545 = vadd.f32 %v5537, 1e-05
        %v5546 = vadd.f32 %v5538, 1e-05
        %v5547 = vadd.f32 %v5539, 1e-05
        %v5548 = vadd.f32 %v5540, 1e-05
        %v5549 = vadd.f32 %v5541, 1e-05
        %v5550 = vadd.f32 %v5542, 1e-05
        %v5551 = vadd.f32 %v5543, 1e-05
        %v5552 = vrsqrt.pop %v5544
        %v5553 = vrsqrt.pop %v5545
        %v5554 = vrsqrt.pop %v5546
        %v5555 = vrsqrt.pop %v5547
        %v5556 = vrsqrt.pop %v5548
        %v5557 = vrsqrt.pop %v5549
        %v5558 = vrsqrt.pop %v5550
        %v5559 = vrsqrt.pop %v5551
        %v5560 = vcombine.high %v4116, %v4116
        %v5561 = vcombine.high %v4117, %v4117
        %v5562 = vcombine.high %v4118, %v4118
        %v5563 = vcombine.high %v4119, %v4119
        %v5568 = vmul.f32 %v5552, %v4116
        %v5569 = vmul.f32 %v5553, %v5560
        %v5570 = vmul.f32 %v5554, %v4117
        %v5571 = vmul.f32 %v5555, %v5561
        %v5572 = vmul.f32 %v5556, %v4118
        %v5573 = vmul.f32 %v5557, %v5562
        %v5574 = vmul.f32 %v5558, %v4119
        %v5575 = vmul.f32 %v5559, %v5563
        %v5576 = vmul.f32 %v5512, %v5552
        %v5577 = vmul.f32 %v5513, %v5553
        %v5578 = vmul.f32 %v5514, %v5554
        %v5579 = vmul.f32 %v5515, %v5555
        %v5580 = vmul.f32 %v5516, %v5556
        %v5581 = vmul.f32 %v5517, %v5557
        %v5582 = vmul.f32 %v5518, %v5558
        %v5583 = vmul.f32 %v5519, %v5559
        %v5584 = vmul.f32 %v5576, %v4116
        %v5585 = vmul.f32 %v5577, %v5560
        %v5586 = vmul.f32 %v5578, %v4117
        %v5587 = vmul.f32 %v5579, %v5561
        %v5588 = vmul.f32 %v5580, %v4118
        %v5589 = vmul.f32 %v5581, %v5562
        %v5590 = vmul.f32 %v5582, %v4119
        %v5591 = vmul.f32 %v5583, %v5563
        %5600 = vrot.lane.b32.xlu0 %v5584, 1
        %v5601 = vpop.permute.xlu0 %5600
        %5602 = vrot.lane.b32.xlu0 %v5585, 1
        %v5603 = vpop.permute.xlu0 %5602
        %5604 = vrot.lane.b32.xlu0 %v5586, 1
        %v5605 = vpop.permute.xlu0 %5604
        %5606 = vrot.lane.b32.xlu0 %v5587, 1
        %v5607 = vpop.permute.xlu0 %5606
        %5608 = vrot.lane.b32.xlu0 %v5588, 1
        %v5609 = vpop.permute.xlu0 %5608
        %5610 = vrot.lane.b32.xlu0 %v5589, 1
        %v5611 = vpop.permute.xlu0 %5610
        %5612 = vrot.lane.b32.xlu0 %v5590, 1
        %v5613 = vpop.permute.xlu0 %5612
        %5614 = vrot.lane.b32.xlu0 %v5591, 1
        %v5615 = vpop.permute.xlu0 %5614
        %v5624 = vsub.f32 %v4116, %v5601
        %v5625 = vsub.f32 %v5560, %v5603
        %v5626 = vsub.f32 %v4117, %v5605
        %v5627 = vsub.f32 %v5561, %v5607
        %v5628 = vsub.f32 %v4118, %v5609
        %v5629 = vsub.f32 %v5562, %v5611
        %v5630 = vsub.f32 %v4119, %v5613
        %v5631 = vsub.f32 %v5563, %v5615
        %5633 = vset.pattern.permute.xlu0 6
        %5634 = vperm.xlu0 %5633, %v5568
        %v5635 = vpop.permute.xlu0 %5634
        %v5638 = vunpack.c.l.s4 839922192
        %v5639 = vunpack.c.0.s8 %v5638
        %v5640 = vlaneseq
        %v5641 = vshrl.u32 %v5640, 7
        %v5642 = vsub.s32 %v5639, %v5641
        %v5643 = vrot.slane %v5635, %v5642
        %5645 = vset.pattern.permute.xlu0 6
        %5646 = vperm.xlu0 %5645, %v5569
        %v5647 = vpop.permute.xlu0 %5646
        %v5650 = vunpack.c.l.s4 839922192
        %v5651 = vunpack.c.0.s8 %v5650
        %v5652 = vlaneseq
        %v5653 = vshrl.u32 %v5652, 7
        %v5654 = vsub.s32 %v5651, %v5653
        %v5655 = vrot.slane %v5647, %v5654
        %5657 = vset.pattern.permute.xlu0 6
        %5658 = vperm.xlu0 %5657, %v5570
        %v5659 = vpop.permute.xlu0 %5658
        %v5662 = vunpack.c.l.s4 839922192
        %v5663 = vunpack.c.0.s8 %v5662
        %v5664 = vlaneseq
        %v5665 = vshrl.u32 %v5664, 7
        %v5666 = vsub.s32 %v5663, %v5665
        %v5667 = vrot.slane %v5659, %v5666
        %5669 = vset.pattern.permute.xlu0 6
        %5670 = vperm.xlu0 %5669, %v5571
        %v5671 = vpop.permute.xlu0 %5670
        %v5674 = vunpack.c.l.s4 839922192
        %v5675 = vunpack.c.0.s8 %v5674
        %v5676 = vlaneseq
        %v5677 = vshrl.u32 %v5676, 7
        %v5678 = vsub.s32 %v5675, %v5677
        %v5679 = vrot.slane %v5671, %v5678
        %5681 = vset.pattern.permute.xlu0 6
        %5682 = vperm.xlu0 %5681, %v5572
        %v5683 = vpop.permute.xlu0 %5682
        %v5686 = vunpack.c.l.s4 839922192
        %v5687 = vunpack.c.0.s8 %v5686
        %v5688 = vlaneseq
        %v5689 = vshrl.u32 %v5688, 7
        %v5690 = vsub.s32 %v5687, %v5689
        %v5691 = vrot.slane %v5683, %v5690
        %5693 = vset.pattern.permute.xlu0 6
        %5694 = vperm.xlu0 %5693, %v5573
        %v5695 = vpop.permute.xlu0 %5694
        %v5698 = vunpack.c.l.s4 839922192
        %v5699 = vunpack.c.0.s8 %v5698
        %v5700 = vlaneseq
        %v5701 = vshrl.u32 %v5700, 7
        %v5702 = vsub.s32 %v5699, %v5701
        %v5703 = vrot.slane %v5695, %v5702
        %5705 = vset.pattern.permute.xlu0 6
        %5706 = vperm.xlu0 %5705, %v5574
        %v5707 = vpop.permute.xlu0 %5706
        %v5710 = vunpack.c.l.s4 839922192
        %v5711 = vunpack.c.0.s8 %v5710
        %v5712 = vlaneseq
        %v5713 = vshrl.u32 %v5712, 7
        %v5714 = vsub.s32 %v5711, %v5713
        %v5715 = vrot.slane %v5707, %v5714
        %5717 = vset.pattern.permute.xlu0 6
        %5718 = vperm.xlu0 %5717, %v5575
        %v5719 = vpop.permute.xlu0 %5718
        %v5722 = vunpack.c.l.s4 839922192
        %v5723 = vunpack.c.0.s8 %v5722
        %v5724 = vlaneseq
        %v5725 = vshrl.u32 %v5724, 7
        %v5726 = vsub.s32 %v5723, %v5725
        %v5727 = vrot.slane %v5719, %v5726
        %v5736 = vcombine.low %v5643, %v5655
        %v5737 = vcombine.high %v5643, %v5655
        %v5738 = vcombine.low %v5667, %v5679
        %v5739 = vcombine.high %v5667, %v5679
        %v5740 = vcombine.low %v5691, %v5703
        %v5741 = vcombine.high %v5691, %v5703
        %v5742 = vcombine.low %v5715, %v5727
        %v5743 = vcombine.high %v5715, %v5727
        %v5752 = vmul.f32 %v4888, %v5736
        %v5753 = vmul.f32 %v4889, %v5737
        %v5754 = vmul.f32 %v4890, %v5738
        %v5755 = vmul.f32 %v4891, %v5739
        %v5756 = vmul.f32 %v4892, %v5740
        %v5757 = vmul.f32 %v4893, %v5741
        %v5758 = vmul.f32 %v4894, %v5742
        %v5759 = vmul.f32 %v4895, %v5743
        %v5760 = vmul.f32 %v4896, %v5736
        %v5761 = vmul.f32 %v4897, %v5737
        %v5762 = vmul.f32 %v4898, %v5738
        %v5763 = vmul.f32 %v4899, %v5739
        %v5764 = vmul.f32 %v4900, %v5740
        %v5765 = vmul.f32 %v4901, %v5741
        %v5766 = vmul.f32 %v4902, %v5742
        %v5767 = vmul.f32 %v4903, %v5743
        %v5768 = vmul.f32 %v4904, %v5736
        %v5769 = vmul.f32 %v4905, %v5737
        %v5770 = vmul.f32 %v4906, %v5738
        %v5771 = vmul.f32 %v4907, %v5739
        %v5772 = vmul.f32 %v4908, %v5740
        %v5773 = vmul.f32 %v4909, %v5741
        %v5774 = vmul.f32 %v4910, %v5742
        %v5775 = vmul.f32 %v4911, %v5743
        %v5776 = vmul.f32 %v4912, %v5736
        %v5777 = vmul.f32 %v4913, %v5737
        %v5778 = vmul.f32 %v4914, %v5738
        %v5779 = vmul.f32 %v4915, %v5739
        %v5780 = vmul.f32 %v4916, %v5740
        %v5781 = vmul.f32 %v4917, %v5741
        %v5782 = vmul.f32 %v4918, %v5742
        %v5783 = vmul.f32 %v4919, %v5743
        %v5784 = vmul.f32 %v4920, %v5736
        %v5785 = vmul.f32 %v4921, %v5737
        %v5786 = vmul.f32 %v4922, %v5738
        %v5787 = vmul.f32 %v4923, %v5739
        %v5788 = vmul.f32 %v4924, %v5740
        %v5789 = vmul.f32 %v4925, %v5741
        %v5790 = vmul.f32 %v4926, %v5742
        %v5791 = vmul.f32 %v4927, %v5743
        %v5792 = vmul.f32 %v4928, %v5736
        %v5793 = vmul.f32 %v4929, %v5737
        %v5794 = vmul.f32 %v4930, %v5738
        %v5795 = vmul.f32 %v4931, %v5739
        %v5796 = vmul.f32 %v4932, %v5740
        %v5797 = vmul.f32 %v4933, %v5741
        %v5798 = vmul.f32 %v4934, %v5742
        %v5799 = vmul.f32 %v4935, %v5743
        %v5800 = vmul.f32 %v4936, %v5736
        %v5801 = vmul.f32 %v4937, %v5737
        %v5802 = vmul.f32 %v4938, %v5738
        %v5803 = vmul.f32 %v4939, %v5739
        %v5804 = vmul.f32 %v4940, %v5740
        %v5805 = vmul.f32 %v4941, %v5741
        %v5806 = vmul.f32 %v4942, %v5742
        %v5807 = vmul.f32 %v4943, %v5743
        %v5808 = vmul.f32 %v4944, %v5736
        %v5809 = vmul.f32 %v4945, %v5737
        %v5810 = vmul.f32 %v4946, %v5738
        %v5811 = vmul.f32 %v4947, %v5739
        %v5812 = vmul.f32 %v4948, %v5740
        %v5813 = vmul.f32 %v4949, %v5741
        %v5814 = vmul.f32 %v4950, %v5742
        %v5815 = vmul.f32 %v4951, %v5743
        %5817 = vset.pattern.permute.xlu0 7
        %5818 = vperm.xlu0 %5817, %v5624
        %v5819 = vpop.permute.xlu0 %5818
        %v5822 = vunpack.c.l.s4 839922192
        %v5823 = vunpack.c.0.s8 %v5822
        %v5824 = vlaneseq
        %v5825 = vshrl.u32 %v5824, 7
        %v5826 = vsub.s32 %v5823, %v5825
        %v5827 = vrot.slane %v5819, %v5826
        %5829 = vset.pattern.permute.xlu0 7
        %5830 = vperm.xlu0 %5829, %v5625
        %v5831 = vpop.permute.xlu0 %5830
        %v5834 = vunpack.c.l.s4 839922192
        %v5835 = vunpack.c.0.s8 %v5834
        %v5836 = vlaneseq
        %v5837 = vshrl.u32 %v5836, 7
        %v5838 = vsub.s32 %v5835, %v5837
        %v5839 = vrot.slane %v5831, %v5838
        %5841 = vset.pattern.permute.xlu0 7
        %5842 = vperm.xlu0 %5841, %v5626
        %v5843 = vpop.permute.xlu0 %5842
        %v5846 = vunpack.c.l.s4 839922192
        %v5847 = vunpack.c.0.s8 %v5846
        %v5848 = vlaneseq
        %v5849 = vshrl.u32 %v5848, 7
        %v5850 = vsub.s32 %v5847, %v5849
        %v5851 = vrot.slane %v5843, %v5850
        %5853 = vset.pattern.permute.xlu0 7
        %5854 = vperm.xlu0 %5853, %v5627
        %v5855 = vpop.permute.xlu0 %5854
        %v5858 = vunpack.c.l.s4 839922192
        %v5859 = vunpack.c.0.s8 %v5858
        %v5860 = vlaneseq
        %v5861 = vshrl.u32 %v5860, 7
        %v5862 = vsub.s32 %v5859, %v5861
        %v5863 = vrot.slane %v5855, %v5862
        %5865 = vset.pattern.permute.xlu0 7
        %5866 = vperm.xlu0 %5865, %v5628
        %v5867 = vpop.permute.xlu0 %5866
        %v5870 = vunpack.c.l.s4 839922192
        %v5871 = vunpack.c.0.s8 %v5870
        %v5872 = vlaneseq
        %v5873 = vshrl.u32 %v5872, 7
        %v5874 = vsub.s32 %v5871, %v5873
        %v5875 = vrot.slane %v5867, %v5874
        %5877 = vset.pattern.permute.xlu0 7
        %5878 = vperm.xlu0 %5877, %v5629
        %v5879 = vpop.permute.xlu0 %5878
        %v5882 = vunpack.c.l.s4 839922192
        %v5883 = vunpack.c.0.s8 %v5882
        %v5884 = vlaneseq
        %v5885 = vshrl.u32 %v5884, 7
        %v5886 = vsub.s32 %v5883, %v5885
        %v5887 = vrot.slane %v5879, %v5886
        %5889 = vset.pattern.permute.xlu0 7
        %5890 = vperm.xlu0 %5889, %v5630
        %v5891 = vpop.permute.xlu0 %5890
        %v5894 = vunpack.c.l.s4 839922192
        %v5895 = vunpack.c.0.s8 %v5894
        %v5896 = vlaneseq
        %v5897 = vshrl.u32 %v5896, 7
        %v5898 = vsub.s32 %v5895, %v5897
        %v5899 = vrot.slane %v5891, %v5898
        %5901 = vset.pattern.permute.xlu0 7
        %5902 = vperm.xlu0 %5901, %v5631
        %v5903 = vpop.permute.xlu0 %5902
        %v5906 = vunpack.c.l.s4 839922192
        %v5907 = vunpack.c.0.s8 %v5906
        %v5908 = vlaneseq
        %v5909 = vshrl.u32 %v5908, 7
        %v5910 = vsub.s32 %v5907, %v5909
        %v5911 = vrot.slane %v5903, %v5910
        %v5920 = vcombine.low %v5827, %v5839
        %v5921 = vcombine.high %v5827, %v5839
        %v5922 = vcombine.low %v5851, %v5863
        %v5923 = vcombine.high %v5851, %v5863
        %v5924 = vcombine.low %v5875, %v5887
        %v5925 = vcombine.high %v5875, %v5887
        %v5926 = vcombine.low %v5899, %v5911
        %v5927 = vcombine.high %v5899, %v5911
        %v5936 = vadd.f32 %v5752, %v5920
        %v5937 = vadd.f32 %v5753, %v5921
        %v5938 = vadd.f32 %v5754, %v5922
        %v5939 = vadd.f32 %v5755, %v5923
        %v5940 = vadd.f32 %v5756, %v5924
        %v5941 = vadd.f32 %v5757, %v5925
        %v5942 = vadd.f32 %v5758, %v5926
        %v5943 = vadd.f32 %v5759, %v5927
        %v5944 = vadd.f32 %v5760, %v5920
        %v5945 = vadd.f32 %v5761, %v5921
        %v5946 = vadd.f32 %v5762, %v5922
        %v5947 = vadd.f32 %v5763, %v5923
        %v5948 = vadd.f32 %v5764, %v5924
        %v5949 = vadd.f32 %v5765, %v5925
        %v5950 = vadd.f32 %v5766, %v5926
        %v5951 = vadd.f32 %v5767, %v5927
        %v5952 = vadd.f32 %v5768, %v5920
        %v5953 = vadd.f32 %v5769, %v5921
        %v5954 = vadd.f32 %v5770, %v5922
        %v5955 = vadd.f32 %v5771, %v5923
        %v5956 = vadd.f32 %v5772, %v5924
        %v5957 = vadd.f32 %v5773, %v5925
        %v5958 = vadd.f32 %v5774, %v5926
        %v5959 = vadd.f32 %v5775, %v5927
        %v5960 = vadd.f32 %v5776, %v5920
        %v5961 = vadd.f32 %v5777, %v5921
        %v5962 = vadd.f32 %v5778, %v5922
        %v5963 = vadd.f32 %v5779, %v5923
        %v5964 = vadd.f32 %v5780, %v5924
        %v5965 = vadd.f32 %v5781, %v5925
        %v5966 = vadd.f32 %v5782, %v5926
        %v5967 = vadd.f32 %v5783, %v5927
        %v5968 = vadd.f32 %v5784, %v5920
        %v5969 = vadd.f32 %v5785, %v5921
        %v5970 = vadd.f32 %v5786, %v5922
        %v5971 = vadd.f32 %v5787, %v5923
        %v5972 = vadd.f32 %v5788, %v5924
        %v5973 = vadd.f32 %v5789, %v5925
        %v5974 = vadd.f32 %v5790, %v5926
        %v5975 = vadd.f32 %v5791, %v5927
        %v5976 = vadd.f32 %v5792, %v5920
        %v5977 = vadd.f32 %v5793, %v5921
        %v5978 = vadd.f32 %v5794, %v5922
        %v5979 = vadd.f32 %v5795, %v5923
        %v5980 = vadd.f32 %v5796, %v5924
        %v5981 = vadd.f32 %v5797, %v5925
        %v5982 = vadd.f32 %v5798, %v5926
        %v5983 = vadd.f32 %v5799, %v5927
        %v5984 = vadd.f32 %v5800, %v5920
        %v5985 = vadd.f32 %v5801, %v5921
        %v5986 = vadd.f32 %v5802, %v5922
        %v5987 = vadd.f32 %v5803, %v5923
        %v5988 = vadd.f32 %v5804, %v5924
        %v5989 = vadd.f32 %v5805, %v5925
        %v5990 = vadd.f32 %v5806, %v5926
        %v5991 = vadd.f32 %v5807, %v5927
        %v5992 = vadd.f32 %v5808, %v5920
        %v5993 = vadd.f32 %v5809, %v5921
        %v5994 = vadd.f32 %v5810, %v5922
        %v5995 = vadd.f32 %v5811, %v5923
        %v5996 = vadd.f32 %v5812, %v5924
        %v5997 = vadd.f32 %v5813, %v5925
        %v5998 = vadd.f32 %v5814, %v5926
        %v5999 = vadd.f32 %v5815, %v5927
        %v6000 = vxor.u32 %v5936, 2147483648
        %v6001 = vxor.u32 %v5937, 2147483648
        %v6002 = vxor.u32 %v5938, 2147483648
        %v6003 = vxor.u32 %v5939, 2147483648
        %v6004 = vxor.u32 %v5940, 2147483648
        %v6005 = vxor.u32 %v5941, 2147483648
        %v6006 = vxor.u32 %v5942, 2147483648
        %v6007 = vxor.u32 %v5943, 2147483648
        %v6008 = vxor.u32 %v5944, 2147483648
        %v6009 = vxor.u32 %v5945, 2147483648
        %v6010 = vxor.u32 %v5946, 2147483648
        %v6011 = vxor.u32 %v5947, 2147483648
        %v6012 = vxor.u32 %v5948, 2147483648
        %v6013 = vxor.u32 %v5949, 2147483648
        %v6014 = vxor.u32 %v5950, 2147483648
        %v6015 = vxor.u32 %v5951, 2147483648
        %v6016 = vxor.u32 %v5952, 2147483648
        %v6017 = vxor.u32 %v5953, 2147483648
        %v6018 = vxor.u32 %v5954, 2147483648
        %v6019 = vxor.u32 %v5955, 2147483648
        %v6020 = vxor.u32 %v5956, 2147483648
        %v6021 = vxor.u32 %v5957, 2147483648
        %v6022 = vxor.u32 %v5958, 2147483648
        %v6023 = vxor.u32 %v5959, 2147483648
        %v6024 = vxor.u32 %v5960, 2147483648
        %v6025 = vxor.u32 %v5961, 2147483648
        %v6026 = vxor.u32 %v5962, 2147483648
        %v6027 = vxor.u32 %v5963, 2147483648
        %v6028 = vxor.u32 %v5964, 2147483648
        %v6029 = vxor.u32 %v5965, 2147483648
        %v6030 = vxor.u32 %v5966, 2147483648
        %v6031 = vxor.u32 %v5967, 2147483648
        %v6032 = vxor.u32 %v5968, 2147483648
        %v6033 = vxor.u32 %v5969, 2147483648
        %v6034 = vxor.u32 %v5970, 2147483648
        %v6035 = vxor.u32 %v5971, 2147483648
        %v6036 = vxor.u32 %v5972, 2147483648
        %v6037 = vxor.u32 %v5973, 2147483648
        %v6038 = vxor.u32 %v5974, 2147483648
        %v6039 = vxor.u32 %v5975, 2147483648
        %v6040 = vxor.u32 %v5976, 2147483648
        %v6041 = vxor.u32 %v5977, 2147483648
        %v6042 = vxor.u32 %v5978, 2147483648
        %v6043 = vxor.u32 %v5979, 2147483648
        %v6044 = vxor.u32 %v5980, 2147483648
        %v6045 = vxor.u32 %v5981, 2147483648
        %v6046 = vxor.u32 %v5982, 2147483648
        %v6047 = vxor.u32 %v5983, 2147483648
        %v6048 = vxor.u32 %v5984, 2147483648
        %v6049 = vxor.u32 %v5985, 2147483648
        %v6050 = vxor.u32 %v5986, 2147483648
        %v6051 = vxor.u32 %v5987, 2147483648
        %v6052 = vxor.u32 %v5988, 2147483648
        %v6053 = vxor.u32 %v5989, 2147483648
        %v6054 = vxor.u32 %v5990, 2147483648
        %v6055 = vxor.u32 %v5991, 2147483648
        %v6056 = vxor.u32 %v5992, 2147483648
        %v6057 = vxor.u32 %v5993, 2147483648
        %v6058 = vxor.u32 %v5994, 2147483648
        %v6059 = vxor.u32 %v5995, 2147483648
        %v6060 = vxor.u32 %v5996, 2147483648
        %v6061 = vxor.u32 %v5997, 2147483648
        %v6062 = vxor.u32 %v5998, 2147483648
        %v6063 = vxor.u32 %v5999, 2147483648
        %v6064 = vmul.f32 %v6000, 1.442695
        %v6065 = vpow.pop %v6064
        %v6066 = vmul.f32 %v6001, 1.442695
        %v6067 = vpow.pop %v6066
        %v6068 = vmul.f32 %v6002, 1.442695
        %v6069 = vpow.pop %v6068
        %v6070 = vmul.f32 %v6003, 1.442695
        %v6071 = vpow.pop %v6070
        %v6072 = vmul.f32 %v6004, 1.442695
        %v6073 = vpow.pop %v6072
        %v6074 = vmul.f32 %v6005, 1.442695
        %v6075 = vpow.pop %v6074
        %v6076 = vmul.f32 %v6006, 1.442695
        %v6077 = vpow.pop %v6076
        %v6078 = vmul.f32 %v6007, 1.442695
        %v6079 = vpow.pop %v6078
        %v6080 = vmul.f32 %v6008, 1.442695
        %v6081 = vpow.pop %v6080
        %v6082 = vmul.f32 %v6009, 1.442695
        %v6083 = vpow.pop %v6082
        %v6084 = vmul.f32 %v6010, 1.442695
        %v6085 = vpow.pop %v6084
        %v6086 = vmul.f32 %v6011, 1.442695
        %v6087 = vpow.pop %v6086
        %v6088 = vmul.f32 %v6012, 1.442695
        %v6089 = vpow.pop %v6088
        %v6090 = vmul.f32 %v6013, 1.442695
        %v6091 = vpow.pop %v6090
        %v6092 = vmul.f32 %v6014, 1.442695
        %v6093 = vpow.pop %v6092
        %v6094 = vmul.f32 %v6015, 1.442695
        %v6095 = vpow.pop %v6094
        %v6096 = vmul.f32 %v6016, 1.442695
        %v6097 = vpow.pop %v6096
        %v6098 = vmul.f32 %v6017, 1.442695
        %v6099 = vpow.pop %v6098
        %v6100 = vmul.f32 %v6018, 1.442695
        %v6101 = vpow.pop %v6100
        %v6102 = vmul.f32 %v6019, 1.442695
        %v6103 = vpow.pop %v6102
        %v6104 = vmul.f32 %v6020, 1.442695
        %v6105 = vpow.pop %v6104
        %v6106 = vmul.f32 %v6021, 1.442695
        %v6107 = vpow.pop %v6106
        %v6108 = vmul.f32 %v6022, 1.442695
        %v6109 = vpow.pop %v6108
        %v6110 = vmul.f32 %v6023, 1.442695
        %v6111 = vpow.pop %v6110
        %v6112 = vmul.f32 %v6024, 1.442695
        %v6113 = vpow.pop %v6112
        %v6114 = vmul.f32 %v6025, 1.442695
        %v6115 = vpow.pop %v6114
        %v6116 = vmul.f32 %v6026, 1.442695
        %v6117 = vpow.pop %v6116
        %v6118 = vmul.f32 %v6027, 1.442695
        %v6119 = vpow.pop %v6118
        %v6120 = vmul.f32 %v6028, 1.442695
        %v6121 = vpow.pop %v6120
        %v6122 = vmul.f32 %v6029, 1.442695
        %v6123 = vpow.pop %v6122
        %v6124 = vmul.f32 %v6030, 1.442695
        %v6125 = vpow.pop %v6124
        %v6126 = vmul.f32 %v6031, 1.442695
        %v6127 = vpow.pop %v6126
        %v6128 = vmul.f32 %v6032, 1.442695
        %v6129 = vpow.pop %v6128
        %v6130 = vmul.f32 %v6033, 1.442695
        %v6131 = vpow.pop %v6130
        %v6132 = vmul.f32 %v6034, 1.442695
        %v6133 = vpow.pop %v6132
        %v6134 = vmul.f32 %v6035, 1.442695
        %v6135 = vpow.pop %v6134
        %v6136 = vmul.f32 %v6036, 1.442695
        %v6137 = vpow.pop %v6136
        %v6138 = vmul.f32 %v6037, 1.442695
        %v6139 = vpow.pop %v6138
        %v6140 = vmul.f32 %v6038, 1.442695
        %v6141 = vpow.pop %v6140
        %v6142 = vmul.f32 %v6039, 1.442695
        %v6143 = vpow.pop %v6142
        %v6144 = vmul.f32 %v6040, 1.442695
        %v6145 = vpow.pop %v6144
        %v6146 = vmul.f32 %v6041, 1.442695
        %v6147 = vpow.pop %v6146
        %v6148 = vmul.f32 %v6042, 1.442695
        %v6149 = vpow.pop %v6148
        %v6150 = vmul.f32 %v6043, 1.442695
        %v6151 = vpow.pop %v6150
        %v6152 = vmul.f32 %v6044, 1.442695
        %v6153 = vpow.pop %v6152
        %v6154 = vmul.f32 %v6045, 1.442695
        %v6155 = vpow.pop %v6154
        %v6156 = vmul.f32 %v6046, 1.442695
        %v6157 = vpow.pop %v6156
        %v6158 = vmul.f32 %v6047, 1.442695
        %v6159 = vpow.pop %v6158
        %v6160 = vmul.f32 %v6048, 1.442695
        %v6161 = vpow.pop %v6160
        %v6162 = vmul.f32 %v6049, 1.442695
        %v6163 = vpow.pop %v6162
        %v6164 = vmul.f32 %v6050, 1.442695
        %v6165 = vpow.pop %v6164
        %v6166 = vmul.f32 %v6051, 1.442695
        %v6167 = vpow.pop %v6166
        %v6168 = vmul.f32 %v6052, 1.442695
        %v6169 = vpow.pop %v6168
        %v6170 = vmul.f32 %v6053, 1.442695
        %v6171 = vpow.pop %v6170
        %v6172 = vmul.f32 %v6054, 1.442695
        %v6173 = vpow.pop %v6172
        %v6174 = vmul.f32 %v6055, 1.442695
        %v6175 = vpow.pop %v6174
        %v6176 = vmul.f32 %v6056, 1.442695
        %v6177 = vpow.pop %v6176
        %v6178 = vmul.f32 %v6057, 1.442695
        %v6179 = vpow.pop %v6178
        %v6180 = vmul.f32 %v6058, 1.442695
        %v6181 = vpow.pop %v6180
        %v6182 = vmul.f32 %v6059, 1.442695
        %v6183 = vpow.pop %v6182
        %v6184 = vmul.f32 %v6060, 1.442695
        %v6185 = vpow.pop %v6184
        %v6186 = vmul.f32 %v6061, 1.442695
        %v6187 = vpow.pop %v6186
        %v6188 = vmul.f32 %v6062, 1.442695
        %v6189 = vpow.pop %v6188
        %v6190 = vmul.f32 %v6063, 1.442695
        %v6191 = vpow.pop %v6190
        %v6192 = vadd.f32 %v6065, 1.0
        %v6193 = vadd.f32 %v6067, 1.0
        %v6194 = vadd.f32 %v6069, 1.0
        %v6195 = vadd.f32 %v6071, 1.0
        %v6196 = vadd.f32 %v6073, 1.0
        %v6197 = vadd.f32 %v6075, 1.0
        %v6198 = vadd.f32 %v6077, 1.0
        %v6199 = vadd.f32 %v6079, 1.0
        %v6200 = vadd.f32 %v6081, 1.0
        %v6201 = vadd.f32 %v6083, 1.0
        %v6202 = vadd.f32 %v6085, 1.0
        %v6203 = vadd.f32 %v6087, 1.0
        %v6204 = vadd.f32 %v6089, 1.0
        %v6205 = vadd.f32 %v6091, 1.0
        %v6206 = vadd.f32 %v6093, 1.0
        %v6207 = vadd.f32 %v6095, 1.0
        %v6208 = vadd.f32 %v6097, 1.0
        %v6209 = vadd.f32 %v6099, 1.0
        %v6210 = vadd.f32 %v6101, 1.0
        %v6211 = vadd.f32 %v6103, 1.0
        %v6212 = vadd.f32 %v6105, 1.0
        %v6213 = vadd.f32 %v6107, 1.0
        %v6214 = vadd.f32 %v6109, 1.0
        %v6215 = vadd.f32 %v6111, 1.0
        %v6216 = vadd.f32 %v6113, 1.0
        %v6217 = vadd.f32 %v6115, 1.0
        %v6218 = vadd.f32 %v6117, 1.0
        %v6219 = vadd.f32 %v6119, 1.0
        %v6220 = vadd.f32 %v6121, 1.0
        %v6221 = vadd.f32 %v6123, 1.0
        %v6222 = vadd.f32 %v6125, 1.0
        %v6223 = vadd.f32 %v6127, 1.0
        %v6224 = vadd.f32 %v6129, 1.0
        %v6225 = vadd.f32 %v6131, 1.0
        %v6226 = vadd.f32 %v6133, 1.0
        %v6227 = vadd.f32 %v6135, 1.0
        %v6228 = vadd.f32 %v6137, 1.0
        %v6229 = vadd.f32 %v6139, 1.0
        %v6230 = vadd.f32 %v6141, 1.0
        %v6231 = vadd.f32 %v6143, 1.0
        %v6232 = vadd.f32 %v6145, 1.0
        %v6233 = vadd.f32 %v6147, 1.0
        %v6234 = vadd.f32 %v6149, 1.0
        %v6235 = vadd.f32 %v6151, 1.0
        %v6236 = vadd.f32 %v6153, 1.0
        %v6237 = vadd.f32 %v6155, 1.0
        %v6238 = vadd.f32 %v6157, 1.0
        %v6239 = vadd.f32 %v6159, 1.0
        %v6240 = vadd.f32 %v6161, 1.0
        %v6241 = vadd.f32 %v6163, 1.0
        %v6242 = vadd.f32 %v6165, 1.0
        %v6243 = vadd.f32 %v6167, 1.0
        %v6244 = vadd.f32 %v6169, 1.0
        %v6245 = vadd.f32 %v6171, 1.0
        %v6246 = vadd.f32 %v6173, 1.0
        %v6247 = vadd.f32 %v6175, 1.0
        %v6248 = vadd.f32 %v6177, 1.0
        %v6249 = vadd.f32 %v6179, 1.0
        %v6250 = vadd.f32 %v6181, 1.0
        %v6251 = vadd.f32 %v6183, 1.0
        %v6252 = vadd.f32 %v6185, 1.0
        %v6253 = vadd.f32 %v6187, 1.0
        %v6254 = vadd.f32 %v6189, 1.0
        %v6255 = vadd.f32 %v6191, 1.0
        %v6256 = vrcp.pop %v6192
        %v6257 = vmul.f32 1.0, %v6256
        %v6258 = vrcp.pop %v6193
        %v6259 = vmul.f32 1.0, %v6258
        %v6260 = vrcp.pop %v6194
        %v6261 = vmul.f32 1.0, %v6260
        %v6262 = vrcp.pop %v6195
        %v6263 = vmul.f32 1.0, %v6262
        %v6264 = vrcp.pop %v6196
        %v6265 = vmul.f32 1.0, %v6264
        %v6266 = vrcp.pop %v6197
        %v6267 = vmul.f32 1.0, %v6266
        %v6268 = vrcp.pop %v6198
        %v6269 = vmul.f32 1.0, %v6268
        %v6270 = vrcp.pop %v6199
        %v6271 = vmul.f32 1.0, %v6270
        %v6272 = vrcp.pop %v6200
        %v6273 = vmul.f32 1.0, %v6272
        %v6274 = vrcp.pop %v6201
        %v6275 = vmul.f32 1.0, %v6274
        %v6276 = vrcp.pop %v6202
        %v6277 = vmul.f32 1.0, %v6276
        %v6278 = vrcp.pop %v6203
        %v6279 = vmul.f32 1.0, %v6278
        %v6280 = vrcp.pop %v6204
        %v6281 = vmul.f32 1.0, %v6280
        %v6282 = vrcp.pop %v6205
        %v6283 = vmul.f32 1.0, %v6282
        %v6284 = vrcp.pop %v6206
        %v6285 = vmul.f32 1.0, %v6284
        %v6286 = vrcp.pop %v6207
        %v6287 = vmul.f32 1.0, %v6286
        %v6288 = vrcp.pop %v6208
        %v6289 = vmul.f32 1.0, %v6288
        %v6290 = vrcp.pop %v6209
        %v6291 = vmul.f32 1.0, %v6290
        %v6292 = vrcp.pop %v6210
        %v6293 = vmul.f32 1.0, %v6292
        %v6294 = vrcp.pop %v6211
        %v6295 = vmul.f32 1.0, %v6294
        %v6296 = vrcp.pop %v6212
        %v6297 = vmul.f32 1.0, %v6296
        %v6298 = vrcp.pop %v6213
        %v6299 = vmul.f32 1.0, %v6298
        %v6300 = vrcp.pop %v6214
        %v6301 = vmul.f32 1.0, %v6300
        %v6302 = vrcp.pop %v6215
        %v6303 = vmul.f32 1.0, %v6302
        %v6304 = vrcp.pop %v6216
        %v6305 = vmul.f32 1.0, %v6304
        %v6306 = vrcp.pop %v6217
        %v6307 = vmul.f32 1.0, %v6306
        %v6308 = vrcp.pop %v6218
        %v6309 = vmul.f32 1.0, %v6308
        %v6310 = vrcp.pop %v6219
        %v6311 = vmul.f32 1.0, %v6310
        %v6312 = vrcp.pop %v6220
        %v6313 = vmul.f32 1.0, %v6312
        %v6314 = vrcp.pop %v6221
        %v6315 = vmul.f32 1.0, %v6314
        %v6316 = vrcp.pop %v6222
        %v6317 = vmul.f32 1.0, %v6316
        %v6318 = vrcp.pop %v6223
        %v6319 = vmul.f32 1.0, %v6318
        %v6320 = vrcp.pop %v6224
        %v6321 = vmul.f32 1.0, %v6320
        %v6322 = vrcp.pop %v6225
        %v6323 = vmul.f32 1.0, %v6322
        %v6324 = vrcp.pop %v6226
        %v6325 = vmul.f32 1.0, %v6324
        %v6326 = vrcp.pop %v6227
        %v6327 = vmul.f32 1.0, %v6326
        %v6328 = vrcp.pop %v6228
        %v6329 = vmul.f32 1.0, %v6328
        %v6330 = vrcp.pop %v6229
        %v6331 = vmul.f32 1.0, %v6330
        %v6332 = vrcp.pop %v6230
        %v6333 = vmul.f32 1.0, %v6332
        %v6334 = vrcp.pop %v6231
        %v6335 = vmul.f32 1.0, %v6334
        %v6336 = vrcp.pop %v6232
        %v6337 = vmul.f32 1.0, %v6336
        %v6338 = vrcp.pop %v6233
        %v6339 = vmul.f32 1.0, %v6338
        %v6340 = vrcp.pop %v6234
        %v6341 = vmul.f32 1.0, %v6340
        %v6342 = vrcp.pop %v6235
        %v6343 = vmul.f32 1.0, %v6342
        %v6344 = vrcp.pop %v6236
        %v6345 = vmul.f32 1.0, %v6344
        %v6346 = vrcp.pop %v6237
        %v6347 = vmul.f32 1.0, %v6346
        %v6348 = vrcp.pop %v6238
        %v6349 = vmul.f32 1.0, %v6348
        %v6350 = vrcp.pop %v6239
        %v6351 = vmul.f32 1.0, %v6350
        %v6352 = vrcp.pop %v6240
        %v6353 = vmul.f32 1.0, %v6352
        %v6354 = vrcp.pop %v6241
        %v6355 = vmul.f32 1.0, %v6354
        %v6356 = vrcp.pop %v6242
        %v6357 = vmul.f32 1.0, %v6356
        %v6358 = vrcp.pop %v6243
        %v6359 = vmul.f32 1.0, %v6358
        %v6360 = vrcp.pop %v6244
        %v6361 = vmul.f32 1.0, %v6360
        %v6362 = vrcp.pop %v6245
        %v6363 = vmul.f32 1.0, %v6362
        %v6364 = vrcp.pop %v6246
        %v6365 = vmul.f32 1.0, %v6364
        %v6366 = vrcp.pop %v6247
        %v6367 = vmul.f32 1.0, %v6366
        %v6368 = vrcp.pop %v6248
        %v6369 = vmul.f32 1.0, %v6368
        %v6370 = vrcp.pop %v6249
        %v6371 = vmul.f32 1.0, %v6370
        %v6372 = vrcp.pop %v6250
        %v6373 = vmul.f32 1.0, %v6372
        %v6374 = vrcp.pop %v6251
        %v6375 = vmul.f32 1.0, %v6374
        %v6376 = vrcp.pop %v6252
        %v6377 = vmul.f32 1.0, %v6376
        %v6378 = vrcp.pop %v6253
        %v6379 = vmul.f32 1.0, %v6378
        %v6380 = vrcp.pop %v6254
        %v6381 = vmul.f32 1.0, %v6380
        %v6382 = vrcp.pop %v6255
        %v6383 = vmul.f32 1.0, %v6382
        %v6384 = vmul.f32 %v5936, %v6257
        %v6385 = vmul.f32 %v5937, %v6259
        %v6386 = vmul.f32 %v5938, %v6261
        %v6387 = vmul.f32 %v5939, %v6263
        %v6388 = vmul.f32 %v5940, %v6265
        %v6389 = vmul.f32 %v5941, %v6267
        %v6390 = vmul.f32 %v5942, %v6269
        %v6391 = vmul.f32 %v5943, %v6271
        %v6392 = vmul.f32 %v5944, %v6273
        %v6393 = vmul.f32 %v5945, %v6275
        %v6394 = vmul.f32 %v5946, %v6277
        %v6395 = vmul.f32 %v5947, %v6279
        %v6396 = vmul.f32 %v5948, %v6281
        %v6397 = vmul.f32 %v5949, %v6283
        %v6398 = vmul.f32 %v5950, %v6285
        %v6399 = vmul.f32 %v5951, %v6287
        %v6400 = vmul.f32 %v5952, %v6289
        %v6401 = vmul.f32 %v5953, %v6291
        %v6402 = vmul.f32 %v5954, %v6293
        %v6403 = vmul.f32 %v5955, %v6295
        %v6404 = vmul.f32 %v5956, %v6297
        %v6405 = vmul.f32 %v5957, %v6299
        %v6406 = vmul.f32 %v5958, %v6301
        %v6407 = vmul.f32 %v5959, %v6303
        %v6408 = vmul.f32 %v5960, %v6305
        %v6409 = vmul.f32 %v5961, %v6307
        %v6410 = vmul.f32 %v5962, %v6309
        %v6411 = vmul.f32 %v5963, %v6311
        %v6412 = vmul.f32 %v5964, %v6313
        %v6413 = vmul.f32 %v5965, %v6315
        %v6414 = vmul.f32 %v5966, %v6317
        %v6415 = vmul.f32 %v5967, %v6319
        %v6416 = vmul.f32 %v5968, %v6321
        %v6417 = vmul.f32 %v5969, %v6323
        %v6418 = vmul.f32 %v5970, %v6325
        %v6419 = vmul.f32 %v5971, %v6327
        %v6420 = vmul.f32 %v5972, %v6329
        %v6421 = vmul.f32 %v5973, %v6331
        %v6422 = vmul.f32 %v5974, %v6333
        %v6423 = vmul.f32 %v5975, %v6335
        %v6424 = vmul.f32 %v5976, %v6337
        %v6425 = vmul.f32 %v5977, %v6339
        %v6426 = vmul.f32 %v5978, %v6341
        %v6427 = vmul.f32 %v5979, %v6343
        %v6428 = vmul.f32 %v5980, %v6345
        %v6429 = vmul.f32 %v5981, %v6347
        %v6430 = vmul.f32 %v5982, %v6349
        %v6431 = vmul.f32 %v5983, %v6351
        %v6432 = vmul.f32 %v5984, %v6353
        %v6433 = vmul.f32 %v5985, %v6355
        %v6434 = vmul.f32 %v5986, %v6357
        %v6435 = vmul.f32 %v5987, %v6359
        %v6436 = vmul.f32 %v5988, %v6361
        %v6437 = vmul.f32 %v5989, %v6363
        %v6438 = vmul.f32 %v5990, %v6365
        %v6439 = vmul.f32 %v5991, %v6367
        %v6440 = vmul.f32 %v5992, %v6369
        %v6441 = vmul.f32 %v5993, %v6371
        %v6442 = vmul.f32 %v5994, %v6373
        %v6443 = vmul.f32 %v5995, %v6375
        %v6444 = vmul.f32 %v5996, %v6377
        %v6445 = vmul.f32 %v5997, %v6379
        %v6446 = vmul.f32 %v5998, %v6381
        %v6447 = vmul.f32 %v5999, %v6383
        %s6448 = scalar_lea.vmem [#allocation5], 64
        %v6449 = vld [vmem:[%s6448] sm:$0xff]
        %v6450 = vld [vmem:[%s6448 + $0x8] sm:$0xff]
        %v6451 = vld [vmem:[%s6448 + $0x10] sm:$0xff]
        %v6452 = vld [vmem:[%s6448 + $0x18] sm:$0xff]
        %v6453 = vld [vmem:[%s2] sm:$0xff]
        %v6454 = vld [vmem:[%s2 + $0x8] sm:$0xff]
        %v6455 = vld [vmem:[%s2 + $0x10] sm:$0xff]
        %v6456 = vld [vmem:[%s2 + $0x18] sm:$0xff]
        %6461 = vrot.lane.b32.xlu0 %v6449, 96
        %v6462 = vpop.permute.xlu0 %6461
        %6463 = vrot.lane.b32.xlu0 %v6450, 96
        %v6464 = vpop.permute.xlu0 %6463
        %6465 = vrot.lane.b32.xlu0 %v6451, 96
        %v6466 = vpop.permute.xlu0 %6465
        %6467 = vrot.lane.b32.xlu0 %v6452, 96
        %v6468 = vpop.permute.xlu0 %6467
        %v6469 = vsel %vm1793, %v6462, 0
        %v6471 = vsel %vm1793, %v6464, 0
        %v6473 = vsel %vm1793, %v6466, 0
        %v6475 = vsel %vm1793, %v6468, 0
        %6477 = vmatprep.subr.mxu0 0.0
        %6478 = vmatpush1.msra.mxu0 0.0
        %6479 = vmatprep.subr.mxu0 0.0
        %6480 = vmatpush1.msra.mxu0 0.0
        %6481 = vmatprep.subr.mxu0 0.0
        %6482 = vmatpush1.msra.mxu0 0.0
        %6483 = vmatprep.subr.mxu0 0.0
        %6484 = vmatpush1.msra.mxu0 0.0
        %6485 = vmatprep.subr.mxu0 0.0
        %6486 = vmatpush1.msra.mxu0 0.0
        %6487 = vmatprep.subr.mxu0 0.0
        %6488 = vmatpush1.msra.mxu0 0.0
        %6489 = vmatprep.subr.mxu0 0.0
        %6490 = vmatpush1.msra.mxu0 0.0
        %6491 = vmatprep.subr.mxu0 0.0
        %6492 = vmatpush1.msra.mxu0 0.0
        %6493 = vmatprep.subr.mxu0 %v6399
        %6494 = vmatpush1.msra.mxu0 %v6398
        %6495 = vmatprep.subr.mxu0 %v6397
        %6496 = vmatpush1.msra.mxu0 %v6396
        %6497 = vmatprep.subr.mxu0 %v6395
        %6498 = vmatpush1.msra.mxu0 %v6394
        %6499 = vmatprep.subr.mxu0 %v6393
        %6500 = vmatpush1.msra.mxu0 %v6392
        %6501 = vmatprep.subr.mxu0 %v6391
        %6502 = vmatpush1.msra.mxu0 %v6390
        %6503 = vmatprep.subr.mxu0 %v6389
        %6504 = vmatpush1.msra.mxu0 %v6388
        %6505 = vmatprep.subr.mxu0 %v6387
        %6506 = vmatpush1.msra.mxu0 %v6386
        %6507 = vmatprep.subr.mxu0 %v6385
        %6508 = vmatpush1.msra.mxu0 %v6384
        %6509 = vmatprep.subr.mxu0 0.0
        %6510 = vmatpush2.msra.mxu0 0.0
        %6511 = vmatprep.subr.mxu0 0.0
        %6512 = vmatpush2.msra.mxu0 0.0
        %6513 = vmatprep.subr.mxu0 0.0
        %6514 = vmatpush2.msra.mxu0 0.0
        %6515 = vmatprep.subr.mxu0 0.0
        %6516 = vmatpush2.msra.mxu0 0.0
        %6517 = vmatprep.subr.mxu0 0.0
        %6518 = vmatpush2.msra.mxu0 0.0
        %6519 = vmatprep.subr.mxu0 0.0
        %6520 = vmatpush2.msra.mxu0 0.0
        %6521 = vmatprep.subr.mxu0 0.0
        %6522 = vmatpush2.msra.mxu0 0.0
        %6523 = vmatprep.subr.mxu0 0.0
        %6524 = vmatpush2.msra.mxu0 0.0
        %6525 = vmatprep.subr.mxu0 0.0
        %6526 = vmatpush2.msra.mxu0 0.0
        %6527 = vmatprep.subr.mxu0 0.0
        %6528 = vmatpush2.msra.mxu0 0.0
        %6529 = vmatprep.subr.mxu0 0.0
        %6530 = vmatpush2.msra.mxu0 0.0
        %6531 = vmatprep.subr.mxu0 0.0
        %6532 = vmatpush2.msra.mxu0 0.0
        %6533 = vmatprep.subr.mxu0 0.0
        %6534 = vmatpush2.msra.mxu0 0.0
        %6535 = vmatprep.subr.mxu0 0.0
        %6536 = vmatpush2.msra.mxu0 0.0
        %6537 = vmatprep.subr.mxu0 0.0
        %6538 = vmatpush2.msra.mxu0 0.0
        %6539 = vmatprep.subr.mxu0 0.0
        %6540 = vmatpush2.msra.mxu0 0.0
        %6541 = vmatprep.mubr.f32.mxu0 0.0
        %6542 = vmatmul.mubr.f32.gmra.mxu0 %v6469
        %v6543 = vpop.f32.mrf.mxu0
        %v6544 = vadd.f32 0.0, %v6543
        %v6545 = vpop.f32.mrf.mxu0
        %v6546 = vadd.f32 0.0, %v6545
        %6547 = vmatprep.mubr.f32.mxu0 0.0
        %6548 = vmatmul.mubr.f32.gmra.mxu0 %v6471
        %v6549 = vpop.f32.mrf.mxu0
        %v6550 = vadd.f32 0.0, %v6549
        %v6551 = vpop.f32.mrf.mxu0
        %v6552 = vadd.f32 0.0, %v6551
        %6553 = vmatprep.mubr.f32.mxu0 0.0
        %6554 = vmatmul.mubr.f32.gmra.mxu0 %v6473
        %v6555 = vpop.f32.mrf.mxu0
        %v6556 = vadd.f32 0.0, %v6555
        %v6557 = vpop.f32.mrf.mxu0
        %v6558 = vadd.f32 0.0, %v6557
        %6559 = vmatprep.mubr.f32.mxu0 0.0
        %6560 = vmatmul.mubr.f32.gmra.mxu0 %v6475
        %v6561 = vpop.f32.mrf.mxu0
        %v6562 = vadd.f32 0.0, %v6561
        %v6563 = vpop.f32.mrf.mxu0
        %v6564 = vadd.f32 0.0, %v6563
        %6565 = vdwg.mxu0
        %v6566 = vsel %vm1891, %v6449, 0
        %v6568 = vsel %vm1891, %v6450, 0
        %v6570 = vsel %vm1891, %v6451, 0
        %v6572 = vsel %vm1891, %v6452, 0
        %6574 = vmatprep.subr.mxu0 0.0
        %6575 = vmatpush1.msra.mxu0 0.0
        %6576 = vmatprep.subr.mxu0 0.0
        %6577 = vmatpush1.msra.mxu0 0.0
        %6578 = vmatprep.subr.mxu0 0.0
        %6579 = vmatpush1.msra.mxu0 0.0
        %6580 = vmatprep.subr.mxu0 0.0
        %6581 = vmatpush1.msra.mxu0 0.0
        %6582 = vmatprep.subr.mxu0 %v6407
        %6583 = vmatpush1.msra.mxu0 %v6406
        %6584 = vmatprep.subr.mxu0 %v6405
        %6585 = vmatpush1.msra.mxu0 %v6404
        %6586 = vmatprep.subr.mxu0 %v6403
        %6587 = vmatpush1.msra.mxu0 %v6402
        %6588 = vmatprep.subr.mxu0 %v6401
        %6589 = vmatpush1.msra.mxu0 %v6400
        %6590 = vmatprep.subr.mxu0 %v6399
        %6591 = vmatpush1.msra.mxu0 %v6398
        %6592 = vmatprep.subr.mxu0 %v6397
        %6593 = vmatpush1.msra.mxu0 %v6396
        %6594 = vmatprep.subr.mxu0 %v6395
        %6595 = vmatpush1.msra.mxu0 %v6394
        %6596 = vmatprep.subr.mxu0 %v6393
        %6597 = vmatpush1.msra.mxu0 %v6392
        %6598 = vmatprep.subr.mxu0 %v6391
        %6599 = vmatpush1.msra.mxu0 %v6390
        %6600 = vmatprep.subr.mxu0 %v6389
        %6601 = vmatpush1.msra.mxu0 %v6388
        %6602 = vmatprep.subr.mxu0 %v6387
        %6603 = vmatpush1.msra.mxu0 %v6386
        %6604 = vmatprep.subr.mxu0 %v6385
        %6605 = vmatpush1.msra.mxu0 %v6384
        %6606 = vmatprep.subr.mxu0 0.0
        %6607 = vmatpush2.msra.mxu0 0.0
        %6608 = vmatprep.subr.mxu0 0.0
        %6609 = vmatpush2.msra.mxu0 0.0
        %6610 = vmatprep.subr.mxu0 0.0
        %6611 = vmatpush2.msra.mxu0 0.0
        %6612 = vmatprep.subr.mxu0 0.0
        %6613 = vmatpush2.msra.mxu0 0.0
        %6614 = vmatprep.subr.mxu0 0.0
        %6615 = vmatpush2.msra.mxu0 0.0
        %6616 = vmatprep.subr.mxu0 0.0
        %6617 = vmatpush2.msra.mxu0 0.0
        %6618 = vmatprep.subr.mxu0 0.0
        %6619 = vmatpush2.msra.mxu0 0.0
        %6620 = vmatprep.subr.mxu0 0.0
        %6621 = vmatpush2.msra.mxu0 0.0
        %6622 = vmatprep.subr.mxu0 0.0
        %6623 = vmatpush2.msra.mxu0 0.0
        %6624 = vmatprep.subr.mxu0 0.0
        %6625 = vmatpush2.msra.mxu0 0.0
        %6626 = vmatprep.subr.mxu0 0.0
        %6627 = vmatpush2.msra.mxu0 0.0
        %6628 = vmatprep.subr.mxu0 0.0
        %6629 = vmatpush2.msra.mxu0 0.0
        %6630 = vmatprep.subr.mxu0 0.0
        %6631 = vmatpush2.msra.mxu0 0.0
        %6632 = vmatprep.subr.mxu0 0.0
        %6633 = vmatpush2.msra.mxu0 0.0
        %6634 = vmatprep.subr.mxu0 0.0
        %6635 = vmatpush2.msra.mxu0 0.0
        %6636 = vmatprep.subr.mxu0 0.0
        %6637 = vmatpush2.msra.mxu0 0.0
        %6638 = vmatprep.mubr.f32.mxu0 0.0
        %6639 = vmatmul.mubr.f32.gmra.mxu0 %v6566
        %v6640 = vpop.f32.mrf.mxu0
        %v6641 = vadd.f32 0.0, %v6640
        %v6642 = vpop.f32.mrf.mxu0
        %v6643 = vadd.f32 0.0, %v6642
        %6644 = vmatprep.mubr.f32.mxu0 0.0
        %6645 = vmatmul.mubr.f32.gmra.mxu0 %v6568
        %v6646 = vpop.f32.mrf.mxu0
        %v6647 = vadd.f32 0.0, %v6646
        %v6648 = vpop.f32.mrf.mxu0
        %v6649 = vadd.f32 0.0, %v6648
        %6650 = vmatprep.mubr.f32.mxu0 0.0
        %6651 = vmatmul.mubr.f32.gmra.mxu0 %v6570
        %v6652 = vpop.f32.mrf.mxu0
        %v6653 = vadd.f32 0.0, %v6652
        %v6654 = vpop.f32.mrf.mxu0
        %v6655 = vadd.f32 0.0, %v6654
        %6656 = vmatprep.mubr.f32.mxu0 0.0
        %6657 = vmatmul.mubr.f32.gmra.mxu0 %v6572
        %v6658 = vpop.f32.mrf.mxu0
        %v6659 = vadd.f32 0.0, %v6658
        %v6660 = vpop.f32.mrf.mxu0
        %v6661 = vadd.f32 0.0, %v6660
        %6662 = vdwg.mxu0
        %6663 = vmatprep.subr.mxu0 0.0
        %6664 = vmatpush1.msra.mxu0 0.0
        %6665 = vmatprep.subr.mxu0 0.0
        %6666 = vmatpush1.msra.mxu0 0.0
        %6667 = vmatprep.subr.mxu0 0.0
        %6668 = vmatpush1.msra.mxu0 0.0
        %6669 = vmatprep.subr.mxu0 0.0
        %6670 = vmatpush1.msra.mxu0 0.0
        %6671 = vmatprep.subr.mxu0 %v6415
        %6672 = vmatpush1.msra.mxu0 %v6414
        %6673 = vmatprep.subr.mxu0 %v6413
        %6674 = vmatpush1.msra.mxu0 %v6412
        %6675 = vmatprep.subr.mxu0 %v6411
        %6676 = vmatpush1.msra.mxu0 %v6410
        %6677 = vmatprep.subr.mxu0 %v6409
        %6678 = vmatpush1.msra.mxu0 %v6408
        %6679 = vmatprep.subr.mxu0 %v6407
        %6680 = vmatpush1.msra.mxu0 %v6406
        %6681 = vmatprep.subr.mxu0 %v6405
        %6682 = vmatpush1.msra.mxu0 %v6404
        %6683 = vmatprep.subr.mxu0 %v6403
        %6684 = vmatpush1.msra.mxu0 %v6402
        %6685 = vmatprep.subr.mxu0 %v6401
        %6686 = vmatpush1.msra.mxu0 %v6400
        %6687 = vmatprep.subr.mxu0 %v6399
        %6688 = vmatpush1.msra.mxu0 %v6398
        %6689 = vmatprep.subr.mxu0 %v6397
        %6690 = vmatpush1.msra.mxu0 %v6396
        %6691 = vmatprep.subr.mxu0 %v6395
        %6692 = vmatpush1.msra.mxu0 %v6394
        %6693 = vmatprep.subr.mxu0 %v6393
        %6694 = vmatpush1.msra.mxu0 %v6392
        %6695 = vmatprep.subr.mxu0 0.0
        %6696 = vmatpush2.msra.mxu0 0.0
        %6697 = vmatprep.subr.mxu0 0.0
        %6698 = vmatpush2.msra.mxu0 0.0
        %6699 = vmatprep.subr.mxu0 0.0
        %6700 = vmatpush2.msra.mxu0 0.0
        %6701 = vmatprep.subr.mxu0 0.0
        %6702 = vmatpush2.msra.mxu0 0.0
        %6703 = vmatprep.subr.mxu0 0.0
        %6704 = vmatpush2.msra.mxu0 0.0
        %6705 = vmatprep.subr.mxu0 0.0
        %6706 = vmatpush2.msra.mxu0 0.0
        %6707 = vmatprep.subr.mxu0 0.0
        %6708 = vmatpush2.msra.mxu0 0.0
        %6709 = vmatprep.subr.mxu0 0.0
        %6710 = vmatpush2.msra.mxu0 0.0
        %6711 = vmatprep.subr.mxu0 0.0
        %6712 = vmatpush2.msra.mxu0 0.0
        %6713 = vmatprep.subr.mxu0 0.0
        %6714 = vmatpush2.msra.mxu0 0.0
        %6715 = vmatprep.subr.mxu0 0.0
        %6716 = vmatpush2.msra.mxu0 0.0
        %6717 = vmatprep.subr.mxu0 0.0
        %6718 = vmatpush2.msra.mxu0 0.0
        %6719 = vmatprep.subr.mxu0 0.0
        %6720 = vmatpush2.msra.mxu0 0.0
        %6721 = vmatprep.subr.mxu0 0.0
        %6722 = vmatpush2.msra.mxu0 0.0
        %6723 = vmatprep.subr.mxu0 0.0
        %6724 = vmatpush2.msra.mxu0 0.0
        %6725 = vmatprep.subr.mxu0 0.0
        %6726 = vmatpush2.msra.mxu0 0.0
        %6727 = vmatprep.mubr.f32.mxu0 0.0
        %6728 = vmatmul.mubr.f32.gmra.mxu0 %v6566
        %v6729 = vpop.f32.mrf.mxu0
        %v6730 = vadd.f32 0.0, %v6729
        %v6731 = vpop.f32.mrf.mxu0
        %v6732 = vadd.f32 0.0, %v6731
        %6733 = vmatprep.mubr.f32.mxu0 0.0
        %6734 = vmatmul.mubr.f32.gmra.mxu0 %v6568
        %v6735 = vpop.f32.mrf.mxu0
        %v6736 = vadd.f32 0.0, %v6735
        %v6737 = vpop.f32.mrf.mxu0
        %v6738 = vadd.f32 0.0, %v6737
        %6739 = vmatprep.mubr.f32.mxu0 0.0
        %6740 = vmatmul.mubr.f32.gmra.mxu0 %v6570
        %v6741 = vpop.f32.mrf.mxu0
        %v6742 = vadd.f32 0.0, %v6741
        %v6743 = vpop.f32.mrf.mxu0
        %v6744 = vadd.f32 0.0, %v6743
        %6745 = vmatprep.mubr.f32.mxu0 0.0
        %6746 = vmatmul.mubr.f32.gmra.mxu0 %v6572
        %v6747 = vpop.f32.mrf.mxu0
        %v6748 = vadd.f32 0.0, %v6747
        %v6749 = vpop.f32.mrf.mxu0
        %v6750 = vadd.f32 0.0, %v6749
        %6751 = vdwg.mxu0
        %6752 = vmatprep.subr.mxu0 0.0
        %6753 = vmatpush1.msra.mxu0 0.0
        %6754 = vmatprep.subr.mxu0 0.0
        %6755 = vmatpush1.msra.mxu0 0.0
        %6756 = vmatprep.subr.mxu0 0.0
        %6757 = vmatpush1.msra.mxu0 0.0
        %6758 = vmatprep.subr.mxu0 0.0
        %6759 = vmatpush1.msra.mxu0 0.0
        %6760 = vmatprep.subr.mxu0 %v6423
        %6761 = vmatpush1.msra.mxu0 %v6422
        %6762 = vmatprep.subr.mxu0 %v6421
        %6763 = vmatpush1.msra.mxu0 %v6420
        %6764 = vmatprep.subr.mxu0 %v6419
        %6765 = vmatpush1.msra.mxu0 %v6418
        %6766 = vmatprep.subr.mxu0 %v6417
        %6767 = vmatpush1.msra.mxu0 %v6416
        %6768 = vmatprep.subr.mxu0 %v6415
        %6769 = vmatpush1.msra.mxu0 %v6414
        %6770 = vmatprep.subr.mxu0 %v6413
        %6771 = vmatpush1.msra.mxu0 %v6412
        %6772 = vmatprep.subr.mxu0 %v6411
        %6773 = vmatpush1.msra.mxu0 %v6410
        %6774 = vmatprep.subr.mxu0 %v6409
        %6775 = vmatpush1.msra.mxu0 %v6408
        %6776 = vmatprep.subr.mxu0 %v6407
        %6777 = vmatpush1.msra.mxu0 %v6406
        %6778 = vmatprep.subr.mxu0 %v6405
        %6779 = vmatpush1.msra.mxu0 %v6404
        %6780 = vmatprep.subr.mxu0 %v6403
        %6781 = vmatpush1.msra.mxu0 %v6402
        %6782 = vmatprep.subr.mxu0 %v6401
        %6783 = vmatpush1.msra.mxu0 %v6400
        %6784 = vmatprep.subr.mxu0 0.0
        %6785 = vmatpush2.msra.mxu0 0.0
        %6786 = vmatprep.subr.mxu0 0.0
        %6787 = vmatpush2.msra.mxu0 0.0
        %6788 = vmatprep.subr.mxu0 0.0
        %6789 = vmatpush2.msra.mxu0 0.0
        %6790 = vmatprep.subr.mxu0 0.0
        %6791 = vmatpush2.msra.mxu0 0.0
        %6792 = vmatprep.subr.mxu0 0.0
        %6793 = vmatpush2.msra.mxu0 0.0
        %6794 = vmatprep.subr.mxu0 0.0
        %6795 = vmatpush2.msra.mxu0 0.0
        %6796 = vmatprep.subr.mxu0 0.0
        %6797 = vmatpush2.msra.mxu0 0.0
        %6798 = vmatprep.subr.mxu0 0.0
        %6799 = vmatpush2.msra.mxu0 0.0
        %6800 = vmatprep.subr.mxu0 0.0
        %6801 = vmatpush2.msra.mxu0 0.0
        %6802 = vmatprep.subr.mxu0 0.0
        %6803 = vmatpush2.msra.mxu0 0.0
        %6804 = vmatprep.subr.mxu0 0.0
        %6805 = vmatpush2.msra.mxu0 0.0
        %6806 = vmatprep.subr.mxu0 0.0
        %6807 = vmatpush2.msra.mxu0 0.0
        %6808 = vmatprep.subr.mxu0 0.0
        %6809 = vmatpush2.msra.mxu0 0.0
        %6810 = vmatprep.subr.mxu0 0.0
        %6811 = vmatpush2.msra.mxu0 0.0
        %6812 = vmatprep.subr.mxu0 0.0
        %6813 = vmatpush2.msra.mxu0 0.0
        %6814 = vmatprep.subr.mxu0 0.0
        %6815 = vmatpush2.msra.mxu0 0.0
        %6816 = vmatprep.mubr.f32.mxu0 0.0
        %6817 = vmatmul.mubr.f32.gmra.mxu0 %v6566
        %v6818 = vpop.f32.mrf.mxu0
        %v6819 = vadd.f32 0.0, %v6818
        %v6820 = vpop.f32.mrf.mxu0
        %v6821 = vadd.f32 0.0, %v6820
        %6822 = vmatprep.mubr.f32.mxu0 0.0
        %6823 = vmatmul.mubr.f32.gmra.mxu0 %v6568
        %v6824 = vpop.f32.mrf.mxu0
        %v6825 = vadd.f32 0.0, %v6824
        %v6826 = vpop.f32.mrf.mxu0
        %v6827 = vadd.f32 0.0, %v6826
        %6828 = vmatprep.mubr.f32.mxu0 0.0
        %6829 = vmatmul.mubr.f32.gmra.mxu0 %v6570
        %v6830 = vpop.f32.mrf.mxu0
        %v6831 = vadd.f32 0.0, %v6830
        %v6832 = vpop.f32.mrf.mxu0
        %v6833 = vadd.f32 0.0, %v6832
        %6834 = vmatprep.mubr.f32.mxu0 0.0
        %6835 = vmatmul.mubr.f32.gmra.mxu0 %v6572
        %v6836 = vpop.f32.mrf.mxu0
        %v6837 = vadd.f32 0.0, %v6836
        %v6838 = vpop.f32.mrf.mxu0
        %v6839 = vadd.f32 0.0, %v6838
        %6840 = vdwg.mxu0
        %6841 = vmatprep.subr.mxu0 0.0
        %6842 = vmatpush1.msra.mxu0 0.0
        %6843 = vmatprep.subr.mxu0 0.0
        %6844 = vmatpush1.msra.mxu0 0.0
        %6845 = vmatprep.subr.mxu0 0.0
        %6846 = vmatpush1.msra.mxu0 0.0
        %6847 = vmatprep.subr.mxu0 0.0
        %6848 = vmatpush1.msra.mxu0 0.0
        %6849 = vmatprep.subr.mxu0 %v6431
        %6850 = vmatpush1.msra.mxu0 %v6430
        %6851 = vmatprep.subr.mxu0 %v6429
        %6852 = vmatpush1.msra.mxu0 %v6428
        %6853 = vmatprep.subr.mxu0 %v6427
        %6854 = vmatpush1.msra.mxu0 %v6426
        %6855 = vmatprep.subr.mxu0 %v6425
        %6856 = vmatpush1.msra.mxu0 %v6424
        %6857 = vmatprep.subr.mxu0 %v6423
        %6858 = vmatpush1.msra.mxu0 %v6422
        %6859 = vmatprep.subr.mxu0 %v6421
        %6860 = vmatpush1.msra.mxu0 %v6420
        %6861 = vmatprep.subr.mxu0 %v6419
        %6862 = vmatpush1.msra.mxu0 %v6418
        %6863 = vmatprep.subr.mxu0 %v6417
        %6864 = vmatpush1.msra.mxu0 %v6416
        %6865 = vmatprep.subr.mxu0 %v6415
        %6866 = vmatpush1.msra.mxu0 %v6414
        %6867 = vmatprep.subr.mxu0 %v6413
        %6868 = vmatpush1.msra.mxu0 %v6412
        %6869 = vmatprep.subr.mxu0 %v6411
        %6870 = vmatpush1.msra.mxu0 %v6410
        %6871 = vmatprep.subr.mxu0 %v6409
        %6872 = vmatpush1.msra.mxu0 %v6408
        %6873 = vmatprep.subr.mxu0 0.0
        %6874 = vmatpush2.msra.mxu0 0.0
        %6875 = vmatprep.subr.mxu0 0.0
        %6876 = vmatpush2.msra.mxu0 0.0
        %6877 = vmatprep.subr.mxu0 0.0
        %6878 = vmatpush2.msra.mxu0 0.0
        %6879 = vmatprep.subr.mxu0 0.0
        %6880 = vmatpush2.msra.mxu0 0.0
        %6881 = vmatprep.subr.mxu0 0.0
        %6882 = vmatpush2.msra.mxu0 0.0
        %6883 = vmatprep.subr.mxu0 0.0
        %6884 = vmatpush2.msra.mxu0 0.0
        %6885 = vmatprep.subr.mxu0 0.0
        %6886 = vmatpush2.msra.mxu0 0.0
        %6887 = vmatprep.subr.mxu0 0.0
        %6888 = vmatpush2.msra.mxu0 0.0
        %6889 = vmatprep.subr.mxu0 0.0
        %6890 = vmatpush2.msra.mxu0 0.0
        %6891 = vmatprep.subr.mxu0 0.0
        %6892 = vmatpush2.msra.mxu0 0.0
        %6893 = vmatprep.subr.mxu0 0.0
        %6894 = vmatpush2.msra.mxu0 0.0
        %6895 = vmatprep.subr.mxu0 0.0
        %6896 = vmatpush2.msra.mxu0 0.0
        %6897 = vmatprep.subr.mxu0 0.0
        %6898 = vmatpush2.msra.mxu0 0.0
        %6899 = vmatprep.subr.mxu0 0.0
        %6900 = vmatpush2.msra.mxu0 0.0
        %6901 = vmatprep.subr.mxu0 0.0
        %6902 = vmatpush2.msra.mxu0 0.0
        %6903 = vmatprep.subr.mxu0 0.0
        %6904 = vmatpush2.msra.mxu0 0.0
        %6905 = vmatprep.mubr.f32.mxu0 0.0
        %6906 = vmatmul.mubr.f32.gmra.mxu0 %v6566
        %v6907 = vpop.f32.mrf.mxu0
        %v6908 = vadd.f32 0.0, %v6907
        %v6909 = vpop.f32.mrf.mxu0
        %v6910 = vadd.f32 0.0, %v6909
        %6911 = vmatprep.mubr.f32.mxu0 0.0
        %6912 = vmatmul.mubr.f32.gmra.mxu0 %v6568
        %v6913 = vpop.f32.mrf.mxu0
        %v6914 = vadd.f32 0.0, %v6913
        %v6915 = vpop.f32.mrf.mxu0
        %v6916 = vadd.f32 0.0, %v6915
        %6917 = vmatprep.mubr.f32.mxu0 0.0
        %6918 = vmatmul.mubr.f32.gmra.mxu0 %v6570
        %v6919 = vpop.f32.mrf.mxu0
        %v6920 = vadd.f32 0.0, %v6919
        %v6921 = vpop.f32.mrf.mxu0
        %v6922 = vadd.f32 0.0, %v6921
        %6923 = vmatprep.mubr.f32.mxu0 0.0
        %6924 = vmatmul.mubr.f32.gmra.mxu0 %v6572
        %v6925 = vpop.f32.mrf.mxu0
        %v6926 = vadd.f32 0.0, %v6925
        %v6927 = vpop.f32.mrf.mxu0
        %v6928 = vadd.f32 0.0, %v6927
        %6929 = vdwg.mxu0
        %6930 = vmatprep.subr.mxu0 0.0
        %6931 = vmatpush1.msra.mxu0 0.0
        %6932 = vmatprep.subr.mxu0 0.0
        %6933 = vmatpush1.msra.mxu0 0.0
        %6934 = vmatprep.subr.mxu0 0.0
        %6935 = vmatpush1.msra.mxu0 0.0
        %6936 = vmatprep.subr.mxu0 0.0
        %6937 = vmatpush1.msra.mxu0 0.0
        %6938 = vmatprep.subr.mxu0 %v6439
        %6939 = vmatpush1.msra.mxu0 %v6438
        %6940 = vmatprep.subr.mxu0 %v6437
        %6941 = vmatpush1.msra.mxu0 %v6436
        %6942 = vmatprep.subr.mxu0 %v6435
        %6943 = vmatpush1.msra.mxu0 %v6434
        %6944 = vmatprep.subr.mxu0 %v6433
        %6945 = vmatpush1.msra.mxu0 %v6432
        %6946 = vmatprep.subr.mxu0 %v6431
        %6947 = vmatpush1.msra.mxu0 %v6430
        %6948 = vmatprep.subr.mxu0 %v6429
        %6949 = vmatpush1.msra.mxu0 %v6428
        %6950 = vmatprep.subr.mxu0 %v6427
        %6951 = vmatpush1.msra.mxu0 %v6426
        %6952 = vmatprep.subr.mxu0 %v6425
        %6953 = vmatpush1.msra.mxu0 %v6424
        %6954 = vmatprep.subr.mxu0 %v6423
        %6955 = vmatpush1.msra.mxu0 %v6422
        %6956 = vmatprep.subr.mxu0 %v6421
        %6957 = vmatpush1.msra.mxu0 %v6420
        %6958 = vmatprep.subr.mxu0 %v6419
        %6959 = vmatpush1.msra.mxu0 %v6418
        %6960 = vmatprep.subr.mxu0 %v6417
        %6961 = vmatpush1.msra.mxu0 %v6416
        %6962 = vmatprep.subr.mxu0 0.0
        %6963 = vmatpush2.msra.mxu0 0.0
        %6964 = vmatprep.subr.mxu0 0.0
        %6965 = vmatpush2.msra.mxu0 0.0
        %6966 = vmatprep.subr.mxu0 0.0
        %6967 = vmatpush2.msra.mxu0 0.0
        %6968 = vmatprep.subr.mxu0 0.0
        %6969 = vmatpush2.msra.mxu0 0.0
        %6970 = vmatprep.subr.mxu0 0.0
        %6971 = vmatpush2.msra.mxu0 0.0
        %6972 = vmatprep.subr.mxu0 0.0
        %6973 = vmatpush2.msra.mxu0 0.0
        %6974 = vmatprep.subr.mxu0 0.0
        %6975 = vmatpush2.msra.mxu0 0.0
        %6976 = vmatprep.subr.mxu0 0.0
        %6977 = vmatpush2.msra.mxu0 0.0
        %6978 = vmatprep.subr.mxu0 0.0
        %6979 = vmatpush2.msra.mxu0 0.0
        %6980 = vmatprep.subr.mxu0 0.0
        %6981 = vmatpush2.msra.mxu0 0.0
        %6982 = vmatprep.subr.mxu0 0.0
        %6983 = vmatpush2.msra.mxu0 0.0
        %6984 = vmatprep.subr.mxu0 0.0
        %6985 = vmatpush2.msra.mxu0 0.0
        %6986 = vmatprep.subr.mxu0 0.0
        %6987 = vmatpush2.msra.mxu0 0.0
        %6988 = vmatprep.subr.mxu0 0.0
        %6989 = vmatpush2.msra.mxu0 0.0
        %6990 = vmatprep.subr.mxu0 0.0
        %6991 = vmatpush2.msra.mxu0 0.0
        %6992 = vmatprep.subr.mxu0 0.0
        %6993 = vmatpush2.msra.mxu0 0.0
        %6994 = vmatprep.mubr.f32.mxu0 0.0
        %6995 = vmatmul.mubr.f32.gmra.mxu0 %v6566
        %v6996 = vpop.f32.mrf.mxu0
        %v6997 = vadd.f32 0.0, %v6996
        %v6998 = vpop.f32.mrf.mxu0
        %v6999 = vadd.f32 0.0, %v6998
        %7000 = vmatprep.mubr.f32.mxu0 0.0
        %7001 = vmatmul.mubr.f32.gmra.mxu0 %v6568
        %v7002 = vpop.f32.mrf.mxu0
        %v7003 = vadd.f32 0.0, %v7002
        %v7004 = vpop.f32.mrf.mxu0
        %v7005 = vadd.f32 0.0, %v7004
        %7006 = vmatprep.mubr.f32.mxu0 0.0
        %7007 = vmatmul.mubr.f32.gmra.mxu0 %v6570
        %v7008 = vpop.f32.mrf.mxu0
        %v7009 = vadd.f32 0.0, %v7008
        %v7010 = vpop.f32.mrf.mxu0
        %v7011 = vadd.f32 0.0, %v7010
        %7012 = vmatprep.mubr.f32.mxu0 0.0
        %7013 = vmatmul.mubr.f32.gmra.mxu0 %v6572
        %v7014 = vpop.f32.mrf.mxu0
        %v7015 = vadd.f32 0.0, %v7014
        %v7016 = vpop.f32.mrf.mxu0
        %v7017 = vadd.f32 0.0, %v7016
        %7018 = vdwg.mxu0
        %7019 = vmatprep.subr.mxu0 0.0
        %7020 = vmatpush1.msra.mxu0 0.0
        %7021 = vmatprep.subr.mxu0 0.0
        %7022 = vmatpush1.msra.mxu0 0.0
        %7023 = vmatprep.subr.mxu0 0.0
        %7024 = vmatpush1.msra.mxu0 0.0
        %7025 = vmatprep.subr.mxu0 0.0
        %7026 = vmatpush1.msra.mxu0 0.0
        %7027 = vmatprep.subr.mxu0 %v6447
        %7028 = vmatpush1.msra.mxu0 %v6446
        %7029 = vmatprep.subr.mxu0 %v6445
        %7030 = vmatpush1.msra.mxu0 %v6444
        %7031 = vmatprep.subr.mxu0 %v6443
        %7032 = vmatpush1.msra.mxu0 %v6442
        %7033 = vmatprep.subr.mxu0 %v6441
        %7034 = vmatpush1.msra.mxu0 %v6440
        %7035 = vmatprep.subr.mxu0 %v6439
        %7036 = vmatpush1.msra.mxu0 %v6438
        %7037 = vmatprep.subr.mxu0 %v6437
        %7038 = vmatpush1.msra.mxu0 %v6436
        %7039 = vmatprep.subr.mxu0 %v6435
        %7040 = vmatpush1.msra.mxu0 %v6434
        %7041 = vmatprep.subr.mxu0 %v6433
        %7042 = vmatpush1.msra.mxu0 %v6432
        %7043 = vmatprep.subr.mxu0 %v6431
        %7044 = vmatpush1.msra.mxu0 %v6430
        %7045 = vmatprep.subr.mxu0 %v6429
        %7046 = vmatpush1.msra.mxu0 %v6428
        %7047 = vmatprep.subr.mxu0 %v6427
        %7048 = vmatpush1.msra.mxu0 %v6426
        %7049 = vmatprep.subr.mxu0 %v6425
        %7050 = vmatpush1.msra.mxu0 %v6424
        %7051 = vmatprep.subr.mxu0 0.0
        %7052 = vmatpush2.msra.mxu0 0.0
        %7053 = vmatprep.subr.mxu0 0.0
        %7054 = vmatpush2.msra.mxu0 0.0
        %7055 = vmatprep.subr.mxu0 0.0
        %7056 = vmatpush2.msra.mxu0 0.0
        %7057 = vmatprep.subr.mxu0 0.0
        %7058 = vmatpush2.msra.mxu0 0.0
        %7059 = vmatprep.subr.mxu0 0.0
        %7060 = vmatpush2.msra.mxu0 0.0
        %7061 = vmatprep.subr.mxu0 0.0
        %7062 = vmatpush2.msra.mxu0 0.0
        %7063 = vmatprep.subr.mxu0 0.0
        %7064 = vmatpush2.msra.mxu0 0.0
        %7065 = vmatprep.subr.mxu0 0.0
        %7066 = vmatpush2.msra.mxu0 0.0
        %7067 = vmatprep.subr.mxu0 0.0
        %7068 = vmatpush2.msra.mxu0 0.0
        %7069 = vmatprep.subr.mxu0 0.0
        %7070 = vmatpush2.msra.mxu0 0.0
        %7071 = vmatprep.subr.mxu0 0.0
        %7072 = vmatpush2.msra.mxu0 0.0
        %7073 = vmatprep.subr.mxu0 0.0
        %7074 = vmatpush2.msra.mxu0 0.0
        %7075 = vmatprep.subr.mxu0 0.0
        %7076 = vmatpush2.msra.mxu0 0.0
        %7077 = vmatprep.subr.mxu0 0.0
        %7078 = vmatpush2.msra.mxu0 0.0
        %7079 = vmatprep.subr.mxu0 0.0
        %7080 = vmatpush2.msra.mxu0 0.0
        %7081 = vmatprep.subr.mxu0 0.0
        %7082 = vmatpush2.msra.mxu0 0.0
        %7083 = vmatprep.mubr.f32.mxu0 0.0
        %7084 = vmatmul.mubr.f32.gmra.mxu0 %v6566
        %v7085 = vpop.f32.mrf.mxu0
        %v7086 = vadd.f32 0.0, %v7085
        %v7087 = vpop.f32.mrf.mxu0
        %v7088 = vadd.f32 0.0, %v7087
        %7089 = vmatprep.mubr.f32.mxu0 0.0
        %7090 = vmatmul.mubr.f32.gmra.mxu0 %v6568
        %v7091 = vpop.f32.mrf.mxu0
        %v7092 = vadd.f32 0.0, %v7091
        %v7093 = vpop.f32.mrf.mxu0
        %v7094 = vadd.f32 0.0, %v7093
        %7095 = vmatprep.mubr.f32.mxu0 0.0
        %7096 = vmatmul.mubr.f32.gmra.mxu0 %v6570
        %v7097 = vpop.f32.mrf.mxu0
        %v7098 = vadd.f32 0.0, %v7097
        %v7099 = vpop.f32.mrf.mxu0
        %v7100 = vadd.f32 0.0, %v7099
        %7101 = vmatprep.mubr.f32.mxu0 0.0
        %7102 = vmatmul.mubr.f32.gmra.mxu0 %v6572
        %v7103 = vpop.f32.mrf.mxu0
        %v7104 = vadd.f32 0.0, %v7103
        %v7105 = vpop.f32.mrf.mxu0
        %v7106 = vadd.f32 0.0, %v7105
        %7107 = vdwg.mxu0
        %v7108 = vsel %vm1793, %v6449, 0
        %v7110 = vsel %vm1793, %v6450, 0
        %v7112 = vsel %vm1793, %v6451, 0
        %v7114 = vsel %vm1793, %v6452, 0
        %7116 = vmatprep.subr.mxu0 0.0
        %7117 = vmatpush1.msra.mxu0 0.0
        %7118 = vmatprep.subr.mxu0 0.0
        %7119 = vmatpush1.msra.mxu0 0.0
        %7120 = vmatprep.subr.mxu0 0.0
        %7121 = vmatpush1.msra.mxu0 0.0
        %7122 = vmatprep.subr.mxu0 0.0
        %7123 = vmatpush1.msra.mxu0 0.0
        %7124 = vmatprep.subr.mxu0 0.0
        %7125 = vmatpush1.msra.mxu0 0.0
        %7126 = vmatprep.subr.mxu0 0.0
        %7127 = vmatpush1.msra.mxu0 0.0
        %7128 = vmatprep.subr.mxu0 0.0
        %7129 = vmatpush1.msra.mxu0 0.0
        %7130 = vmatprep.subr.mxu0 0.0
        %7131 = vmatpush1.msra.mxu0 0.0
        %7132 = vmatprep.subr.mxu0 %v6447
        %7133 = vmatpush1.msra.mxu0 %v6446
        %7134 = vmatprep.subr.mxu0 %v6445
        %7135 = vmatpush1.msra.mxu0 %v6444
        %7136 = vmatprep.subr.mxu0 %v6443
        %7137 = vmatpush1.msra.mxu0 %v6442
        %7138 = vmatprep.subr.mxu0 %v6441
        %7139 = vmatpush1.msra.mxu0 %v6440
        %7140 = vmatprep.subr.mxu0 %v6439
        %7141 = vmatpush1.msra.mxu0 %v6438
        %7142 = vmatprep.subr.mxu0 %v6437
        %7143 = vmatpush1.msra.mxu0 %v6436
        %7144 = vmatprep.subr.mxu0 %v6435
        %7145 = vmatpush1.msra.mxu0 %v6434
        %7146 = vmatprep.subr.mxu0 %v6433
        %7147 = vmatpush1.msra.mxu0 %v6432
        %7148 = vmatprep.subr.mxu0 0.0
        %7149 = vmatpush2.msra.mxu0 0.0
        %7150 = vmatprep.subr.mxu0 0.0
        %7151 = vmatpush2.msra.mxu0 0.0
        %7152 = vmatprep.subr.mxu0 0.0
        %7153 = vmatpush2.msra.mxu0 0.0
        %7154 = vmatprep.subr.mxu0 0.0
        %7155 = vmatpush2.msra.mxu0 0.0
        %7156 = vmatprep.subr.mxu0 0.0
        %7157 = vmatpush2.msra.mxu0 0.0
        %7158 = vmatprep.subr.mxu0 0.0
        %7159 = vmatpush2.msra.mxu0 0.0
        %7160 = vmatprep.subr.mxu0 0.0
        %7161 = vmatpush2.msra.mxu0 0.0
        %7162 = vmatprep.subr.mxu0 0.0
        %7163 = vmatpush2.msra.mxu0 0.0
        %7164 = vmatprep.subr.mxu0 0.0
        %7165 = vmatpush2.msra.mxu0 0.0
        %7166 = vmatprep.subr.mxu0 0.0
        %7167 = vmatpush2.msra.mxu0 0.0
        %7168 = vmatprep.subr.mxu0 0.0
        %7169 = vmatpush2.msra.mxu0 0.0
        %7170 = vmatprep.subr.mxu0 0.0
        %7171 = vmatpush2.msra.mxu0 0.0
        %7172 = vmatprep.subr.mxu0 0.0
        %7173 = vmatpush2.msra.mxu0 0.0
        %7174 = vmatprep.subr.mxu0 0.0
        %7175 = vmatpush2.msra.mxu0 0.0
        %7176 = vmatprep.subr.mxu0 0.0
        %7177 = vmatpush2.msra.mxu0 0.0
        %7178 = vmatprep.subr.mxu0 0.0
        %7179 = vmatpush2.msra.mxu0 0.0
        %7180 = vmatprep.mubr.f32.mxu0 0.0
        %7181 = vmatmul.mubr.f32.gmra.mxu0 %v7108
        %v7182 = vpop.f32.mrf.mxu0
        %v7183 = vadd.f32 0.0, %v7182
        %v7184 = vpop.f32.mrf.mxu0
        %v7185 = vadd.f32 0.0, %v7184
        %7186 = vmatprep.mubr.f32.mxu0 0.0
        %7187 = vmatmul.mubr.f32.gmra.mxu0 %v7110
        %v7188 = vpop.f32.mrf.mxu0
        %v7189 = vadd.f32 0.0, %v7188
        %v7190 = vpop.f32.mrf.mxu0
        %v7191 = vadd.f32 0.0, %v7190
        %7192 = vmatprep.mubr.f32.mxu0 0.0
        %7193 = vmatmul.mubr.f32.gmra.mxu0 %v7112
        %v7194 = vpop.f32.mrf.mxu0
        %v7195 = vadd.f32 0.0, %v7194
        %v7196 = vpop.f32.mrf.mxu0
        %v7197 = vadd.f32 0.0, %v7196
        %7198 = vmatprep.mubr.f32.mxu0 0.0
        %7199 = vmatmul.mubr.f32.gmra.mxu0 %v7114
        %v7200 = vpop.f32.mrf.mxu0
        %v7201 = vadd.f32 0.0, %v7200
        %v7202 = vpop.f32.mrf.mxu0
        %v7203 = vadd.f32 0.0, %v7202
        %7204 = vdwg.mxu0
        %7206 = vset.pattern.permute.xlu0 8
        %7207 = vperm.xlu0 %7206, %v6453
        %v7208 = vpop.permute.xlu0 %7207
        %7211 = vset.pattern.permute.xlu0 8
        %7212 = vperm.xlu0 %7211, %v6454
        %v7213 = vpop.permute.xlu0 %7212
        %7216 = vset.pattern.permute.xlu0 8
        %7217 = vperm.xlu0 %7216, %v6455
        %v7218 = vpop.permute.xlu0 %7217
        %7221 = vset.pattern.permute.xlu0 8
        %7222 = vperm.xlu0 %7221, %v6456
        %v7223 = vpop.permute.xlu0 %7222
        %v7225 = vadd.f32 %v6544, %v7208
        %v7226 = vadd.f32 %v6546, %v7208
        %v7227 = vadd.f32 %v6550, %v7213
        %v7228 = vadd.f32 %v6552, %v7213
        %v7229 = vadd.f32 %v6556, %v7218
        %v7230 = vadd.f32 %v6558, %v7218
        %v7231 = vadd.f32 %v6562, %v7223
        %v7232 = vadd.f32 %v6564, %v7223
        %v7233 = vadd.f32 %v6641, %v7208
        %v7234 = vadd.f32 %v6643, %v7208
        %v7235 = vadd.f32 %v6647, %v7213
        %v7236 = vadd.f32 %v6649, %v7213
        %v7237 = vadd.f32 %v6653, %v7218
        %v7238 = vadd.f32 %v6655, %v7218
        %v7239 = vadd.f32 %v6659, %v7223
        %v7240 = vadd.f32 %v6661, %v7223
        %v7241 = vadd.f32 %v6730, %v7208
        %v7242 = vadd.f32 %v6732, %v7208
        %v7243 = vadd.f32 %v6736, %v7213
        %v7244 = vadd.f32 %v6738, %v7213
        %v7245 = vadd.f32 %v6742, %v7218
        %v7246 = vadd.f32 %v6744, %v7218
        %v7247 = vadd.f32 %v6748, %v7223
        %v7248 = vadd.f32 %v6750, %v7223
        %v7249 = vadd.f32 %v6819, %v7208
        %v7250 = vadd.f32 %v6821, %v7208
        %v7251 = vadd.f32 %v6825, %v7213
        %v7252 = vadd.f32 %v6827, %v7213
        %v7253 = vadd.f32 %v6831, %v7218
        %v7254 = vadd.f32 %v6833, %v7218
        %v7255 = vadd.f32 %v6837, %v7223
        %v7256 = vadd.f32 %v6839, %v7223
        %v7257 = vadd.f32 %v6908, %v7208
        %v7258 = vadd.f32 %v6910, %v7208
        %v7259 = vadd.f32 %v6914, %v7213
        %v7260 = vadd.f32 %v6916, %v7213
        %v7261 = vadd.f32 %v6920, %v7218
        %v7262 = vadd.f32 %v6922, %v7218
        %v7263 = vadd.f32 %v6926, %v7223
        %v7264 = vadd.f32 %v6928, %v7223
        %v7265 = vadd.f32 %v6997, %v7208
        %v7266 = vadd.f32 %v6999, %v7208
        %v7267 = vadd.f32 %v7003, %v7213
        %v7268 = vadd.f32 %v7005, %v7213
        %v7269 = vadd.f32 %v7009, %v7218
        %v7270 = vadd.f32 %v7011, %v7218
        %v7271 = vadd.f32 %v7015, %v7223
        %v7272 = vadd.f32 %v7017, %v7223
        %v7273 = vadd.f32 %v7086, %v7208
        %v7274 = vadd.f32 %v7088, %v7208
        %v7275 = vadd.f32 %v7092, %v7213
        %v7276 = vadd.f32 %v7094, %v7213
        %v7277 = vadd.f32 %v7098, %v7218
        %v7278 = vadd.f32 %v7100, %v7218
        %v7279 = vadd.f32 %v7104, %v7223
        %v7280 = vadd.f32 %v7106, %v7223
        %v7281 = vadd.f32 %v7183, %v7208
        %v7282 = vadd.f32 %v7185, %v7208
        %v7283 = vadd.f32 %v7189, %v7213
        %v7284 = vadd.f32 %v7191, %v7213
        %v7285 = vadd.f32 %v7195, %v7218
        %v7286 = vadd.f32 %v7197, %v7218
        %v7287 = vadd.f32 %v7201, %v7223
        %v7288 = vadd.f32 %v7203, %v7223
        %v7289 = vadd.f32 %v7225, %v7226
        %7290 = vadd.xlane.f32.xlu0 %v7289
        %v7291 = vpop.xlane.xlu0 %7290
        %v7292 = vadd.f32 %v7227, %v7228
        %7293 = vadd.xlane.f32.xlu0 %v7292
        %v7294 = vpop.xlane.xlu0 %7293
        %v7295 = vadd.f32 %v7229, %v7230
        %7296 = vadd.xlane.f32.xlu0 %v7295
        %v7297 = vpop.xlane.xlu0 %7296
        %v7298 = vadd.f32 %v7231, %v7232
        %7299 = vadd.xlane.f32.xlu0 %v7298
        %v7300 = vpop.xlane.xlu0 %7299
        %v7301 = vadd.f32 %v7233, %v7234
        %7302 = vadd.xlane.f32.xlu0 %v7301
        %v7303 = vpop.xlane.xlu0 %7302
        %v7304 = vadd.f32 %v7235, %v7236
        %7305 = vadd.xlane.f32.xlu0 %v7304
        %v7306 = vpop.xlane.xlu0 %7305
        %v7307 = vadd.f32 %v7237, %v7238
        %7308 = vadd.xlane.f32.xlu0 %v7307
        %v7309 = vpop.xlane.xlu0 %7308
        %v7310 = vadd.f32 %v7239, %v7240
        %7311 = vadd.xlane.f32.xlu0 %v7310
        %v7312 = vpop.xlane.xlu0 %7311
        %v7313 = vadd.f32 %v7241, %v7242
        %7314 = vadd.xlane.f32.xlu0 %v7313
        %v7315 = vpop.xlane.xlu0 %7314
        %v7316 = vadd.f32 %v7243, %v7244
        %7317 = vadd.xlane.f32.xlu0 %v7316
        %v7318 = vpop.xlane.xlu0 %7317
        %v7319 = vadd.f32 %v7245, %v7246
        %7320 = vadd.xlane.f32.xlu0 %v7319
        %v7321 = vpop.xlane.xlu0 %7320
        %v7322 = vadd.f32 %v7247, %v7248
        %7323 = vadd.xlane.f32.xlu0 %v7322
        %v7324 = vpop.xlane.xlu0 %7323
        %v7325 = vadd.f32 %v7249, %v7250
        %7326 = vadd.xlane.f32.xlu0 %v7325
        %v7327 = vpop.xlane.xlu0 %7326
        %v7328 = vadd.f32 %v7251, %v7252
        %7329 = vadd.xlane.f32.xlu0 %v7328
        %v7330 = vpop.xlane.xlu0 %7329
        %v7331 = vadd.f32 %v7253, %v7254
        %7332 = vadd.xlane.f32.xlu0 %v7331
        %v7333 = vpop.xlane.xlu0 %7332
        %v7334 = vadd.f32 %v7255, %v7256
        %7335 = vadd.xlane.f32.xlu0 %v7334
        %v7336 = vpop.xlane.xlu0 %7335
        %v7337 = vadd.f32 %v7257, %v7258
        %7338 = vadd.xlane.f32.xlu0 %v7337
        %v7339 = vpop.xlane.xlu0 %7338
        %v7340 = vadd.f32 %v7259, %v7260
        %7341 = vadd.xlane.f32.xlu0 %v7340
        %v7342 = vpop.xlane.xlu0 %7341
        %v7343 = vadd.f32 %v7261, %v7262
        %7344 = vadd.xlane.f32.xlu0 %v7343
        %v7345 = vpop.xlane.xlu0 %7344
        %v7346 = vadd.f32 %v7263, %v7264
        %7347 = vadd.xlane.f32.xlu0 %v7346
        %v7348 = vpop.xlane.xlu0 %7347
        %v7349 = vadd.f32 %v7265, %v7266
        %7350 = vadd.xlane.f32.xlu0 %v7349
        %v7351 = vpop.xlane.xlu0 %7350
        %v7352 = vadd.f32 %v7267, %v7268
        %7353 = vadd.xlane.f32.xlu0 %v7352
        %v7354 = vpop.xlane.xlu0 %7353
        %v7355 = vadd.f32 %v7269, %v7270
        %7356 = vadd.xlane.f32.xlu0 %v7355
        %v7357 = vpop.xlane.xlu0 %7356
        %v7358 = vadd.f32 %v7271, %v7272
        %7359 = vadd.xlane.f32.xlu0 %v7358
        %v7360 = vpop.xlane.xlu0 %7359
        %v7361 = vadd.f32 %v7273, %v7274
        %7362 = vadd.xlane.f32.xlu0 %v7361
        %v7363 = vpop.xlane.xlu0 %7362
        %v7364 = vadd.f32 %v7275, %v7276
        %7365 = vadd.xlane.f32.xlu0 %v7364
        %v7366 = vpop.xlane.xlu0 %7365
        %v7367 = vadd.f32 %v7277, %v7278
        %7368 = vadd.xlane.f32.xlu0 %v7367
        %v7369 = vpop.xlane.xlu0 %7368
        %v7370 = vadd.f32 %v7279, %v7280
        %7371 = vadd.xlane.f32.xlu0 %v7370
        %v7372 = vpop.xlane.xlu0 %7371
        %v7373 = vadd.f32 %v7281, %v7282
        %7374 = vadd.xlane.f32.xlu0 %v7373
        %v7375 = vpop.xlane.xlu0 %7374
        %v7376 = vadd.f32 %v7283, %v7284
        %7377 = vadd.xlane.f32.xlu0 %v7376
        %v7378 = vpop.xlane.xlu0 %7377
        %v7379 = vadd.f32 %v7285, %v7286
        %7380 = vadd.xlane.f32.xlu0 %v7379
        %v7381 = vpop.xlane.xlu0 %7380
        %v7382 = vadd.f32 %v7287, %v7288
        %7383 = vadd.xlane.f32.xlu0 %v7382
        %v7384 = vpop.xlane.xlu0 %7383
        %v7385 = vadd.f32 %v7291, %v7303
        %v7386 = vadd.f32 %v7385, %v7315
        %v7387 = vadd.f32 %v7386, %v7327
        %v7388 = vadd.f32 %v7387, %v7339
        %v7389 = vadd.f32 %v7388, %v7351
        %v7390 = vadd.f32 %v7389, %v7363
        %v7391 = vadd.f32 %v7390, %v7375
        %v7392 = vadd.f32 %v7294, %v7306
        %v7393 = vadd.f32 %v7392, %v7318
        %v7394 = vadd.f32 %v7393, %v7330
        %v7395 = vadd.f32 %v7394, %v7342
        %v7396 = vadd.f32 %v7395, %v7354
        %v7397 = vadd.f32 %v7396, %v7366
        %v7398 = vadd.f32 %v7397, %v7378
        %v7399 = vadd.f32 %v7297, %v7309
        %v7400 = vadd.f32 %v7399, %v7321
        %v7401 = vadd.f32 %v7400, %v7333
        %v7402 = vadd.f32 %v7401, %v7345
        %v7403 = vadd.f32 %v7402, %v7357
        %v7404 = vadd.f32 %v7403, %v7369
        %v7405 = vadd.f32 %v7404, %v7381
        %v7406 = vadd.f32 %v7300, %v7312
        %v7407 = vadd.f32 %v7406, %v7324
        %v7408 = vadd.f32 %v7407, %v7336
        %v7409 = vadd.f32 %v7408, %v7348
        %v7410 = vadd.f32 %v7409, %v7360
        %v7411 = vadd.f32 %v7410, %v7372
        %v7412 = vadd.f32 %v7411, %v7384
        %v7413 = vmul.f32 %v7225, %v7225
        %v7414 = vmul.f32 %v7226, %v7226
        %v7415 = vmul.f32 %v7227, %v7227
        %v7416 = vmul.f32 %v7228, %v7228
        %v7417 = vmul.f32 %v7229, %v7229
        %v7418 = vmul.f32 %v7230, %v7230
        %v7419 = vmul.f32 %v7231, %v7231
        %v7420 = vmul.f32 %v7232, %v7232
        %v7421 = vmul.f32 %v7233, %v7233
        %v7422 = vmul.f32 %v7234, %v7234
        %v7423 = vmul.f32 %v7235, %v7235
        %v7424 = vmul.f32 %v7236, %v7236
        %v7425 = vmul.f32 %v7237, %v7237
        %v7426 = vmul.f32 %v7238, %v7238
        %v7427 = vmul.f32 %v7239, %v7239
        %v7428 = vmul.f32 %v7240, %v7240
        %v7429 = vmul.f32 %v7241, %v7241
        %v7430 = vmul.f32 %v7242, %v7242
        %v7431 = vmul.f32 %v7243, %v7243
        %v7432 = vmul.f32 %v7244, %v7244
        %v7433 = vmul.f32 %v7245, %v7245
        %v7434 = vmul.f32 %v7246, %v7246
        %v7435 = vmul.f32 %v7247, %v7247
        %v7436 = vmul.f32 %v7248, %v7248
        %v7437 = vmul.f32 %v7249, %v7249
        %v7438 = vmul.f32 %v7250, %v7250
        %v7439 = vmul.f32 %v7251, %v7251
        %v7440 = vmul.f32 %v7252, %v7252
        %v7441 = vmul.f32 %v7253, %v7253
        %v7442 = vmul.f32 %v7254, %v7254
        %v7443 = vmul.f32 %v7255, %v7255
        %v7444 = vmul.f32 %v7256, %v7256
        %v7445 = vmul.f32 %v7257, %v7257
        %v7446 = vmul.f32 %v7258, %v7258
        %v7447 = vmul.f32 %v7259, %v7259
        %v7448 = vmul.f32 %v7260, %v7260
        %v7449 = vmul.f32 %v7261, %v7261
        %v7450 = vmul.f32 %v7262, %v7262
        %v7451 = vmul.f32 %v7263, %v7263
        %v7452 = vmul.f32 %v7264, %v7264
        %v7453 = vmul.f32 %v7265, %v7265
        %v7454 = vmul.f32 %v7266, %v7266
        %v7455 = vmul.f32 %v7267, %v7267
        %v7456 = vmul.f32 %v7268, %v7268
        %v7457 = vmul.f32 %v7269, %v7269
        %v7458 = vmul.f32 %v7270, %v7270
        %v7459 = vmul.f32 %v7271, %v7271
        %v7460 = vmul.f32 %v7272, %v7272
        %v7461 = vmul.f32 %v7273, %v7273
        %v7462 = vmul.f32 %v7274, %v7274
        %v7463 = vmul.f32 %v7275, %v7275
        %v7464 = vmul.f32 %v7276, %v7276
        %v7465 = vmul.f32 %v7277, %v7277
        %v7466 = vmul.f32 %v7278, %v7278
        %v7467 = vmul.f32 %v7279, %v7279
        %v7468 = vmul.f32 %v7280, %v7280
        %v7469 = vmul.f32 %v7281, %v7281
        %v7470 = vmul.f32 %v7282, %v7282
        %v7471 = vmul.f32 %v7283, %v7283
        %v7472 = vmul.f32 %v7284, %v7284
        %v7473 = vmul.f32 %v7285, %v7285
        %v7474 = vmul.f32 %v7286, %v7286
        %v7475 = vmul.f32 %v7287, %v7287
        %v7476 = vmul.f32 %v7288, %v7288
        %v7477 = vadd.f32 %v7413, %v7414
        %7478 = vadd.xlane.f32.xlu0 %v7477
        %v7479 = vpop.xlane.xlu0 %7478
        %v7480 = vadd.f32 %v7415, %v7416
        %7481 = vadd.xlane.f32.xlu0 %v7480
        %v7482 = vpop.xlane.xlu0 %7481
        %v7483 = vadd.f32 %v7417, %v7418
        %7484 = vadd.xlane.f32.xlu0 %v7483
        %v7485 = vpop.xlane.xlu0 %7484
        %v7486 = vadd.f32 %v7419, %v7420
        %7487 = vadd.xlane.f32.xlu0 %v7486
        %v7488 = vpop.xlane.xlu0 %7487
        %v7489 = vadd.f32 %v7421, %v7422
        %7490 = vadd.xlane.f32.xlu0 %v7489
        %v7491 = vpop.xlane.xlu0 %7490
        %v7492 = vadd.f32 %v7423, %v7424
        %7493 = vadd.xlane.f32.xlu0 %v7492
        %v7494 = vpop.xlane.xlu0 %7493
        %v7495 = vadd.f32 %v7425, %v7426
        %7496 = vadd.xlane.f32.xlu0 %v7495
        %v7497 = vpop.xlane.xlu0 %7496
        %v7498 = vadd.f32 %v7427, %v7428
        %7499 = vadd.xlane.f32.xlu0 %v7498
        %v7500 = vpop.xlane.xlu0 %7499
        %v7501 = vadd.f32 %v7429, %v7430
        %7502 = vadd.xlane.f32.xlu0 %v7501
        %v7503 = vpop.xlane.xlu0 %7502
        %v7504 = vadd.f32 %v7431, %v7432
        %7505 = vadd.xlane.f32.xlu0 %v7504
        %v7506 = vpop.xlane.xlu0 %7505
        %v7507 = vadd.f32 %v7433, %v7434
        %7508 = vadd.xlane.f32.xlu0 %v7507
        %v7509 = vpop.xlane.xlu0 %7508
        %v7510 = vadd.f32 %v7435, %v7436
        %7511 = vadd.xlane.f32.xlu0 %v7510
        %v7512 = vpop.xlane.xlu0 %7511
        %v7513 = vadd.f32 %v7437, %v7438
        %7514 = vadd.xlane.f32.xlu0 %v7513
        %v7515 = vpop.xlane.xlu0 %7514
        %v7516 = vadd.f32 %v7439, %v7440
        %7517 = vadd.xlane.f32.xlu0 %v7516
        %v7518 = vpop.xlane.xlu0 %7517
        %v7519 = vadd.f32 %v7441, %v7442
        %7520 = vadd.xlane.f32.xlu0 %v7519
        %v7521 = vpop.xlane.xlu0 %7520
        %v7522 = vadd.f32 %v7443, %v7444
        %7523 = vadd.xlane.f32.xlu0 %v7522
        %v7524 = vpop.xlane.xlu0 %7523
        %v7525 = vadd.f32 %v7445, %v7446
        %7526 = vadd.xlane.f32.xlu0 %v7525
        %v7527 = vpop.xlane.xlu0 %7526
        %v7528 = vadd.f32 %v7447, %v7448
        %7529 = vadd.xlane.f32.xlu0 %v7528
        %v7530 = vpop.xlane.xlu0 %7529
        %v7531 = vadd.f32 %v7449, %v7450
        %7532 = vadd.xlane.f32.xlu0 %v7531
        %v7533 = vpop.xlane.xlu0 %7532
        %v7534 = vadd.f32 %v7451, %v7452
        %7535 = vadd.xlane.f32.xlu0 %v7534
        %v7536 = vpop.xlane.xlu0 %7535
        %v7537 = vadd.f32 %v7453, %v7454
        %7538 = vadd.xlane.f32.xlu0 %v7537
        %v7539 = vpop.xlane.xlu0 %7538
        %v7540 = vadd.f32 %v7455, %v7456
        %7541 = vadd.xlane.f32.xlu0 %v7540
        %v7542 = vpop.xlane.xlu0 %7541
        %v7543 = vadd.f32 %v7457, %v7458
        %7544 = vadd.xlane.f32.xlu0 %v7543
        %v7545 = vpop.xlane.xlu0 %7544
        %v7546 = vadd.f32 %v7459, %v7460
        %7547 = vadd.xlane.f32.xlu0 %v7546
        %v7548 = vpop.xlane.xlu0 %7547
        %v7549 = vadd.f32 %v7461, %v7462
        %7550 = vadd.xlane.f32.xlu0 %v7549
        %v7551 = vpop.xlane.xlu0 %7550
        %v7552 = vadd.f32 %v7463, %v7464
        %7553 = vadd.xlane.f32.xlu0 %v7552
        %v7554 = vpop.xlane.xlu0 %7553
        %v7555 = vadd.f32 %v7465, %v7466
        %7556 = vadd.xlane.f32.xlu0 %v7555
        %v7557 = vpop.xlane.xlu0 %7556
        %v7558 = vadd.f32 %v7467, %v7468
        %7559 = vadd.xlane.f32.xlu0 %v7558
        %v7560 = vpop.xlane.xlu0 %7559
        %v7561 = vadd.f32 %v7469, %v7470
        %7562 = vadd.xlane.f32.xlu0 %v7561
        %v7563 = vpop.xlane.xlu0 %7562
        %v7564 = vadd.f32 %v7471, %v7472
        %7565 = vadd.xlane.f32.xlu0 %v7564
        %v7566 = vpop.xlane.xlu0 %7565
        %v7567 = vadd.f32 %v7473, %v7474
        %7568 = vadd.xlane.f32.xlu0 %v7567
        %v7569 = vpop.xlane.xlu0 %7568
        %v7570 = vadd.f32 %v7475, %v7476
        %7571 = vadd.xlane.f32.xlu0 %v7570
        %v7572 = vpop.xlane.xlu0 %7571
        %v7573 = vadd.f32 %v7479, %v7491
        %v7574 = vadd.f32 %v7573, %v7503
        %v7575 = vadd.f32 %v7574, %v7515
        %v7576 = vadd.f32 %v7575, %v7527
        %v7577 = vadd.f32 %v7576, %v7539
        %v7578 = vadd.f32 %v7577, %v7551
        %v7579 = vadd.f32 %v7578, %v7563
        %v7580 = vadd.f32 %v7482, %v7494
        %v7581 = vadd.f32 %v7580, %v7506
        %v7582 = vadd.f32 %v7581, %v7518
        %v7583 = vadd.f32 %v7582, %v7530
        %v7584 = vadd.f32 %v7583, %v7542
        %v7585 = vadd.f32 %v7584, %v7554
        %v7586 = vadd.f32 %v7585, %v7566
        %v7587 = vadd.f32 %v7485, %v7497
        %v7588 = vadd.f32 %v7587, %v7509
        %v7589 = vadd.f32 %v7588, %v7521
        %v7590 = vadd.f32 %v7589, %v7533
        %v7591 = vadd.f32 %v7590, %v7545
        %v7592 = vadd.f32 %v7591, %v7557
        %v7593 = vadd.f32 %v7592, %v7569
        %v7594 = vadd.f32 %v7488, %v7500
        %v7595 = vadd.f32 %v7594, %v7512
        %v7596 = vadd.f32 %v7595, %v7524
        %v7597 = vadd.f32 %v7596, %v7536
        %v7598 = vadd.f32 %v7597, %v7548
        %v7599 = vadd.f32 %v7598, %v7560
        %v7600 = vadd.f32 %v7599, %v7572
        %v7606 = vunpack.c.l.s4 839922192
        %v7607 = vunpack.c.0.s8 %v7606
        %v7608 = vlaneseq
        %v7609 = vshrl.u32 %v7608, 7
        %v7610 = vsub.s32 %v7607, %v7609
        %v7611 = vrot.slane %v7391, %v7610
        %v7613 = vunpack.c.l.s4 1985246804
        %v7614 = vunpack.c.0.s8 %v7613
        %v7615 = vlaneseq
        %v7616 = vshrl.u32 %v7615, 7
        %v7617 = vsub.s32 %v7614, %v7616
        %v7618 = vrot.slane %v7391, %v7617
        %v7620 = vunpack.c.l.s4 839922192
        %v7621 = vunpack.c.0.s8 %v7620
        %v7622 = vlaneseq
        %v7623 = vshrl.u32 %v7622, 7
        %v7624 = vsub.s32 %v7621, %v7623
        %v7625 = vrot.slane %v7398, %v7624
        %v7627 = vunpack.c.l.s4 1985246804
        %v7628 = vunpack.c.0.s8 %v7627
        %v7629 = vlaneseq
        %v7630 = vshrl.u32 %v7629, 7
        %v7631 = vsub.s32 %v7628, %v7630
        %v7632 = vrot.slane %v7398, %v7631
        %v7634 = vunpack.c.l.s4 839922192
        %v7635 = vunpack.c.0.s8 %v7634
        %v7636 = vlaneseq
        %v7637 = vshrl.u32 %v7636, 7
        %v7638 = vsub.s32 %v7635, %v7637
        %v7639 = vrot.slane %v7405, %v7638
        %v7641 = vunpack.c.l.s4 1985246804
        %v7642 = vunpack.c.0.s8 %v7641
        %v7643 = vlaneseq
        %v7644 = vshrl.u32 %v7643, 7
        %v7645 = vsub.s32 %v7642, %v7644
        %v7646 = vrot.slane %v7405, %v7645
        %v7648 = vunpack.c.l.s4 839922192
        %v7649 = vunpack.c.0.s8 %v7648
        %v7650 = vlaneseq
        %v7651 = vshrl.u32 %v7650, 7
        %v7652 = vsub.s32 %v7649, %v7651
        %v7653 = vrot.slane %v7412, %v7652
        %v7655 = vunpack.c.l.s4 1985246804
        %v7656 = vunpack.c.0.s8 %v7655
        %v7657 = vlaneseq
        %v7658 = vshrl.u32 %v7657, 7
        %v7659 = vsub.s32 %v7656, %v7658
        %v7660 = vrot.slane %v7412, %v7659
        %v7669 = vsel %vm652, %v7611, 0.0
        %v7670 = vrot.slane %v7669, 4
        %v7671 = vadd.f32 %v7669, %v7670
        %v7672 = vrot.slane %v7671, 2
        %v7673 = vadd.f32 %v7671, %v7672
        %v7674 = vrot.slane %v7673, 1
        %v7675 = vadd.f32 %v7673, %v7674
        %v7676 = vsel %vm652, %v7618, 0.0
        %v7677 = vrot.slane %v7676, 4
        %v7678 = vadd.f32 %v7676, %v7677
        %v7679 = vrot.slane %v7678, 2
        %v7680 = vadd.f32 %v7678, %v7679
        %v7681 = vrot.slane %v7680, 1
        %v7682 = vadd.f32 %v7680, %v7681
        %v7683 = vsel %vm652, %v7625, 0.0
        %v7684 = vrot.slane %v7683, 4
        %v7685 = vadd.f32 %v7683, %v7684
        %v7686 = vrot.slane %v7685, 2
        %v7687 = vadd.f32 %v7685, %v7686
        %v7688 = vrot.slane %v7687, 1
        %v7689 = vadd.f32 %v7687, %v7688
        %v7690 = vsel %vm652, %v7632, 0.0
        %v7691 = vrot.slane %v7690, 4
        %v7692 = vadd.f32 %v7690, %v7691
        %v7693 = vrot.slane %v7692, 2
        %v7694 = vadd.f32 %v7692, %v7693
        %v7695 = vrot.slane %v7694, 1
        %v7696 = vadd.f32 %v7694, %v7695
        %v7697 = vsel %vm652, %v7639, 0.0
        %v7698 = vrot.slane %v7697, 4
        %v7699 = vadd.f32 %v7697, %v7698
        %v7700 = vrot.slane %v7699, 2
        %v7701 = vadd.f32 %v7699, %v7700
        %v7702 = vrot.slane %v7701, 1
        %v7703 = vadd.f32 %v7701, %v7702
        %v7704 = vsel %vm652, %v7646, 0.0
        %v7705 = vrot.slane %v7704, 4
        %v7706 = vadd.f32 %v7704, %v7705
        %v7707 = vrot.slane %v7706, 2
        %v7708 = vadd.f32 %v7706, %v7707
        %v7709 = vrot.slane %v7708, 1
        %v7710 = vadd.f32 %v7708, %v7709
        %v7711 = vsel %vm652, %v7653, 0.0
        %v7712 = vrot.slane %v7711, 4
        %v7713 = vadd.f32 %v7711, %v7712
        %v7714 = vrot.slane %v7713, 2
        %v7715 = vadd.f32 %v7713, %v7714
        %v7716 = vrot.slane %v7715, 1
        %v7717 = vadd.f32 %v7715, %v7716
        %v7718 = vsel %vm652, %v7660, 0.0
        %v7719 = vrot.slane %v7718, 4
        %v7720 = vadd.f32 %v7718, %v7719
        %v7721 = vrot.slane %v7720, 2
        %v7722 = vadd.f32 %v7720, %v7721
        %v7723 = vrot.slane %v7722, 1
        %v7724 = vadd.f32 %v7722, %v7723
        %v7730 = vunpack.c.l.s4 839922192
        %v7731 = vunpack.c.0.s8 %v7730
        %v7732 = vlaneseq
        %v7733 = vshrl.u32 %v7732, 7
        %v7734 = vsub.s32 %v7731, %v7733
        %v7735 = vrot.slane %v7579, %v7734
        %v7737 = vunpack.c.l.s4 1985246804
        %v7738 = vunpack.c.0.s8 %v7737
        %v7739 = vlaneseq
        %v7740 = vshrl.u32 %v7739, 7
        %v7741 = vsub.s32 %v7738, %v7740
        %v7742 = vrot.slane %v7579, %v7741
        %v7744 = vunpack.c.l.s4 839922192
        %v7745 = vunpack.c.0.s8 %v7744
        %v7746 = vlaneseq
        %v7747 = vshrl.u32 %v7746, 7
        %v7748 = vsub.s32 %v7745, %v7747
        %v7749 = vrot.slane %v7586, %v7748
        %v7751 = vunpack.c.l.s4 1985246804
        %v7752 = vunpack.c.0.s8 %v7751
        %v7753 = vlaneseq
        %v7754 = vshrl.u32 %v7753, 7
        %v7755 = vsub.s32 %v7752, %v7754
        %v7756 = vrot.slane %v7586, %v7755
        %v7758 = vunpack.c.l.s4 839922192
        %v7759 = vunpack.c.0.s8 %v7758
        %v7760 = vlaneseq
        %v7761 = vshrl.u32 %v7760, 7
        %v7762 = vsub.s32 %v7759, %v7761
        %v7763 = vrot.slane %v7593, %v7762
        %v7765 = vunpack.c.l.s4 1985246804
        %v7766 = vunpack.c.0.s8 %v7765
        %v7767 = vlaneseq
        %v7768 = vshrl.u32 %v7767, 7
        %v7769 = vsub.s32 %v7766, %v7768
        %v7770 = vrot.slane %v7593, %v7769
        %v7772 = vunpack.c.l.s4 839922192
        %v7773 = vunpack.c.0.s8 %v7772
        %v7774 = vlaneseq
        %v7775 = vshrl.u32 %v7774, 7
        %v7776 = vsub.s32 %v7773, %v7775
        %v7777 = vrot.slane %v7600, %v7776
        %v7779 = vunpack.c.l.s4 1985246804
        %v7780 = vunpack.c.0.s8 %v7779
        %v7781 = vlaneseq
        %v7782 = vshrl.u32 %v7781, 7
        %v7783 = vsub.s32 %v7780, %v7782
        %v7784 = vrot.slane %v7600, %v7783
        %v7793 = vsel %vm652, %v7735, 0.0
        %v7794 = vrot.slane %v7793, 4
        %v7795 = vadd.f32 %v7793, %v7794
        %v7796 = vrot.slane %v7795, 2
        %v7797 = vadd.f32 %v7795, %v7796
        %v7798 = vrot.slane %v7797, 1
        %v7799 = vadd.f32 %v7797, %v7798
        %v7800 = vsel %vm652, %v7742, 0.0
        %v7801 = vrot.slane %v7800, 4
        %v7802 = vadd.f32 %v7800, %v7801
        %v7803 = vrot.slane %v7802, 2
        %v7804 = vadd.f32 %v7802, %v7803
        %v7805 = vrot.slane %v7804, 1
        %v7806 = vadd.f32 %v7804, %v7805
        %v7807 = vsel %vm652, %v7749, 0.0
        %v7808 = vrot.slane %v7807, 4
        %v7809 = vadd.f32 %v7807, %v7808
        %v7810 = vrot.slane %v7809, 2
        %v7811 = vadd.f32 %v7809, %v7810
        %v7812 = vrot.slane %v7811, 1
        %v7813 = vadd.f32 %v7811, %v7812
        %v7814 = vsel %vm652, %v7756, 0.0
        %v7815 = vrot.slane %v7814, 4
        %v7816 = vadd.f32 %v7814, %v7815
        %v7817 = vrot.slane %v7816, 2
        %v7818 = vadd.f32 %v7816, %v7817
        %v7819 = vrot.slane %v7818, 1
        %v7820 = vadd.f32 %v7818, %v7819
        %v7821 = vsel %vm652, %v7763, 0.0
        %v7822 = vrot.slane %v7821, 4
        %v7823 = vadd.f32 %v7821, %v7822
        %v7824 = vrot.slane %v7823, 2
        %v7825 = vadd.f32 %v7823, %v7824
        %v7826 = vrot.slane %v7825, 1
        %v7827 = vadd.f32 %v7825, %v7826
        %v7828 = vsel %vm652, %v7770, 0.0
        %v7829 = vrot.slane %v7828, 4
        %v7830 = vadd.f32 %v7828, %v7829
        %v7831 = vrot.slane %v7830, 2
        %v7832 = vadd.f32 %v7830, %v7831
        %v7833 = vrot.slane %v7832, 1
        %v7834 = vadd.f32 %v7832, %v7833
        %v7835 = vsel %vm652, %v7777, 0.0
        %v7836 = vrot.slane %v7835, 4
        %v7837 = vadd.f32 %v7835, %v7836
        %v7838 = vrot.slane %v7837, 2
        %v7839 = vadd.f32 %v7837, %v7838
        %v7840 = vrot.slane %v7839, 1
        %v7841 = vadd.f32 %v7839, %v7840
        %v7842 = vsel %vm652, %v7784, 0.0
        %v7843 = vrot.slane %v7842, 4
        %v7844 = vadd.f32 %v7842, %v7843
        %v7845 = vrot.slane %v7844, 2
        %v7846 = vadd.f32 %v7844, %v7845
        %v7847 = vrot.slane %v7846, 1
        %v7848 = vadd.f32 %v7846, %v7847
        %v7849 = vmul.f32 %v7675, 0.00012207031
        %v7850 = vmul.f32 %v7682, 0.00012207031
        %v7851 = vmul.f32 %v7689, 0.00012207031
        %v7852 = vmul.f32 %v7696, 0.00012207031
        %v7853 = vmul.f32 %v7703, 0.00012207031
        %v7854 = vmul.f32 %v7710, 0.00012207031
        %v7855 = vmul.f32 %v7717, 0.00012207031
        %v7856 = vmul.f32 %v7724, 0.00012207031
        %v7857 = vmul.f32 %v7799, 0.00012207031
        %v7858 = vmul.f32 %v7806, 0.00012207031
        %v7859 = vmul.f32 %v7813, 0.00012207031
        %v7860 = vmul.f32 %v7820, 0.00012207031
        %v7861 = vmul.f32 %v7827, 0.00012207031
        %v7862 = vmul.f32 %v7834, 0.00012207031
        %v7863 = vmul.f32 %v7841, 0.00012207031
        %v7864 = vmul.f32 %v7848, 0.00012207031
        %v7865 = vmul.f32 %v7849, %v7849
        %v7866 = vmul.f32 %v7850, %v7850
        %v7867 = vmul.f32 %v7851, %v7851
        %v7868 = vmul.f32 %v7852, %v7852
        %v7869 = vmul.f32 %v7853, %v7853
        %v7870 = vmul.f32 %v7854, %v7854
        %v7871 = vmul.f32 %v7855, %v7855
        %v7872 = vmul.f32 %v7856, %v7856
        %v7873 = vsub.f32 %v7857, %v7865
        %v7874 = vsub.f32 %v7858, %v7866
        %v7875 = vsub.f32 %v7859, %v7867
        %v7876 = vsub.f32 %v7860, %v7868
        %v7877 = vsub.f32 %v7861, %v7869
        %v7878 = vsub.f32 %v7862, %v7870
        %v7879 = vsub.f32 %v7863, %v7871
        %v7880 = vsub.f32 %v7864, %v7872
        %v7881 = vadd.f32 %v7873, 1e-05
        %v7882 = vadd.f32 %v7874, 1e-05
        %v7883 = vadd.f32 %v7875, 1e-05
        %v7884 = vadd.f32 %v7876, 1e-05
        %v7885 = vadd.f32 %v7877, 1e-05
        %v7886 = vadd.f32 %v7878, 1e-05
        %v7887 = vadd.f32 %v7879, 1e-05
        %v7888 = vadd.f32 %v7880, 1e-05
        %v7889 = vrsqrt.pop %v7881
        %v7890 = vrsqrt.pop %v7882
        %v7891 = vrsqrt.pop %v7883
        %v7892 = vrsqrt.pop %v7884
        %v7893 = vrsqrt.pop %v7885
        %v7894 = vrsqrt.pop %v7886
        %v7895 = vrsqrt.pop %v7887
        %v7896 = vrsqrt.pop %v7888
        %v7897 = vcombine.high %v6453, %v6453
        %v7898 = vcombine.high %v6454, %v6454
        %v7899 = vcombine.high %v6455, %v6455
        %v7900 = vcombine.high %v6456, %v6456
        %v7905 = vmul.f32 %v7889, %v6453
        %v7906 = vmul.f32 %v7890, %v7897
        %v7907 = vmul.f32 %v7891, %v6454
        %v7908 = vmul.f32 %v7892, %v7898
        %v7909 = vmul.f32 %v7893, %v6455
        %v7910 = vmul.f32 %v7894, %v7899
        %v7911 = vmul.f32 %v7895, %v6456
        %v7912 = vmul.f32 %v7896, %v7900
        %v7913 = vmul.f32 %v7849, %v7889
        %v7914 = vmul.f32 %v7850, %v7890
        %v7915 = vmul.f32 %v7851, %v7891
        %v7916 = vmul.f32 %v7852, %v7892
        %v7917 = vmul.f32 %v7853, %v7893
        %v7918 = vmul.f32 %v7854, %v7894
        %v7919 = vmul.f32 %v7855, %v7895
        %v7920 = vmul.f32 %v7856, %v7896
        %v7921 = vmul.f32 %v7913, %v6453
        %v7922 = vmul.f32 %v7914, %v7897
        %v7923 = vmul.f32 %v7915, %v6454
        %v7924 = vmul.f32 %v7916, %v7898
        %v7925 = vmul.f32 %v7917, %v6455
        %v7926 = vmul.f32 %v7918, %v7899
        %v7927 = vmul.f32 %v7919, %v6456
        %v7928 = vmul.f32 %v7920, %v7900
        %7937 = vrot.lane.b32.xlu0 %v7921, 1
        %v7938 = vpop.permute.xlu0 %7937
        %7939 = vrot.lane.b32.xlu0 %v7922, 1
        %v7940 = vpop.permute.xlu0 %7939
        %7941 = vrot.lane.b32.xlu0 %v7923, 1
        %v7942 = vpop.permute.xlu0 %7941
        %7943 = vrot.lane.b32.xlu0 %v7924, 1
        %v7944 = vpop.permute.xlu0 %7943
        %7945 = vrot.lane.b32.xlu0 %v7925, 1
        %v7946 = vpop.permute.xlu0 %7945
        %7947 = vrot.lane.b32.xlu0 %v7926, 1
        %v7948 = vpop.permute.xlu0 %7947
        %7949 = vrot.lane.b32.xlu0 %v7927, 1
        %v7950 = vpop.permute.xlu0 %7949
        %7951 = vrot.lane.b32.xlu0 %v7928, 1
        %v7952 = vpop.permute.xlu0 %7951
        %v7961 = vsub.f32 %v6453, %v7938
        %v7962 = vsub.f32 %v7897, %v7940
        %v7963 = vsub.f32 %v6454, %v7942
        %v7964 = vsub.f32 %v7898, %v7944
        %v7965 = vsub.f32 %v6455, %v7946
        %v7966 = vsub.f32 %v7899, %v7948
        %v7967 = vsub.f32 %v6456, %v7950
        %v7968 = vsub.f32 %v7900, %v7952
        %7970 = vset.pattern.permute.xlu0 9
        %7971 = vperm.xlu0 %7970, %v7905
        %v7972 = vpop.permute.xlu0 %7971
        %v7975 = vunpack.c.l.s4 839922192
        %v7976 = vunpack.c.0.s8 %v7975
        %v7977 = vlaneseq
        %v7978 = vshrl.u32 %v7977, 7
        %v7979 = vsub.s32 %v7976, %v7978
        %v7980 = vrot.slane %v7972, %v7979
        %7982 = vset.pattern.permute.xlu0 9
        %7983 = vperm.xlu0 %7982, %v7906
        %v7984 = vpop.permute.xlu0 %7983
        %v7987 = vunpack.c.l.s4 839922192
        %v7988 = vunpack.c.0.s8 %v7987
        %v7989 = vlaneseq
        %v7990 = vshrl.u32 %v7989, 7
        %v7991 = vsub.s32 %v7988, %v7990
        %v7992 = vrot.slane %v7984, %v7991
        %7994 = vset.pattern.permute.xlu0 9
        %7995 = vperm.xlu0 %7994, %v7907
        %v7996 = vpop.permute.xlu0 %7995
        %v7999 = vunpack.c.l.s4 839922192
        %v8000 = vunpack.c.0.s8 %v7999
        %v8001 = vlaneseq
        %v8002 = vshrl.u32 %v8001, 7
        %v8003 = vsub.s32 %v8000, %v8002
        %v8004 = vrot.slane %v7996, %v8003
        %8006 = vset.pattern.permute.xlu0 9
        %8007 = vperm.xlu0 %8006, %v7908
        %v8008 = vpop.permute.xlu0 %8007
        %v8011 = vunpack.c.l.s4 839922192
        %v8012 = vunpack.c.0.s8 %v8011
        %v8013 = vlaneseq
        %v8014 = vshrl.u32 %v8013, 7
        %v8015 = vsub.s32 %v8012, %v8014
        %v8016 = vrot.slane %v8008, %v8015
        %8018 = vset.pattern.permute.xlu0 9
        %8019 = vperm.xlu0 %8018, %v7909
        %v8020 = vpop.permute.xlu0 %8019
        %v8023 = vunpack.c.l.s4 839922192
        %v8024 = vunpack.c.0.s8 %v8023
        %v8025 = vlaneseq
        %v8026 = vshrl.u32 %v8025, 7
        %v8027 = vsub.s32 %v8024, %v8026
        %v8028 = vrot.slane %v8020, %v8027
        %8030 = vset.pattern.permute.xlu0 9
        %8031 = vperm.xlu0 %8030, %v7910
        %v8032 = vpop.permute.xlu0 %8031
        %v8035 = vunpack.c.l.s4 839922192
        %v8036 = vunpack.c.0.s8 %v8035
        %v8037 = vlaneseq
        %v8038 = vshrl.u32 %v8037, 7
        %v8039 = vsub.s32 %v8036, %v8038
        %v8040 = vrot.slane %v8032, %v8039
        %8042 = vset.pattern.permute.xlu0 9
        %8043 = vperm.xlu0 %8042, %v7911
        %v8044 = vpop.permute.xlu0 %8043
        %v8047 = vunpack.c.l.s4 839922192
        %v8048 = vunpack.c.0.s8 %v8047
        %v8049 = vlaneseq
        %v8050 = vshrl.u32 %v8049, 7
        %v8051 = vsub.s32 %v8048, %v8050
        %v8052 = vrot.slane %v8044, %v8051
        %8054 = vset.pattern.permute.xlu0 9
        %8055 = vperm.xlu0 %8054, %v7912
        %v8056 = vpop.permute.xlu0 %8055
        %v8059 = vunpack.c.l.s4 839922192
        %v8060 = vunpack.c.0.s8 %v8059
        %v8061 = vlaneseq
        %v8062 = vshrl.u32 %v8061, 7
        %v8063 = vsub.s32 %v8060, %v8062
        %v8064 = vrot.slane %v8056, %v8063
        %v8073 = vcombine.low %v7980, %v7992
        %v8074 = vcombine.high %v7980, %v7992
        %v8075 = vcombine.low %v8004, %v8016
        %v8076 = vcombine.high %v8004, %v8016
        %v8077 = vcombine.low %v8028, %v8040
        %v8078 = vcombine.high %v8028, %v8040
        %v8079 = vcombine.low %v8052, %v8064
        %v8080 = vcombine.high %v8052, %v8064
        %v8089 = vmul.f32 %v7225, %v8073
        %v8090 = vmul.f32 %v7226, %v8074
        %v8091 = vmul.f32 %v7227, %v8075
        %v8092 = vmul.f32 %v7228, %v8076
        %v8093 = vmul.f32 %v7229, %v8077
        %v8094 = vmul.f32 %v7230, %v8078
        %v8095 = vmul.f32 %v7231, %v8079
        %v8096 = vmul.f32 %v7232, %v8080
        %v8097 = vmul.f32 %v7233, %v8073
        %v8098 = vmul.f32 %v7234, %v8074
        %v8099 = vmul.f32 %v7235, %v8075
        %v8100 = vmul.f32 %v7236, %v8076
        %v8101 = vmul.f32 %v7237, %v8077
        %v8102 = vmul.f32 %v7238, %v8078
        %v8103 = vmul.f32 %v7239, %v8079
        %v8104 = vmul.f32 %v7240, %v8080
        %v8105 = vmul.f32 %v7241, %v8073
        %v8106 = vmul.f32 %v7242, %v8074
        %v8107 = vmul.f32 %v7243, %v8075
        %v8108 = vmul.f32 %v7244, %v8076
        %v8109 = vmul.f32 %v7245, %v8077
        %v8110 = vmul.f32 %v7246, %v8078
        %v8111 = vmul.f32 %v7247, %v8079
        %v8112 = vmul.f32 %v7248, %v8080
        %v8113 = vmul.f32 %v7249, %v8073
        %v8114 = vmul.f32 %v7250, %v8074
        %v8115 = vmul.f32 %v7251, %v8075
        %v8116 = vmul.f32 %v7252, %v8076
        %v8117 = vmul.f32 %v7253, %v8077
        %v8118 = vmul.f32 %v7254, %v8078
        %v8119 = vmul.f32 %v7255, %v8079
        %v8120 = vmul.f32 %v7256, %v8080
        %v8121 = vmul.f32 %v7257, %v8073
        %v8122 = vmul.f32 %v7258, %v8074
        %v8123 = vmul.f32 %v7259, %v8075
        %v8124 = vmul.f32 %v7260, %v8076
        %v8125 = vmul.f32 %v7261, %v8077
        %v8126 = vmul.f32 %v7262, %v8078
        %v8127 = vmul.f32 %v7263, %v8079
        %v8128 = vmul.f32 %v7264, %v8080
        %v8129 = vmul.f32 %v7265, %v8073
        %v8130 = vmul.f32 %v7266, %v8074
        %v8131 = vmul.f32 %v7267, %v8075
        %v8132 = vmul.f32 %v7268, %v8076
        %v8133 = vmul.f32 %v7269, %v8077
        %v8134 = vmul.f32 %v7270, %v8078
        %v8135 = vmul.f32 %v7271, %v8079
        %v8136 = vmul.f32 %v7272, %v8080
        %v8137 = vmul.f32 %v7273, %v8073
        %v8138 = vmul.f32 %v7274, %v8074
        %v8139 = vmul.f32 %v7275, %v8075
        %v8140 = vmul.f32 %v7276, %v8076
        %v8141 = vmul.f32 %v7277, %v8077
        %v8142 = vmul.f32 %v7278, %v8078
        %v8143 = vmul.f32 %v7279, %v8079
        %v8144 = vmul.f32 %v7280, %v8080
        %v8145 = vmul.f32 %v7281, %v8073
        %v8146 = vmul.f32 %v7282, %v8074
        %v8147 = vmul.f32 %v7283, %v8075
        %v8148 = vmul.f32 %v7284, %v8076
        %v8149 = vmul.f32 %v7285, %v8077
        %v8150 = vmul.f32 %v7286, %v8078
        %v8151 = vmul.f32 %v7287, %v8079
        %v8152 = vmul.f32 %v7288, %v8080
        %8154 = vset.pattern.permute.xlu0 10
        %8155 = vperm.xlu0 %8154, %v7961
        %v8156 = vpop.permute.xlu0 %8155
        %v8159 = vunpack.c.l.s4 839922192
        %v8160 = vunpack.c.0.s8 %v8159
        %v8161 = vlaneseq
        %v8162 = vshrl.u32 %v8161, 7
        %v8163 = vsub.s32 %v8160, %v8162
        %v8164 = vrot.slane %v8156, %v8163
        %8166 = vset.pattern.permute.xlu0 10
        %8167 = vperm.xlu0 %8166, %v7962
        %v8168 = vpop.permute.xlu0 %8167
        %v8171 = vunpack.c.l.s4 839922192
        %v8172 = vunpack.c.0.s8 %v8171
        %v8173 = vlaneseq
        %v8174 = vshrl.u32 %v8173, 7
        %v8175 = vsub.s32 %v8172, %v8174
        %v8176 = vrot.slane %v8168, %v8175
        %8178 = vset.pattern.permute.xlu0 10
        %8179 = vperm.xlu0 %8178, %v7963
        %v8180 = vpop.permute.xlu0 %8179
        %v8183 = vunpack.c.l.s4 839922192
        %v8184 = vunpack.c.0.s8 %v8183
        %v8185 = vlaneseq
        %v8186 = vshrl.u32 %v8185, 7
        %v8187 = vsub.s32 %v8184, %v8186
        %v8188 = vrot.slane %v8180, %v8187
        %8190 = vset.pattern.permute.xlu0 10
        %8191 = vperm.xlu0 %8190, %v7964
        %v8192 = vpop.permute.xlu0 %8191
        %v8195 = vunpack.c.l.s4 839922192
        %v8196 = vunpack.c.0.s8 %v8195
        %v8197 = vlaneseq
        %v8198 = vshrl.u32 %v8197, 7
        %v8199 = vsub.s32 %v8196, %v8198
        %v8200 = vrot.slane %v8192, %v8199
        %8202 = vset.pattern.permute.xlu0 10
        %8203 = vperm.xlu0 %8202, %v7965
        %v8204 = vpop.permute.xlu0 %8203
        %v8207 = vunpack.c.l.s4 839922192
        %v8208 = vunpack.c.0.s8 %v8207
        %v8209 = vlaneseq
        %v8210 = vshrl.u32 %v8209, 7
        %v8211 = vsub.s32 %v8208, %v8210
        %v8212 = vrot.slane %v8204, %v8211
        %8214 = vset.pattern.permute.xlu0 10
        %8215 = vperm.xlu0 %8214, %v7966
        %v8216 = vpop.permute.xlu0 %8215
        %v8219 = vunpack.c.l.s4 839922192
        %v8220 = vunpack.c.0.s8 %v8219
        %v8221 = vlaneseq
        %v8222 = vshrl.u32 %v8221, 7
        %v8223 = vsub.s32 %v8220, %v8222
        %v8224 = vrot.slane %v8216, %v8223
        %8226 = vset.pattern.permute.xlu0 10
        %8227 = vperm.xlu0 %8226, %v7967
        %v8228 = vpop.permute.xlu0 %8227
        %v8231 = vunpack.c.l.s4 839922192
        %v8232 = vunpack.c.0.s8 %v8231
        %v8233 = vlaneseq
        %v8234 = vshrl.u32 %v8233, 7
        %v8235 = vsub.s32 %v8232, %v8234
        %v8236 = vrot.slane %v8228, %v8235
        %8238 = vset.pattern.permute.xlu0 10
        %8239 = vperm.xlu0 %8238, %v7968
        %v8240 = vpop.permute.xlu0 %8239
        %v8243 = vunpack.c.l.s4 839922192
        %v8244 = vunpack.c.0.s8 %v8243
        %v8245 = vlaneseq
        %v8246 = vshrl.u32 %v8245, 7
        %v8247 = vsub.s32 %v8244, %v8246
        %v8248 = vrot.slane %v8240, %v8247
        %v8257 = vcombine.low %v8164, %v8176
        %v8258 = vcombine.high %v8164, %v8176
        %v8259 = vcombine.low %v8188, %v8200
        %v8260 = vcombine.high %v8188, %v8200
        %v8261 = vcombine.low %v8212, %v8224
        %v8262 = vcombine.high %v8212, %v8224
        %v8263 = vcombine.low %v8236, %v8248
        %v8264 = vcombine.high %v8236, %v8248
        %v8273 = vadd.f32 %v8089, %v8257
        %v8274 = vadd.f32 %v8090, %v8258
        %v8275 = vadd.f32 %v8091, %v8259
        %v8276 = vadd.f32 %v8092, %v8260
        %v8277 = vadd.f32 %v8093, %v8261
        %v8278 = vadd.f32 %v8094, %v8262
        %v8279 = vadd.f32 %v8095, %v8263
        %v8280 = vadd.f32 %v8096, %v8264
        %v8281 = vadd.f32 %v8097, %v8257
        %v8282 = vadd.f32 %v8098, %v8258
        %v8283 = vadd.f32 %v8099, %v8259
        %v8284 = vadd.f32 %v8100, %v8260
        %v8285 = vadd.f32 %v8101, %v8261
        %v8286 = vadd.f32 %v8102, %v8262
        %v8287 = vadd.f32 %v8103, %v8263
        %v8288 = vadd.f32 %v8104, %v8264
        %v8289 = vadd.f32 %v8105, %v8257
        %v8290 = vadd.f32 %v8106, %v8258
        %v8291 = vadd.f32 %v8107, %v8259
        %v8292 = vadd.f32 %v8108, %v8260
        %v8293 = vadd.f32 %v8109, %v8261
        %v8294 = vadd.f32 %v8110, %v8262
        %v8295 = vadd.f32 %v8111, %v8263
        %v8296 = vadd.f32 %v8112, %v8264
        %v8297 = vadd.f32 %v8113, %v8257
        %v8298 = vadd.f32 %v8114, %v8258
        %v8299 = vadd.f32 %v8115, %v8259
        %v8300 = vadd.f32 %v8116, %v8260
        %v8301 = vadd.f32 %v8117, %v8261
        %v8302 = vadd.f32 %v8118, %v8262
        %v8303 = vadd.f32 %v8119, %v8263
        %v8304 = vadd.f32 %v8120, %v8264
        %v8305 = vadd.f32 %v8121, %v8257
        %v8306 = vadd.f32 %v8122, %v8258
        %v8307 = vadd.f32 %v8123, %v8259
        %v8308 = vadd.f32 %v8124, %v8260
        %v8309 = vadd.f32 %v8125, %v8261
        %v8310 = vadd.f32 %v8126, %v8262
        %v8311 = vadd.f32 %v8127, %v8263
        %v8312 = vadd.f32 %v8128, %v8264
        %v8313 = vadd.f32 %v8129, %v8257
        %v8314 = vadd.f32 %v8130, %v8258
        %v8315 = vadd.f32 %v8131, %v8259
        %v8316 = vadd.f32 %v8132, %v8260
        %v8317 = vadd.f32 %v8133, %v8261
        %v8318 = vadd.f32 %v8134, %v8262
        %v8319 = vadd.f32 %v8135, %v8263
        %v8320 = vadd.f32 %v8136, %v8264
        %v8321 = vadd.f32 %v8137, %v8257
        %v8322 = vadd.f32 %v8138, %v8258
        %v8323 = vadd.f32 %v8139, %v8259
        %v8324 = vadd.f32 %v8140, %v8260
        %v8325 = vadd.f32 %v8141, %v8261
        %v8326 = vadd.f32 %v8142, %v8262
        %v8327 = vadd.f32 %v8143, %v8263
        %v8328 = vadd.f32 %v8144, %v8264
        %v8329 = vadd.f32 %v8145, %v8257
        %v8330 = vadd.f32 %v8146, %v8258
        %v8331 = vadd.f32 %v8147, %v8259
        %v8332 = vadd.f32 %v8148, %v8260
        %v8333 = vadd.f32 %v8149, %v8261
        %v8334 = vadd.f32 %v8150, %v8262
        %v8335 = vadd.f32 %v8151, %v8263
        %v8336 = vadd.f32 %v8152, %v8264
        %v8337 = vxor.u32 %v8273, 2147483648
        %v8338 = vxor.u32 %v8274, 2147483648
        %v8339 = vxor.u32 %v8275, 2147483648
        %v8340 = vxor.u32 %v8276, 2147483648
        %v8341 = vxor.u32 %v8277, 2147483648
        %v8342 = vxor.u32 %v8278, 2147483648
        %v8343 = vxor.u32 %v8279, 2147483648
        %v8344 = vxor.u32 %v8280, 2147483648
        %v8345 = vxor.u32 %v8281, 2147483648
        %v8346 = vxor.u32 %v8282, 2147483648
        %v8347 = vxor.u32 %v8283, 2147483648
        %v8348 = vxor.u32 %v8284, 2147483648
        %v8349 = vxor.u32 %v8285, 2147483648
        %v8350 = vxor.u32 %v8286, 2147483648
        %v8351 = vxor.u32 %v8287, 2147483648
        %v8352 = vxor.u32 %v8288, 2147483648
        %v8353 = vxor.u32 %v8289, 2147483648
        %v8354 = vxor.u32 %v8290, 2147483648
        %v8355 = vxor.u32 %v8291, 2147483648
        %v8356 = vxor.u32 %v8292, 2147483648
        %v8357 = vxor.u32 %v8293, 2147483648
        %v8358 = vxor.u32 %v8294, 2147483648
        %v8359 = vxor.u32 %v8295, 2147483648
        %v8360 = vxor.u32 %v8296, 2147483648
        %v8361 = vxor.u32 %v8297, 2147483648
        %v8362 = vxor.u32 %v8298, 2147483648
        %v8363 = vxor.u32 %v8299, 2147483648
        %v8364 = vxor.u32 %v8300, 2147483648
        %v8365 = vxor.u32 %v8301, 2147483648
        %v8366 = vxor.u32 %v8302, 2147483648
        %v8367 = vxor.u32 %v8303, 2147483648
        %v8368 = vxor.u32 %v8304, 2147483648
        %v8369 = vxor.u32 %v8305, 2147483648
        %v8370 = vxor.u32 %v8306, 2147483648
        %v8371 = vxor.u32 %v8307, 2147483648
        %v8372 = vxor.u32 %v8308, 2147483648
        %v8373 = vxor.u32 %v8309, 2147483648
        %v8374 = vxor.u32 %v8310, 2147483648
        %v8375 = vxor.u32 %v8311, 2147483648
        %v8376 = vxor.u32 %v8312, 2147483648
        %v8377 = vxor.u32 %v8313, 2147483648
        %v8378 = vxor.u32 %v8314, 2147483648
        %v8379 = vxor.u32 %v8315, 2147483648
        %v8380 = vxor.u32 %v8316, 2147483648
        %v8381 = vxor.u32 %v8317, 2147483648
        %v8382 = vxor.u32 %v8318, 2147483648
        %v8383 = vxor.u32 %v8319, 2147483648
        %v8384 = vxor.u32 %v8320, 2147483648
        %v8385 = vxor.u32 %v8321, 2147483648
        %v8386 = vxor.u32 %v8322, 2147483648
        %v8387 = vxor.u32 %v8323, 2147483648
        %v8388 = vxor.u32 %v8324, 2147483648
        %v8389 = vxor.u32 %v8325, 2147483648
        %v8390 = vxor.u32 %v8326, 2147483648
        %v8391 = vxor.u32 %v8327, 2147483648
        %v8392 = vxor.u32 %v8328, 2147483648
        %v8393 = vxor.u32 %v8329, 2147483648
        %v8394 = vxor.u32 %v8330, 2147483648
        %v8395 = vxor.u32 %v8331, 2147483648
        %v8396 = vxor.u32 %v8332, 2147483648
        %v8397 = vxor.u32 %v8333, 2147483648
        %v8398 = vxor.u32 %v8334, 2147483648
        %v8399 = vxor.u32 %v8335, 2147483648
        %v8400 = vxor.u32 %v8336, 2147483648
        %v8401 = vmul.f32 %v8337, 1.442695
        %v8402 = vpow.pop %v8401
        %v8403 = vmul.f32 %v8338, 1.442695
        %v8404 = vpow.pop %v8403
        %v8405 = vmul.f32 %v8339, 1.442695
        %v8406 = vpow.pop %v8405
        %v8407 = vmul.f32 %v8340, 1.442695
        %v8408 = vpow.pop %v8407
        %v8409 = vmul.f32 %v8341, 1.442695
        %v8410 = vpow.pop %v8409
        %v8411 = vmul.f32 %v8342, 1.442695
        %v8412 = vpow.pop %v8411
        %v8413 = vmul.f32 %v8343, 1.442695
        %v8414 = vpow.pop %v8413
        %v8415 = vmul.f32 %v8344, 1.442695
        %v8416 = vpow.pop %v8415
        %v8417 = vmul.f32 %v8345, 1.442695
        %v8418 = vpow.pop %v8417
        %v8419 = vmul.f32 %v8346, 1.442695
        %v8420 = vpow.pop %v8419
        %v8421 = vmul.f32 %v8347, 1.442695
        %v8422 = vpow.pop %v8421
        %v8423 = vmul.f32 %v8348, 1.442695
        %v8424 = vpow.pop %v8423
        %v8425 = vmul.f32 %v8349, 1.442695
        %v8426 = vpow.pop %v8425
        %v8427 = vmul.f32 %v8350, 1.442695
        %v8428 = vpow.pop %v8427
        %v8429 = vmul.f32 %v8351, 1.442695
        %v8430 = vpow.pop %v8429
        %v8431 = vmul.f32 %v8352, 1.442695
        %v8432 = vpow.pop %v8431
        %v8433 = vmul.f32 %v8353, 1.442695
        %v8434 = vpow.pop %v8433
        %v8435 = vmul.f32 %v8354, 1.442695
        %v8436 = vpow.pop %v8435
        %v8437 = vmul.f32 %v8355, 1.442695
        %v8438 = vpow.pop %v8437
        %v8439 = vmul.f32 %v8356, 1.442695
        %v8440 = vpow.pop %v8439
        %v8441 = vmul.f32 %v8357, 1.442695
        %v8442 = vpow.pop %v8441
        %v8443 = vmul.f32 %v8358, 1.442695
        %v8444 = vpow.pop %v8443
        %v8445 = vmul.f32 %v8359, 1.442695
        %v8446 = vpow.pop %v8445
        %v8447 = vmul.f32 %v8360, 1.442695
        %v8448 = vpow.pop %v8447
        %v8449 = vmul.f32 %v8361, 1.442695
        %v8450 = vpow.pop %v8449
        %v8451 = vmul.f32 %v8362, 1.442695
        %v8452 = vpow.pop %v8451
        %v8453 = vmul.f32 %v8363, 1.442695
        %v8454 = vpow.pop %v8453
        %v8455 = vmul.f32 %v8364, 1.442695
        %v8456 = vpow.pop %v8455
        %v8457 = vmul.f32 %v8365, 1.442695
        %v8458 = vpow.pop %v8457
        %v8459 = vmul.f32 %v8366, 1.442695
        %v8460 = vpow.pop %v8459
        %v8461 = vmul.f32 %v8367, 1.442695
        %v8462 = vpow.pop %v8461
        %v8463 = vmul.f32 %v8368, 1.442695
        %v8464 = vpow.pop %v8463
        %v8465 = vmul.f32 %v8369, 1.442695
        %v8466 = vpow.pop %v8465
        %v8467 = vmul.f32 %v8370, 1.442695
        %v8468 = vpow.pop %v8467
        %v8469 = vmul.f32 %v8371, 1.442695
        %v8470 = vpow.pop %v8469
        %v8471 = vmul.f32 %v8372, 1.442695
        %v8472 = vpow.pop %v8471
        %v8473 = vmul.f32 %v8373, 1.442695
        %v8474 = vpow.pop %v8473
        %v8475 = vmul.f32 %v8374, 1.442695
        %v8476 = vpow.pop %v8475
        %v8477 = vmul.f32 %v8375, 1.442695
        %v8478 = vpow.pop %v8477
        %v8479 = vmul.f32 %v8376, 1.442695
        %v8480 = vpow.pop %v8479
        %v8481 = vmul.f32 %v8377, 1.442695
        %v8482 = vpow.pop %v8481
        %v8483 = vmul.f32 %v8378, 1.442695
        %v8484 = vpow.pop %v8483
        %v8485 = vmul.f32 %v8379, 1.442695
        %v8486 = vpow.pop %v8485
        %v8487 = vmul.f32 %v8380, 1.442695
        %v8488 = vpow.pop %v8487
        %v8489 = vmul.f32 %v8381, 1.442695
        %v8490 = vpow.pop %v8489
        %v8491 = vmul.f32 %v8382, 1.442695
        %v8492 = vpow.pop %v8491
        %v8493 = vmul.f32 %v8383, 1.442695
        %v8494 = vpow.pop %v8493
        %v8495 = vmul.f32 %v8384, 1.442695
        %v8496 = vpow.pop %v8495
        %v8497 = vmul.f32 %v8385, 1.442695
        %v8498 = vpow.pop %v8497
        %v8499 = vmul.f32 %v8386, 1.442695
        %v8500 = vpow.pop %v8499
        %v8501 = vmul.f32 %v8387, 1.442695
        %v8502 = vpow.pop %v8501
        %v8503 = vmul.f32 %v8388, 1.442695
        %v8504 = vpow.pop %v8503
        %v8505 = vmul.f32 %v8389, 1.442695
        %v8506 = vpow.pop %v8505
        %v8507 = vmul.f32 %v8390, 1.442695
        %v8508 = vpow.pop %v8507
        %v8509 = vmul.f32 %v8391, 1.442695
        %v8510 = vpow.pop %v8509
        %v8511 = vmul.f32 %v8392, 1.442695
        %v8512 = vpow.pop %v8511
        %v8513 = vmul.f32 %v8393, 1.442695
        %v8514 = vpow.pop %v8513
        %v8515 = vmul.f32 %v8394, 1.442695
        %v8516 = vpow.pop %v8515
        %v8517 = vmul.f32 %v8395, 1.442695
        %v8518 = vpow.pop %v8517
        %v8519 = vmul.f32 %v8396, 1.442695
        %v8520 = vpow.pop %v8519
        %v8521 = vmul.f32 %v8397, 1.442695
        %v8522 = vpow.pop %v8521
        %v8523 = vmul.f32 %v8398, 1.442695
        %v8524 = vpow.pop %v8523
        %v8525 = vmul.f32 %v8399, 1.442695
        %v8526 = vpow.pop %v8525
        %v8527 = vmul.f32 %v8400, 1.442695
        %v8528 = vpow.pop %v8527
        %v8529 = vadd.f32 %v8402, 1.0
        %v8530 = vadd.f32 %v8404, 1.0
        %v8531 = vadd.f32 %v8406, 1.0
        %v8532 = vadd.f32 %v8408, 1.0
        %v8533 = vadd.f32 %v8410, 1.0
        %v8534 = vadd.f32 %v8412, 1.0
        %v8535 = vadd.f32 %v8414, 1.0
        %v8536 = vadd.f32 %v8416, 1.0
        %v8537 = vadd.f32 %v8418, 1.0
        %v8538 = vadd.f32 %v8420, 1.0
        %v8539 = vadd.f32 %v8422, 1.0
        %v8540 = vadd.f32 %v8424, 1.0
        %v8541 = vadd.f32 %v8426, 1.0
        %v8542 = vadd.f32 %v8428, 1.0
        %v8543 = vadd.f32 %v8430, 1.0
        %v8544 = vadd.f32 %v8432, 1.0
        %v8545 = vadd.f32 %v8434, 1.0
        %v8546 = vadd.f32 %v8436, 1.0
        %v8547 = vadd.f32 %v8438, 1.0
        %v8548 = vadd.f32 %v8440, 1.0
        %v8549 = vadd.f32 %v8442, 1.0
        %v8550 = vadd.f32 %v8444, 1.0
        %v8551 = vadd.f32 %v8446, 1.0
        %v8552 = vadd.f32 %v8448, 1.0
        %v8553 = vadd.f32 %v8450, 1.0
        %v8554 = vadd.f32 %v8452, 1.0
        %v8555 = vadd.f32 %v8454, 1.0
        %v8556 = vadd.f32 %v8456, 1.0
        %v8557 = vadd.f32 %v8458, 1.0
        %v8558 = vadd.f32 %v8460, 1.0
        %v8559 = vadd.f32 %v8462, 1.0
        %v8560 = vadd.f32 %v8464, 1.0
        %v8561 = vadd.f32 %v8466, 1.0
        %v8562 = vadd.f32 %v8468, 1.0
        %v8563 = vadd.f32 %v8470, 1.0
        %v8564 = vadd.f32 %v8472, 1.0
        %v8565 = vadd.f32 %v8474, 1.0
        %v8566 = vadd.f32 %v8476, 1.0
        %v8567 = vadd.f32 %v8478, 1.0
        %v8568 = vadd.f32 %v8480, 1.0
        %v8569 = vadd.f32 %v8482, 1.0
        %v8570 = vadd.f32 %v8484, 1.0
        %v8571 = vadd.f32 %v8486, 1.0
        %v8572 = vadd.f32 %v8488, 1.0
        %v8573 = vadd.f32 %v8490, 1.0
        %v8574 = vadd.f32 %v8492, 1.0
        %v8575 = vadd.f32 %v8494, 1.0
        %v8576 = vadd.f32 %v8496, 1.0
        %v8577 = vadd.f32 %v8498, 1.0
        %v8578 = vadd.f32 %v8500, 1.0
        %v8579 = vadd.f32 %v8502, 1.0
        %v8580 = vadd.f32 %v8504, 1.0
        %v8581 = vadd.f32 %v8506, 1.0
        %v8582 = vadd.f32 %v8508, 1.0
        %v8583 = vadd.f32 %v8510, 1.0
        %v8584 = vadd.f32 %v8512, 1.0
        %v8585 = vadd.f32 %v8514, 1.0
        %v8586 = vadd.f32 %v8516, 1.0
        %v8587 = vadd.f32 %v8518, 1.0
        %v8588 = vadd.f32 %v8520, 1.0
        %v8589 = vadd.f32 %v8522, 1.0
        %v8590 = vadd.f32 %v8524, 1.0
        %v8591 = vadd.f32 %v8526, 1.0
        %v8592 = vadd.f32 %v8528, 1.0
        %v8593 = vrcp.pop %v8529
        %v8594 = vmul.f32 1.0, %v8593
        %v8595 = vrcp.pop %v8530
        %v8596 = vmul.f32 1.0, %v8595
        %v8597 = vrcp.pop %v8531
        %v8598 = vmul.f32 1.0, %v8597
        %v8599 = vrcp.pop %v8532
        %v8600 = vmul.f32 1.0, %v8599
        %v8601 = vrcp.pop %v8533
        %v8602 = vmul.f32 1.0, %v8601
        %v8603 = vrcp.pop %v8534
        %v8604 = vmul.f32 1.0, %v8603
        %v8605 = vrcp.pop %v8535
        %v8606 = vmul.f32 1.0, %v8605
        %v8607 = vrcp.pop %v8536
        %v8608 = vmul.f32 1.0, %v8607
        %v8609 = vrcp.pop %v8537
        %v8610 = vmul.f32 1.0, %v8609
        %v8611 = vrcp.pop %v8538
        %v8612 = vmul.f32 1.0, %v8611
        %v8613 = vrcp.pop %v8539
        %v8614 = vmul.f32 1.0, %v8613
        %v8615 = vrcp.pop %v8540
        %v8616 = vmul.f32 1.0, %v8615
        %v8617 = vrcp.pop %v8541
        %v8618 = vmul.f32 1.0, %v8617
        %v8619 = vrcp.pop %v8542
        %v8620 = vmul.f32 1.0, %v8619
        %v8621 = vrcp.pop %v8543
        %v8622 = vmul.f32 1.0, %v8621
        %v8623 = vrcp.pop %v8544
        %v8624 = vmul.f32 1.0, %v8623
        %v8625 = vrcp.pop %v8545
        %v8626 = vmul.f32 1.0, %v8625
        %v8627 = vrcp.pop %v8546
        %v8628 = vmul.f32 1.0, %v8627
        %v8629 = vrcp.pop %v8547
        %v8630 = vmul.f32 1.0, %v8629
        %v8631 = vrcp.pop %v8548
        %v8632 = vmul.f32 1.0, %v8631
        %v8633 = vrcp.pop %v8549
        %v8634 = vmul.f32 1.0, %v8633
        %v8635 = vrcp.pop %v8550
        %v8636 = vmul.f32 1.0, %v8635
        %v8637 = vrcp.pop %v8551
        %v8638 = vmul.f32 1.0, %v8637
        %v8639 = vrcp.pop %v8552
        %v8640 = vmul.f32 1.0, %v8639
        %v8641 = vrcp.pop %v8553
        %v8642 = vmul.f32 1.0, %v8641
        %v8643 = vrcp.pop %v8554
        %v8644 = vmul.f32 1.0, %v8643
        %v8645 = vrcp.pop %v8555
        %v8646 = vmul.f32 1.0, %v8645
        %v8647 = vrcp.pop %v8556
        %v8648 = vmul.f32 1.0, %v8647
        %v8649 = vrcp.pop %v8557
        %v8650 = vmul.f32 1.0, %v8649
        %v8651 = vrcp.pop %v8558
        %v8652 = vmul.f32 1.0, %v8651
        %v8653 = vrcp.pop %v8559
        %v8654 = vmul.f32 1.0, %v8653
        %v8655 = vrcp.pop %v8560
        %v8656 = vmul.f32 1.0, %v8655
        %v8657 = vrcp.pop %v8561
        %v8658 = vmul.f32 1.0, %v8657
        %v8659 = vrcp.pop %v8562
        %v8660 = vmul.f32 1.0, %v8659
        %v8661 = vrcp.pop %v8563
        %v8662 = vmul.f32 1.0, %v8661
        %v8663 = vrcp.pop %v8564
        %v8664 = vmul.f32 1.0, %v8663
        %v8665 = vrcp.pop %v8565
        %v8666 = vmul.f32 1.0, %v8665
        %v8667 = vrcp.pop %v8566
        %v8668 = vmul.f32 1.0, %v8667
        %v8669 = vrcp.pop %v8567
        %v8670 = vmul.f32 1.0, %v8669
        %v8671 = vrcp.pop %v8568
        %v8672 = vmul.f32 1.0, %v8671
        %v8673 = vrcp.pop %v8569
        %v8674 = vmul.f32 1.0, %v8673
        %v8675 = vrcp.pop %v8570
        %v8676 = vmul.f32 1.0, %v8675
        %v8677 = vrcp.pop %v8571
        %v8678 = vmul.f32 1.0, %v8677
        %v8679 = vrcp.pop %v8572
        %v8680 = vmul.f32 1.0, %v8679
        %v8681 = vrcp.pop %v8573
        %v8682 = vmul.f32 1.0, %v8681
        %v8683 = vrcp.pop %v8574
        %v8684 = vmul.f32 1.0, %v8683
        %v8685 = vrcp.pop %v8575
        %v8686 = vmul.f32 1.0, %v8685
        %v8687 = vrcp.pop %v8576
        %v8688 = vmul.f32 1.0, %v8687
        %v8689 = vrcp.pop %v8577
        %v8690 = vmul.f32 1.0, %v8689
        %v8691 = vrcp.pop %v8578
        %v8692 = vmul.f32 1.0, %v8691
        %v8693 = vrcp.pop %v8579
        %v8694 = vmul.f32 1.0, %v8693
        %v8695 = vrcp.pop %v8580
        %v8696 = vmul.f32 1.0, %v8695
        %v8697 = vrcp.pop %v8581
        %v8698 = vmul.f32 1.0, %v8697
        %v8699 = vrcp.pop %v8582
        %v8700 = vmul.f32 1.0, %v8699
        %v8701 = vrcp.pop %v8583
        %v8702 = vmul.f32 1.0, %v8701
        %v8703 = vrcp.pop %v8584
        %v8704 = vmul.f32 1.0, %v8703
        %v8705 = vrcp.pop %v8585
        %v8706 = vmul.f32 1.0, %v8705
        %v8707 = vrcp.pop %v8586
        %v8708 = vmul.f32 1.0, %v8707
        %v8709 = vrcp.pop %v8587
        %v8710 = vmul.f32 1.0, %v8709
        %v8711 = vrcp.pop %v8588
        %v8712 = vmul.f32 1.0, %v8711
        %v8713 = vrcp.pop %v8589
        %v8714 = vmul.f32 1.0, %v8713
        %v8715 = vrcp.pop %v8590
        %v8716 = vmul.f32 1.0, %v8715
        %v8717 = vrcp.pop %v8591
        %v8718 = vmul.f32 1.0, %v8717
        %v8719 = vrcp.pop %v8592
        %v8720 = vmul.f32 1.0, %v8719
        %v8721 = vmul.f32 %v8273, %v8594
        %v8722 = vmul.f32 %v8274, %v8596
        %v8723 = vmul.f32 %v8275, %v8598
        %v8724 = vmul.f32 %v8276, %v8600
        %v8725 = vmul.f32 %v8277, %v8602
        %v8726 = vmul.f32 %v8278, %v8604
        %v8727 = vmul.f32 %v8279, %v8606
        %v8728 = vmul.f32 %v8280, %v8608
        %v8729 = vmul.f32 %v8281, %v8610
        %v8730 = vmul.f32 %v8282, %v8612
        %v8731 = vmul.f32 %v8283, %v8614
        %v8732 = vmul.f32 %v8284, %v8616
        %v8733 = vmul.f32 %v8285, %v8618
        %v8734 = vmul.f32 %v8286, %v8620
        %v8735 = vmul.f32 %v8287, %v8622
        %v8736 = vmul.f32 %v8288, %v8624
        %v8737 = vmul.f32 %v8289, %v8626
        %v8738 = vmul.f32 %v8290, %v8628
        %v8739 = vmul.f32 %v8291, %v8630
        %v8740 = vmul.f32 %v8292, %v8632
        %v8741 = vmul.f32 %v8293, %v8634
        %v8742 = vmul.f32 %v8294, %v8636
        %v8743 = vmul.f32 %v8295, %v8638
        %v8744 = vmul.f32 %v8296, %v8640
        %v8745 = vmul.f32 %v8297, %v8642
        %v8746 = vmul.f32 %v8298, %v8644
        %v8747 = vmul.f32 %v8299, %v8646
        %v8748 = vmul.f32 %v8300, %v8648
        %v8749 = vmul.f32 %v8301, %v8650
        %v8750 = vmul.f32 %v8302, %v8652
        %v8751 = vmul.f32 %v8303, %v8654
        %v8752 = vmul.f32 %v8304, %v8656
        %v8753 = vmul.f32 %v8305, %v8658
        %v8754 = vmul.f32 %v8306, %v8660
        %v8755 = vmul.f32 %v8307, %v8662
        %v8756 = vmul.f32 %v8308, %v8664
        %v8757 = vmul.f32 %v8309, %v8666
        %v8758 = vmul.f32 %v8310, %v8668
        %v8759 = vmul.f32 %v8311, %v8670
        %v8760 = vmul.f32 %v8312, %v8672
        %v8761 = vmul.f32 %v8313, %v8674
        %v8762 = vmul.f32 %v8314, %v8676
        %v8763 = vmul.f32 %v8315, %v8678
        %v8764 = vmul.f32 %v8316, %v8680
        %v8765 = vmul.f32 %v8317, %v8682
        %v8766 = vmul.f32 %v8318, %v8684
        %v8767 = vmul.f32 %v8319, %v8686
        %v8768 = vmul.f32 %v8320, %v8688
        %v8769 = vmul.f32 %v8321, %v8690
        %v8770 = vmul.f32 %v8322, %v8692
        %v8771 = vmul.f32 %v8323, %v8694
        %v8772 = vmul.f32 %v8324, %v8696
        %v8773 = vmul.f32 %v8325, %v8698
        %v8774 = vmul.f32 %v8326, %v8700
        %v8775 = vmul.f32 %v8327, %v8702
        %v8776 = vmul.f32 %v8328, %v8704
        %v8777 = vmul.f32 %v8329, %v8706
        %v8778 = vmul.f32 %v8330, %v8708
        %v8779 = vmul.f32 %v8331, %v8710
        %v8780 = vmul.f32 %v8332, %v8712
        %v8781 = vmul.f32 %v8333, %v8714
        %v8782 = vmul.f32 %v8334, %v8716
        %v8783 = vmul.f32 %v8335, %v8718
        %v8784 = vmul.f32 %v8336, %v8720
        %s8785 = scalar_lea.vmem [#allocation5], 96
        %v8786 = vld [vmem:[%s8785] sm:$0xff]
        %v8787 = vld [vmem:[%s8785 + $0x8] sm:$0xff]
        %v8788 = vld [vmem:[%s8785 + $0x10] sm:$0xff]
        %v8789 = vld [vmem:[%s8785 + $0x18] sm:$0xff]
        %v8790 = vld [vmem:[%s2] sm:$0xff]
        %v8791 = vld [vmem:[%s2 + $0x8] sm:$0xff]
        %v8792 = vld [vmem:[%s2 + $0x10] sm:$0xff]
        %v8793 = vld [vmem:[%s2 + $0x18] sm:$0xff]
        %8798 = vrot.lane.b32.xlu0 %v8786, 96
        %v8799 = vpop.permute.xlu0 %8798
        %8800 = vrot.lane.b32.xlu0 %v8787, 96
        %v8801 = vpop.permute.xlu0 %8800
        %8802 = vrot.lane.b32.xlu0 %v8788, 96
        %v8803 = vpop.permute.xlu0 %8802
        %8804 = vrot.lane.b32.xlu0 %v8789, 96
        %v8805 = vpop.permute.xlu0 %8804
        %v8806 = vsel %vm1793, %v8799, 0
        %v8808 = vsel %vm1793, %v8801, 0
        %v8810 = vsel %vm1793, %v8803, 0
        %v8812 = vsel %vm1793, %v8805, 0
        %8814 = vmatprep.subr.mxu0 0.0
        %8815 = vmatpush1.msra.mxu0 0.0
        %8816 = vmatprep.subr.mxu0 0.0
        %8817 = vmatpush1.msra.mxu0 0.0
        %8818 = vmatprep.subr.mxu0 0.0
        %8819 = vmatpush1.msra.mxu0 0.0
        %8820 = vmatprep.subr.mxu0 0.0
        %8821 = vmatpush1.msra.mxu0 0.0
        %8822 = vmatprep.subr.mxu0 0.0
        %8823 = vmatpush1.msra.mxu0 0.0
        %8824 = vmatprep.subr.mxu0 0.0
        %8825 = vmatpush1.msra.mxu0 0.0
        %8826 = vmatprep.subr.mxu0 0.0
        %8827 = vmatpush1.msra.mxu0 0.0
        %8828 = vmatprep.subr.mxu0 0.0
        %8829 = vmatpush1.msra.mxu0 0.0
        %8830 = vmatprep.subr.mxu0 %v8736
        %8831 = vmatpush1.msra.mxu0 %v8735
        %8832 = vmatprep.subr.mxu0 %v8734
        %8833 = vmatpush1.msra.mxu0 %v8733
        %8834 = vmatprep.subr.mxu0 %v8732
        %8835 = vmatpush1.msra.mxu0 %v8731
        %8836 = vmatprep.subr.mxu0 %v8730
        %8837 = vmatpush1.msra.mxu0 %v8729
        %8838 = vmatprep.subr.mxu0 %v8728
        %8839 = vmatpush1.msra.mxu0 %v8727
        %8840 = vmatprep.subr.mxu0 %v8726
        %8841 = vmatpush1.msra.mxu0 %v8725
        %8842 = vmatprep.subr.mxu0 %v8724
        %8843 = vmatpush1.msra.mxu0 %v8723
        %8844 = vmatprep.subr.mxu0 %v8722
        %8845 = vmatpush1.msra.mxu0 %v8721
        %8846 = vmatprep.subr.mxu0 0.0
        %8847 = vmatpush2.msra.mxu0 0.0
        %8848 = vmatprep.subr.mxu0 0.0
        %8849 = vmatpush2.msra.mxu0 0.0
        %8850 = vmatprep.subr.mxu0 0.0
        %8851 = vmatpush2.msra.mxu0 0.0
        %8852 = vmatprep.subr.mxu0 0.0
        %8853 = vmatpush2.msra.mxu0 0.0
        %8854 = vmatprep.subr.mxu0 0.0
        %8855 = vmatpush2.msra.mxu0 0.0
        %8856 = vmatprep.subr.mxu0 0.0
        %8857 = vmatpush2.msra.mxu0 0.0
        %8858 = vmatprep.subr.mxu0 0.0
        %8859 = vmatpush2.msra.mxu0 0.0
        %8860 = vmatprep.subr.mxu0 0.0
        %8861 = vmatpush2.msra.mxu0 0.0
        %8862 = vmatprep.subr.mxu0 0.0
        %8863 = vmatpush2.msra.mxu0 0.0
        %8864 = vmatprep.subr.mxu0 0.0
        %8865 = vmatpush2.msra.mxu0 0.0
        %8866 = vmatprep.subr.mxu0 0.0
        %8867 = vmatpush2.msra.mxu0 0.0
        %8868 = vmatprep.subr.mxu0 0.0
        %8869 = vmatpush2.msra.mxu0 0.0
        %8870 = vmatprep.subr.mxu0 0.0
        %8871 = vmatpush2.msra.mxu0 0.0
        %8872 = vmatprep.subr.mxu0 0.0
        %8873 = vmatpush2.msra.mxu0 0.0
        %8874 = vmatprep.subr.mxu0 0.0
        %8875 = vmatpush2.msra.mxu0 0.0
        %8876 = vmatprep.subr.mxu0 0.0
        %8877 = vmatpush2.msra.mxu0 0.0
        %8878 = vmatprep.mubr.f32.mxu0 0.0
        %8879 = vmatmul.mubr.f32.gmra.mxu0 %v8806
        %v8880 = vpop.f32.mrf.mxu0
        %v8881 = vadd.f32 0.0, %v8880
        %v8882 = vpop.f32.mrf.mxu0
        %v8883 = vadd.f32 0.0, %v8882
        %8884 = vmatprep.mubr.f32.mxu0 0.0
        %8885 = vmatmul.mubr.f32.gmra.mxu0 %v8808
        %v8886 = vpop.f32.mrf.mxu0
        %v8887 = vadd.f32 0.0, %v8886
        %v8888 = vpop.f32.mrf.mxu0
        %v8889 = vadd.f32 0.0, %v8888
        %8890 = vmatprep.mubr.f32.mxu0 0.0
        %8891 = vmatmul.mubr.f32.gmra.mxu0 %v8810
        %v8892 = vpop.f32.mrf.mxu0
        %v8893 = vadd.f32 0.0, %v8892
        %v8894 = vpop.f32.mrf.mxu0
        %v8895 = vadd.f32 0.0, %v8894
        %8896 = vmatprep.mubr.f32.mxu0 0.0
        %8897 = vmatmul.mubr.f32.gmra.mxu0 %v8812
        %v8898 = vpop.f32.mrf.mxu0
        %v8899 = vadd.f32 0.0, %v8898
        %v8900 = vpop.f32.mrf.mxu0
        %v8901 = vadd.f32 0.0, %v8900
        %8902 = vdwg.mxu0
        %v8903 = vsel %vm1891, %v8786, 0
        %v8905 = vsel %vm1891, %v8787, 0
        %v8907 = vsel %vm1891, %v8788, 0
        %v8909 = vsel %vm1891, %v8789, 0
        %8911 = vmatprep.subr.mxu0 0.0
        %8912 = vmatpush1.msra.mxu0 0.0
        %8913 = vmatprep.subr.mxu0 0.0
        %8914 = vmatpush1.msra.mxu0 0.0
        %8915 = vmatprep.subr.mxu0 0.0
        %8916 = vmatpush1.msra.mxu0 0.0
        %8917 = vmatprep.subr.mxu0 0.0
        %8918 = vmatpush1.msra.mxu0 0.0
        %8919 = vmatprep.subr.mxu0 %v8744
        %8920 = vmatpush1.msra.mxu0 %v8743
        %8921 = vmatprep.subr.mxu0 %v8742
        %8922 = vmatpush1.msra.mxu0 %v8741
        %8923 = vmatprep.subr.mxu0 %v8740
        %8924 = vmatpush1.msra.mxu0 %v8739
        %8925 = vmatprep.subr.mxu0 %v8738
        %8926 = vmatpush1.msra.mxu0 %v8737
        %8927 = vmatprep.subr.mxu0 %v8736
        %8928 = vmatpush1.msra.mxu0 %v8735
        %8929 = vmatprep.subr.mxu0 %v8734
        %8930 = vmatpush1.msra.mxu0 %v8733
        %8931 = vmatprep.subr.mxu0 %v8732
        %8932 = vmatpush1.msra.mxu0 %v8731
        %8933 = vmatprep.subr.mxu0 %v8730
        %8934 = vmatpush1.msra.mxu0 %v8729
        %8935 = vmatprep.subr.mxu0 %v8728
        %8936 = vmatpush1.msra.mxu0 %v8727
        %8937 = vmatprep.subr.mxu0 %v8726
        %8938 = vmatpush1.msra.mxu0 %v8725
        %8939 = vmatprep.subr.mxu0 %v8724
        %8940 = vmatpush1.msra.mxu0 %v8723
        %8941 = vmatprep.subr.mxu0 %v8722
        %8942 = vmatpush1.msra.mxu0 %v8721
        %8943 = vmatprep.subr.mxu0 0.0
        %8944 = vmatpush2.msra.mxu0 0.0
        %8945 = vmatprep.subr.mxu0 0.0
        %8946 = vmatpush2.msra.mxu0 0.0
        %8947 = vmatprep.subr.mxu0 0.0
        %8948 = vmatpush2.msra.mxu0 0.0
        %8949 = vmatprep.subr.mxu0 0.0
        %8950 = vmatpush2.msra.mxu0 0.0
        %8951 = vmatprep.subr.mxu0 0.0
        %8952 = vmatpush2.msra.mxu0 0.0
        %8953 = vmatprep.subr.mxu0 0.0
        %8954 = vmatpush2.msra.mxu0 0.0
        %8955 = vmatprep.subr.mxu0 0.0
        %8956 = vmatpush2.msra.mxu0 0.0
        %8957 = vmatprep.subr.mxu0 0.0
        %8958 = vmatpush2.msra.mxu0 0.0
        %8959 = vmatprep.subr.mxu0 0.0
        %8960 = vmatpush2.msra.mxu0 0.0
        %8961 = vmatprep.subr.mxu0 0.0
        %8962 = vmatpush2.msra.mxu0 0.0
        %8963 = vmatprep.subr.mxu0 0.0
        %8964 = vmatpush2.msra.mxu0 0.0
        %8965 = vmatprep.subr.mxu0 0.0
        %8966 = vmatpush2.msra.mxu0 0.0
        %8967 = vmatprep.subr.mxu0 0.0
        %8968 = vmatpush2.msra.mxu0 0.0
        %8969 = vmatprep.subr.mxu0 0.0
        %8970 = vmatpush2.msra.mxu0 0.0
        %8971 = vmatprep.subr.mxu0 0.0
        %8972 = vmatpush2.msra.mxu0 0.0
        %8973 = vmatprep.subr.mxu0 0.0
        %8974 = vmatpush2.msra.mxu0 0.0
        %8975 = vmatprep.mubr.f32.mxu0 0.0
        %8976 = vmatmul.mubr.f32.gmra.mxu0 %v8903
        %v8977 = vpop.f32.mrf.mxu0
        %v8978 = vadd.f32 0.0, %v8977
        %v8979 = vpop.f32.mrf.mxu0
        %v8980 = vadd.f32 0.0, %v8979
        %8981 = vmatprep.mubr.f32.mxu0 0.0
        %8982 = vmatmul.mubr.f32.gmra.mxu0 %v8905
        %v8983 = vpop.f32.mrf.mxu0
        %v8984 = vadd.f32 0.0, %v8983
        %v8985 = vpop.f32.mrf.mxu0
        %v8986 = vadd.f32 0.0, %v8985
        %8987 = vmatprep.mubr.f32.mxu0 0.0
        %8988 = vmatmul.mubr.f32.gmra.mxu0 %v8907
        %v8989 = vpop.f32.mrf.mxu0
        %v8990 = vadd.f32 0.0, %v8989
        %v8991 = vpop.f32.mrf.mxu0
        %v8992 = vadd.f32 0.0, %v8991
        %8993 = vmatprep.mubr.f32.mxu0 0.0
        %8994 = vmatmul.mubr.f32.gmra.mxu0 %v8909
        %v8995 = vpop.f32.mrf.mxu0
        %v8996 = vadd.f32 0.0, %v8995
        %v8997 = vpop.f32.mrf.mxu0
        %v8998 = vadd.f32 0.0, %v8997
        %8999 = vdwg.mxu0
        %9000 = vmatprep.subr.mxu0 0.0
        %9001 = vmatpush1.msra.mxu0 0.0
        %9002 = vmatprep.subr.mxu0 0.0
        %9003 = vmatpush1.msra.mxu0 0.0
        %9004 = vmatprep.subr.mxu0 0.0
        %9005 = vmatpush1.msra.mxu0 0.0
        %9006 = vmatprep.subr.mxu0 0.0
        %9007 = vmatpush1.msra.mxu0 0.0
        %9008 = vmatprep.subr.mxu0 %v8752
        %9009 = vmatpush1.msra.mxu0 %v8751
        %9010 = vmatprep.subr.mxu0 %v8750
        %9011 = vmatpush1.msra.mxu0 %v8749
        %9012 = vmatprep.subr.mxu0 %v8748
        %9013 = vmatpush1.msra.mxu0 %v8747
        %9014 = vmatprep.subr.mxu0 %v8746
        %9015 = vmatpush1.msra.mxu0 %v8745
        %9016 = vmatprep.subr.mxu0 %v8744
        %9017 = vmatpush1.msra.mxu0 %v8743
        %9018 = vmatprep.subr.mxu0 %v8742
        %9019 = vmatpush1.msra.mxu0 %v8741
        %9020 = vmatprep.subr.mxu0 %v8740
        %9021 = vmatpush1.msra.mxu0 %v8739
        %9022 = vmatprep.subr.mxu0 %v8738
        %9023 = vmatpush1.msra.mxu0 %v8737
        %9024 = vmatprep.subr.mxu0 %v8736
        %9025 = vmatpush1.msra.mxu0 %v8735
        %9026 = vmatprep.subr.mxu0 %v8734
        %9027 = vmatpush1.msra.mxu0 %v8733
        %9028 = vmatprep.subr.mxu0 %v8732
        %9029 = vmatpush1.msra.mxu0 %v8731
        %9030 = vmatprep.subr.mxu0 %v8730
        %9031 = vmatpush1.msra.mxu0 %v8729
        %9032 = vmatprep.subr.mxu0 0.0
        %9033 = vmatpush2.msra.mxu0 0.0
        %9034 = vmatprep.subr.mxu0 0.0
        %9035 = vmatpush2.msra.mxu0 0.0
        %9036 = vmatprep.subr.mxu0 0.0
        %9037 = vmatpush2.msra.mxu0 0.0
        %9038 = vmatprep.subr.mxu0 0.0
        %9039 = vmatpush2.msra.mxu0 0.0
        %9040 = vmatprep.subr.mxu0 0.0
        %9041 = vmatpush2.msra.mxu0 0.0
        %9042 = vmatprep.subr.mxu0 0.0
        %9043 = vmatpush2.msra.mxu0 0.0
        %9044 = vmatprep.subr.mxu0 0.0
        %9045 = vmatpush2.msra.mxu0 0.0
        %9046 = vmatprep.subr.mxu0 0.0
        %9047 = vmatpush2.msra.mxu0 0.0
        %9048 = vmatprep.subr.mxu0 0.0
        %9049 = vmatpush2.msra.mxu0 0.0
        %9050 = vmatprep.subr.mxu0 0.0
        %9051 = vmatpush2.msra.mxu0 0.0
        %9052 = vmatprep.subr.mxu0 0.0
        %9053 = vmatpush2.msra.mxu0 0.0
        %9054 = vmatprep.subr.mxu0 0.0
        %9055 = vmatpush2.msra.mxu0 0.0
        %9056 = vmatprep.subr.mxu0 0.0
        %9057 = vmatpush2.msra.mxu0 0.0
        %9058 = vmatprep.subr.mxu0 0.0
        %9059 = vmatpush2.msra.mxu0 0.0
        %9060 = vmatprep.subr.mxu0 0.0
        %9061 = vmatpush2.msra.mxu0 0.0
        %9062 = vmatprep.subr.mxu0 0.0
        %9063 = vmatpush2.msra.mxu0 0.0
        %9064 = vmatprep.mubr.f32.mxu0 0.0
        %9065 = vmatmul.mubr.f32.gmra.mxu0 %v8903
        %v9066 = vpop.f32.mrf.mxu0
        %v9067 = vadd.f32 0.0, %v9066
        %v9068 = vpop.f32.mrf.mxu0
        %v9069 = vadd.f32 0.0, %v9068
        %9070 = vmatprep.mubr.f32.mxu0 0.0
        %9071 = vmatmul.mubr.f32.gmra.mxu0 %v8905
        %v9072 = vpop.f32.mrf.mxu0
        %v9073 = vadd.f32 0.0, %v9072
        %v9074 = vpop.f32.mrf.mxu0
        %v9075 = vadd.f32 0.0, %v9074
        %9076 = vmatprep.mubr.f32.mxu0 0.0
        %9077 = vmatmul.mubr.f32.gmra.mxu0 %v8907
        %v9078 = vpop.f32.mrf.mxu0
        %v9079 = vadd.f32 0.0, %v9078
        %v9080 = vpop.f32.mrf.mxu0
        %v9081 = vadd.f32 0.0, %v9080
        %9082 = vmatprep.mubr.f32.mxu0 0.0
        %9083 = vmatmul.mubr.f32.gmra.mxu0 %v8909
        %v9084 = vpop.f32.mrf.mxu0
        %v9085 = vadd.f32 0.0, %v9084
        %v9086 = vpop.f32.mrf.mxu0
        %v9087 = vadd.f32 0.0, %v9086
        %9088 = vdwg.mxu0
        %9089 = vmatprep.subr.mxu0 0.0
        %9090 = vmatpush1.msra.mxu0 0.0
        %9091 = vmatprep.subr.mxu0 0.0
        %9092 = vmatpush1.msra.mxu0 0.0
        %9093 = vmatprep.subr.mxu0 0.0
        %9094 = vmatpush1.msra.mxu0 0.0
        %9095 = vmatprep.subr.mxu0 0.0
        %9096 = vmatpush1.msra.mxu0 0.0
        %9097 = vmatprep.subr.mxu0 %v8760
        %9098 = vmatpush1.msra.mxu0 %v8759
        %9099 = vmatprep.subr.mxu0 %v8758
        %9100 = vmatpush1.msra.mxu0 %v8757
        %9101 = vmatprep.subr.mxu0 %v8756
        %9102 = vmatpush1.msra.mxu0 %v8755
        %9103 = vmatprep.subr.mxu0 %v8754
        %9104 = vmatpush1.msra.mxu0 %v8753
        %9105 = vmatprep.subr.mxu0 %v8752
        %9106 = vmatpush1.msra.mxu0 %v8751
        %9107 = vmatprep.subr.mxu0 %v8750
        %9108 = vmatpush1.msra.mxu0 %v8749
        %9109 = vmatprep.subr.mxu0 %v8748
        %9110 = vmatpush1.msra.mxu0 %v8747
        %9111 = vmatprep.subr.mxu0 %v8746
        %9112 = vmatpush1.msra.mxu0 %v8745
        %9113 = vmatprep.subr.mxu0 %v8744
        %9114 = vmatpush1.msra.mxu0 %v8743
        %9115 = vmatprep.subr.mxu0 %v8742
        %9116 = vmatpush1.msra.mxu0 %v8741
        %9117 = vmatprep.subr.mxu0 %v8740
        %9118 = vmatpush1.msra.mxu0 %v8739
        %9119 = vmatprep.subr.mxu0 %v8738
        %9120 = vmatpush1.msra.mxu0 %v8737
        %9121 = vmatprep.subr.mxu0 0.0
        %9122 = vmatpush2.msra.mxu0 0.0
        %9123 = vmatprep.subr.mxu0 0.0
        %9124 = vmatpush2.msra.mxu0 0.0
        %9125 = vmatprep.subr.mxu0 0.0
        %9126 = vmatpush2.msra.mxu0 0.0
        %9127 = vmatprep.subr.mxu0 0.0
        %9128 = vmatpush2.msra.mxu0 0.0
        %9129 = vmatprep.subr.mxu0 0.0
        %9130 = vmatpush2.msra.mxu0 0.0
        %9131 = vmatprep.subr.mxu0 0.0
        %9132 = vmatpush2.msra.mxu0 0.0
        %9133 = vmatprep.subr.mxu0 0.0
        %9134 = vmatpush2.msra.mxu0 0.0
        %9135 = vmatprep.subr.mxu0 0.0
        %9136 = vmatpush2.msra.mxu0 0.0
        %9137 = vmatprep.subr.mxu0 0.0
        %9138 = vmatpush2.msra.mxu0 0.0
        %9139 = vmatprep.subr.mxu0 0.0
        %9140 = vmatpush2.msra.mxu0 0.0
        %9141 = vmatprep.subr.mxu0 0.0
        %9142 = vmatpush2.msra.mxu0 0.0
        %9143 = vmatprep.subr.mxu0 0.0
        %9144 = vmatpush2.msra.mxu0 0.0
        %9145 = vmatprep.subr.mxu0 0.0
        %9146 = vmatpush2.msra.mxu0 0.0
        %9147 = vmatprep.subr.mxu0 0.0
        %9148 = vmatpush2.msra.mxu0 0.0
        %9149 = vmatprep.subr.mxu0 0.0
        %9150 = vmatpush2.msra.mxu0 0.0
        %9151 = vmatprep.subr.mxu0 0.0
        %9152 = vmatpush2.msra.mxu0 0.0
        %9153 = vmatprep.mubr.f32.mxu0 0.0
        %9154 = vmatmul.mubr.f32.gmra.mxu0 %v8903
        %v9155 = vpop.f32.mrf.mxu0
        %v9156 = vadd.f32 0.0, %v9155
        %v9157 = vpop.f32.mrf.mxu0
        %v9158 = vadd.f32 0.0, %v9157
        %9159 = vmatprep.mubr.f32.mxu0 0.0
        %9160 = vmatmul.mubr.f32.gmra.mxu0 %v8905
        %v9161 = vpop.f32.mrf.mxu0
        %v9162 = vadd.f32 0.0, %v9161
        %v9163 = vpop.f32.mrf.mxu0
        %v9164 = vadd.f32 0.0, %v9163
        %9165 = vmatprep.mubr.f32.mxu0 0.0
        %9166 = vmatmul.mubr.f32.gmra.mxu0 %v8907
        %v9167 = vpop.f32.mrf.mxu0
        %v9168 = vadd.f32 0.0, %v9167
        %v9169 = vpop.f32.mrf.mxu0
        %v9170 = vadd.f32 0.0, %v9169
        %9171 = vmatprep.mubr.f32.mxu0 0.0
        %9172 = vmatmul.mubr.f32.gmra.mxu0 %v8909
        %v9173 = vpop.f32.mrf.mxu0
        %v9174 = vadd.f32 0.0, %v9173
        %v9175 = vpop.f32.mrf.mxu0
        %v9176 = vadd.f32 0.0, %v9175
        %9177 = vdwg.mxu0
        %9178 = vmatprep.subr.mxu0 0.0
        %9179 = vmatpush1.msra.mxu0 0.0
        %9180 = vmatprep.subr.mxu0 0.0
        %9181 = vmatpush1.msra.mxu0 0.0
        %9182 = vmatprep.subr.mxu0 0.0
        %9183 = vmatpush1.msra.mxu0 0.0
        %9184 = vmatprep.subr.mxu0 0.0
        %9185 = vmatpush1.msra.mxu0 0.0
        %9186 = vmatprep.subr.mxu0 %v8768
        %9187 = vmatpush1.msra.mxu0 %v8767
        %9188 = vmatprep.subr.mxu0 %v8766
        %9189 = vmatpush1.msra.mxu0 %v8765
        %9190 = vmatprep.subr.mxu0 %v8764
        %9191 = vmatpush1.msra.mxu0 %v8763
        %9192 = vmatprep.subr.mxu0 %v8762
        %9193 = vmatpush1.msra.mxu0 %v8761
        %9194 = vmatprep.subr.mxu0 %v8760
        %9195 = vmatpush1.msra.mxu0 %v8759
        %9196 = vmatprep.subr.mxu0 %v8758
        %9197 = vmatpush1.msra.mxu0 %v8757
        %9198 = vmatprep.subr.mxu0 %v8756
        %9199 = vmatpush1.msra.mxu0 %v8755
        %9200 = vmatprep.subr.mxu0 %v8754
        %9201 = vmatpush1.msra.mxu0 %v8753
        %9202 = vmatprep.subr.mxu0 %v8752
        %9203 = vmatpush1.msra.mxu0 %v8751
        %9204 = vmatprep.subr.mxu0 %v8750
        %9205 = vmatpush1.msra.mxu0 %v8749
        %9206 = vmatprep.subr.mxu0 %v8748
        %9207 = vmatpush1.msra.mxu0 %v8747
        %9208 = vmatprep.subr.mxu0 %v8746
        %9209 = vmatpush1.msra.mxu0 %v8745
        %9210 = vmatprep.subr.mxu0 0.0
        %9211 = vmatpush2.msra.mxu0 0.0
        %9212 = vmatprep.subr.mxu0 0.0
        %9213 = vmatpush2.msra.mxu0 0.0
        %9214 = vmatprep.subr.mxu0 0.0
        %9215 = vmatpush2.msra.mxu0 0.0
        %9216 = vmatprep.subr.mxu0 0.0
        %9217 = vmatpush2.msra.mxu0 0.0
        %9218 = vmatprep.subr.mxu0 0.0
        %9219 = vmatpush2.msra.mxu0 0.0
        %9220 = vmatprep.subr.mxu0 0.0
        %9221 = vmatpush2.msra.mxu0 0.0
        %9222 = vmatprep.subr.mxu0 0.0
        %9223 = vmatpush2.msra.mxu0 0.0
        %9224 = vmatprep.subr.mxu0 0.0
        %9225 = vmatpush2.msra.mxu0 0.0
        %9226 = vmatprep.subr.mxu0 0.0
        %9227 = vmatpush2.msra.mxu0 0.0
        %9228 = vmatprep.subr.mxu0 0.0
        %9229 = vmatpush2.msra.mxu0 0.0
        %9230 = vmatprep.subr.mxu0 0.0
        %9231 = vmatpush2.msra.mxu0 0.0
        %9232 = vmatprep.subr.mxu0 0.0
        %9233 = vmatpush2.msra.mxu0 0.0
        %9234 = vmatprep.subr.mxu0 0.0
        %9235 = vmatpush2.msra.mxu0 0.0
        %9236 = vmatprep.subr.mxu0 0.0
        %9237 = vmatpush2.msra.mxu0 0.0
        %9238 = vmatprep.subr.mxu0 0.0
        %9239 = vmatpush2.msra.mxu0 0.0
        %9240 = vmatprep.subr.mxu0 0.0
        %9241 = vmatpush2.msra.mxu0 0.0
        %9242 = vmatprep.mubr.f32.mxu0 0.0
        %9243 = vmatmul.mubr.f32.gmra.mxu0 %v8903
        %v9244 = vpop.f32.mrf.mxu0
        %v9245 = vadd.f32 0.0, %v9244
        %v9246 = vpop.f32.mrf.mxu0
        %v9247 = vadd.f32 0.0, %v9246
        %9248 = vmatprep.mubr.f32.mxu0 0.0
        %9249 = vmatmul.mubr.f32.gmra.mxu0 %v8905
        %v9250 = vpop.f32.mrf.mxu0
        %v9251 = vadd.f32 0.0, %v9250
        %v9252 = vpop.f32.mrf.mxu0
        %v9253 = vadd.f32 0.0, %v9252
        %9254 = vmatprep.mubr.f32.mxu0 0.0
        %9255 = vmatmul.mubr.f32.gmra.mxu0 %v8907
        %v9256 = vpop.f32.mrf.mxu0
        %v9257 = vadd.f32 0.0, %v9256
        %v9258 = vpop.f32.mrf.mxu0
        %v9259 = vadd.f32 0.0, %v9258
        %9260 = vmatprep.mubr.f32.mxu0 0.0
        %9261 = vmatmul.mubr.f32.gmra.mxu0 %v8909
        %v9262 = vpop.f32.mrf.mxu0
        %v9263 = vadd.f32 0.0, %v9262
        %v9264 = vpop.f32.mrf.mxu0
        %v9265 = vadd.f32 0.0, %v9264
        %9266 = vdwg.mxu0
        %9267 = vmatprep.subr.mxu0 0.0
        %9268 = vmatpush1.msra.mxu0 0.0
        %9269 = vmatprep.subr.mxu0 0.0
        %9270 = vmatpush1.msra.mxu0 0.0
        %9271 = vmatprep.subr.mxu0 0.0
        %9272 = vmatpush1.msra.mxu0 0.0
        %9273 = vmatprep.subr.mxu0 0.0
        %9274 = vmatpush1.msra.mxu0 0.0
        %9275 = vmatprep.subr.mxu0 %v8776
        %9276 = vmatpush1.msra.mxu0 %v8775
        %9277 = vmatprep.subr.mxu0 %v8774
        %9278 = vmatpush1.msra.mxu0 %v8773
        %9279 = vmatprep.subr.mxu0 %v8772
        %9280 = vmatpush1.msra.mxu0 %v8771
        %9281 = vmatprep.subr.mxu0 %v8770
        %9282 = vmatpush1.msra.mxu0 %v8769
        %9283 = vmatprep.subr.mxu0 %v8768
        %9284 = vmatpush1.msra.mxu0 %v8767
        %9285 = vmatprep.subr.mxu0 %v8766
        %9286 = vmatpush1.msra.mxu0 %v8765
        %9287 = vmatprep.subr.mxu0 %v8764
        %9288 = vmatpush1.msra.mxu0 %v8763
        %9289 = vmatprep.subr.mxu0 %v8762
        %9290 = vmatpush1.msra.mxu0 %v8761
        %9291 = vmatprep.subr.mxu0 %v8760
        %9292 = vmatpush1.msra.mxu0 %v8759
        %9293 = vmatprep.subr.mxu0 %v8758
        %9294 = vmatpush1.msra.mxu0 %v8757
        %9295 = vmatprep.subr.mxu0 %v8756
        %9296 = vmatpush1.msra.mxu0 %v8755
        %9297 = vmatprep.subr.mxu0 %v8754
        %9298 = vmatpush1.msra.mxu0 %v8753
        %9299 = vmatprep.subr.mxu0 0.0
        %9300 = vmatpush2.msra.mxu0 0.0
        %9301 = vmatprep.subr.mxu0 0.0
        %9302 = vmatpush2.msra.mxu0 0.0
        %9303 = vmatprep.subr.mxu0 0.0
        %9304 = vmatpush2.msra.mxu0 0.0
        %9305 = vmatprep.subr.mxu0 0.0
        %9306 = vmatpush2.msra.mxu0 0.0
        %9307 = vmatprep.subr.mxu0 0.0
        %9308 = vmatpush2.msra.mxu0 0.0
        %9309 = vmatprep.subr.mxu0 0.0
        %9310 = vmatpush2.msra.mxu0 0.0
        %9311 = vmatprep.subr.mxu0 0.0
        %9312 = vmatpush2.msra.mxu0 0.0
        %9313 = vmatprep.subr.mxu0 0.0
        %9314 = vmatpush2.msra.mxu0 0.0
        %9315 = vmatprep.subr.mxu0 0.0
        %9316 = vmatpush2.msra.mxu0 0.0
        %9317 = vmatprep.subr.mxu0 0.0
        %9318 = vmatpush2.msra.mxu0 0.0
        %9319 = vmatprep.subr.mxu0 0.0
        %9320 = vmatpush2.msra.mxu0 0.0
        %9321 = vmatprep.subr.mxu0 0.0
        %9322 = vmatpush2.msra.mxu0 0.0
        %9323 = vmatprep.subr.mxu0 0.0
        %9324 = vmatpush2.msra.mxu0 0.0
        %9325 = vmatprep.subr.mxu0 0.0
        %9326 = vmatpush2.msra.mxu0 0.0
        %9327 = vmatprep.subr.mxu0 0.0
        %9328 = vmatpush2.msra.mxu0 0.0
        %9329 = vmatprep.subr.mxu0 0.0
        %9330 = vmatpush2.msra.mxu0 0.0
        %9331 = vmatprep.mubr.f32.mxu0 0.0
        %9332 = vmatmul.mubr.f32.gmra.mxu0 %v8903
        %v9333 = vpop.f32.mrf.mxu0
        %v9334 = vadd.f32 0.0, %v9333
        %v9335 = vpop.f32.mrf.mxu0
        %v9336 = vadd.f32 0.0, %v9335
        %9337 = vmatprep.mubr.f32.mxu0 0.0
        %9338 = vmatmul.mubr.f32.gmra.mxu0 %v8905
        %v9339 = vpop.f32.mrf.mxu0
        %v9340 = vadd.f32 0.0, %v9339
        %v9341 = vpop.f32.mrf.mxu0
        %v9342 = vadd.f32 0.0, %v9341
        %9343 = vmatprep.mubr.f32.mxu0 0.0
        %9344 = vmatmul.mubr.f32.gmra.mxu0 %v8907
        %v9345 = vpop.f32.mrf.mxu0
        %v9346 = vadd.f32 0.0, %v9345
        %v9347 = vpop.f32.mrf.mxu0
        %v9348 = vadd.f32 0.0, %v9347
        %9349 = vmatprep.mubr.f32.mxu0 0.0
        %9350 = vmatmul.mubr.f32.gmra.mxu0 %v8909
        %v9351 = vpop.f32.mrf.mxu0
        %v9352 = vadd.f32 0.0, %v9351
        %v9353 = vpop.f32.mrf.mxu0
        %v9354 = vadd.f32 0.0, %v9353
        %9355 = vdwg.mxu0
        %9356 = vmatprep.subr.mxu0 0.0
        %9357 = vmatpush1.msra.mxu0 0.0
        %9358 = vmatprep.subr.mxu0 0.0
        %9359 = vmatpush1.msra.mxu0 0.0
        %9360 = vmatprep.subr.mxu0 0.0
        %9361 = vmatpush1.msra.mxu0 0.0
        %9362 = vmatprep.subr.mxu0 0.0
        %9363 = vmatpush1.msra.mxu0 0.0
        %9364 = vmatprep.subr.mxu0 %v8784
        %9365 = vmatpush1.msra.mxu0 %v8783
        %9366 = vmatprep.subr.mxu0 %v8782
        %9367 = vmatpush1.msra.mxu0 %v8781
        %9368 = vmatprep.subr.mxu0 %v8780
        %9369 = vmatpush1.msra.mxu0 %v8779
        %9370 = vmatprep.subr.mxu0 %v8778
        %9371 = vmatpush1.msra.mxu0 %v8777
        %9372 = vmatprep.subr.mxu0 %v8776
        %9373 = vmatpush1.msra.mxu0 %v8775
        %9374 = vmatprep.subr.mxu0 %v8774
        %9375 = vmatpush1.msra.mxu0 %v8773
        %9376 = vmatprep.subr.mxu0 %v8772
        %9377 = vmatpush1.msra.mxu0 %v8771
        %9378 = vmatprep.subr.mxu0 %v8770
        %9379 = vmatpush1.msra.mxu0 %v8769
        %9380 = vmatprep.subr.mxu0 %v8768
        %9381 = vmatpush1.msra.mxu0 %v8767
        %9382 = vmatprep.subr.mxu0 %v8766
        %9383 = vmatpush1.msra.mxu0 %v8765
        %9384 = vmatprep.subr.mxu0 %v8764
        %9385 = vmatpush1.msra.mxu0 %v8763
        %9386 = vmatprep.subr.mxu0 %v8762
        %9387 = vmatpush1.msra.mxu0 %v8761
        %9388 = vmatprep.subr.mxu0 0.0
        %9389 = vmatpush2.msra.mxu0 0.0
        %9390 = vmatprep.subr.mxu0 0.0
        %9391 = vmatpush2.msra.mxu0 0.0
        %9392 = vmatprep.subr.mxu0 0.0
        %9393 = vmatpush2.msra.mxu0 0.0
        %9394 = vmatprep.subr.mxu0 0.0
        %9395 = vmatpush2.msra.mxu0 0.0
        %9396 = vmatprep.subr.mxu0 0.0
        %9397 = vmatpush2.msra.mxu0 0.0
        %9398 = vmatprep.subr.mxu0 0.0
        %9399 = vmatpush2.msra.mxu0 0.0
        %9400 = vmatprep.subr.mxu0 0.0
        %9401 = vmatpush2.msra.mxu0 0.0
        %9402 = vmatprep.subr.mxu0 0.0
        %9403 = vmatpush2.msra.mxu0 0.0
        %9404 = vmatprep.subr.mxu0 0.0
        %9405 = vmatpush2.msra.mxu0 0.0
        %9406 = vmatprep.subr.mxu0 0.0
        %9407 = vmatpush2.msra.mxu0 0.0
        %9408 = vmatprep.subr.mxu0 0.0
        %9409 = vmatpush2.msra.mxu0 0.0
        %9410 = vmatprep.subr.mxu0 0.0
        %9411 = vmatpush2.msra.mxu0 0.0
        %9412 = vmatprep.subr.mxu0 0.0
        %9413 = vmatpush2.msra.mxu0 0.0
        %9414 = vmatprep.subr.mxu0 0.0
        %9415 = vmatpush2.msra.mxu0 0.0
        %9416 = vmatprep.subr.mxu0 0.0
        %9417 = vmatpush2.msra.mxu0 0.0
        %9418 = vmatprep.subr.mxu0 0.0
        %9419 = vmatpush2.msra.mxu0 0.0
        %9420 = vmatprep.mubr.f32.mxu0 0.0
        %9421 = vmatmul.mubr.f32.gmra.mxu0 %v8903
        %v9422 = vpop.f32.mrf.mxu0
        %v9423 = vadd.f32 0.0, %v9422
        %v9424 = vpop.f32.mrf.mxu0
        %v9425 = vadd.f32 0.0, %v9424
        %9426 = vmatprep.mubr.f32.mxu0 0.0
        %9427 = vmatmul.mubr.f32.gmra.mxu0 %v8905
        %v9428 = vpop.f32.mrf.mxu0
        %v9429 = vadd.f32 0.0, %v9428
        %v9430 = vpop.f32.mrf.mxu0
        %v9431 = vadd.f32 0.0, %v9430
        %9432 = vmatprep.mubr.f32.mxu0 0.0
        %9433 = vmatmul.mubr.f32.gmra.mxu0 %v8907
        %v9434 = vpop.f32.mrf.mxu0
        %v9435 = vadd.f32 0.0, %v9434
        %v9436 = vpop.f32.mrf.mxu0
        %v9437 = vadd.f32 0.0, %v9436
        %9438 = vmatprep.mubr.f32.mxu0 0.0
        %9439 = vmatmul.mubr.f32.gmra.mxu0 %v8909
        %v9440 = vpop.f32.mrf.mxu0
        %v9441 = vadd.f32 0.0, %v9440
        %v9442 = vpop.f32.mrf.mxu0
        %v9443 = vadd.f32 0.0, %v9442
        %9444 = vdwg.mxu0
        %v9445 = vsel %vm1793, %v8786, 0
        %v9447 = vsel %vm1793, %v8787, 0
        %v9449 = vsel %vm1793, %v8788, 0
        %v9451 = vsel %vm1793, %v8789, 0
        %9453 = vmatprep.subr.mxu0 0.0
        %9454 = vmatpush1.msra.mxu0 0.0
        %9455 = vmatprep.subr.mxu0 0.0
        %9456 = vmatpush1.msra.mxu0 0.0
        %9457 = vmatprep.subr.mxu0 0.0
        %9458 = vmatpush1.msra.mxu0 0.0
        %9459 = vmatprep.subr.mxu0 0.0
        %9460 = vmatpush1.msra.mxu0 0.0
        %9461 = vmatprep.subr.mxu0 0.0
        %9462 = vmatpush1.msra.mxu0 0.0
        %9463 = vmatprep.subr.mxu0 0.0
        %9464 = vmatpush1.msra.mxu0 0.0
        %9465 = vmatprep.subr.mxu0 0.0
        %9466 = vmatpush1.msra.mxu0 0.0
        %9467 = vmatprep.subr.mxu0 0.0
        %9468 = vmatpush1.msra.mxu0 0.0
        %9469 = vmatprep.subr.mxu0 %v8784
        %9470 = vmatpush1.msra.mxu0 %v8783
        %9471 = vmatprep.subr.mxu0 %v8782
        %9472 = vmatpush1.msra.mxu0 %v8781
        %9473 = vmatprep.subr.mxu0 %v8780
        %9474 = vmatpush1.msra.mxu0 %v8779
        %9475 = vmatprep.subr.mxu0 %v8778
        %9476 = vmatpush1.msra.mxu0 %v8777
        %9477 = vmatprep.subr.mxu0 %v8776
        %9478 = vmatpush1.msra.mxu0 %v8775
        %9479 = vmatprep.subr.mxu0 %v8774
        %9480 = vmatpush1.msra.mxu0 %v8773
        %9481 = vmatprep.subr.mxu0 %v8772
        %9482 = vmatpush1.msra.mxu0 %v8771
        %9483 = vmatprep.subr.mxu0 %v8770
        %9484 = vmatpush1.msra.mxu0 %v8769
        %9485 = vmatprep.subr.mxu0 0.0
        %9486 = vmatpush2.msra.mxu0 0.0
        %9487 = vmatprep.subr.mxu0 0.0
        %9488 = vmatpush2.msra.mxu0 0.0
        %9489 = vmatprep.subr.mxu0 0.0
        %9490 = vmatpush2.msra.mxu0 0.0
        %9491 = vmatprep.subr.mxu0 0.0
        %9492 = vmatpush2.msra.mxu0 0.0
        %9493 = vmatprep.subr.mxu0 0.0
        %9494 = vmatpush2.msra.mxu0 0.0
        %9495 = vmatprep.subr.mxu0 0.0
        %9496 = vmatpush2.msra.mxu0 0.0
        %9497 = vmatprep.subr.mxu0 0.0
        %9498 = vmatpush2.msra.mxu0 0.0
        %9499 = vmatprep.subr.mxu0 0.0
        %9500 = vmatpush2.msra.mxu0 0.0
        %9501 = vmatprep.subr.mxu0 0.0
        %9502 = vmatpush2.msra.mxu0 0.0
        %9503 = vmatprep.subr.mxu0 0.0
        %9504 = vmatpush2.msra.mxu0 0.0
        %9505 = vmatprep.subr.mxu0 0.0
        %9506 = vmatpush2.msra.mxu0 0.0
        %9507 = vmatprep.subr.mxu0 0.0
        %9508 = vmatpush2.msra.mxu0 0.0
        %9509 = vmatprep.subr.mxu0 0.0
        %9510 = vmatpush2.msra.mxu0 0.0
        %9511 = vmatprep.subr.mxu0 0.0
        %9512 = vmatpush2.msra.mxu0 0.0
        %9513 = vmatprep.subr.mxu0 0.0
        %9514 = vmatpush2.msra.mxu0 0.0
        %9515 = vmatprep.subr.mxu0 0.0
        %9516 = vmatpush2.msra.mxu0 0.0
        %9517 = vmatprep.mubr.f32.mxu0 0.0
        %9518 = vmatmul.mubr.f32.gmra.mxu0 %v9445
        %v9519 = vpop.f32.mrf.mxu0
        %v9520 = vadd.f32 0.0, %v9519
        %v9521 = vpop.f32.mrf.mxu0
        %v9522 = vadd.f32 0.0, %v9521
        %9523 = vmatprep.mubr.f32.mxu0 0.0
        %9524 = vmatmul.mubr.f32.gmra.mxu0 %v9447
        %v9525 = vpop.f32.mrf.mxu0
        %v9526 = vadd.f32 0.0, %v9525
        %v9527 = vpop.f32.mrf.mxu0
        %v9528 = vadd.f32 0.0, %v9527
        %9529 = vmatprep.mubr.f32.mxu0 0.0
        %9530 = vmatmul.mubr.f32.gmra.mxu0 %v9449
        %v9531 = vpop.f32.mrf.mxu0
        %v9532 = vadd.f32 0.0, %v9531
        %v9533 = vpop.f32.mrf.mxu0
        %v9534 = vadd.f32 0.0, %v9533
        %9535 = vmatprep.mubr.f32.mxu0 0.0
        %9536 = vmatmul.mubr.f32.gmra.mxu0 %v9451
        %v9537 = vpop.f32.mrf.mxu0
        %v9538 = vadd.f32 0.0, %v9537
        %v9539 = vpop.f32.mrf.mxu0
        %v9540 = vadd.f32 0.0, %v9539
        %9541 = vdwg.mxu0
        %9543 = vset.pattern.permute.xlu0 11
        %9544 = vperm.xlu0 %9543, %v8790
        %v9545 = vpop.permute.xlu0 %9544
        %9548 = vset.pattern.permute.xlu0 11
        %9549 = vperm.xlu0 %9548, %v8791
        %v9550 = vpop.permute.xlu0 %9549
        %9553 = vset.pattern.permute.xlu0 11
        %9554 = vperm.xlu0 %9553, %v8792
        %v9555 = vpop.permute.xlu0 %9554
        %9558 = vset.pattern.permute.xlu0 11
        %9559 = vperm.xlu0 %9558, %v8793
        %v9560 = vpop.permute.xlu0 %9559
        %v9562 = vadd.f32 %v8881, %v9545
        %v9563 = vadd.f32 %v8883, %v9545
        %v9564 = vadd.f32 %v8887, %v9550
        %v9565 = vadd.f32 %v8889, %v9550
        %v9566 = vadd.f32 %v8893, %v9555
        %v9567 = vadd.f32 %v8895, %v9555
        %v9568 = vadd.f32 %v8899, %v9560
        %v9569 = vadd.f32 %v8901, %v9560
        %v9570 = vadd.f32 %v8978, %v9545
        %v9571 = vadd.f32 %v8980, %v9545
        %v9572 = vadd.f32 %v8984, %v9550
        %v9573 = vadd.f32 %v8986, %v9550
        %v9574 = vadd.f32 %v8990, %v9555
        %v9575 = vadd.f32 %v8992, %v9555
        %v9576 = vadd.f32 %v8996, %v9560
        %v9577 = vadd.f32 %v8998, %v9560
        %v9578 = vadd.f32 %v9067, %v9545
        %v9579 = vadd.f32 %v9069, %v9545
        %v9580 = vadd.f32 %v9073, %v9550
        %v9581 = vadd.f32 %v9075, %v9550
        %v9582 = vadd.f32 %v9079, %v9555
        %v9583 = vadd.f32 %v9081, %v9555
        %v9584 = vadd.f32 %v9085, %v9560
        %v9585 = vadd.f32 %v9087, %v9560
        %v9586 = vadd.f32 %v9156, %v9545
        %v9587 = vadd.f32 %v9158, %v9545
        %v9588 = vadd.f32 %v9162, %v9550
        %v9589 = vadd.f32 %v9164, %v9550
        %v9590 = vadd.f32 %v9168, %v9555
        %v9591 = vadd.f32 %v9170, %v9555
        %v9592 = vadd.f32 %v9174, %v9560
        %v9593 = vadd.f32 %v9176, %v9560
        %v9594 = vadd.f32 %v9245, %v9545
        %v9595 = vadd.f32 %v9247, %v9545
        %v9596 = vadd.f32 %v9251, %v9550
        %v9597 = vadd.f32 %v9253, %v9550
        %v9598 = vadd.f32 %v9257, %v9555
        %v9599 = vadd.f32 %v9259, %v9555
        %v9600 = vadd.f32 %v9263, %v9560
        %v9601 = vadd.f32 %v9265, %v9560
        %v9602 = vadd.f32 %v9334, %v9545
        %v9603 = vadd.f32 %v9336, %v9545
        %v9604 = vadd.f32 %v9340, %v9550
        %v9605 = vadd.f32 %v9342, %v9550
        %v9606 = vadd.f32 %v9346, %v9555
        %v9607 = vadd.f32 %v9348, %v9555
        %v9608 = vadd.f32 %v9352, %v9560
        %v9609 = vadd.f32 %v9354, %v9560
        %v9610 = vadd.f32 %v9423, %v9545
        %v9611 = vadd.f32 %v9425, %v9545
        %v9612 = vadd.f32 %v9429, %v9550
        %v9613 = vadd.f32 %v9431, %v9550
        %v9614 = vadd.f32 %v9435, %v9555
        %v9615 = vadd.f32 %v9437, %v9555
        %v9616 = vadd.f32 %v9441, %v9560
        %v9617 = vadd.f32 %v9443, %v9560
        %v9618 = vadd.f32 %v9520, %v9545
        %v9619 = vadd.f32 %v9522, %v9545
        %v9620 = vadd.f32 %v9526, %v9550
        %v9621 = vadd.f32 %v9528, %v9550
        %v9622 = vadd.f32 %v9532, %v9555
        %v9623 = vadd.f32 %v9534, %v9555
        %v9624 = vadd.f32 %v9538, %v9560
        %v9625 = vadd.f32 %v9540, %v9560
        %v9626 = vadd.f32 %v204, %v9562
        %v9627 = vadd.f32 %v205, %v9563
        %v9628 = vadd.f32 %v206, %v9564
        %v9629 = vadd.f32 %v207, %v9565
        %v9630 = vadd.f32 %v208, %v9566
        %v9631 = vadd.f32 %v209, %v9567
        %v9632 = vadd.f32 %v210, %v9568
        %v9633 = vadd.f32 %v211, %v9569
        %v9634 = vadd.f32 %v212, %v9570
        %v9635 = vadd.f32 %v213, %v9571
        %v9636 = vadd.f32 %v214, %v9572
        %v9637 = vadd.f32 %v215, %v9573
        %v9638 = vadd.f32 %v216, %v9574
        %v9639 = vadd.f32 %v217, %v9575
        %v9640 = vadd.f32 %v218, %v9576
        %v9641 = vadd.f32 %v219, %v9577
        %v9642 = vadd.f32 %v220, %v9578
        %v9643 = vadd.f32 %v221, %v9579
        %v9644 = vadd.f32 %v222, %v9580
        %v9645 = vadd.f32 %v223, %v9581
        %v9646 = vadd.f32 %v224, %v9582
        %v9647 = vadd.f32 %v225, %v9583
        %v9648 = vadd.f32 %v226, %v9584
        %v9649 = vadd.f32 %v227, %v9585
        %v9650 = vadd.f32 %v228, %v9586
        %v9651 = vadd.f32 %v229, %v9587
        %v9652 = vadd.f32 %v230, %v9588
        %v9653 = vadd.f32 %v231, %v9589
        %v9654 = vadd.f32 %v232, %v9590
        %v9655 = vadd.f32 %v233, %v9591
        %v9656 = vadd.f32 %v234, %v9592
        %v9657 = vadd.f32 %v235, %v9593
        %v9658 = vadd.f32 %v236, %v9594
        %v9659 = vadd.f32 %v237, %v9595
        %v9660 = vadd.f32 %v238, %v9596
        %v9661 = vadd.f32 %v239, %v9597
        %v9662 = vadd.f32 %v240, %v9598
        %v9663 = vadd.f32 %v241, %v9599
        %v9664 = vadd.f32 %v242, %v9600
        %v9665 = vadd.f32 %v243, %v9601
        %v9666 = vadd.f32 %v244, %v9602
        %v9667 = vadd.f32 %v245, %v9603
        %v9668 = vadd.f32 %v246, %v9604
        %v9669 = vadd.f32 %v247, %v9605
        %v9670 = vadd.f32 %v248, %v9606
        %v9671 = vadd.f32 %v249, %v9607
        %v9672 = vadd.f32 %v250, %v9608
        %v9673 = vadd.f32 %v251, %v9609
        %v9674 = vadd.f32 %v252, %v9610
        %v9675 = vadd.f32 %v253, %v9611
        %v9676 = vadd.f32 %v254, %v9612
        %v9677 = vadd.f32 %v255, %v9613
        %v9678 = vadd.f32 %v256, %v9614
        %v9679 = vadd.f32 %v257, %v9615
        %v9680 = vadd.f32 %v258, %v9616
        %v9681 = vadd.f32 %v259, %v9617
        %v9682 = vadd.f32 %v260, %v9618
        %v9683 = vadd.f32 %v261, %v9619
        %v9684 = vadd.f32 %v262, %v9620
        %v9685 = vadd.f32 %v263, %v9621
        %v9686 = vadd.f32 %v264, %v9622
        %v9687 = vadd.f32 %v265, %v9623
        %v9688 = vadd.f32 %v266, %v9624
        %v9689 = vadd.f32 %v267, %v9625
        %9690 = vst [vmem:[%s203] sm:$0xff] %v9626
        %9691 = vst [vmem:[%s203 + $0x8] sm:$0xff] %v9627
        %9692 = vst [vmem:[%s203 + $0x10] sm:$0xff] %v9628
        %9693 = vst [vmem:[%s203 + $0x18] sm:$0xff] %v9629
        %9694 = vst [vmem:[%s203 + $0x20] sm:$0xff] %v9630
        %9695 = vst [vmem:[%s203 + $0x28] sm:$0xff] %v9631
        %9696 = vst [vmem:[%s203 + $0x30] sm:$0xff] %v9632
        %9697 = vst [vmem:[%s203 + $0x38] sm:$0xff] %v9633
        %9698 = vst [vmem:[%s203 + $0x40] sm:$0xff] %v9634
        %9699 = vst [vmem:[%s203 + $0x48] sm:$0xff] %v9635
        %9700 = vst [vmem:[%s203 + $0x50] sm:$0xff] %v9636
        %9701 = vst [vmem:[%s203 + $0x58] sm:$0xff] %v9637
        %9702 = vst [vmem:[%s203 + $0x60] sm:$0xff] %v9638
        %9703 = vst [vmem:[%s203 + $0x68] sm:$0xff] %v9639
        %9704 = vst [vmem:[%s203 + $0x70] sm:$0xff] %v9640
        %9705 = vst [vmem:[%s203 + $0x78] sm:$0xff] %v9641
        %9706 = vst [vmem:[%s203 + $0x80] sm:$0xff] %v9642
        %9707 = vst [vmem:[%s203 + $0x88] sm:$0xff] %v9643
        %9708 = vst [vmem:[%s203 + $0x90] sm:$0xff] %v9644
        %9709 = vst [vmem:[%s203 + $0x98] sm:$0xff] %v9645
        %9710 = vst [vmem:[%s203 + $0xa0] sm:$0xff] %v9646
        %9711 = vst [vmem:[%s203 + $0xa8] sm:$0xff] %v9647
        %9712 = vst [vmem:[%s203 + $0xb0] sm:$0xff] %v9648
        %9713 = vst [vmem:[%s203 + $0xb8] sm:$0xff] %v9649
        %9714 = vst [vmem:[%s203 + $0xc0] sm:$0xff] %v9650
        %9715 = vst [vmem:[%s203 + $0xc8] sm:$0xff] %v9651
        %9716 = vst [vmem:[%s203 + $0xd0] sm:$0xff] %v9652
        %9717 = vst [vmem:[%s203 + $0xd8] sm:$0xff] %v9653
        %9718 = vst [vmem:[%s203 + $0xe0] sm:$0xff] %v9654
        %9719 = vst [vmem:[%s203 + $0xe8] sm:$0xff] %v9655
        %9720 = vst [vmem:[%s203 + $0xf0] sm:$0xff] %v9656
        %9721 = vst [vmem:[%s203 + $0xf8] sm:$0xff] %v9657
        %9722 = vst [vmem:[%s203 + $0x100] sm:$0xff] %v9658
        %9723 = vst [vmem:[%s203 + $0x108] sm:$0xff] %v9659
        %9724 = vst [vmem:[%s203 + $0x110] sm:$0xff] %v9660
        %9725 = vst [vmem:[%s203 + $0x118] sm:$0xff] %v9661
        %9726 = vst [vmem:[%s203 + $0x120] sm:$0xff] %v9662
        %9727 = vst [vmem:[%s203 + $0x128] sm:$0xff] %v9663
        %9728 = vst [vmem:[%s203 + $0x130] sm:$0xff] %v9664
        %9729 = vst [vmem:[%s203 + $0x138] sm:$0xff] %v9665
        %9730 = vst [vmem:[%s203 + $0x140] sm:$0xff] %v9666
        %9731 = vst [vmem:[%s203 + $0x148] sm:$0xff] %v9667
        %9732 = vst [vmem:[%s203 + $0x150] sm:$0xff] %v9668
        %9733 = vst [vmem:[%s203 + $0x158] sm:$0xff] %v9669
        %9734 = vst [vmem:[%s203 + $0x160] sm:$0xff] %v9670
        %9735 = vst [vmem:[%s203 + $0x168] sm:$0xff] %v9671
        %9736 = vst [vmem:[%s203 + $0x170] sm:$0xff] %v9672
        %9737 = vst [vmem:[%s203 + $0x178] sm:$0xff] %v9673
        %9738 = vst [vmem:[%s203 + $0x180] sm:$0xff] %v9674
        %9739 = vst [vmem:[%s203 + $0x188] sm:$0xff] %v9675
        %9740 = vst [vmem:[%s203 + $0x190] sm:$0xff] %v9676
        %9741 = vst [vmem:[%s203 + $0x198] sm:$0xff] %v9677
        %9742 = vst [vmem:[%s203 + $0x1a0] sm:$0xff] %v9678
        %9743 = vst [vmem:[%s203 + $0x1a8] sm:$0xff] %v9679
        %9744 = vst [vmem:[%s203 + $0x1b0] sm:$0xff] %v9680
        %9745 = vst [vmem:[%s203 + $0x1b8] sm:$0xff] %v9681
        %9746 = vst [vmem:[%s203 + $0x1c0] sm:$0xff] %v9682
        %9747 = vst [vmem:[%s203 + $0x1c8] sm:$0xff] %v9683
        %9748 = vst [vmem:[%s203 + $0x1d0] sm:$0xff] %v9684
        %9749 = vst [vmem:[%s203 + $0x1d8] sm:$0xff] %v9685
        %9750 = vst [vmem:[%s203 + $0x1e0] sm:$0xff] %v9686
        %9751 = vst [vmem:[%s203 + $0x1e8] sm:$0xff] %v9687
        %9752 = vst [vmem:[%s203 + $0x1f0] sm:$0xff] %v9688
        %9753 = vst [vmem:[%s203 + $0x1f8] sm:$0xff] %v9689
        %s9754 = sand.u32 %s97, 1
        %s9755 = scalar_lea.sflag [#allocation4], %s9754
        %s9756 = sand.u32 %s97, 1
        %s9757 = smul.addr %s9756, 512
        %s9758 = scalar_lea.vmem [#allocation7], %s9757
        // Predicated region
        $region41: #{tpu_custom_call.1} parent=31 // pred_check
          %p9759 = pneg %p107
        $region42: #{tpu_custom_call.1} parent=31 // pred_check_branch
          %9761 = sbr.rel (%p9759) target = $region44
        $region43: #{tpu_custom_call.1} parent=31 // pred_region
          %s9763 = ssub.s32 8192, 8192
          %9764 = vsyncadd %s9755, %s9763
          %s9765 = smul.addr %s21, 64
          %s9766 = smul.addr %s9765, 128
          %s9767 = scalar_lea.hbm %s3, %s9766
          %s9768 = sshll.u32 %s9758, 4
          %s9769 = int_to_ptr.vmem [resolvable:$true] %s9768
          %9774 = dma.vmem_to_hbm [thread:$0]  %s9769, 8192, %s9767, %s9755, 256, 256, 16
        $region44: #{tpu_custom_call.1} parent=31 // pred_fallthru
          _
      $region32: #{tpu_custom_call.1} parent=5 // pred_fallthru
        _
      %p9775 = scmp.le.s32.totalorder 2, %s16
      // Predicated region
      $region45: #{tpu_custom_call.1} parent=5 // pred_check
        %p9776 = pneg %p9775
      $region46: #{tpu_custom_call.1} parent=5 // pred_check_branch
        %9778 = sbr.rel (%p9776) target = $region48
      $region47: #{tpu_custom_call.1} parent=5 // pred_region
        %s9779 = ssub.s32 %s16, 2
        // Predicated region
        $region49: #{tpu_custom_call.1} parent=47 // pred_check
          %p9780 = pneg %p113
        $region50: #{tpu_custom_call.1} parent=47 // pred_check_branch
          %9782 = sbr.rel (%p9780) target = $region52
        $region51: #{tpu_custom_call.1} parent=47 // pred_region
          %s9783 = sand.u32 %s98, 1
          %s9784 = scalar_lea.sflag [#allocation4], %s9783
          %s9785 = sand.u32 %s98, 1
          %s9786 = smul.addr %s9785, 512
          %s9787 = scalar_lea.vmem [#allocation7], %s9786
          %9788 = dma.done %s9784, 8192
        $region52: #{tpu_custom_call.1} parent=47 // pred_fallthru
          _
      $region48: #{tpu_custom_call.1} parent=5 // pred_fallthru
        _
    $region6: #{tpu_custom_call.1} parent=1 // loop_footer
      %s20 = sadd.s32 1, %s16
    $region7: #{tpu_custom_call.1} parent=1 // loop_footer_branch
      %15 = sbr.rel target = $region3
    $region8: #{tpu_custom_call.1} parent=1 // loop_exit
      _
    %9789 = vsyncpa [#allocation3], 1
    %s9790 = scalar_lea.sflag [#allocation3], 1
    %9791 = vsyncpa %s9790, 1
    %9792 = vsyncpa [#allocation6], 1
    %9793 = vsyncpa [#allocation4], 1
    %s9794 = scalar_lea.sflag [#allocation4], 1
    %9795 = vsyncpa %s9794, 1

</llo_original>
